<compile_context>
chip_gen: v7x
topology: tpu7x:2x2x1
jax: 0.10.0
libtpu: 0.0.40
codegen_flags: <defaults>
</compile_context>

<pallas_src>
import functools

import jax
import jax.numpy as jnp
from jax import lax
from jax.experimental import pallas as pl
from jax.experimental.pallas import tpu as pltpu

C_IN = 256
C_HID = 64
EPS = 1e-5


# ---------------------------------------------------------------------------
# In-kernel helpers
# ---------------------------------------------------------------------------
def _dot(a, b):
    # Only small weight matmuls remain; HIGHEST kept for the tolerance check.
    return jnp.dot(a, b, preferred_element_type=jnp.float32,
                   precision=jax.lax.Precision.HIGHEST)


def _sigmoid(x):
    return 1.0 / (1.0 + jnp.exp(-x))


def _delay(x, s, rows, T):
    """x delayed by s time steps along axis 0, first s rows zeroed.

    XLU sublane roll + VPU mask instead of a (T,T) shift matmul."""
    if s == 0:
        return x
    if s >= T:
        return jnp.zeros_like(x)
    rolled = pltpu.roll(x, s, axis=0)
    return jnp.where(rows >= s, rolled, 0.0)


def _cumsum_time(x, rows, T):
    """Inclusive causal prefix sum over time (axis 0), log2(T) rolls."""
    d = 1
    while d < T:
        rolled = pltpu.roll(x, d, axis=0)
        x = x + jnp.where(rows >= d, rolled, 0.0)
        d *= 2
    return x


# ---------------------------------------------------------------------------
# Pallas kernel: one Glu block, one batch element per grid step
# ---------------------------------------------------------------------------
def _glu_kernel(x_ref, w_in_ref,
                al_ref, gl_ref, bl_ref, wssl_ref, wdl_ref,
                ar_ref, gr_ref, br_ref, wssr_ref, wdr_ref,
                ao_ref, go_ref, bo_ref, w_out_ref,
                o_ref, *, T, dilation, K):
    # Small structural helpers (hoisted once; (T,64) / (T,1) only).
    rows_c = lax.broadcasted_iota(jnp.int32, (T, C_HID), 0)   # (T,64) row idx
    rows_1 = lax.broadcasted_iota(jnp.int32, (T, 1), 0)       # (T,1) row idx
    inv_cnt = 1.0 / ((rows_1.astype(jnp.float32) + 1.0) * float(C_HID))

    x = x_ref[0]                               # (T, 256)
    h = _dot(x, w_in_ref[...])                 # (T, 64)   in_conv (1x1)

    def cln(p, gain, bias):
        # Cumulative (causal) LayerNorm: reduce channels first, then a narrow
        # prefix sum over time (no (T,T) tri matrix, no tri matmul).
        s1 = jnp.sum(p, axis=1, keepdims=True)          # (T, 1)
        s2 = jnp.sum(p * p, axis=1, keepdims=True)      # (T, 1)
        c1 = _cumsum_time(s1, rows_1, T)
        c2 = _cumsum_time(s2, rows_1, T)
        mean = c1 * inv_cnt
        var = jnp.maximum(c2 * inv_cnt - mean * mean, 0.0)
        std = jnp.sqrt(var + EPS)
        return (p - mean) / std * gain + bias

    def branch(alpha, gain, bias, wss_ref, wd_ref):
        # PReLU
        p = jnp.where(h > 0, h, alpha * h)
        # cLN
        n = cln(p, gain, bias)
        # ShareSepConv: K scaled causal shifts (no (T,T) matrix input).
        g = wss_ref[K - 1:K, :] * n
        for j in range(K - 1):
            g = g + wss_ref[j:j + 1, :] * _delay(n, K - 1 - j, rows_c, T)
        # ConstantPad1d((4*d,0)) + Conv1d(64,64,k=5,dilation=d): 5 taps fused
        # into a single (T,320)@(320,64) matmul (weights pre-stacked).
        taps = [_delay(g, (4 - tap) * dilation, rows_c, T) for tap in range(5)]
        stack = jnp.concatenate(taps, axis=1)            # (T, 320)
        return _dot(stack, wd_ref[...])                  # (T, 64)

    yl = branch(al_ref[...], gl_ref[...], bl_ref[...], wssl_ref, wdl_ref)
    yr = branch(ar_ref[...], gr_ref[...], br_ref[...], wssr_ref, wdr_ref)
    z = yl * _sigmoid(yr)

    # out_conv: PReLU -> cLN -> 1x1 conv to 256
    p = jnp.where(z > 0, z, ao_ref[...] * z)
    n = cln(p, go_ref[...], bo_ref[...])
    o = _dot(n, w_out_ref[...])                          # (T, 256)

    o_ref[0] = (o + x).astype(o_ref.dtype)               # residual add


# ---------------------------------------------------------------------------
# Wrappers (parameter plumbing in plain JAX)
# ---------------------------------------------------------------------------
def glu_pallas(x_btc, p, dilation):
    B, T, C = x_btc.shape
    assert C == C_IN
    K = 2 * dilation - 1

    # ShareSep coefficients broadcast to (K, 64) so the kernel does a pure
    # elementwise multiply (no scalar extraction).
    wss_l = jnp.broadcast_to(p['wss_l'][:, None], (K, C_HID)).astype(jnp.float32)
    wss_r = jnp.broadcast_to(p['wss_r'][:, None], (K, C_HID)).astype(jnp.float32)
    # Dilated-conv taps stacked to (320, 64) for the fused matmul.
    wd_l = p['wd_l'].reshape(5 * C_HID, C_HID)
    wd_r = p['wd_r'].reshape(5 * C_HID, C_HID)

    def vspec(shape):
        n = len(shape)
        return pl.BlockSpec(shape, lambda b, _n=n: (0,) * _n)

    kern = functools.partial(_glu_kernel, T=T, dilation=dilation, K=K)

    grid_spec = pltpu.PrefetchScalarGridSpec(
        num_scalar_prefetch=0,
        grid=(B,),
        in_specs=[
            pl.BlockSpec((1, T, C_IN), lambda b: (b, 0, 0)),      # x
            vspec((C_IN, C_HID)),                                 # w_in^T
            vspec((1, C_HID)), vspec((1, C_HID)), vspec((1, C_HID)),  # left
            vspec((K, C_HID)), vspec((5 * C_HID, C_HID)),
            vspec((1, C_HID)), vspec((1, C_HID)), vspec((1, C_HID)),  # right
            vspec((K, C_HID)), vspec((5 * C_HID, C_HID)),
            vspec((1, C_HID)), vspec((1, C_HID)), vspec((1, C_HID)),  # out
            vspec((C_HID, C_IN)),                                 # w_out^T
        ],
        out_specs=pl.BlockSpec((1, T, C_IN), lambda b: (b, 0, 0)),
    )

    return pl.pallas_call(
        kern,
        out_shape=jax.ShapeDtypeStruct((B, T, C_IN), jnp.float32),
        grid_spec=grid_spec,
        compiler_params=pltpu.CompilerParams(
            dimension_semantics=("parallel",)),
    )(x_btc, p['w_in_t'],
      p['alpha_l'], p['gain_l'], p['bias_l'], wss_l, wd_l,
      p['alpha_r'], p['gain_r'], p['bias_r'], wss_r, wd_r,
      p['alpha_o'], p['gain_o'], p['bias_o'], p['w_out_t'])


def tcm_list_pallas(x_btc, layer_params):
    # Tcm_list.forward: x = Glu(2**i)(x) for i in range(X)
    for i, p in enumerate(layer_params):
        x_btc = glu_pallas(x_btc, p, 2 ** i)
    return x_btc


# ---------------------------------------------------------------------------
# Deterministic parameter init (shapes from the module __init__)
# ---------------------------------------------------------------------------
def _init_layer_params(key, dilation):
    K = 2 * dilation - 1
    ks = jax.random.split(key, 9)

    def conv_w(k, shape, fan_in):
        return jax.random.normal(k, shape, jnp.float32) / jnp.sqrt(float(fan_in))

    # Module init is a delta at (K-1)//2; perturb so all K taps are exercised.
    wss_base = jnp.zeros((K,), jnp.float32).at[(K - 1) // 2].set(1.0)
    wss_l = wss_base + 0.1 * jax.random.normal(ks[4], (K,), jnp.float32)
    wss_r = wss_base + 0.1 * jax.random.normal(ks[5], (K,), jnp.float32)

    def affine(k):
        kg, kb = jax.random.split(k)
        gain = 1.0 + 0.1 * jax.random.normal(kg, (1, C_HID), jnp.float32)
        bias = 0.1 * jax.random.normal(kb, (1, C_HID), jnp.float32)
        return gain, bias

    gl, bl = affine(ks[6])
    gr, br = affine(ks[7])
    go, bo = affine(ks[8])

    return dict(
        w_in_t=conv_w(ks[0], (C_IN, C_HID), C_IN),           # Conv1d(256,64,1)
        alpha_l=jnp.full((1, C_HID), 0.25, jnp.float32),
        gain_l=gl, bias_l=bl, wss_l=wss_l,
        wd_l=conv_w(ks[1], (5, C_HID, C_HID), 5 * C_HID),    # [tap, ci, co]
        alpha_r=jnp.full((1, C_HID), 0.25, jnp.float32),
        gain_r=gr, bias_r=br, wss_r=wss_r,
        wd_r=conv_w(ks[2], (5, C_HID, C_HID), 5 * C_HID),
        alpha_o=jnp.full((1, C_HID), 0.25, jnp.float32),
        gain_o=go, bias_o=bo,
        w_out_t=conv_w(ks[3], (C_HID, C_IN), C_HID),         # Conv1d(64,256,1)
    )


def init_params(key, X):
    keys = jax.random.split(key, X)
    return [_init_layer_params(keys[i], 2 ** i) for i in range(X)]


# ---------------------------------------------------------------------------
# Pure-JAX reference (same math, channels-last) for correctness check
# ---------------------------------------------------------------------------
def glu_reference(x_btc, p, dilation):
    B, T, C = x_btc.shape
    K = 2 * dilation - 1

    def dot(a, b):
        return jnp.einsum('btc,cd->btd', a, b,
                          precision=jax.lax.Precision.HIGHEST)

    def cln(q, gain, bias):
        s1 = jnp.cumsum(jnp.sum(q, axis=-1), axis=-1)
        s2 = jnp.cumsum(jnp.sum(q * q, axis=-1), axis=-1)
        cnt = C_HID * (jnp.arange(T, dtype=jnp.float32) + 1.0)
        mean = s1 / cnt
        var = jnp.maximum(s2 / cnt - mean * mean, 0.0)
        std = jnp.sqrt(var + EPS)
        return (q - mean[..., None]) / std[..., None] * gain + bias

    def shift(q, s):
        if s == 0:
            return q
        return jnp.pad(q, ((0, 0), (s, 0), (0, 0)))[:, :T, :]

    def branch(h, a, g, b, wss, wd):
        q = jnp.where(h > 0, h, a * h)
        n = cln(q, g, b)
        sh = sum(wss[j] * shift(n, K - 1 - j) for j in range(K))
        y = jnp.zeros_like(sh)
        for tap in range(5):
            y = y + dot(shift(sh, (4 - tap) * dilation), wd[tap])
        return y

    h = dot(x_btc, p['w_in_t'])
    yl = branch(h, p['alpha_l'], p['gain_l'], p['bias_l'],
                p['wss_l'], p['wd_l'])
    yr = jax.nn.sigmoid(branch(h, p['alpha_r'], p['gain_r'], p['bias_r'],
                               p['wss_r'], p['wd_r']))
    z = yl * yr
    q = jnp.where(z > 0, z, p['alpha_o'] * z)
    n = cln(q, p['gain_o'], p['bias_o'])
    return dot(n, p['w_out_t']) + x_btc


def tcm_list_reference(x_btc, layer_params):
    for i, p in enumerate(layer_params):
        x_btc = glu_reference(x_btc, p, 2 ** i)
    return x_btc


if __name__ == "__main__":
    key = jax.random.PRNGKey(0)
    kp, kx = jax.random.split(key)

    X = 3            # Tcm_list depth -> dilations 1, 2, 4
    B, T = 2, 32

    params = init_params(kp, X)
    # kernel layout (B, T, 256) == PyTorch (B, 256, T) transposed.
    x = jax.random.normal(kx, (B, T, C_IN), jnp.float32)

    out = jax.block_until_ready(tcm_list_pallas(x, params))
    ref = jax.block_until_ready(tcm_list_reference(x, params))

    assert out.shape == (B, T, C_IN)
    err = float(jnp.max(jnp.abs(out - ref)))
    tol = 1e-3 * max(1.0, float(jnp.max(jnp.abs(ref))))
    if err > tol:
        raise AssertionError(
            f"kernel/reference mismatch: max abs err = {err} > tol = {tol}")
    print("KERNEL_OK")
</pallas_src>

<mosaic_0001>
module attributes {stable_mosaic.version = 11 : i64} {
  func.func @_glu_kernel(%arg0: i32, %arg1: memref<1x32x256xf32, #tpu.memory_space<vmem>>, %arg2: memref<256x64xf32, #tpu.memory_space<vmem>>, %arg3: memref<1x64xf32, #tpu.memory_space<vmem>>, %arg4: memref<1x64xf32, #tpu.memory_space<vmem>>, %arg5: memref<1x64xf32, #tpu.memory_space<vmem>>, %arg6: memref<1x64xf32, #tpu.memory_space<vmem>>, %arg7: memref<320x64xf32, #tpu.memory_space<vmem>>, %arg8: memref<1x64xf32, #tpu.memory_space<vmem>>, %arg9: memref<1x64xf32, #tpu.memory_space<vmem>>, %arg10: memref<1x64xf32, #tpu.memory_space<vmem>>, %arg11: memref<1x64xf32, #tpu.memory_space<vmem>>, %arg12: memref<320x64xf32, #tpu.memory_space<vmem>>, %arg13: memref<1x64xf32, #tpu.memory_space<vmem>>, %arg14: memref<1x64xf32, #tpu.memory_space<vmem>>, %arg15: memref<1x64xf32, #tpu.memory_space<vmem>>, %arg16: memref<64x256xf32, #tpu.memory_space<vmem>>, %arg17: memref<1x32x256xf32, #tpu.memory_space<vmem>>) attributes {dimension_semantics = [#tpu.dimension_semantics<parallel>], iteration_bounds = array<i64: 2>, scalar_prefetch = 0 : i64, scratch_operands = 0 : i64, tpu.core_type = #tpu.core_type<tc>, window_params = [{transform_indices = @transform_0, window_bounds = array<i64: 1, 32, 256>}, {pipeline_mode = #tpu.pipeline_mode<synchronous>, transform_indices = @transform_1, window_bounds = array<i64: 256, 64>}, {pipeline_mode = #tpu.pipeline_mode<synchronous>, transform_indices = @transform_2, window_bounds = array<i64: 1, 64>}, {pipeline_mode = #tpu.pipeline_mode<synchronous>, transform_indices = @transform_3, window_bounds = array<i64: 1, 64>}, {pipeline_mode = #tpu.pipeline_mode<synchronous>, transform_indices = @transform_4, window_bounds = array<i64: 1, 64>}, {pipeline_mode = #tpu.pipeline_mode<synchronous>, transform_indices = @transform_5, window_bounds = array<i64: 1, 64>}, {pipeline_mode = #tpu.pipeline_mode<synchronous>, transform_indices = @transform_6, window_bounds = array<i64: 320, 64>}, {pipeline_mode = #tpu.pipeline_mode<synchronous>, transform_indices = @transform_7, window_bounds = array<i64: 1, 64>}, {pipeline_mode = #tpu.pipeline_mode<synchronous>, transform_indices = @transform_8, window_bounds = array<i64: 1, 64>}, {pipeline_mode = #tpu.pipeline_mode<synchronous>, transform_indices = @transform_9, window_bounds = array<i64: 1, 64>}, {pipeline_mode = #tpu.pipeline_mode<synchronous>, transform_indices = @transform_10, window_bounds = array<i64: 1, 64>}, {pipeline_mode = #tpu.pipeline_mode<synchronous>, transform_indices = @transform_11, window_bounds = array<i64: 320, 64>}, {pipeline_mode = #tpu.pipeline_mode<synchronous>, transform_indices = @transform_12, window_bounds = array<i64: 1, 64>}, {pipeline_mode = #tpu.pipeline_mode<synchronous>, transform_indices = @transform_13, window_bounds = array<i64: 1, 64>}, {pipeline_mode = #tpu.pipeline_mode<synchronous>, transform_indices = @transform_14, window_bounds = array<i64: 1, 64>}, {pipeline_mode = #tpu.pipeline_mode<synchronous>, transform_indices = @transform_15, window_bounds = array<i64: 64, 256>}, {transform_indices = @transform_16, window_bounds = array<i64: 1, 32, 256>}]} {
    %0 = tpu.iota {dimensions = array<i32: 0>} : vector<32x64xi32>
    %1 = tpu.iota {dimensions = array<i32: 0>} : vector<32x1xi32>
    %2 = arith.sitofp %1 : vector<32x1xi32> to vector<32x1xf32>
    %cst = arith.constant 1.000000e+00 : f32
    %3 = vector.broadcast %cst : f32 to vector<32x1xf32>
    %4 = arith.addf %2, %3 : vector<32x1xf32>
    %cst_0 = arith.constant 6.400000e+01 : f32
    %5 = vector.broadcast %cst_0 : f32 to vector<32x1xf32>
    %6 = arith.mulf %4, %5 : vector<32x1xf32>
    %cst_1 = arith.constant 1.000000e+00 : f32
    %7 = vector.broadcast %cst_1 : f32 to vector<32x1xf32>
    %8 = arith.divf %7, %6 : vector<32x1xf32>
    %c0 = arith.constant 0 : index
    %c0_2 = arith.constant 0 : index
    %c0_3 = arith.constant 0 : index
    %9 = vector.load %arg1[%c0, %c0_2, %c0_3] : memref<1x32x256xf32, #tpu.memory_space<vmem>>, vector<1x32x256xf32>
    %10 = vector.shape_cast %9 : vector<1x32x256xf32> to vector<32x256xf32>
    %c0_4 = arith.constant 0 : index
    %c0_5 = arith.constant 0 : index
    %11 = vector.load %arg2[%c0_4, %c0_5] : memref<256x64xf32, #tpu.memory_space<vmem>>, vector<256x64xf32>
    %cst_6 = arith.constant dense<0.000000e+00> : vector<32x64xf32>
    %12 = tpu.matmul %10, %11, %cst_6 {dimension_numbers = #tpu.dot_dimension_numbers<[1], [0], [0], [1], [0, 0, 1, 1], [], []>, precision = #tpu.contract_precision<fp32>} : vector<32x256xf32>, vector<256x64xf32>, vector<32x64xf32> -> vector<32x64xf32>
    %c0_7 = arith.constant 0 : index
    %c0_8 = arith.constant 0 : index
    %13 = vector.load %arg3[%c0_7, %c0_8] : memref<1x64xf32, #tpu.memory_space<vmem>>, vector<1x64xf32>
    %c0_9 = arith.constant 0 : index
    %c0_10 = arith.constant 0 : index
    %14 = vector.load %arg4[%c0_9, %c0_10] : memref<1x64xf32, #tpu.memory_space<vmem>>, vector<1x64xf32>
    %c0_11 = arith.constant 0 : index
    %c0_12 = arith.constant 0 : index
    %15 = vector.load %arg5[%c0_11, %c0_12] : memref<1x64xf32, #tpu.memory_space<vmem>>, vector<1x64xf32>
    %cst_13 = arith.constant 0.000000e+00 : f32
    %16 = vector.broadcast %cst_13 : f32 to vector<32x64xf32>
    %17 = arith.cmpf ogt, %12, %16 : vector<32x64xf32>
    %18 = vector.broadcast %13 : vector<1x64xf32> to vector<32x64xf32>
    %19 = arith.mulf %18, %12 : vector<32x64xf32>
    %20 = arith.select %17, %12, %19 : vector<32x64xi1>, vector<32x64xf32>
    %cst_14 = arith.constant dense<0.000000e+00> : vector<32xf32>
    %21 = vector.multi_reduction <add>, %20, %cst_14 [1] : vector<32x64xf32> to vector<32xf32>
    %22 = vector.shape_cast %21 : vector<32xf32> to vector<32x1xf32>
    %23 = arith.mulf %20, %20 : vector<32x64xf32>
    %cst_15 = arith.constant dense<0.000000e+00> : vector<32xf32>
    %24 = vector.multi_reduction <add>, %23, %cst_15 [1] : vector<32x64xf32> to vector<32xf32>
    %25 = vector.shape_cast %24 : vector<32xf32> to vector<32x1xf32>
    %c1_i32 = arith.constant 1 : i32
    %26 = tpu.dynamic_rotate %22 by %c1_i32 dim 0 : vector<32x1xf32>, i32 -> vector<32x1xf32>
    %c1_i32_16 = arith.constant 1 : i32
    %27 = vector.broadcast %c1_i32_16 : i32 to vector<32x1xi32>
    %28 = arith.cmpi sge, %1, %27 : vector<32x1xi32>
    %cst_17 = arith.constant 0.000000e+00 : f32
    %29 = vector.broadcast %cst_17 : f32 to vector<32x1xf32>
    %30 = arith.select %28, %26, %29 : vector<32x1xi1>, vector<32x1xf32>
    %31 = arith.addf %22, %30 : vector<32x1xf32>
    %c2_i32 = arith.constant 2 : i32
    %32 = tpu.dynamic_rotate %31 by %c2_i32 dim 0 : vector<32x1xf32>, i32 -> vector<32x1xf32>
    %c2_i32_18 = arith.constant 2 : i32
    %33 = vector.broadcast %c2_i32_18 : i32 to vector<32x1xi32>
    %34 = arith.cmpi sge, %1, %33 : vector<32x1xi32>
    %cst_19 = arith.constant 0.000000e+00 : f32
    %35 = vector.broadcast %cst_19 : f32 to vector<32x1xf32>
    %36 = arith.select %34, %32, %35 : vector<32x1xi1>, vector<32x1xf32>
    %37 = arith.addf %31, %36 : vector<32x1xf32>
    %c4_i32 = arith.constant 4 : i32
    %38 = tpu.dynamic_rotate %37 by %c4_i32 dim 0 : vector<32x1xf32>, i32 -> vector<32x1xf32>
    %c4_i32_20 = arith.constant 4 : i32
    %39 = vector.broadcast %c4_i32_20 : i32 to vector<32x1xi32>
    %40 = arith.cmpi sge, %1, %39 : vector<32x1xi32>
    %cst_21 = arith.constant 0.000000e+00 : f32
    %41 = vector.broadcast %cst_21 : f32 to vector<32x1xf32>
    %42 = arith.select %40, %38, %41 : vector<32x1xi1>, vector<32x1xf32>
    %43 = arith.addf %37, %42 : vector<32x1xf32>
    %c8_i32 = arith.constant 8 : i32
    %44 = tpu.dynamic_rotate %43 by %c8_i32 dim 0 : vector<32x1xf32>, i32 -> vector<32x1xf32>
    %c8_i32_22 = arith.constant 8 : i32
    %45 = vector.broadcast %c8_i32_22 : i32 to vector<32x1xi32>
    %46 = arith.cmpi sge, %1, %45 : vector<32x1xi32>
    %cst_23 = arith.constant 0.000000e+00 : f32
    %47 = vector.broadcast %cst_23 : f32 to vector<32x1xf32>
    %48 = arith.select %46, %44, %47 : vector<32x1xi1>, vector<32x1xf32>
    %49 = arith.addf %43, %48 : vector<32x1xf32>
    %c16_i32 = arith.constant 16 : i32
    %50 = tpu.dynamic_rotate %49 by %c16_i32 dim 0 : vector<32x1xf32>, i32 -> vector<32x1xf32>
    %c16_i32_24 = arith.constant 16 : i32
    %51 = vector.broadcast %c16_i32_24 : i32 to vector<32x1xi32>
    %52 = arith.cmpi sge, %1, %51 : vector<32x1xi32>
    %cst_25 = arith.constant 0.000000e+00 : f32
    %53 = vector.broadcast %cst_25 : f32 to vector<32x1xf32>
    %54 = arith.select %52, %50, %53 : vector<32x1xi1>, vector<32x1xf32>
    %55 = arith.addf %49, %54 : vector<32x1xf32>
    %c1_i32_26 = arith.constant 1 : i32
    %56 = tpu.dynamic_rotate %25 by %c1_i32_26 dim 0 : vector<32x1xf32>, i32 -> vector<32x1xf32>
    %c1_i32_27 = arith.constant 1 : i32
    %57 = vector.broadcast %c1_i32_27 : i32 to vector<32x1xi32>
    %58 = arith.cmpi sge, %1, %57 : vector<32x1xi32>
    %cst_28 = arith.constant 0.000000e+00 : f32
    %59 = vector.broadcast %cst_28 : f32 to vector<32x1xf32>
    %60 = arith.select %58, %56, %59 : vector<32x1xi1>, vector<32x1xf32>
    %61 = arith.addf %25, %60 : vector<32x1xf32>
    %c2_i32_29 = arith.constant 2 : i32
    %62 = tpu.dynamic_rotate %61 by %c2_i32_29 dim 0 : vector<32x1xf32>, i32 -> vector<32x1xf32>
    %c2_i32_30 = arith.constant 2 : i32
    %63 = vector.broadcast %c2_i32_30 : i32 to vector<32x1xi32>
    %64 = arith.cmpi sge, %1, %63 : vector<32x1xi32>
    %cst_31 = arith.constant 0.000000e+00 : f32
    %65 = vector.broadcast %cst_31 : f32 to vector<32x1xf32>
    %66 = arith.select %64, %62, %65 : vector<32x1xi1>, vector<32x1xf32>
    %67 = arith.addf %61, %66 : vector<32x1xf32>
    %c4_i32_32 = arith.constant 4 : i32
    %68 = tpu.dynamic_rotate %67 by %c4_i32_32 dim 0 : vector<32x1xf32>, i32 -> vector<32x1xf32>
    %c4_i32_33 = arith.constant 4 : i32
    %69 = vector.broadcast %c4_i32_33 : i32 to vector<32x1xi32>
    %70 = arith.cmpi sge, %1, %69 : vector<32x1xi32>
    %cst_34 = arith.constant 0.000000e+00 : f32
    %71 = vector.broadcast %cst_34 : f32 to vector<32x1xf32>
    %72 = arith.select %70, %68, %71 : vector<32x1xi1>, vector<32x1xf32>
    %73 = arith.addf %67, %72 : vector<32x1xf32>
    %c8_i32_35 = arith.constant 8 : i32
    %74 = tpu.dynamic_rotate %73 by %c8_i32_35 dim 0 : vector<32x1xf32>, i32 -> vector<32x1xf32>
    %c8_i32_36 = arith.constant 8 : i32
    %75 = vector.broadcast %c8_i32_36 : i32 to vector<32x1xi32>
    %76 = arith.cmpi sge, %1, %75 : vector<32x1xi32>
    %cst_37 = arith.constant 0.000000e+00 : f32
    %77 = vector.broadcast %cst_37 : f32 to vector<32x1xf32>
    %78 = arith.select %76, %74, %77 : vector<32x1xi1>, vector<32x1xf32>
    %79 = arith.addf %73, %78 : vector<32x1xf32>
    %c16_i32_38 = arith.constant 16 : i32
    %80 = tpu.dynamic_rotate %79 by %c16_i32_38 dim 0 : vector<32x1xf32>, i32 -> vector<32x1xf32>
    %c16_i32_39 = arith.constant 16 : i32
    %81 = vector.broadcast %c16_i32_39 : i32 to vector<32x1xi32>
    %82 = arith.cmpi sge, %1, %81 : vector<32x1xi32>
    %cst_40 = arith.constant 0.000000e+00 : f32
    %83 = vector.broadcast %cst_40 : f32 to vector<32x1xf32>
    %84 = arith.select %82, %80, %83 : vector<32x1xi1>, vector<32x1xf32>
    %85 = arith.addf %79, %84 : vector<32x1xf32>
    %86 = arith.mulf %55, %8 : vector<32x1xf32>
    %87 = arith.mulf %85, %8 : vector<32x1xf32>
    %88 = arith.mulf %86, %86 : vector<32x1xf32>
    %89 = arith.subf %87, %88 : vector<32x1xf32>
    %cst_41 = arith.constant 0.000000e+00 : f32
    %90 = vector.broadcast %cst_41 : f32 to vector<32x1xf32>
    %91 = arith.maximumf %89, %90 : vector<32x1xf32>
    %cst_42 = arith.constant 9.99999974E-6 : f32
    %92 = vector.broadcast %cst_42 : f32 to vector<32x1xf32>
    %93 = arith.addf %91, %92 : vector<32x1xf32>
    %94 = math.sqrt %93 : vector<32x1xf32>
    %95 = vector.broadcast %86 : vector<32x1xf32> to vector<32x64xf32>
    %96 = arith.subf %20, %95 : vector<32x64xf32>
    %97 = vector.broadcast %94 : vector<32x1xf32> to vector<32x64xf32>
    %98 = arith.divf %96, %97 : vector<32x64xf32>
    %99 = vector.broadcast %14 : vector<1x64xf32> to vector<32x64xf32>
    %100 = arith.mulf %98, %99 : vector<32x64xf32>
    %101 = vector.broadcast %15 : vector<1x64xf32> to vector<32x64xf32>
    %102 = arith.addf %100, %101 : vector<32x64xf32>
    %c0_43 = arith.constant 0 : index
    %c0_44 = arith.constant 0 : index
    %103 = vector.load %arg6[%c0_43, %c0_44] : memref<1x64xf32, #tpu.memory_space<vmem>>, vector<1x64xf32>
    %104 = vector.broadcast %103 : vector<1x64xf32> to vector<32x64xf32>
    %105 = arith.mulf %104, %102 : vector<32x64xf32>
    %c4_i32_45 = arith.constant 4 : i32
    %106 = tpu.dynamic_rotate %105 by %c4_i32_45 dim 0 : vector<32x64xf32>, i32 -> vector<32x64xf32>
    %c4_i32_46 = arith.constant 4 : i32
    %107 = vector.broadcast %c4_i32_46 : i32 to vector<32x64xi32>
    %108 = arith.cmpi sge, %0, %107 : vector<32x64xi32>
    %cst_47 = arith.constant 0.000000e+00 : f32
    %109 = vector.broadcast %cst_47 : f32 to vector<32x64xf32>
    %110 = arith.select %108, %106, %109 : vector<32x64xi1>, vector<32x64xf32>
    %c3_i32 = arith.constant 3 : i32
    %111 = tpu.dynamic_rotate %105 by %c3_i32 dim 0 : vector<32x64xf32>, i32 -> vector<32x64xf32>
    %c3_i32_48 = arith.constant 3 : i32
    %112 = vector.broadcast %c3_i32_48 : i32 to vector<32x64xi32>
    %113 = arith.cmpi sge, %0, %112 : vector<32x64xi32>
    %cst_49 = arith.constant 0.000000e+00 : f32
    %114 = vector.broadcast %cst_49 : f32 to vector<32x64xf32>
    %115 = arith.select %113, %111, %114 : vector<32x64xi1>, vector<32x64xf32>
    %c2_i32_50 = arith.constant 2 : i32
    %116 = tpu.dynamic_rotate %105 by %c2_i32_50 dim 0 : vector<32x64xf32>, i32 -> vector<32x64xf32>
    %c2_i32_51 = arith.constant 2 : i32
    %117 = vector.broadcast %c2_i32_51 : i32 to vector<32x64xi32>
    %118 = arith.cmpi sge, %0, %117 : vector<32x64xi32>
    %cst_52 = arith.constant 0.000000e+00 : f32
    %119 = vector.broadcast %cst_52 : f32 to vector<32x64xf32>
    %120 = arith.select %118, %116, %119 : vector<32x64xi1>, vector<32x64xf32>
    %c1_i32_53 = arith.constant 1 : i32
    %121 = tpu.dynamic_rotate %105 by %c1_i32_53 dim 0 : vector<32x64xf32>, i32 -> vector<32x64xf32>
    %c1_i32_54 = arith.constant 1 : i32
    %122 = vector.broadcast %c1_i32_54 : i32 to vector<32x64xi32>
    %123 = arith.cmpi sge, %0, %122 : vector<32x64xi32>
    %cst_55 = arith.constant 0.000000e+00 : f32
    %124 = vector.broadcast %cst_55 : f32 to vector<32x64xf32>
    %125 = arith.select %123, %121, %124 : vector<32x64xi1>, vector<32x64xf32>
    %126 = tpu.concatenate %110, %115, %120, %125, %105 in 1 : vector<32x64xf32>, vector<32x64xf32>, vector<32x64xf32>, vector<32x64xf32>, vector<32x64xf32> -> vector<32x320xf32>
    %c0_56 = arith.constant 0 : index
    %c0_57 = arith.constant 0 : index
    %127 = vector.load %arg7[%c0_56, %c0_57] : memref<320x64xf32, #tpu.memory_space<vmem>>, vector<320x64xf32>
    %cst_58 = arith.constant dense<0.000000e+00> : vector<32x64xf32>
    %128 = tpu.matmul %126, %127, %cst_58 {dimension_numbers = #tpu.dot_dimension_numbers<[1], [0], [0], [1], [0, 0, 1, 1], [], []>, precision = #tpu.contract_precision<fp32>} : vector<32x320xf32>, vector<320x64xf32>, vector<32x64xf32> -> vector<32x64xf32>
    %c0_59 = arith.constant 0 : index
    %c0_60 = arith.constant 0 : index
    %129 = vector.load %arg8[%c0_59, %c0_60] : memref<1x64xf32, #tpu.memory_space<vmem>>, vector<1x64xf32>
    %c0_61 = arith.constant 0 : index
    %c0_62 = arith.constant 0 : index
    %130 = vector.load %arg9[%c0_61, %c0_62] : memref<1x64xf32, #tpu.memory_space<vmem>>, vector<1x64xf32>
    %c0_63 = arith.constant 0 : index
    %c0_64 = arith.constant 0 : index
    %131 = vector.load %arg10[%c0_63, %c0_64] : memref<1x64xf32, #tpu.memory_space<vmem>>, vector<1x64xf32>
    %cst_65 = arith.constant 0.000000e+00 : f32
    %132 = vector.broadcast %cst_65 : f32 to vector<32x64xf32>
    %133 = arith.cmpf ogt, %12, %132 : vector<32x64xf32>
    %134 = vector.broadcast %129 : vector<1x64xf32> to vector<32x64xf32>
    %135 = arith.mulf %134, %12 : vector<32x64xf32>
    %136 = arith.select %133, %12, %135 : vector<32x64xi1>, vector<32x64xf32>
    %cst_66 = arith.constant dense<0.000000e+00> : vector<32xf32>
    %137 = vector.multi_reduction <add>, %136, %cst_66 [1] : vector<32x64xf32> to vector<32xf32>
    %138 = vector.shape_cast %137 : vector<32xf32> to vector<32x1xf32>
    %139 = arith.mulf %136, %136 : vector<32x64xf32>
    %cst_67 = arith.constant dense<0.000000e+00> : vector<32xf32>
    %140 = vector.multi_reduction <add>, %139, %cst_67 [1] : vector<32x64xf32> to vector<32xf32>
    %141 = vector.shape_cast %140 : vector<32xf32> to vector<32x1xf32>
    %c1_i32_68 = arith.constant 1 : i32
    %142 = tpu.dynamic_rotate %138 by %c1_i32_68 dim 0 : vector<32x1xf32>, i32 -> vector<32x1xf32>
    %c1_i32_69 = arith.constant 1 : i32
    %143 = vector.broadcast %c1_i32_69 : i32 to vector<32x1xi32>
    %144 = arith.cmpi sge, %1, %143 : vector<32x1xi32>
    %cst_70 = arith.constant 0.000000e+00 : f32
    %145 = vector.broadcast %cst_70 : f32 to vector<32x1xf32>
    %146 = arith.select %144, %142, %145 : vector<32x1xi1>, vector<32x1xf32>
    %147 = arith.addf %138, %146 : vector<32x1xf32>
    %c2_i32_71 = arith.constant 2 : i32
    %148 = tpu.dynamic_rotate %147 by %c2_i32_71 dim 0 : vector<32x1xf32>, i32 -> vector<32x1xf32>
    %c2_i32_72 = arith.constant 2 : i32
    %149 = vector.broadcast %c2_i32_72 : i32 to vector<32x1xi32>
    %150 = arith.cmpi sge, %1, %149 : vector<32x1xi32>
    %cst_73 = arith.constant 0.000000e+00 : f32
    %151 = vector.broadcast %cst_73 : f32 to vector<32x1xf32>
    %152 = arith.select %150, %148, %151 : vector<32x1xi1>, vector<32x1xf32>
    %153 = arith.addf %147, %152 : vector<32x1xf32>
    %c4_i32_74 = arith.constant 4 : i32
    %154 = tpu.dynamic_rotate %153 by %c4_i32_74 dim 0 : vector<32x1xf32>, i32 -> vector<32x1xf32>
    %c4_i32_75 = arith.constant 4 : i32
    %155 = vector.broadcast %c4_i32_75 : i32 to vector<32x1xi32>
    %156 = arith.cmpi sge, %1, %155 : vector<32x1xi32>
    %cst_76 = arith.constant 0.000000e+00 : f32
    %157 = vector.broadcast %cst_76 : f32 to vector<32x1xf32>
    %158 = arith.select %156, %154, %157 : vector<32x1xi1>, vector<32x1xf32>
    %159 = arith.addf %153, %158 : vector<32x1xf32>
    %c8_i32_77 = arith.constant 8 : i32
    %160 = tpu.dynamic_rotate %159 by %c8_i32_77 dim 0 : vector<32x1xf32>, i32 -> vector<32x1xf32>
    %c8_i32_78 = arith.constant 8 : i32
    %161 = vector.broadcast %c8_i32_78 : i32 to vector<32x1xi32>
    %162 = arith.cmpi sge, %1, %161 : vector<32x1xi32>
    %cst_79 = arith.constant 0.000000e+00 : f32
    %163 = vector.broadcast %cst_79 : f32 to vector<32x1xf32>
    %164 = arith.select %162, %160, %163 : vector<32x1xi1>, vector<32x1xf32>
    %165 = arith.addf %159, %164 : vector<32x1xf32>
    %c16_i32_80 = arith.constant 16 : i32
    %166 = tpu.dynamic_rotate %165 by %c16_i32_80 dim 0 : vector<32x1xf32>, i32 -> vector<32x1xf32>
    %c16_i32_81 = arith.constant 16 : i32
    %167 = vector.broadcast %c16_i32_81 : i32 to vector<32x1xi32>
    %168 = arith.cmpi sge, %1, %167 : vector<32x1xi32>
    %cst_82 = arith.constant 0.000000e+00 : f32
    %169 = vector.broadcast %cst_82 : f32 to vector<32x1xf32>
    %170 = arith.select %168, %166, %169 : vector<32x1xi1>, vector<32x1xf32>
    %171 = arith.addf %165, %170 : vector<32x1xf32>
    %c1_i32_83 = arith.constant 1 : i32
    %172 = tpu.dynamic_rotate %141 by %c1_i32_83 dim 0 : vector<32x1xf32>, i32 -> vector<32x1xf32>
    %c1_i32_84 = arith.constant 1 : i32
    %173 = vector.broadcast %c1_i32_84 : i32 to vector<32x1xi32>
    %174 = arith.cmpi sge, %1, %173 : vector<32x1xi32>
    %cst_85 = arith.constant 0.000000e+00 : f32
    %175 = vector.broadcast %cst_85 : f32 to vector<32x1xf32>
    %176 = arith.select %174, %172, %175 : vector<32x1xi1>, vector<32x1xf32>
    %177 = arith.addf %141, %176 : vector<32x1xf32>
    %c2_i32_86 = arith.constant 2 : i32
    %178 = tpu.dynamic_rotate %177 by %c2_i32_86 dim 0 : vector<32x1xf32>, i32 -> vector<32x1xf32>
    %c2_i32_87 = arith.constant 2 : i32
    %179 = vector.broadcast %c2_i32_87 : i32 to vector<32x1xi32>
    %180 = arith.cmpi sge, %1, %179 : vector<32x1xi32>
    %cst_88 = arith.constant 0.000000e+00 : f32
    %181 = vector.broadcast %cst_88 : f32 to vector<32x1xf32>
    %182 = arith.select %180, %178, %181 : vector<32x1xi1>, vector<32x1xf32>
    %183 = arith.addf %177, %182 : vector<32x1xf32>
    %c4_i32_89 = arith.constant 4 : i32
    %184 = tpu.dynamic_rotate %183 by %c4_i32_89 dim 0 : vector<32x1xf32>, i32 -> vector<32x1xf32>
    %c4_i32_90 = arith.constant 4 : i32
    %185 = vector.broadcast %c4_i32_90 : i32 to vector<32x1xi32>
    %186 = arith.cmpi sge, %1, %185 : vector<32x1xi32>
    %cst_91 = arith.constant 0.000000e+00 : f32
    %187 = vector.broadcast %cst_91 : f32 to vector<32x1xf32>
    %188 = arith.select %186, %184, %187 : vector<32x1xi1>, vector<32x1xf32>
    %189 = arith.addf %183, %188 : vector<32x1xf32>
    %c8_i32_92 = arith.constant 8 : i32
    %190 = tpu.dynamic_rotate %189 by %c8_i32_92 dim 0 : vector<32x1xf32>, i32 -> vector<32x1xf32>
    %c8_i32_93 = arith.constant 8 : i32
    %191 = vector.broadcast %c8_i32_93 : i32 to vector<32x1xi32>
    %192 = arith.cmpi sge, %1, %191 : vector<32x1xi32>
    %cst_94 = arith.constant 0.000000e+00 : f32
    %193 = vector.broadcast %cst_94 : f32 to vector<32x1xf32>
    %194 = arith.select %192, %190, %193 : vector<32x1xi1>, vector<32x1xf32>
    %195 = arith.addf %189, %194 : vector<32x1xf32>
    %c16_i32_95 = arith.constant 16 : i32
    %196 = tpu.dynamic_rotate %195 by %c16_i32_95 dim 0 : vector<32x1xf32>, i32 -> vector<32x1xf32>
    %c16_i32_96 = arith.constant 16 : i32
    %197 = vector.broadcast %c16_i32_96 : i32 to vector<32x1xi32>
    %198 = arith.cmpi sge, %1, %197 : vector<32x1xi32>
    %cst_97 = arith.constant 0.000000e+00 : f32
    %199 = vector.broadcast %cst_97 : f32 to vector<32x1xf32>
    %200 = arith.select %198, %196, %199 : vector<32x1xi1>, vector<32x1xf32>
    %201 = arith.addf %195, %200 : vector<32x1xf32>
    %202 = arith.mulf %171, %8 : vector<32x1xf32>
    %203 = arith.mulf %201, %8 : vector<32x1xf32>
    %204 = arith.mulf %202, %202 : vector<32x1xf32>
    %205 = arith.subf %203, %204 : vector<32x1xf32>
    %cst_98 = arith.constant 0.000000e+00 : f32
    %206 = vector.broadcast %cst_98 : f32 to vector<32x1xf32>
    %207 = arith.maximumf %205, %206 : vector<32x1xf32>
    %cst_99 = arith.constant 9.99999974E-6 : f32
    %208 = vector.broadcast %cst_99 : f32 to vector<32x1xf32>
    %209 = arith.addf %207, %208 : vector<32x1xf32>
    %210 = math.sqrt %209 : vector<32x1xf32>
    %211 = vector.broadcast %202 : vector<32x1xf32> to vector<32x64xf32>
    %212 = arith.subf %136, %211 : vector<32x64xf32>
    %213 = vector.broadcast %210 : vector<32x1xf32> to vector<32x64xf32>
    %214 = arith.divf %212, %213 : vector<32x64xf32>
    %215 = vector.broadcast %130 : vector<1x64xf32> to vector<32x64xf32>
    %216 = arith.mulf %214, %215 : vector<32x64xf32>
    %217 = vector.broadcast %131 : vector<1x64xf32> to vector<32x64xf32>
    %218 = arith.addf %216, %217 : vector<32x64xf32>
    %c0_100 = arith.constant 0 : index
    %c0_101 = arith.constant 0 : index
    %219 = vector.load %arg11[%c0_100, %c0_101] : memref<1x64xf32, #tpu.memory_space<vmem>>, vector<1x64xf32>
    %220 = vector.broadcast %219 : vector<1x64xf32> to vector<32x64xf32>
    %221 = arith.mulf %220, %218 : vector<32x64xf32>
    %c4_i32_102 = arith.constant 4 : i32
    %222 = tpu.dynamic_rotate %221 by %c4_i32_102 dim 0 : vector<32x64xf32>, i32 -> vector<32x64xf32>
    %c4_i32_103 = arith.constant 4 : i32
    %223 = vector.broadcast %c4_i32_103 : i32 to vector<32x64xi32>
    %224 = arith.cmpi sge, %0, %223 : vector<32x64xi32>
    %cst_104 = arith.constant 0.000000e+00 : f32
    %225 = vector.broadcast %cst_104 : f32 to vector<32x64xf32>
    %226 = arith.select %224, %222, %225 : vector<32x64xi1>, vector<32x64xf32>
    %c3_i32_105 = arith.constant 3 : i32
    %227 = tpu.dynamic_rotate %221 by %c3_i32_105 dim 0 : vector<32x64xf32>, i32 -> vector<32x64xf32>
    %c3_i32_106 = arith.constant 3 : i32
    %228 = vector.broadcast %c3_i32_106 : i32 to vector<32x64xi32>
    %229 = arith.cmpi sge, %0, %228 : vector<32x64xi32>
    %cst_107 = arith.constant 0.000000e+00 : f32
    %230 = vector.broadcast %cst_107 : f32 to vector<32x64xf32>
    %231 = arith.select %229, %227, %230 : vector<32x64xi1>, vector<32x64xf32>
    %c2_i32_108 = arith.constant 2 : i32
    %232 = tpu.dynamic_rotate %221 by %c2_i32_108 dim 0 : vector<32x64xf32>, i32 -> vector<32x64xf32>
    %c2_i32_109 = arith.constant 2 : i32
    %233 = vector.broadcast %c2_i32_109 : i32 to vector<32x64xi32>
    %234 = arith.cmpi sge, %0, %233 : vector<32x64xi32>
    %cst_110 = arith.constant 0.000000e+00 : f32
    %235 = vector.broadcast %cst_110 : f32 to vector<32x64xf32>
    %236 = arith.select %234, %232, %235 : vector<32x64xi1>, vector<32x64xf32>
    %c1_i32_111 = arith.constant 1 : i32
    %237 = tpu.dynamic_rotate %221 by %c1_i32_111 dim 0 : vector<32x64xf32>, i32 -> vector<32x64xf32>
    %c1_i32_112 = arith.constant 1 : i32
    %238 = vector.broadcast %c1_i32_112 : i32 to vector<32x64xi32>
    %239 = arith.cmpi sge, %0, %238 : vector<32x64xi32>
    %cst_113 = arith.constant 0.000000e+00 : f32
    %240 = vector.broadcast %cst_113 : f32 to vector<32x64xf32>
    %241 = arith.select %239, %237, %240 : vector<32x64xi1>, vector<32x64xf32>
    %242 = tpu.concatenate %226, %231, %236, %241, %221 in 1 : vector<32x64xf32>, vector<32x64xf32>, vector<32x64xf32>, vector<32x64xf32>, vector<32x64xf32> -> vector<32x320xf32>
    %c0_114 = arith.constant 0 : index
    %c0_115 = arith.constant 0 : index
    %243 = vector.load %arg12[%c0_114, %c0_115] : memref<320x64xf32, #tpu.memory_space<vmem>>, vector<320x64xf32>
    %cst_116 = arith.constant dense<0.000000e+00> : vector<32x64xf32>
    %244 = tpu.matmul %242, %243, %cst_116 {dimension_numbers = #tpu.dot_dimension_numbers<[1], [0], [0], [1], [0, 0, 1, 1], [], []>, precision = #tpu.contract_precision<fp32>} : vector<32x320xf32>, vector<320x64xf32>, vector<32x64xf32> -> vector<32x64xf32>
    %cst_117 = arith.constant 0.000000e+00 : f32
    %245 = vector.broadcast %cst_117 : f32 to vector<32x64xf32>
    %246 = arith.subf %245, %244 : vector<32x64xf32>
    %247 = math.exp %246 : vector<32x64xf32>
    %cst_118 = arith.constant 1.000000e+00 : f32
    %248 = vector.broadcast %cst_118 : f32 to vector<32x64xf32>
    %249 = arith.addf %248, %247 : vector<32x64xf32>
    %cst_119 = arith.constant 1.000000e+00 : f32
    %250 = vector.broadcast %cst_119 : f32 to vector<32x64xf32>
    %251 = arith.divf %250, %249 : vector<32x64xf32>
    %252 = arith.mulf %128, %251 : vector<32x64xf32>
    %cst_120 = arith.constant 0.000000e+00 : f32
    %253 = vector.broadcast %cst_120 : f32 to vector<32x64xf32>
    %254 = arith.cmpf ogt, %252, %253 : vector<32x64xf32>
    %c0_121 = arith.constant 0 : index
    %c0_122 = arith.constant 0 : index
    %255 = vector.load %arg13[%c0_121, %c0_122] : memref<1x64xf32, #tpu.memory_space<vmem>>, vector<1x64xf32>
    %256 = vector.broadcast %255 : vector<1x64xf32> to vector<32x64xf32>
    %257 = arith.mulf %256, %252 : vector<32x64xf32>
    %258 = arith.select %254, %252, %257 : vector<32x64xi1>, vector<32x64xf32>
    %c0_123 = arith.constant 0 : index
    %c0_124 = arith.constant 0 : index
    %259 = vector.load %arg14[%c0_123, %c0_124] : memref<1x64xf32, #tpu.memory_space<vmem>>, vector<1x64xf32>
    %c0_125 = arith.constant 0 : index
    %c0_126 = arith.constant 0 : index
    %260 = vector.load %arg15[%c0_125, %c0_126] : memref<1x64xf32, #tpu.memory_space<vmem>>, vector<1x64xf32>
    %cst_127 = arith.constant dense<0.000000e+00> : vector<32xf32>
    %261 = vector.multi_reduction <add>, %258, %cst_127 [1] : vector<32x64xf32> to vector<32xf32>
    %262 = vector.shape_cast %261 : vector<32xf32> to vector<32x1xf32>
    %263 = arith.mulf %258, %258 : vector<32x64xf32>
    %cst_128 = arith.constant dense<0.000000e+00> : vector<32xf32>
    %264 = vector.multi_reduction <add>, %263, %cst_128 [1] : vector<32x64xf32> to vector<32xf32>
    %265 = vector.shape_cast %264 : vector<32xf32> to vector<32x1xf32>
    %c1_i32_129 = arith.constant 1 : i32
    %266 = tpu.dynamic_rotate %262 by %c1_i32_129 dim 0 : vector<32x1xf32>, i32 -> vector<32x1xf32>
    %c1_i32_130 = arith.constant 1 : i32
    %267 = vector.broadcast %c1_i32_130 : i32 to vector<32x1xi32>
    %268 = arith.cmpi sge, %1, %267 : vector<32x1xi32>
    %cst_131 = arith.constant 0.000000e+00 : f32
    %269 = vector.broadcast %cst_131 : f32 to vector<32x1xf32>
    %270 = arith.select %268, %266, %269 : vector<32x1xi1>, vector<32x1xf32>
    %271 = arith.addf %262, %270 : vector<32x1xf32>
    %c2_i32_132 = arith.constant 2 : i32
    %272 = tpu.dynamic_rotate %271 by %c2_i32_132 dim 0 : vector<32x1xf32>, i32 -> vector<32x1xf32>
    %c2_i32_133 = arith.constant 2 : i32
    %273 = vector.broadcast %c2_i32_133 : i32 to vector<32x1xi32>
    %274 = arith.cmpi sge, %1, %273 : vector<32x1xi32>
    %cst_134 = arith.constant 0.000000e+00 : f32
    %275 = vector.broadcast %cst_134 : f32 to vector<32x1xf32>
    %276 = arith.select %274, %272, %275 : vector<32x1xi1>, vector<32x1xf32>
    %277 = arith.addf %271, %276 : vector<32x1xf32>
    %c4_i32_135 = arith.constant 4 : i32
    %278 = tpu.dynamic_rotate %277 by %c4_i32_135 dim 0 : vector<32x1xf32>, i32 -> vector<32x1xf32>
    %c4_i32_136 = arith.constant 4 : i32
    %279 = vector.broadcast %c4_i32_136 : i32 to vector<32x1xi32>
    %280 = arith.cmpi sge, %1, %279 : vector<32x1xi32>
    %cst_137 = arith.constant 0.000000e+00 : f32
    %281 = vector.broadcast %cst_137 : f32 to vector<32x1xf32>
    %282 = arith.select %280, %278, %281 : vector<32x1xi1>, vector<32x1xf32>
    %283 = arith.addf %277, %282 : vector<32x1xf32>
    %c8_i32_138 = arith.constant 8 : i32
    %284 = tpu.dynamic_rotate %283 by %c8_i32_138 dim 0 : vector<32x1xf32>, i32 -> vector<32x1xf32>
    %c8_i32_139 = arith.constant 8 : i32
    %285 = vector.broadcast %c8_i32_139 : i32 to vector<32x1xi32>
    %286 = arith.cmpi sge, %1, %285 : vector<32x1xi32>
    %cst_140 = arith.constant 0.000000e+00 : f32
    %287 = vector.broadcast %cst_140 : f32 to vector<32x1xf32>
    %288 = arith.select %286, %284, %287 : vector<32x1xi1>, vector<32x1xf32>
    %289 = arith.addf %283, %288 : vector<32x1xf32>
    %c16_i32_141 = arith.constant 16 : i32
    %290 = tpu.dynamic_rotate %289 by %c16_i32_141 dim 0 : vector<32x1xf32>, i32 -> vector<32x1xf32>
    %c16_i32_142 = arith.constant 16 : i32
    %291 = vector.broadcast %c16_i32_142 : i32 to vector<32x1xi32>
    %292 = arith.cmpi sge, %1, %291 : vector<32x1xi32>
    %cst_143 = arith.constant 0.000000e+00 : f32
    %293 = vector.broadcast %cst_143 : f32 to vector<32x1xf32>
    %294 = arith.select %292, %290, %293 : vector<32x1xi1>, vector<32x1xf32>
    %295 = arith.addf %289, %294 : vector<32x1xf32>
    %c1_i32_144 = arith.constant 1 : i32
    %296 = tpu.dynamic_rotate %265 by %c1_i32_144 dim 0 : vector<32x1xf32>, i32 -> vector<32x1xf32>
    %c1_i32_145 = arith.constant 1 : i32
    %297 = vector.broadcast %c1_i32_145 : i32 to vector<32x1xi32>
    %298 = arith.cmpi sge, %1, %297 : vector<32x1xi32>
    %cst_146 = arith.constant 0.000000e+00 : f32
    %299 = vector.broadcast %cst_146 : f32 to vector<32x1xf32>
    %300 = arith.select %298, %296, %299 : vector<32x1xi1>, vector<32x1xf32>
    %301 = arith.addf %265, %300 : vector<32x1xf32>
    %c2_i32_147 = arith.constant 2 : i32
    %302 = tpu.dynamic_rotate %301 by %c2_i32_147 dim 0 : vector<32x1xf32>, i32 -> vector<32x1xf32>
    %c2_i32_148 = arith.constant 2 : i32
    %303 = vector.broadcast %c2_i32_148 : i32 to vector<32x1xi32>
    %304 = arith.cmpi sge, %1, %303 : vector<32x1xi32>
    %cst_149 = arith.constant 0.000000e+00 : f32
    %305 = vector.broadcast %cst_149 : f32 to vector<32x1xf32>
    %306 = arith.select %304, %302, %305 : vector<32x1xi1>, vector<32x1xf32>
    %307 = arith.addf %301, %306 : vector<32x1xf32>
    %c4_i32_150 = arith.constant 4 : i32
    %308 = tpu.dynamic_rotate %307 by %c4_i32_150 dim 0 : vector<32x1xf32>, i32 -> vector<32x1xf32>
    %c4_i32_151 = arith.constant 4 : i32
    %309 = vector.broadcast %c4_i32_151 : i32 to vector<32x1xi32>
    %310 = arith.cmpi sge, %1, %309 : vector<32x1xi32>
    %cst_152 = arith.constant 0.000000e+00 : f32
    %311 = vector.broadcast %cst_152 : f32 to vector<32x1xf32>
    %312 = arith.select %310, %308, %311 : vector<32x1xi1>, vector<32x1xf32>
    %313 = arith.addf %307, %312 : vector<32x1xf32>
    %c8_i32_153 = arith.constant 8 : i32
    %314 = tpu.dynamic_rotate %313 by %c8_i32_153 dim 0 : vector<32x1xf32>, i32 -> vector<32x1xf32>
    %c8_i32_154 = arith.constant 8 : i32
    %315 = vector.broadcast %c8_i32_154 : i32 to vector<32x1xi32>
    %316 = arith.cmpi sge, %1, %315 : vector<32x1xi32>
    %cst_155 = arith.constant 0.000000e+00 : f32
    %317 = vector.broadcast %cst_155 : f32 to vector<32x1xf32>
    %318 = arith.select %316, %314, %317 : vector<32x1xi1>, vector<32x1xf32>
    %319 = arith.addf %313, %318 : vector<32x1xf32>
    %c16_i32_156 = arith.constant 16 : i32
    %320 = tpu.dynamic_rotate %319 by %c16_i32_156 dim 0 : vector<32x1xf32>, i32 -> vector<32x1xf32>
    %c16_i32_157 = arith.constant 16 : i32
    %321 = vector.broadcast %c16_i32_157 : i32 to vector<32x1xi32>
    %322 = arith.cmpi sge, %1, %321 : vector<32x1xi32>
    %cst_158 = arith.constant 0.000000e+00 : f32
    %323 = vector.broadcast %cst_158 : f32 to vector<32x1xf32>
    %324 = arith.select %322, %320, %323 : vector<32x1xi1>, vector<32x1xf32>
    %325 = arith.addf %319, %324 : vector<32x1xf32>
    %326 = arith.mulf %295, %8 : vector<32x1xf32>
    %327 = arith.mulf %325, %8 : vector<32x1xf32>
    %328 = arith.mulf %326, %326 : vector<32x1xf32>
    %329 = arith.subf %327, %328 : vector<32x1xf32>
    %cst_159 = arith.constant 0.000000e+00 : f32
    %330 = vector.broadcast %cst_159 : f32 to vector<32x1xf32>
    %331 = arith.maximumf %329, %330 : vector<32x1xf32>
    %cst_160 = arith.constant 9.99999974E-6 : f32
    %332 = vector.broadcast %cst_160 : f32 to vector<32x1xf32>
    %333 = arith.addf %331, %332 : vector<32x1xf32>
    %334 = math.sqrt %333 : vector<32x1xf32>
    %335 = vector.broadcast %326 : vector<32x1xf32> to vector<32x64xf32>
    %336 = arith.subf %258, %335 : vector<32x64xf32>
    %337 = vector.broadcast %334 : vector<32x1xf32> to vector<32x64xf32>
    %338 = arith.divf %336, %337 : vector<32x64xf32>
    %339 = vector.broadcast %259 : vector<1x64xf32> to vector<32x64xf32>
    %340 = arith.mulf %338, %339 : vector<32x64xf32>
    %341 = vector.broadcast %260 : vector<1x64xf32> to vector<32x64xf32>
    %342 = arith.addf %340, %341 : vector<32x64xf32>
    %c0_161 = arith.constant 0 : index
    %c0_162 = arith.constant 0 : index
    %343 = vector.load %arg16[%c0_161, %c0_162] : memref<64x256xf32, #tpu.memory_space<vmem>>, vector<64x256xf32>
    %cst_163 = arith.constant dense<0.000000e+00> : vector<32x256xf32>
    %344 = tpu.matmul %342, %343, %cst_163 {dimension_numbers = #tpu.dot_dimension_numbers<[1], [0], [0], [1], [0, 0, 1, 1], [], []>, precision = #tpu.contract_precision<fp32>} : vector<32x64xf32>, vector<64x256xf32>, vector<32x256xf32> -> vector<32x256xf32>
    %345 = arith.addf %344, %10 : vector<32x256xf32>
    %c0_164 = arith.constant 0 : index
    %c0_165 = arith.constant 0 : index
    %c0_166 = arith.constant 0 : index
    %346 = vector.load %arg17[%c0_164, %c0_165, %c0_166] : memref<1x32x256xf32, #tpu.memory_space<vmem>>, vector<1x32x256xf32>
    %347 = vector.shape_cast %346 : vector<1x32x256xf32> to vector<32x256xf32>
    %348 = vector.shape_cast %345 : vector<32x256xf32> to vector<1x32x256xf32>
    tpu.vector_store %arg17[%c0_164, %c0_165, %c0_166], %348 {strides = array<i32>} : memref<1x32x256xf32, #tpu.memory_space<vmem>>, vector<1x32x256xf32>,
    return
  }
  func.func @transform_0(%arg0: i32) -> (i32, i32, i32) {
    %c0_i32 = arith.constant 0 : i32
    %c0_i32_0 = arith.constant 0 : i32
    %c0_i32_1 = arith.constant 0 : i32
    return %arg0, %c0_i32, %c0_i32_0 : i32, i32, i32
  }
  func.func @transform_1(%arg0: i32) -> (i32, i32) {
    %c0_i32 = arith.constant 0 : i32
    %c0_i32_0 = arith.constant 0 : i32
    %c0_i32_1 = arith.constant 0 : i32
    return %c0_i32, %c0_i32_0 : i32, i32
  }
  func.func @transform_2(%arg0: i32) -> (i32, i32) {
    %c0_i32 = arith.constant 0 : i32
    %c0_i32_0 = arith.constant 0 : i32
    %c0_i32_1 = arith.constant 0 : i32
    return %c0_i32, %c0_i32_0 : i32, i32
  }
  func.func @transform_3(%arg0: i32) -> (i32, i32) {
    %c0_i32 = arith.constant 0 : i32
    %c0_i32_0 = arith.constant 0 : i32
    %c0_i32_1 = arith.constant 0 : i32
    return %c0_i32, %c0_i32_0 : i32, i32
  }
  func.func @transform_4(%arg0: i32) -> (i32, i32) {
    %c0_i32 = arith.constant 0 : i32
    %c0_i32_0 = arith.constant 0 : i32
    %c0_i32_1 = arith.constant 0 : i32
    return %c0_i32, %c0_i32_0 : i32, i32
  }
  func.func @transform_5(%arg0: i32) -> (i32, i32) {
    %c0_i32 = arith.constant 0 : i32
    %c0_i32_0 = arith.constant 0 : i32
    %c0_i32_1 = arith.constant 0 : i32
    return %c0_i32, %c0_i32_0 : i32, i32
  }
  func.func @transform_6(%arg0: i32) -> (i32, i32) {
    %c0_i32 = arith.constant 0 : i32
    %c0_i32_0 = arith.constant 0 : i32
    %c0_i32_1 = arith.constant 0 : i32
    return %c0_i32, %c0_i32_0 : i32, i32
  }
  func.func @transform_7(%arg0: i32) -> (i32, i32) {
    %c0_i32 = arith.constant 0 : i32
    %c0_i32_0 = arith.constant 0 : i32
    %c0_i32_1 = arith.constant 0 : i32
    return %c0_i32, %c0_i32_0 : i32, i32
  }
  func.func @transform_8(%arg0: i32) -> (i32, i32) {
    %c0_i32 = arith.constant 0 : i32
    %c0_i32_0 = arith.constant 0 : i32
    %c0_i32_1 = arith.constant 0 : i32
    return %c0_i32, %c0_i32_0 : i32, i32
  }
  func.func @transform_9(%arg0: i32) -> (i32, i32) {
    %c0_i32 = arith.constant 0 : i32
    %c0_i32_0 = arith.constant 0 : i32
    %c0_i32_1 = arith.constant 0 : i32
    return %c0_i32, %c0_i32_0 : i32, i32
  }
  func.func @transform_10(%arg0: i32) -> (i32, i32) {
    %c0_i32 = arith.constant 0 : i32
    %c0_i32_0 = arith.constant 0 : i32
    %c0_i32_1 = arith.constant 0 : i32
    return %c0_i32, %c0_i32_0 : i32, i32
  }
  func.func @transform_11(%arg0: i32) -> (i32, i32) {
    %c0_i32 = arith.constant 0 : i32
    %c0_i32_0 = arith.constant 0 : i32
    %c0_i32_1 = arith.constant 0 : i32
    return %c0_i32, %c0_i32_0 : i32, i32
  }
  func.func @transform_12(%arg0: i32) -> (i32, i32) {
    %c0_i32 = arith.constant 0 : i32
    %c0_i32_0 = arith.constant 0 : i32
    %c0_i32_1 = arith.constant 0 : i32
    return %c0_i32, %c0_i32_0 : i32, i32
  }
  func.func @transform_13(%arg0: i32) -> (i32, i32) {
    %c0_i32 = arith.constant 0 : i32
    %c0_i32_0 = arith.constant 0 : i32
    %c0_i32_1 = arith.constant 0 : i32
    return %c0_i32, %c0_i32_0 : i32, i32
  }
  func.func @transform_14(%arg0: i32) -> (i32, i32) {
    %c0_i32 = arith.constant 0 : i32
    %c0_i32_0 = arith.constant 0 : i32
    %c0_i32_1 = arith.constant 0 : i32
    return %c0_i32, %c0_i32_0 : i32, i32
  }
  func.func @transform_15(%arg0: i32) -> (i32, i32) {
    %c0_i32 = arith.constant 0 : i32
    %c0_i32_0 = arith.constant 0 : i32
    %c0_i32_1 = arith.constant 0 : i32
    return %c0_i32, %c0_i32_0 : i32, i32
  }
  func.func @transform_16(%arg0: i32) -> (i32, i32, i32) {
    %c0_i32 = arith.constant 0 : i32
    %c0_i32_0 = arith.constant 0 : i32
    %c0_i32_1 = arith.constant 0 : i32
    return %arg0, %c0_i32, %c0_i32_0 : i32, i32, i32
  }
}

</mosaic_0001>

<llo_original>
// kernel: tpu_custom_call.1
$region0: #{tpu_custom_call.1}
  #allocation0 [shape = 'u32[]', space=smem, size = 0x4, offset = 0x4, fixed_abs, tag = 'smem constant byte address 0x4 - core index']
  #allocation1 [shape = 'u32[144,128]{1,0:T(1,128)}', space=vmem, size = 0x12000, scoped, tag = 'internal scratch']
  %s0 = inlined_call_operand.vmem [shape: f32[2,32,256], index: 0, kind: input, shape index: {}]
  %s1 = inlined_call_operand.vmem [shape: f32[256,64], index: 1, kind: input, shape index: {}]
  %s2 = inlined_call_operand.vmem [shape: f32[1,64], index: 2, kind: input, shape index: {}]
  %s3 = inlined_call_operand.vmem [shape: f32[1,64], index: 3, kind: input, shape index: {}]
  %s4 = inlined_call_operand.vmem [shape: f32[1,64], index: 4, kind: input, shape index: {}]
  %s5 = inlined_call_operand.vmem [shape: f32[1,64], index: 5, kind: input, shape index: {}]
  %s6 = inlined_call_operand.vmem [shape: f32[320,64], index: 6, kind: input, shape index: {}]
  %s7 = inlined_call_operand.vmem [shape: f32[1,64], index: 7, kind: input, shape index: {}]
  %s8 = inlined_call_operand.vmem [shape: f32[1,64], index: 8, kind: input, shape index: {}]
  %s9 = inlined_call_operand.vmem [shape: f32[1,64], index: 9, kind: input, shape index: {}]
  %s10 = inlined_call_operand.vmem [shape: f32[1,64], index: 10, kind: input, shape index: {}]
  %s11 = inlined_call_operand.vmem [shape: f32[320,64], index: 11, kind: input, shape index: {}]
  %s12 = inlined_call_operand.vmem [shape: f32[1,64], index: 12, kind: input, shape index: {}]
  %s13 = inlined_call_operand.vmem [shape: f32[1,64], index: 13, kind: input, shape index: {}]
  %s14 = inlined_call_operand.vmem [shape: f32[1,64], index: 14, kind: input, shape index: {}]
  %s15 = inlined_call_operand.vmem [shape: f32[64,256], index: 15, kind: input, shape index: {}]
  %s16 = inlined_call_operand.hbm [shape: f32[2,32,256], index: 16, kind: output, shape index: {}]
  %s17 = sld [smem:[#allocation0]]
  $region97: #{tpu_custom_call.1} parent=0
    _
  %s19 = ssub.s32 1, %s17
  %s20 = scalar_select 0, %s19, %s17
  $region1: #{tpu_custom_call.1} parent=0
    #allocation2 [shape = 'u8[65536]{0}', space=vmem, size = 0x10000, scoped, tag = 'output window, operand 0']
    #allocation3 [shape = 's32[2]{0}', space=sflag, size = 0x8, scoped, tag = 'scoped memory for tpu_custom_call.1']
    %21 = vsyncpa [#allocation3], 0
    %s22 = scalar_lea.sflag [#allocation3], 1
    %23 = vsyncpa %s22, 0
    loop: start=0, step=1, limit=4
    $region2: #{tpu_custom_call.1} parent=1 // loop_pre_header
      _
    $region3: #{tpu_custom_call.1} parent=1 // loop_header
      %s25 = sphi 0, %s29
      %p26 = scmp.ge.s32.totalorder %s25, 4
      %s35 = sphi 0, %s37
      %s38 = sphi 0, %s35
      %s39 = sphi 0, %s38
      %s55 = sphi 0, %s39
      %s59 = sphi 0, %s59
      %s61 = sphi 0, %s59
      %s62 = sphi 0, %s61
      %s76 = sphi 0, %s62
      %s80 = sphi 0, %s80
      %s82 = sphi 0, %s80
      %s83 = sphi 0, %s82
      %s97 = sphi 0, %s83
      %s101 = sphi 0, %s101
      %s103 = sphi 0, %s101
      %s104 = sphi 0, %s103
      %s118 = sphi 0, %s104
      %s122 = sphi 0, %s122
      %s124 = sphi 0, %s122
      %s125 = sphi 0, %s124
      %s139 = sphi 0, %s125
      %s143 = sphi 0, %s143
      %s145 = sphi 0, %s143
      %s146 = sphi 0, %s145
      %s160 = sphi 0, %s146
      %s164 = sphi 0, %s164
      %s166 = sphi 0, %s164
      %s167 = sphi 0, %s166
      %s181 = sphi 0, %s167
      %s185 = sphi 0, %s185
      %s187 = sphi 0, %s185
      %s188 = sphi 0, %s187
      %s202 = sphi 0, %s188
      %s206 = sphi 0, %s206
      %s208 = sphi 0, %s206
      %s209 = sphi 0, %s208
      %s223 = sphi 0, %s209
      %s227 = sphi 0, %s227
      %s229 = sphi 0, %s227
      %s230 = sphi 0, %s229
      %s244 = sphi 0, %s230
      %s248 = sphi 0, %s248
      %s250 = sphi 0, %s248
      %s251 = sphi 0, %s250
      %s265 = sphi 0, %s251
      %s269 = sphi 0, %s269
      %s271 = sphi 0, %s269
      %s272 = sphi 0, %s271
      %s286 = sphi 0, %s272
      %s290 = sphi 0, %s290
      %s292 = sphi 0, %s290
      %s293 = sphi 0, %s292
      %s307 = sphi 0, %s293
      %s311 = sphi 0, %s311
      %s313 = sphi 0, %s311
      %s314 = sphi 0, %s313
      %s328 = sphi 0, %s314
      %s332 = sphi 0, %s332
      %s334 = sphi 0, %s332
      %s335 = sphi 0, %s334
      %s349 = sphi 0, %s335
      %s353 = sphi 0, %s353
      %s355 = sphi 0, %s353
      %s356 = sphi 0, %s355
      %s370 = sphi 0, %s356
      %s376 = sphi 0, %s378
      %s379 = sphi 0, %s376
      %s380 = sphi 0, %s379
      %s396 = sphi 0, %s380
    $region4: #{tpu_custom_call.1} parent=1 // loop_header_branch
      %28 = sbr.rel (%p26) target = $region8
    $region5: #{tpu_custom_call.1} parent=1 // loop_body
      %s30 = ssub.s32 %s25, 1
      %s31 = ssub.s32 %s25, 2
      %s32 = sadd.s32 %s25, 1
      %s33 = ssub.s32 %s25, %s32
      %p34 = scmp.eq.s32.totalorder %s33, 0
      %s36 = sadd.s32 %s35, 1
      %s37 = scalar_select %p34, %s35, %s36
      %p40 = pneg %p34
      %p41 = scmp.eq.s32.totalorder %s25, 1
      %p42 = por %p40, %p41
      %p43 = scmp.ne.s32.totalorder %s35, %s38
      %p44 = scmp.eq.s32.totalorder %s25, 0
      %p45 = por %p43, %p44
      %p46 = scmp.ne.s32.totalorder %s35, %s38
      %p47 = scmp.eq.s32.totalorder %s30, 1
      %p48 = por %p46, %p47
      %p49 = scmp.ne.s32.totalorder %s38, %s39
      %p50 = scmp.eq.s32.totalorder %s30, 0
      %p51 = por %p49, %p50
      %p52 = scmp.ne.s32.totalorder %s38, %s39
      %p53 = scmp.eq.s32.totalorder %s31, 1
      %p54 = por %p52, %p53
      %p56 = scmp.ne.s32.totalorder %s39, %s55
      %p57 = scmp.eq.s32.totalorder %s31, 0
      %p58 = por %p56, %p57
      %s60 = sadd.s32 %s59, 1
      %p63 = scmp.eq.s32.totalorder %s25, 1
      %p64 = scmp.ne.s32.totalorder %s59, %s61
      %p65 = scmp.eq.s32.totalorder %s25, 0
      %p66 = por %p64, %p65
      %p67 = scmp.ne.s32.totalorder %s59, %s61
      %p68 = scmp.eq.s32.totalorder %s30, 1
      %p69 = por %p67, %p68
      %p70 = scmp.ne.s32.totalorder %s61, %s62
      %p71 = scmp.eq.s32.totalorder %s30, 0
      %p72 = por %p70, %p71
      %p73 = scmp.ne.s32.totalorder %s61, %s62
      %p74 = scmp.eq.s32.totalorder %s31, 1
      %p75 = por %p73, %p74
      %p77 = scmp.ne.s32.totalorder %s62, %s76
      %p78 = scmp.eq.s32.totalorder %s31, 0
      %p79 = por %p77, %p78
      %s81 = sadd.s32 %s80, 1
      %p84 = scmp.eq.s32.totalorder %s25, 1
      %p85 = scmp.ne.s32.totalorder %s80, %s82
      %p86 = scmp.eq.s32.totalorder %s25, 0
      %p87 = por %p85, %p86
      %p88 = scmp.ne.s32.totalorder %s80, %s82
      %p89 = scmp.eq.s32.totalorder %s30, 1
      %p90 = por %p88, %p89
      %p91 = scmp.ne.s32.totalorder %s82, %s83
      %p92 = scmp.eq.s32.totalorder %s30, 0
      %p93 = por %p91, %p92
      %p94 = scmp.ne.s32.totalorder %s82, %s83
      %p95 = scmp.eq.s32.totalorder %s31, 1
      %p96 = por %p94, %p95
      %p98 = scmp.ne.s32.totalorder %s83, %s97
      %p99 = scmp.eq.s32.totalorder %s31, 0
      %p100 = por %p98, %p99
      %s102 = sadd.s32 %s101, 1
      %p105 = scmp.eq.s32.totalorder %s25, 1
      %p106 = scmp.ne.s32.totalorder %s101, %s103
      %p107 = scmp.eq.s32.totalorder %s25, 0
      %p108 = por %p106, %p107
      %p109 = scmp.ne.s32.totalorder %s101, %s103
      %p110 = scmp.eq.s32.totalorder %s30, 1
      %p111 = por %p109, %p110
      %p112 = scmp.ne.s32.totalorder %s103, %s104
      %p113 = scmp.eq.s32.totalorder %s30, 0
      %p114 = por %p112, %p113
      %p115 = scmp.ne.s32.totalorder %s103, %s104
      %p116 = scmp.eq.s32.totalorder %s31, 1
      %p117 = por %p115, %p116
      %p119 = scmp.ne.s32.totalorder %s104, %s118
      %p120 = scmp.eq.s32.totalorder %s31, 0
      %p121 = por %p119, %p120
      %s123 = sadd.s32 %s122, 1
      %p126 = scmp.eq.s32.totalorder %s25, 1
      %p127 = scmp.ne.s32.totalorder %s122, %s124
      %p128 = scmp.eq.s32.totalorder %s25, 0
      %p129 = por %p127, %p128
      %p130 = scmp.ne.s32.totalorder %s122, %s124
      %p131 = scmp.eq.s32.totalorder %s30, 1
      %p132 = por %p130, %p131
      %p133 = scmp.ne.s32.totalorder %s124, %s125
      %p134 = scmp.eq.s32.totalorder %s30, 0
      %p135 = por %p133, %p134
      %p136 = scmp.ne.s32.totalorder %s124, %s125
      %p137 = scmp.eq.s32.totalorder %s31, 1
      %p138 = por %p136, %p137
      %p140 = scmp.ne.s32.totalorder %s125, %s139
      %p141 = scmp.eq.s32.totalorder %s31, 0
      %p142 = por %p140, %p141
      %s144 = sadd.s32 %s143, 1
      %p147 = scmp.eq.s32.totalorder %s25, 1
      %p148 = scmp.ne.s32.totalorder %s143, %s145
      %p149 = scmp.eq.s32.totalorder %s25, 0
      %p150 = por %p148, %p149
      %p151 = scmp.ne.s32.totalorder %s143, %s145
      %p152 = scmp.eq.s32.totalorder %s30, 1
      %p153 = por %p151, %p152
      %p154 = scmp.ne.s32.totalorder %s145, %s146
      %p155 = scmp.eq.s32.totalorder %s30, 0
      %p156 = por %p154, %p155
      %p157 = scmp.ne.s32.totalorder %s145, %s146
      %p158 = scmp.eq.s32.totalorder %s31, 1
      %p159 = por %p157, %p158
      %p161 = scmp.ne.s32.totalorder %s146, %s160
      %p162 = scmp.eq.s32.totalorder %s31, 0
      %p163 = por %p161, %p162
      %s165 = sadd.s32 %s164, 1
      %p168 = scmp.eq.s32.totalorder %s25, 1
      %p169 = scmp.ne.s32.totalorder %s164, %s166
      %p170 = scmp.eq.s32.totalorder %s25, 0
      %p171 = por %p169, %p170
      %p172 = scmp.ne.s32.totalorder %s164, %s166
      %p173 = scmp.eq.s32.totalorder %s30, 1
      %p174 = por %p172, %p173
      %p175 = scmp.ne.s32.totalorder %s166, %s167
      %p176 = scmp.eq.s32.totalorder %s30, 0
      %p177 = por %p175, %p176
      %p178 = scmp.ne.s32.totalorder %s166, %s167
      %p179 = scmp.eq.s32.totalorder %s31, 1
      %p180 = por %p178, %p179
      %p182 = scmp.ne.s32.totalorder %s167, %s181
      %p183 = scmp.eq.s32.totalorder %s31, 0
      %p184 = por %p182, %p183
      %s186 = sadd.s32 %s185, 1
      %p189 = scmp.eq.s32.totalorder %s25, 1
      %p190 = scmp.ne.s32.totalorder %s185, %s187
      %p191 = scmp.eq.s32.totalorder %s25, 0
      %p192 = por %p190, %p191
      %p193 = scmp.ne.s32.totalorder %s185, %s187
      %p194 = scmp.eq.s32.totalorder %s30, 1
      %p195 = por %p193, %p194
      %p196 = scmp.ne.s32.totalorder %s187, %s188
      %p197 = scmp.eq.s32.totalorder %s30, 0
      %p198 = por %p196, %p197
      %p199 = scmp.ne.s32.totalorder %s187, %s188
      %p200 = scmp.eq.s32.totalorder %s31, 1
      %p201 = por %p199, %p200
      %p203 = scmp.ne.s32.totalorder %s188, %s202
      %p204 = scmp.eq.s32.totalorder %s31, 0
      %p205 = por %p203, %p204
      %s207 = sadd.s32 %s206, 1
      %p210 = scmp.eq.s32.totalorder %s25, 1
      %p211 = scmp.ne.s32.totalorder %s206, %s208
      %p212 = scmp.eq.s32.totalorder %s25, 0
      %p213 = por %p211, %p212
      %p214 = scmp.ne.s32.totalorder %s206, %s208
      %p215 = scmp.eq.s32.totalorder %s30, 1
      %p216 = por %p214, %p215
      %p217 = scmp.ne.s32.totalorder %s208, %s209
      %p218 = scmp.eq.s32.totalorder %s30, 0
      %p219 = por %p217, %p218
      %p220 = scmp.ne.s32.totalorder %s208, %s209
      %p221 = scmp.eq.s32.totalorder %s31, 1
      %p222 = por %p220, %p221
      %p224 = scmp.ne.s32.totalorder %s209, %s223
      %p225 = scmp.eq.s32.totalorder %s31, 0
      %p226 = por %p224, %p225
      %s228 = sadd.s32 %s227, 1
      %p231 = scmp.eq.s32.totalorder %s25, 1
      %p232 = scmp.ne.s32.totalorder %s227, %s229
      %p233 = scmp.eq.s32.totalorder %s25, 0
      %p234 = por %p232, %p233
      %p235 = scmp.ne.s32.totalorder %s227, %s229
      %p236 = scmp.eq.s32.totalorder %s30, 1
      %p237 = por %p235, %p236
      %p238 = scmp.ne.s32.totalorder %s229, %s230
      %p239 = scmp.eq.s32.totalorder %s30, 0
      %p240 = por %p238, %p239
      %p241 = scmp.ne.s32.totalorder %s229, %s230
      %p242 = scmp.eq.s32.totalorder %s31, 1
      %p243 = por %p241, %p242
      %p245 = scmp.ne.s32.totalorder %s230, %s244
      %p246 = scmp.eq.s32.totalorder %s31, 0
      %p247 = por %p245, %p246
      %s249 = sadd.s32 %s248, 1
      %p252 = scmp.eq.s32.totalorder %s25, 1
      %p253 = scmp.ne.s32.totalorder %s248, %s250
      %p254 = scmp.eq.s32.totalorder %s25, 0
      %p255 = por %p253, %p254
      %p256 = scmp.ne.s32.totalorder %s248, %s250
      %p257 = scmp.eq.s32.totalorder %s30, 1
      %p258 = por %p256, %p257
      %p259 = scmp.ne.s32.totalorder %s250, %s251
      %p260 = scmp.eq.s32.totalorder %s30, 0
      %p261 = por %p259, %p260
      %p262 = scmp.ne.s32.totalorder %s250, %s251
      %p263 = scmp.eq.s32.totalorder %s31, 1
      %p264 = por %p262, %p263
      %p266 = scmp.ne.s32.totalorder %s251, %s265
      %p267 = scmp.eq.s32.totalorder %s31, 0
      %p268 = por %p266, %p267
      %s270 = sadd.s32 %s269, 1
      %p273 = scmp.eq.s32.totalorder %s25, 1
      %p274 = scmp.ne.s32.totalorder %s269, %s271
      %p275 = scmp.eq.s32.totalorder %s25, 0
      %p276 = por %p274, %p275
      %p277 = scmp.ne.s32.totalorder %s269, %s271
      %p278 = scmp.eq.s32.totalorder %s30, 1
      %p279 = por %p277, %p278
      %p280 = scmp.ne.s32.totalorder %s271, %s272
      %p281 = scmp.eq.s32.totalorder %s30, 0
      %p282 = por %p280, %p281
      %p283 = scmp.ne.s32.totalorder %s271, %s272
      %p284 = scmp.eq.s32.totalorder %s31, 1
      %p285 = por %p283, %p284
      %p287 = scmp.ne.s32.totalorder %s272, %s286
      %p288 = scmp.eq.s32.totalorder %s31, 0
      %p289 = por %p287, %p288
      %s291 = sadd.s32 %s290, 1
      %p294 = scmp.eq.s32.totalorder %s25, 1
      %p295 = scmp.ne.s32.totalorder %s290, %s292
      %p296 = scmp.eq.s32.totalorder %s25, 0
      %p297 = por %p295, %p296
      %p298 = scmp.ne.s32.totalorder %s290, %s292
      %p299 = scmp.eq.s32.totalorder %s30, 1
      %p300 = por %p298, %p299
      %p301 = scmp.ne.s32.totalorder %s292, %s293
      %p302 = scmp.eq.s32.totalorder %s30, 0
      %p303 = por %p301, %p302
      %p304 = scmp.ne.s32.totalorder %s292, %s293
      %p305 = scmp.eq.s32.totalorder %s31, 1
      %p306 = por %p304, %p305
      %p308 = scmp.ne.s32.totalorder %s293, %s307
      %p309 = scmp.eq.s32.totalorder %s31, 0
      %p310 = por %p308, %p309
      %s312 = sadd.s32 %s311, 1
      %p315 = scmp.eq.s32.totalorder %s25, 1
      %p316 = scmp.ne.s32.totalorder %s311, %s313
      %p317 = scmp.eq.s32.totalorder %s25, 0
      %p318 = por %p316, %p317
      %p319 = scmp.ne.s32.totalorder %s311, %s313
      %p320 = scmp.eq.s32.totalorder %s30, 1
      %p321 = por %p319, %p320
      %p322 = scmp.ne.s32.totalorder %s313, %s314
      %p323 = scmp.eq.s32.totalorder %s30, 0
      %p324 = por %p322, %p323
      %p325 = scmp.ne.s32.totalorder %s313, %s314
      %p326 = scmp.eq.s32.totalorder %s31, 1
      %p327 = por %p325, %p326
      %p329 = scmp.ne.s32.totalorder %s314, %s328
      %p330 = scmp.eq.s32.totalorder %s31, 0
      %p331 = por %p329, %p330
      %s333 = sadd.s32 %s332, 1
      %p336 = scmp.eq.s32.totalorder %s25, 1
      %p337 = scmp.ne.s32.totalorder %s332, %s334
      %p338 = scmp.eq.s32.totalorder %s25, 0
      %p339 = por %p337, %p338
      %p340 = scmp.ne.s32.totalorder %s332, %s334
      %p341 = scmp.eq.s32.totalorder %s30, 1
      %p342 = por %p340, %p341
      %p343 = scmp.ne.s32.totalorder %s334, %s335
      %p344 = scmp.eq.s32.totalorder %s30, 0
      %p345 = por %p343, %p344
      %p346 = scmp.ne.s32.totalorder %s334, %s335
      %p347 = scmp.eq.s32.totalorder %s31, 1
      %p348 = por %p346, %p347
      %p350 = scmp.ne.s32.totalorder %s335, %s349
      %p351 = scmp.eq.s32.totalorder %s31, 0
      %p352 = por %p350, %p351
      %s354 = sadd.s32 %s353, 1
      %p357 = scmp.eq.s32.totalorder %s25, 1
      %p358 = scmp.ne.s32.totalorder %s353, %s355
      %p359 = scmp.eq.s32.totalorder %s25, 0
      %p360 = por %p358, %p359
      %p361 = scmp.ne.s32.totalorder %s353, %s355
      %p362 = scmp.eq.s32.totalorder %s30, 1
      %p363 = por %p361, %p362
      %p364 = scmp.ne.s32.totalorder %s355, %s356
      %p365 = scmp.eq.s32.totalorder %s30, 0
      %p366 = por %p364, %p365
      %p367 = scmp.ne.s32.totalorder %s355, %s356
      %p368 = scmp.eq.s32.totalorder %s31, 1
      %p369 = por %p367, %p368
      %p371 = scmp.ne.s32.totalorder %s356, %s370
      %p372 = scmp.eq.s32.totalorder %s31, 0
      %p373 = por %p371, %p372
      %s374 = ssub.s32 %s25, %s32
      %p375 = scmp.eq.s32.totalorder %s374, 0
      %s377 = sadd.s32 %s376, 1
      %s378 = scalar_select %p375, %s376, %s377
      %p381 = pneg %p375
      %p382 = scmp.eq.s32.totalorder %s25, 1
      %p383 = por %p381, %p382
      %p384 = scmp.ne.s32.totalorder %s376, %s379
      %p385 = scmp.eq.s32.totalorder %s25, 0
      %p386 = por %p384, %p385
      %p387 = scmp.ne.s32.totalorder %s376, %s379
      %p388 = scmp.eq.s32.totalorder %s30, 1
      %p389 = por %p387, %p388
      %p390 = scmp.ne.s32.totalorder %s379, %s380
      %p391 = scmp.eq.s32.totalorder %s30, 0
      %p392 = por %p390, %p391
      %p393 = scmp.ne.s32.totalorder %s379, %s380
      %p394 = scmp.eq.s32.totalorder %s31, 1
      %p395 = por %p393, %p394
      %p397 = scmp.ne.s32.totalorder %s380, %s396
      %p398 = scmp.eq.s32.totalorder %s31, 0
      %p399 = por %p397, %p398
      %p400 = scmp.le.s32.totalorder 1, %s25
      %p401 = scmp.lt.s32.totalorder %s25, 3
      %p402 = pnand %p400, %p401
      %p403 = pneg %p402
      // Predicated region
      $region9: #{tpu_custom_call.1} parent=5 // pred_check
        _
      $region10: #{tpu_custom_call.1} parent=5 // pred_check_branch
        %405 = sbr.rel (%p402) target = $region12
      $region11: #{tpu_custom_call.1} parent=5 // pred_region
        %s406 = ssub.s32 %s25, 1
        // Predicated region
        $region13: #{tpu_custom_call.1} parent=11 // pred_check
          %p407 = pneg %p72
        $region14: #{tpu_custom_call.1} parent=11 // pred_check_branch
          %409 = sbr.rel (%p407) target = $region16
        $region15: #{tpu_custom_call.1} parent=11 // pred_region
          _
        $region16: #{tpu_custom_call.1} parent=11 // pred_fallthru
          _
        // Predicated region
        $region17: #{tpu_custom_call.1} parent=11 // pred_check
          %p410 = pneg %p93
        $region18: #{tpu_custom_call.1} parent=11 // pred_check_branch
          %412 = sbr.rel (%p410) target = $region20
        $region19: #{tpu_custom_call.1} parent=11 // pred_region
          _
        $region20: #{tpu_custom_call.1} parent=11 // pred_fallthru
          _
        // Predicated region
        $region21: #{tpu_custom_call.1} parent=11 // pred_check
          %p413 = pneg %p114
        $region22: #{tpu_custom_call.1} parent=11 // pred_check_branch
          %415 = sbr.rel (%p413) target = $region24
        $region23: #{tpu_custom_call.1} parent=11 // pred_region
          _
        $region24: #{tpu_custom_call.1} parent=11 // pred_fallthru
          _
        // Predicated region
        $region25: #{tpu_custom_call.1} parent=11 // pred_check
          %p416 = pneg %p135
        $region26: #{tpu_custom_call.1} parent=11 // pred_check_branch
          %418 = sbr.rel (%p416) target = $region28
        $region27: #{tpu_custom_call.1} parent=11 // pred_region
          _
        $region28: #{tpu_custom_call.1} parent=11 // pred_fallthru
          _
        // Predicated region
        $region29: #{tpu_custom_call.1} parent=11 // pred_check
          %p419 = pneg %p156
        $region30: #{tpu_custom_call.1} parent=11 // pred_check_branch
          %421 = sbr.rel (%p419) target = $region32
        $region31: #{tpu_custom_call.1} parent=11 // pred_region
          _
        $region32: #{tpu_custom_call.1} parent=11 // pred_fallthru
          _
        // Predicated region
        $region33: #{tpu_custom_call.1} parent=11 // pred_check
          %p422 = pneg %p177
        $region34: #{tpu_custom_call.1} parent=11 // pred_check_branch
          %424 = sbr.rel (%p422) target = $region36
        $region35: #{tpu_custom_call.1} parent=11 // pred_region
          _
        $region36: #{tpu_custom_call.1} parent=11 // pred_fallthru
          _
        // Predicated region
        $region37: #{tpu_custom_call.1} parent=11 // pred_check
          %p425 = pneg %p198
        $region38: #{tpu_custom_call.1} parent=11 // pred_check_branch
          %427 = sbr.rel (%p425) target = $region40
        $region39: #{tpu_custom_call.1} parent=11 // pred_region
          _
        $region40: #{tpu_custom_call.1} parent=11 // pred_fallthru
          _
        // Predicated region
        $region41: #{tpu_custom_call.1} parent=11 // pred_check
          %p428 = pneg %p219
        $region42: #{tpu_custom_call.1} parent=11 // pred_check_branch
          %430 = sbr.rel (%p428) target = $region44
        $region43: #{tpu_custom_call.1} parent=11 // pred_region
          _
        $region44: #{tpu_custom_call.1} parent=11 // pred_fallthru
          _
        // Predicated region
        $region45: #{tpu_custom_call.1} parent=11 // pred_check
          %p431 = pneg %p240
        $region46: #{tpu_custom_call.1} parent=11 // pred_check_branch
          %433 = sbr.rel (%p431) target = $region48
        $region47: #{tpu_custom_call.1} parent=11 // pred_region
          _
        $region48: #{tpu_custom_call.1} parent=11 // pred_fallthru
          _
        // Predicated region
        $region49: #{tpu_custom_call.1} parent=11 // pred_check
          %p434 = pneg %p261
        $region50: #{tpu_custom_call.1} parent=11 // pred_check_branch
          %436 = sbr.rel (%p434) target = $region52
        $region51: #{tpu_custom_call.1} parent=11 // pred_region
          _
        $region52: #{tpu_custom_call.1} parent=11 // pred_fallthru
          _
        // Predicated region
        $region53: #{tpu_custom_call.1} parent=11 // pred_check
          %p437 = pneg %p282
        $region54: #{tpu_custom_call.1} parent=11 // pred_check_branch
          %439 = sbr.rel (%p437) target = $region56
        $region55: #{tpu_custom_call.1} parent=11 // pred_region
          _
        $region56: #{tpu_custom_call.1} parent=11 // pred_fallthru
          _
        // Predicated region
        $region57: #{tpu_custom_call.1} parent=11 // pred_check
          %p440 = pneg %p303
        $region58: #{tpu_custom_call.1} parent=11 // pred_check_branch
          %442 = sbr.rel (%p440) target = $region60
        $region59: #{tpu_custom_call.1} parent=11 // pred_region
          _
        $region60: #{tpu_custom_call.1} parent=11 // pred_fallthru
          _
        // Predicated region
        $region61: #{tpu_custom_call.1} parent=11 // pred_check
          %p443 = pneg %p324
        $region62: #{tpu_custom_call.1} parent=11 // pred_check_branch
          %445 = sbr.rel (%p443) target = $region64
        $region63: #{tpu_custom_call.1} parent=11 // pred_region
          _
        $region64: #{tpu_custom_call.1} parent=11 // pred_fallthru
          _
        // Predicated region
        $region65: #{tpu_custom_call.1} parent=11 // pred_check
          %p446 = pneg %p345
        $region66: #{tpu_custom_call.1} parent=11 // pred_check_branch
          %448 = sbr.rel (%p446) target = $region68
        $region67: #{tpu_custom_call.1} parent=11 // pred_region
          _
        $region68: #{tpu_custom_call.1} parent=11 // pred_fallthru
          _
        // Predicated region
        $region69: #{tpu_custom_call.1} parent=11 // pred_check
          %p449 = pneg %p366
        $region70: #{tpu_custom_call.1} parent=11 // pred_check_branch
          %451 = sbr.rel (%p449) target = $region72
        $region71: #{tpu_custom_call.1} parent=11 // pred_region
          _
        $region72: #{tpu_custom_call.1} parent=11 // pred_fallthru
          _
      $region12: #{tpu_custom_call.1} parent=5 // pred_fallthru
        _
      %p452 = scmp.lt.s32.totalorder %s25, 2
      // Predicated region
      $region73: #{tpu_custom_call.1} parent=5 // pred_check
        %p453 = pneg %p452
      $region74: #{tpu_custom_call.1} parent=5 // pred_check_branch
        %455 = sbr.rel (%p453) target = $region76
      $region75: #{tpu_custom_call.1} parent=5 // pred_region
        // Predicated region
        $region77: #{tpu_custom_call.1} parent=75 // pred_check
          %p456 = pneg %p45
        $region78: #{tpu_custom_call.1} parent=75 // pred_check_branch
          %458 = sbr.rel (%p456) target = $region80
        $region79: #{tpu_custom_call.1} parent=75 // pred_region
          %p459 = scmp.lt.s32.totalorder %s25, 1
          %s460 = scalar_select %p459, %s25, 1
          %s461 = smul.addr %s460, 8
          %s462 = smul.addr %s461, 8
          %s463 = scalar_lea.vmem %s0, %s462
        $region80: #{tpu_custom_call.1} parent=75 // pred_fallthru
          _
      $region76: #{tpu_custom_call.1} parent=5 // pred_fallthru
        _
      %p464 = scmp.le.s32.totalorder 1, %s25
      %p465 = scmp.lt.s32.totalorder %s25, 3
      %p466 = pnand %p464, %p465
      %p467 = pneg %p466
      // Predicated region
      $region81: #{tpu_custom_call.1} parent=5 // pred_check
        _
      $region82: #{tpu_custom_call.1} parent=5 // pred_check_branch
        %469 = sbr.rel (%p466) target = $region84
      $region83: #{tpu_custom_call.1} parent=5 // pred_region
        %s470 = ssub.s32 %s25, 1
        %p471 = scmp.lt.s32.totalorder %s30, 1
        %s472 = scalar_select %p471, %s30, 1
        %s473 = smul.addr %s472, 8
        %s474 = smul.addr %s473, 8
        %s475 = scalar_lea.vmem %s0, %s474
        %p476 = pneg %p51
        %p477 = pneg %p48
        %p478 = pneg %p72
        %p479 = pneg %p69
        %p480 = pneg %p93
        %p481 = pneg %p90
        %p482 = pneg %p114
        %p483 = pneg %p111
        %p484 = pneg %p135
        %p485 = pneg %p132
        %p486 = pneg %p156
        %p487 = pneg %p153
        %p488 = pneg %p177
        %p489 = pneg %p174
        %p490 = pneg %p198
        %p491 = pneg %p195
        %p492 = pneg %p219
        %p493 = pneg %p216
        %p494 = pneg %p240
        %p495 = pneg %p237
        %p496 = pneg %p261
        %p497 = pneg %p258
        %p498 = pneg %p282
        %p499 = pneg %p279
        %p500 = pneg %p303
        %p501 = pneg %p300
        %p502 = pneg %p324
        %p503 = pneg %p321
        %p504 = pneg %p345
        %p505 = pneg %p342
        %p506 = pneg %p366
        %p507 = pneg %p363
        %p508 = pneg %p392
        %p509 = pneg %p389
        %s510 = sand.u32 %s379, 1
        %s511 = scalar_lea.sflag [#allocation3], %s510
        %s512 = sand.u32 %s379, 1
        %s513 = smul.addr %s512, 64
        %s514 = scalar_lea.vmem [#allocation2], %s513
        %p515 = scmp.lt.s32.totalorder %s30, 1
        %s516 = scalar_select %p515, %s30, 1
        %s517 = smul.addr %s516, 8
        %s518 = smul.addr %s517, 8
        %s519 = scalar_lea.vmem %s0, %s518
        %v520 = vlaneseq
        %v521 = vshrl.u32 %v520, 7
        %v522 = vadd.s32 %v521, 8
        %v523 = vadd.s32 %v521, 16
        %v524 = vadd.s32 %v521, 24
        %v525 = vcvt.s32.f32 %v521
        %v526 = vcvt.s32.f32 %v522
        %v527 = vcvt.s32.f32 %v523
        %v528 = vcvt.s32.f32 %v524
        %v529 = vadd.f32 %v525, 1.0
        %v530 = vadd.f32 %v526, 1.0
        %v531 = vadd.f32 %v527, 1.0
        %v532 = vadd.f32 %v528, 1.0
        %v533 = vmul.f32 %v529, 64.0
        %v534 = vmul.f32 %v530, 64.0
        %v535 = vmul.f32 %v531, 64.0
        %v536 = vmul.f32 %v532, 64.0
        %v537 = vrcp.pop %v533
        %v538 = vmul.f32 1.0, %v537
        %v539 = vrcp.pop %v534
        %v540 = vmul.f32 1.0, %v539
        %v541 = vrcp.pop %v535
        %v542 = vmul.f32 1.0, %v541
        %v543 = vrcp.pop %v536
        %v544 = vmul.f32 1.0, %v543
        %v545 = vld [vmem:[%s519] sm:$0xff]
        %v546 = vld [vmem:[%s519 + $0x8] sm:$0xff]
        %v547 = vld [vmem:[%s519 + $0x10] sm:$0xff]
        %v548 = vld [vmem:[%s519 + $0x18] sm:$0xff]
        %v549 = vld [vmem:[%s519 + $0x20] sm:$0xff]
        %v550 = vld [vmem:[%s519 + $0x28] sm:$0xff]
        %v551 = vld [vmem:[%s519 + $0x30] sm:$0xff]
        %v552 = vld [vmem:[%s519 + $0x38] sm:$0xff]
        %v553 = vld [vmem:[%s1] sm:$0xff]
        %v554 = vld [vmem:[%s1 + $0x8] sm:$0xff]
        %v555 = vld [vmem:[%s1 + $0x10] sm:$0xff]
        %v556 = vld [vmem:[%s1 + $0x18] sm:$0xff]
        %v557 = vld [vmem:[%s1 + $0x20] sm:$0xff]
        %v558 = vld [vmem:[%s1 + $0x28] sm:$0xff]
        %v559 = vld [vmem:[%s1 + $0x30] sm:$0xff]
        %v560 = vld [vmem:[%s1 + $0x38] sm:$0xff]
        %v561 = vld [vmem:[%s1 + $0x40] sm:$0xff]
        %v562 = vld [vmem:[%s1 + $0x48] sm:$0xff]
        %v563 = vld [vmem:[%s1 + $0x50] sm:$0xff]
        %v564 = vld [vmem:[%s1 + $0x58] sm:$0xff]
        %v565 = vld [vmem:[%s1 + $0x60] sm:$0xff]
        %v566 = vld [vmem:[%s1 + $0x68] sm:$0xff]
        %v567 = vld [vmem:[%s1 + $0x70] sm:$0xff]
        %v568 = vld [vmem:[%s1 + $0x78] sm:$0xff]
        %v569 = vld [vmem:[%s1 + $0x80] sm:$0xff]
        %v570 = vld [vmem:[%s1 + $0x88] sm:$0xff]
        %v571 = vld [vmem:[%s1 + $0x90] sm:$0xff]
        %v572 = vld [vmem:[%s1 + $0x98] sm:$0xff]
        %v573 = vld [vmem:[%s1 + $0xa0] sm:$0xff]
        %v574 = vld [vmem:[%s1 + $0xa8] sm:$0xff]
        %v575 = vld [vmem:[%s1 + $0xb0] sm:$0xff]
        %v576 = vld [vmem:[%s1 + $0xb8] sm:$0xff]
        %v577 = vld [vmem:[%s1 + $0xc0] sm:$0xff]
        %v578 = vld [vmem:[%s1 + $0xc8] sm:$0xff]
        %v579 = vld [vmem:[%s1 + $0xd0] sm:$0xff]
        %v580 = vld [vmem:[%s1 + $0xd8] sm:$0xff]
        %v581 = vld [vmem:[%s1 + $0xe0] sm:$0xff]
        %v582 = vld [vmem:[%s1 + $0xe8] sm:$0xff]
        %v583 = vld [vmem:[%s1 + $0xf0] sm:$0xff]
        %v584 = vld [vmem:[%s1 + $0xf8] sm:$0xff]
        %585 = vmatprep.subr.mxu0 0.0
        %v586 = vand.u32 %v553, 4294901760
        %587 = vmatpush1.msra.mxu0 %v586
        %588 = vmatprep.subr.mxu0 0.0
        %v589 = vand.u32 %v554, 4294901760
        %590 = vmatpush1.msra.mxu0 %v589
        %591 = vmatprep.subr.mxu0 0.0
        %v592 = vand.u32 %v555, 4294901760
        %593 = vmatpush1.msra.mxu0 %v592
        %594 = vmatprep.subr.mxu0 0.0
        %v595 = vand.u32 %v556, 4294901760
        %596 = vmatpush1.msra.mxu0 %v595
        %597 = vmatprep.subr.mxu0 0.0
        %v598 = vand.u32 %v557, 4294901760
        %599 = vmatpush1.msra.mxu0 %v598
        %600 = vmatprep.subr.mxu0 0.0
        %v601 = vand.u32 %v558, 4294901760
        %602 = vmatpush1.msra.mxu0 %v601
        %603 = vmatprep.subr.mxu0 0.0
        %v604 = vand.u32 %v559, 4294901760
        %605 = vmatpush1.msra.mxu0 %v604
        %606 = vmatprep.subr.mxu0 0.0
        %v607 = vand.u32 %v560, 4294901760
        %608 = vmatpush1.msra.mxu0 %v607
        %609 = vmatprep.subr.mxu0 0.0
        %v610 = vand.u32 %v561, 4294901760
        %611 = vmatpush1.msra.mxu0 %v610
        %612 = vmatprep.subr.mxu0 0.0
        %v613 = vand.u32 %v562, 4294901760
        %614 = vmatpush1.msra.mxu0 %v613
        %615 = vmatprep.subr.mxu0 0.0
        %v616 = vand.u32 %v563, 4294901760
        %617 = vmatpush1.msra.mxu0 %v616
        %618 = vmatprep.subr.mxu0 0.0
        %v619 = vand.u32 %v564, 4294901760
        %620 = vmatpush1.msra.mxu0 %v619
        %621 = vmatprep.subr.mxu0 0.0
        %v622 = vand.u32 %v565, 4294901760
        %623 = vmatpush1.msra.mxu0 %v622
        %624 = vmatprep.subr.mxu0 0.0
        %v625 = vand.u32 %v566, 4294901760
        %626 = vmatpush1.msra.mxu0 %v625
        %627 = vmatprep.subr.mxu0 0.0
        %v628 = vand.u32 %v567, 4294901760
        %629 = vmatpush1.msra.mxu0 %v628
        %630 = vmatprep.subr.mxu0 0.0
        %v631 = vand.u32 %v568, 4294901760
        %632 = vmatpush1.msra.mxu0 %v631
        %633 = vmatprep.subr.mxu0 0.0
        %v634 = vand.u32 %v569, 4294901760
        %635 = vmatpush1.msra.mxu0 %v634
        %636 = vmatprep.subr.mxu0 0.0
        %v637 = vand.u32 %v570, 4294901760
        %638 = vmatpush1.msra.mxu0 %v637
        %639 = vmatprep.subr.mxu0 0.0
        %v640 = vand.u32 %v571, 4294901760
        %641 = vmatpush1.msra.mxu0 %v640
        %642 = vmatprep.subr.mxu0 0.0
        %v643 = vand.u32 %v572, 4294901760
        %644 = vmatpush1.msra.mxu0 %v643
        %645 = vmatprep.subr.mxu0 0.0
        %v646 = vand.u32 %v573, 4294901760
        %647 = vmatpush1.msra.mxu0 %v646
        %648 = vmatprep.subr.mxu0 0.0
        %v649 = vand.u32 %v574, 4294901760
        %650 = vmatpush1.msra.mxu0 %v649
        %651 = vmatprep.subr.mxu0 0.0
        %v652 = vand.u32 %v575, 4294901760
        %653 = vmatpush1.msra.mxu0 %v652
        %654 = vmatprep.subr.mxu0 0.0
        %v655 = vand.u32 %v576, 4294901760
        %656 = vmatpush1.msra.mxu0 %v655
        %657 = vmatprep.subr.mxu0 0.0
        %v658 = vand.u32 %v577, 4294901760
        %659 = vmatpush1.msra.mxu0 %v658
        %660 = vmatprep.subr.mxu0 0.0
        %v661 = vand.u32 %v578, 4294901760
        %662 = vmatpush1.msra.mxu0 %v661
        %663 = vmatprep.subr.mxu0 0.0
        %v664 = vand.u32 %v579, 4294901760
        %665 = vmatpush1.msra.mxu0 %v664
        %666 = vmatprep.subr.mxu0 0.0
        %v667 = vand.u32 %v580, 4294901760
        %668 = vmatpush1.msra.mxu0 %v667
        %669 = vmatprep.subr.mxu0 0.0
        %v670 = vand.u32 %v581, 4294901760
        %671 = vmatpush1.msra.mxu0 %v670
        %672 = vmatprep.subr.mxu0 0.0
        %v673 = vand.u32 %v582, 4294901760
        %674 = vmatpush1.msra.mxu0 %v673
        %675 = vmatprep.subr.mxu0 0.0
        %v676 = vand.u32 %v583, 4294901760
        %677 = vmatpush1.msra.mxu0 %v676
        %678 = vmatprep.subr.mxu0 0.0
        %v679 = vand.u32 %v584, 4294901760
        %680 = vmatpush1.msra.mxu0 %v679
        %v681 = vand.u32 %v546, 4294901760
        %v682 = vsub.f32 %v546, %v681
        %v683 = vand.u32 %v682, 4294901760
        %v684 = vsub.f32 %v682, %v683
        %v685 = vand.u32 %v684, 4294901760
        %686 = vmatprep.mubr.f32.mxu0 %v685
        %v687 = vand.u32 %v545, 4294901760
        %v688 = vsub.f32 %v545, %v687
        %v689 = vand.u32 %v688, 4294901760
        %v690 = vsub.f32 %v688, %v689
        %v691 = vand.u32 %v690, 4294901760
        %692 = vmatmul.mubr.f32.gmra.mrb[0].mxu0 %v691
        %v693 = vpop.f32.mrb[0].mxu0
        %v694 = vadd.f32 0.0, %v693
        %v695 = vpop.f32.mrb[0].mxu0
        %v696 = vand.u32 %v548, 4294901760
        %v697 = vsub.f32 %v548, %v696
        %v698 = vand.u32 %v697, 4294901760
        %v699 = vsub.f32 %v697, %v698
        %v700 = vand.u32 %v699, 4294901760
        %701 = vmatprep.mubr.f32.mxu0 %v700
        %v702 = vand.u32 %v547, 4294901760
        %v703 = vsub.f32 %v547, %v702
        %v704 = vand.u32 %v703, 4294901760
        %v705 = vsub.f32 %v703, %v704
        %v706 = vand.u32 %v705, 4294901760
        %707 = vmatmul.mubr.f32.gmra.mrb[0].mxu0 %v706
        %v708 = vpop.f32.mrb[0].mxu0
        %v709 = vadd.f32 0.0, %v708
        %v710 = vpop.f32.mrb[0].mxu0
        %v711 = vand.u32 %v550, 4294901760
        %v712 = vsub.f32 %v550, %v711
        %v713 = vand.u32 %v712, 4294901760
        %v714 = vsub.f32 %v712, %v713
        %v715 = vand.u32 %v714, 4294901760
        %716 = vmatprep.mubr.f32.mxu0 %v715
        %v717 = vand.u32 %v549, 4294901760
        %v718 = vsub.f32 %v549, %v717
        %v719 = vand.u32 %v718, 4294901760
        %v720 = vsub.f32 %v718, %v719
        %v721 = vand.u32 %v720, 4294901760
        %722 = vmatmul.mubr.f32.gmra.mrb[0].mxu0 %v721
        %v723 = vpop.f32.mrb[0].mxu0
        %v724 = vadd.f32 0.0, %v723
        %v725 = vpop.f32.mrb[0].mxu0
        %v726 = vand.u32 %v552, 4294901760
        %v727 = vsub.f32 %v552, %v726
        %v728 = vand.u32 %v727, 4294901760
        %v729 = vsub.f32 %v727, %v728
        %v730 = vand.u32 %v729, 4294901760
        %731 = vmatprep.mubr.f32.mxu0 %v730
        %v732 = vand.u32 %v551, 4294901760
        %v733 = vsub.f32 %v551, %v732
        %v734 = vand.u32 %v733, 4294901760
        %v735 = vsub.f32 %v733, %v734
        %v736 = vand.u32 %v735, 4294901760
        %737 = vmatmul.mubr.f32.gmra.mrb[0].mxu0 %v736
        %v738 = vpop.f32.mrb[0].mxu0
        %v739 = vadd.f32 0.0, %v738
        %v740 = vpop.f32.mrb[0].mxu0
        %741 = vdwg.mxu0
        %742 = vmatprep.subr.mxu0 0.0
        %v743 = vand.u32 %v553, 4294901760
        %v744 = vsub.f32 %v553, %v743
        %v745 = vand.u32 %v744, 4294901760
        %v746 = vsub.f32 %v744, %v745
        %v747 = vand.u32 %v746, 4294901760
        %748 = vmatpush1.msra.mxu0 %v747
        %749 = vmatprep.subr.mxu0 0.0
        %v750 = vand.u32 %v554, 4294901760
        %v751 = vsub.f32 %v554, %v750
        %v752 = vand.u32 %v751, 4294901760
        %v753 = vsub.f32 %v751, %v752
        %v754 = vand.u32 %v753, 4294901760
        %755 = vmatpush1.msra.mxu0 %v754
        %756 = vmatprep.subr.mxu0 0.0
        %v757 = vand.u32 %v555, 4294901760
        %v758 = vsub.f32 %v555, %v757
        %v759 = vand.u32 %v758, 4294901760
        %v760 = vsub.f32 %v758, %v759
        %v761 = vand.u32 %v760, 4294901760
        %762 = vmatpush1.msra.mxu0 %v761
        %763 = vmatprep.subr.mxu0 0.0
        %v764 = vand.u32 %v556, 4294901760
        %v765 = vsub.f32 %v556, %v764
        %v766 = vand.u32 %v765, 4294901760
        %v767 = vsub.f32 %v765, %v766
        %v768 = vand.u32 %v767, 4294901760
        %769 = vmatpush1.msra.mxu0 %v768
        %770 = vmatprep.subr.mxu0 0.0
        %v771 = vand.u32 %v557, 4294901760
        %v772 = vsub.f32 %v557, %v771
        %v773 = vand.u32 %v772, 4294901760
        %v774 = vsub.f32 %v772, %v773
        %v775 = vand.u32 %v774, 4294901760
        %776 = vmatpush1.msra.mxu0 %v775
        %777 = vmatprep.subr.mxu0 0.0
        %v778 = vand.u32 %v558, 4294901760
        %v779 = vsub.f32 %v558, %v778
        %v780 = vand.u32 %v779, 4294901760
        %v781 = vsub.f32 %v779, %v780
        %v782 = vand.u32 %v781, 4294901760
        %783 = vmatpush1.msra.mxu0 %v782
        %784 = vmatprep.subr.mxu0 0.0
        %v785 = vand.u32 %v559, 4294901760
        %v786 = vsub.f32 %v559, %v785
        %v787 = vand.u32 %v786, 4294901760
        %v788 = vsub.f32 %v786, %v787
        %v789 = vand.u32 %v788, 4294901760
        %790 = vmatpush1.msra.mxu0 %v789
        %791 = vmatprep.subr.mxu0 0.0
        %v792 = vand.u32 %v560, 4294901760
        %v793 = vsub.f32 %v560, %v792
        %v794 = vand.u32 %v793, 4294901760
        %v795 = vsub.f32 %v793, %v794
        %v796 = vand.u32 %v795, 4294901760
        %797 = vmatpush1.msra.mxu0 %v796
        %798 = vmatprep.subr.mxu0 0.0
        %v799 = vand.u32 %v561, 4294901760
        %v800 = vsub.f32 %v561, %v799
        %v801 = vand.u32 %v800, 4294901760
        %v802 = vsub.f32 %v800, %v801
        %v803 = vand.u32 %v802, 4294901760
        %804 = vmatpush1.msra.mxu0 %v803
        %805 = vmatprep.subr.mxu0 0.0
        %v806 = vand.u32 %v562, 4294901760
        %v807 = vsub.f32 %v562, %v806
        %v808 = vand.u32 %v807, 4294901760
        %v809 = vsub.f32 %v807, %v808
        %v810 = vand.u32 %v809, 4294901760
        %811 = vmatpush1.msra.mxu0 %v810
        %812 = vmatprep.subr.mxu0 0.0
        %v813 = vand.u32 %v563, 4294901760
        %v814 = vsub.f32 %v563, %v813
        %v815 = vand.u32 %v814, 4294901760
        %v816 = vsub.f32 %v814, %v815
        %v817 = vand.u32 %v816, 4294901760
        %818 = vmatpush1.msra.mxu0 %v817
        %819 = vmatprep.subr.mxu0 0.0
        %v820 = vand.u32 %v564, 4294901760
        %v821 = vsub.f32 %v564, %v820
        %v822 = vand.u32 %v821, 4294901760
        %v823 = vsub.f32 %v821, %v822
        %v824 = vand.u32 %v823, 4294901760
        %825 = vmatpush1.msra.mxu0 %v824
        %826 = vmatprep.subr.mxu0 0.0
        %v827 = vand.u32 %v565, 4294901760
        %v828 = vsub.f32 %v565, %v827
        %v829 = vand.u32 %v828, 4294901760
        %v830 = vsub.f32 %v828, %v829
        %v831 = vand.u32 %v830, 4294901760
        %832 = vmatpush1.msra.mxu0 %v831
        %833 = vmatprep.subr.mxu0 0.0
        %v834 = vand.u32 %v566, 4294901760
        %v835 = vsub.f32 %v566, %v834
        %v836 = vand.u32 %v835, 4294901760
        %v837 = vsub.f32 %v835, %v836
        %v838 = vand.u32 %v837, 4294901760
        %839 = vmatpush1.msra.mxu0 %v838
        %840 = vmatprep.subr.mxu0 0.0
        %v841 = vand.u32 %v567, 4294901760
        %v842 = vsub.f32 %v567, %v841
        %v843 = vand.u32 %v842, 4294901760
        %v844 = vsub.f32 %v842, %v843
        %v845 = vand.u32 %v844, 4294901760
        %846 = vmatpush1.msra.mxu0 %v845
        %847 = vmatprep.subr.mxu0 0.0
        %v848 = vand.u32 %v568, 4294901760
        %v849 = vsub.f32 %v568, %v848
        %v850 = vand.u32 %v849, 4294901760
        %v851 = vsub.f32 %v849, %v850
        %v852 = vand.u32 %v851, 4294901760
        %853 = vmatpush1.msra.mxu0 %v852
        %854 = vmatprep.subr.mxu0 0.0
        %v855 = vand.u32 %v569, 4294901760
        %v856 = vsub.f32 %v569, %v855
        %v857 = vand.u32 %v856, 4294901760
        %v858 = vsub.f32 %v856, %v857
        %v859 = vand.u32 %v858, 4294901760
        %860 = vmatpush1.msra.mxu0 %v859
        %861 = vmatprep.subr.mxu0 0.0
        %v862 = vand.u32 %v570, 4294901760
        %v863 = vsub.f32 %v570, %v862
        %v864 = vand.u32 %v863, 4294901760
        %v865 = vsub.f32 %v863, %v864
        %v866 = vand.u32 %v865, 4294901760
        %867 = vmatpush1.msra.mxu0 %v866
        %868 = vmatprep.subr.mxu0 0.0
        %v869 = vand.u32 %v571, 4294901760
        %v870 = vsub.f32 %v571, %v869
        %v871 = vand.u32 %v870, 4294901760
        %v872 = vsub.f32 %v870, %v871
        %v873 = vand.u32 %v872, 4294901760
        %874 = vmatpush1.msra.mxu0 %v873
        %875 = vmatprep.subr.mxu0 0.0
        %v876 = vand.u32 %v572, 4294901760
        %v877 = vsub.f32 %v572, %v876
        %v878 = vand.u32 %v877, 4294901760
        %v879 = vsub.f32 %v877, %v878
        %v880 = vand.u32 %v879, 4294901760
        %881 = vmatpush1.msra.mxu0 %v880
        %882 = vmatprep.subr.mxu0 0.0
        %v883 = vand.u32 %v573, 4294901760
        %v884 = vsub.f32 %v573, %v883
        %v885 = vand.u32 %v884, 4294901760
        %v886 = vsub.f32 %v884, %v885
        %v887 = vand.u32 %v886, 4294901760
        %888 = vmatpush1.msra.mxu0 %v887
        %889 = vmatprep.subr.mxu0 0.0
        %v890 = vand.u32 %v574, 4294901760
        %v891 = vsub.f32 %v574, %v890
        %v892 = vand.u32 %v891, 4294901760
        %v893 = vsub.f32 %v891, %v892
        %v894 = vand.u32 %v893, 4294901760
        %895 = vmatpush1.msra.mxu0 %v894
        %896 = vmatprep.subr.mxu0 0.0
        %v897 = vand.u32 %v575, 4294901760
        %v898 = vsub.f32 %v575, %v897
        %v899 = vand.u32 %v898, 4294901760
        %v900 = vsub.f32 %v898, %v899
        %v901 = vand.u32 %v900, 4294901760
        %902 = vmatpush1.msra.mxu0 %v901
        %903 = vmatprep.subr.mxu0 0.0
        %v904 = vand.u32 %v576, 4294901760
        %v905 = vsub.f32 %v576, %v904
        %v906 = vand.u32 %v905, 4294901760
        %v907 = vsub.f32 %v905, %v906
        %v908 = vand.u32 %v907, 4294901760
        %909 = vmatpush1.msra.mxu0 %v908
        %910 = vmatprep.subr.mxu0 0.0
        %v911 = vand.u32 %v577, 4294901760
        %v912 = vsub.f32 %v577, %v911
        %v913 = vand.u32 %v912, 4294901760
        %v914 = vsub.f32 %v912, %v913
        %v915 = vand.u32 %v914, 4294901760
        %916 = vmatpush1.msra.mxu0 %v915
        %917 = vmatprep.subr.mxu0 0.0
        %v918 = vand.u32 %v578, 4294901760
        %v919 = vsub.f32 %v578, %v918
        %v920 = vand.u32 %v919, 4294901760
        %v921 = vsub.f32 %v919, %v920
        %v922 = vand.u32 %v921, 4294901760
        %923 = vmatpush1.msra.mxu0 %v922
        %924 = vmatprep.subr.mxu0 0.0
        %v925 = vand.u32 %v579, 4294901760
        %v926 = vsub.f32 %v579, %v925
        %v927 = vand.u32 %v926, 4294901760
        %v928 = vsub.f32 %v926, %v927
        %v929 = vand.u32 %v928, 4294901760
        %930 = vmatpush1.msra.mxu0 %v929
        %931 = vmatprep.subr.mxu0 0.0
        %v932 = vand.u32 %v580, 4294901760
        %v933 = vsub.f32 %v580, %v932
        %v934 = vand.u32 %v933, 4294901760
        %v935 = vsub.f32 %v933, %v934
        %v936 = vand.u32 %v935, 4294901760
        %937 = vmatpush1.msra.mxu0 %v936
        %938 = vmatprep.subr.mxu0 0.0
        %v939 = vand.u32 %v581, 4294901760
        %v940 = vsub.f32 %v581, %v939
        %v941 = vand.u32 %v940, 4294901760
        %v942 = vsub.f32 %v940, %v941
        %v943 = vand.u32 %v942, 4294901760
        %944 = vmatpush1.msra.mxu0 %v943
        %945 = vmatprep.subr.mxu0 0.0
        %v946 = vand.u32 %v582, 4294901760
        %v947 = vsub.f32 %v582, %v946
        %v948 = vand.u32 %v947, 4294901760
        %v949 = vsub.f32 %v947, %v948
        %v950 = vand.u32 %v949, 4294901760
        %951 = vmatpush1.msra.mxu0 %v950
        %952 = vmatprep.subr.mxu0 0.0
        %v953 = vand.u32 %v583, 4294901760
        %v954 = vsub.f32 %v583, %v953
        %v955 = vand.u32 %v954, 4294901760
        %v956 = vsub.f32 %v954, %v955
        %v957 = vand.u32 %v956, 4294901760
        %958 = vmatpush1.msra.mxu0 %v957
        %959 = vmatprep.subr.mxu0 0.0
        %v960 = vand.u32 %v584, 4294901760
        %v961 = vsub.f32 %v584, %v960
        %v962 = vand.u32 %v961, 4294901760
        %v963 = vsub.f32 %v961, %v962
        %v964 = vand.u32 %v963, 4294901760
        %965 = vmatpush1.msra.mxu0 %v964
        %v966 = vand.u32 %v546, 4294901760
        %967 = vmatprep.mubr.f32.mxu0 %v966
        %v968 = vand.u32 %v545, 4294901760
        %969 = vmatmul.mubr.f32.gmra.mrb[0].mxu0 %v968
        %v970 = vpop.f32.mrb[0].mxu0
        %v971 = vadd.f32 %v694, %v970
        %v972 = vpop.f32.mrb[0].mxu0
        %v973 = vand.u32 %v548, 4294901760
        %974 = vmatprep.mubr.f32.mxu0 %v973
        %v975 = vand.u32 %v547, 4294901760
        %976 = vmatmul.mubr.f32.gmra.mrb[0].mxu0 %v975
        %v977 = vpop.f32.mrb[0].mxu0
        %v978 = vadd.f32 %v709, %v977
        %v979 = vpop.f32.mrb[0].mxu0
        %v980 = vand.u32 %v550, 4294901760
        %981 = vmatprep.mubr.f32.mxu0 %v980
        %v982 = vand.u32 %v549, 4294901760
        %983 = vmatmul.mubr.f32.gmra.mrb[0].mxu0 %v982
        %v984 = vpop.f32.mrb[0].mxu0
        %v985 = vadd.f32 %v724, %v984
        %v986 = vpop.f32.mrb[0].mxu0
        %v987 = vand.u32 %v552, 4294901760
        %988 = vmatprep.mubr.f32.mxu0 %v987
        %v989 = vand.u32 %v551, 4294901760
        %990 = vmatmul.mubr.f32.gmra.mrb[0].mxu0 %v989
        %v991 = vpop.f32.mrb[0].mxu0
        %v992 = vadd.f32 %v739, %v991
        %v993 = vpop.f32.mrb[0].mxu0
        %994 = vdwg.mxu0
        %995 = vmatprep.subr.mxu0 0.0
        %v996 = vand.u32 %v553, 4294901760
        %v997 = vsub.f32 %v553, %v996
        %998 = vmatpush1.msra.mxu0 %v997
        %999 = vmatprep.subr.mxu0 0.0
        %v1000 = vand.u32 %v554, 4294901760
        %v1001 = vsub.f32 %v554, %v1000
        %1002 = vmatpush1.msra.mxu0 %v1001
        %1003 = vmatprep.subr.mxu0 0.0
        %v1004 = vand.u32 %v555, 4294901760
        %v1005 = vsub.f32 %v555, %v1004
        %1006 = vmatpush1.msra.mxu0 %v1005
        %1007 = vmatprep.subr.mxu0 0.0
        %v1008 = vand.u32 %v556, 4294901760
        %v1009 = vsub.f32 %v556, %v1008
        %1010 = vmatpush1.msra.mxu0 %v1009
        %1011 = vmatprep.subr.mxu0 0.0
        %v1012 = vand.u32 %v557, 4294901760
        %v1013 = vsub.f32 %v557, %v1012
        %1014 = vmatpush1.msra.mxu0 %v1013
        %1015 = vmatprep.subr.mxu0 0.0
        %v1016 = vand.u32 %v558, 4294901760
        %v1017 = vsub.f32 %v558, %v1016
        %1018 = vmatpush1.msra.mxu0 %v1017
        %1019 = vmatprep.subr.mxu0 0.0
        %v1020 = vand.u32 %v559, 4294901760
        %v1021 = vsub.f32 %v559, %v1020
        %1022 = vmatpush1.msra.mxu0 %v1021
        %1023 = vmatprep.subr.mxu0 0.0
        %v1024 = vand.u32 %v560, 4294901760
        %v1025 = vsub.f32 %v560, %v1024
        %1026 = vmatpush1.msra.mxu0 %v1025
        %1027 = vmatprep.subr.mxu0 0.0
        %v1028 = vand.u32 %v561, 4294901760
        %v1029 = vsub.f32 %v561, %v1028
        %1030 = vmatpush1.msra.mxu0 %v1029
        %1031 = vmatprep.subr.mxu0 0.0
        %v1032 = vand.u32 %v562, 4294901760
        %v1033 = vsub.f32 %v562, %v1032
        %1034 = vmatpush1.msra.mxu0 %v1033
        %1035 = vmatprep.subr.mxu0 0.0
        %v1036 = vand.u32 %v563, 4294901760
        %v1037 = vsub.f32 %v563, %v1036
        %1038 = vmatpush1.msra.mxu0 %v1037
        %1039 = vmatprep.subr.mxu0 0.0
        %v1040 = vand.u32 %v564, 4294901760
        %v1041 = vsub.f32 %v564, %v1040
        %1042 = vmatpush1.msra.mxu0 %v1041
        %1043 = vmatprep.subr.mxu0 0.0
        %v1044 = vand.u32 %v565, 4294901760
        %v1045 = vsub.f32 %v565, %v1044
        %1046 = vmatpush1.msra.mxu0 %v1045
        %1047 = vmatprep.subr.mxu0 0.0
        %v1048 = vand.u32 %v566, 4294901760
        %v1049 = vsub.f32 %v566, %v1048
        %1050 = vmatpush1.msra.mxu0 %v1049
        %1051 = vmatprep.subr.mxu0 0.0
        %v1052 = vand.u32 %v567, 4294901760
        %v1053 = vsub.f32 %v567, %v1052
        %1054 = vmatpush1.msra.mxu0 %v1053
        %1055 = vmatprep.subr.mxu0 0.0
        %v1056 = vand.u32 %v568, 4294901760
        %v1057 = vsub.f32 %v568, %v1056
        %1058 = vmatpush1.msra.mxu0 %v1057
        %1059 = vmatprep.subr.mxu0 0.0
        %v1060 = vand.u32 %v569, 4294901760
        %v1061 = vsub.f32 %v569, %v1060
        %1062 = vmatpush1.msra.mxu0 %v1061
        %1063 = vmatprep.subr.mxu0 0.0
        %v1064 = vand.u32 %v570, 4294901760
        %v1065 = vsub.f32 %v570, %v1064
        %1066 = vmatpush1.msra.mxu0 %v1065
        %1067 = vmatprep.subr.mxu0 0.0
        %v1068 = vand.u32 %v571, 4294901760
        %v1069 = vsub.f32 %v571, %v1068
        %1070 = vmatpush1.msra.mxu0 %v1069
        %1071 = vmatprep.subr.mxu0 0.0
        %v1072 = vand.u32 %v572, 4294901760
        %v1073 = vsub.f32 %v572, %v1072
        %1074 = vmatpush1.msra.mxu0 %v1073
        %1075 = vmatprep.subr.mxu0 0.0
        %v1076 = vand.u32 %v573, 4294901760
        %v1077 = vsub.f32 %v573, %v1076
        %1078 = vmatpush1.msra.mxu0 %v1077
        %1079 = vmatprep.subr.mxu0 0.0
        %v1080 = vand.u32 %v574, 4294901760
        %v1081 = vsub.f32 %v574, %v1080
        %1082 = vmatpush1.msra.mxu0 %v1081
        %1083 = vmatprep.subr.mxu0 0.0
        %v1084 = vand.u32 %v575, 4294901760
        %v1085 = vsub.f32 %v575, %v1084
        %1086 = vmatpush1.msra.mxu0 %v1085
        %1087 = vmatprep.subr.mxu0 0.0
        %v1088 = vand.u32 %v576, 4294901760
        %v1089 = vsub.f32 %v576, %v1088
        %1090 = vmatpush1.msra.mxu0 %v1089
        %1091 = vmatprep.subr.mxu0 0.0
        %v1092 = vand.u32 %v577, 4294901760
        %v1093 = vsub.f32 %v577, %v1092
        %1094 = vmatpush1.msra.mxu0 %v1093
        %1095 = vmatprep.subr.mxu0 0.0
        %v1096 = vand.u32 %v578, 4294901760
        %v1097 = vsub.f32 %v578, %v1096
        %1098 = vmatpush1.msra.mxu0 %v1097
        %1099 = vmatprep.subr.mxu0 0.0
        %v1100 = vand.u32 %v579, 4294901760
        %v1101 = vsub.f32 %v579, %v1100
        %1102 = vmatpush1.msra.mxu0 %v1101
        %1103 = vmatprep.subr.mxu0 0.0
        %v1104 = vand.u32 %v580, 4294901760
        %v1105 = vsub.f32 %v580, %v1104
        %1106 = vmatpush1.msra.mxu0 %v1105
        %1107 = vmatprep.subr.mxu0 0.0
        %v1108 = vand.u32 %v581, 4294901760
        %v1109 = vsub.f32 %v581, %v1108
        %1110 = vmatpush1.msra.mxu0 %v1109
        %1111 = vmatprep.subr.mxu0 0.0
        %v1112 = vand.u32 %v582, 4294901760
        %v1113 = vsub.f32 %v582, %v1112
        %1114 = vmatpush1.msra.mxu0 %v1113
        %1115 = vmatprep.subr.mxu0 0.0
        %v1116 = vand.u32 %v583, 4294901760
        %v1117 = vsub.f32 %v583, %v1116
        %1118 = vmatpush1.msra.mxu0 %v1117
        %1119 = vmatprep.subr.mxu0 0.0
        %v1120 = vand.u32 %v584, 4294901760
        %v1121 = vsub.f32 %v584, %v1120
        %1122 = vmatpush1.msra.mxu0 %v1121
        %v1123 = vand.u32 %v546, 4294901760
        %v1124 = vsub.f32 %v546, %v1123
        %1125 = vmatprep.mubr.f32.mxu0 %v1124
        %v1126 = vand.u32 %v545, 4294901760
        %v1127 = vsub.f32 %v545, %v1126
        %1128 = vmatmul.mubr.f32.gmra.mrb[0].mxu0 %v1127
        %v1129 = vpop.f32.mrb[0].mxu0
        %v1130 = vadd.f32 %v971, %v1129
        %v1131 = vpop.f32.mrb[0].mxu0
        %v1132 = vand.u32 %v548, 4294901760
        %v1133 = vsub.f32 %v548, %v1132
        %1134 = vmatprep.mubr.f32.mxu0 %v1133
        %v1135 = vand.u32 %v547, 4294901760
        %v1136 = vsub.f32 %v547, %v1135
        %1137 = vmatmul.mubr.f32.gmra.mrb[0].mxu0 %v1136
        %v1138 = vpop.f32.mrb[0].mxu0
        %v1139 = vadd.f32 %v978, %v1138
        %v1140 = vpop.f32.mrb[0].mxu0
        %v1141 = vand.u32 %v550, 4294901760
        %v1142 = vsub.f32 %v550, %v1141
        %1143 = vmatprep.mubr.f32.mxu0 %v1142
        %v1144 = vand.u32 %v549, 4294901760
        %v1145 = vsub.f32 %v549, %v1144
        %1146 = vmatmul.mubr.f32.gmra.mrb[0].mxu0 %v1145
        %v1147 = vpop.f32.mrb[0].mxu0
        %v1148 = vadd.f32 %v985, %v1147
        %v1149 = vpop.f32.mrb[0].mxu0
        %v1150 = vand.u32 %v552, 4294901760
        %v1151 = vsub.f32 %v552, %v1150
        %1152 = vmatprep.mubr.f32.mxu0 %v1151
        %v1153 = vand.u32 %v551, 4294901760
        %v1154 = vsub.f32 %v551, %v1153
        %1155 = vmatmul.mubr.f32.gmra.mrb[0].mxu0 %v1154
        %v1156 = vpop.f32.mrb[0].mxu0
        %v1157 = vadd.f32 %v992, %v1156
        %v1158 = vpop.f32.mrb[0].mxu0
        %1159 = vdwg.mxu0
        %1160 = vmatprep.subr.mxu0 0.0
        %v1161 = vand.u32 %v553, 4294901760
        %1162 = vmatpush1.msra.mxu0 %v1161
        %1163 = vmatprep.subr.mxu0 0.0
        %v1164 = vand.u32 %v554, 4294901760
        %1165 = vmatpush1.msra.mxu0 %v1164
        %1166 = vmatprep.subr.mxu0 0.0
        %v1167 = vand.u32 %v555, 4294901760
        %1168 = vmatpush1.msra.mxu0 %v1167
        %1169 = vmatprep.subr.mxu0 0.0
        %v1170 = vand.u32 %v556, 4294901760
        %1171 = vmatpush1.msra.mxu0 %v1170
        %1172 = vmatprep.subr.mxu0 0.0
        %v1173 = vand.u32 %v557, 4294901760
        %1174 = vmatpush1.msra.mxu0 %v1173
        %1175 = vmatprep.subr.mxu0 0.0
        %v1176 = vand.u32 %v558, 4294901760
        %1177 = vmatpush1.msra.mxu0 %v1176
        %1178 = vmatprep.subr.mxu0 0.0
        %v1179 = vand.u32 %v559, 4294901760
        %1180 = vmatpush1.msra.mxu0 %v1179
        %1181 = vmatprep.subr.mxu0 0.0
        %v1182 = vand.u32 %v560, 4294901760
        %1183 = vmatpush1.msra.mxu0 %v1182
        %1184 = vmatprep.subr.mxu0 0.0
        %v1185 = vand.u32 %v561, 4294901760
        %1186 = vmatpush1.msra.mxu0 %v1185
        %1187 = vmatprep.subr.mxu0 0.0
        %v1188 = vand.u32 %v562, 4294901760
        %1189 = vmatpush1.msra.mxu0 %v1188
        %1190 = vmatprep.subr.mxu0 0.0
        %v1191 = vand.u32 %v563, 4294901760
        %1192 = vmatpush1.msra.mxu0 %v1191
        %1193 = vmatprep.subr.mxu0 0.0
        %v1194 = vand.u32 %v564, 4294901760
        %1195 = vmatpush1.msra.mxu0 %v1194
        %1196 = vmatprep.subr.mxu0 0.0
        %v1197 = vand.u32 %v565, 4294901760
        %1198 = vmatpush1.msra.mxu0 %v1197
        %1199 = vmatprep.subr.mxu0 0.0
        %v1200 = vand.u32 %v566, 4294901760
        %1201 = vmatpush1.msra.mxu0 %v1200
        %1202 = vmatprep.subr.mxu0 0.0
        %v1203 = vand.u32 %v567, 4294901760
        %1204 = vmatpush1.msra.mxu0 %v1203
        %1205 = vmatprep.subr.mxu0 0.0
        %v1206 = vand.u32 %v568, 4294901760
        %1207 = vmatpush1.msra.mxu0 %v1206
        %1208 = vmatprep.subr.mxu0 0.0
        %v1209 = vand.u32 %v569, 4294901760
        %1210 = vmatpush1.msra.mxu0 %v1209
        %1211 = vmatprep.subr.mxu0 0.0
        %v1212 = vand.u32 %v570, 4294901760
        %1213 = vmatpush1.msra.mxu0 %v1212
        %1214 = vmatprep.subr.mxu0 0.0
        %v1215 = vand.u32 %v571, 4294901760
        %1216 = vmatpush1.msra.mxu0 %v1215
        %1217 = vmatprep.subr.mxu0 0.0
        %v1218 = vand.u32 %v572, 4294901760
        %1219 = vmatpush1.msra.mxu0 %v1218
        %1220 = vmatprep.subr.mxu0 0.0
        %v1221 = vand.u32 %v573, 4294901760
        %1222 = vmatpush1.msra.mxu0 %v1221
        %1223 = vmatprep.subr.mxu0 0.0
        %v1224 = vand.u32 %v574, 4294901760
        %1225 = vmatpush1.msra.mxu0 %v1224
        %1226 = vmatprep.subr.mxu0 0.0
        %v1227 = vand.u32 %v575, 4294901760
        %1228 = vmatpush1.msra.mxu0 %v1227
        %1229 = vmatprep.subr.mxu0 0.0
        %v1230 = vand.u32 %v576, 4294901760
        %1231 = vmatpush1.msra.mxu0 %v1230
        %1232 = vmatprep.subr.mxu0 0.0
        %v1233 = vand.u32 %v577, 4294901760
        %1234 = vmatpush1.msra.mxu0 %v1233
        %1235 = vmatprep.subr.mxu0 0.0
        %v1236 = vand.u32 %v578, 4294901760
        %1237 = vmatpush1.msra.mxu0 %v1236
        %1238 = vmatprep.subr.mxu0 0.0
        %v1239 = vand.u32 %v579, 4294901760
        %1240 = vmatpush1.msra.mxu0 %v1239
        %1241 = vmatprep.subr.mxu0 0.0
        %v1242 = vand.u32 %v580, 4294901760
        %1243 = vmatpush1.msra.mxu0 %v1242
        %1244 = vmatprep.subr.mxu0 0.0
        %v1245 = vand.u32 %v581, 4294901760
        %1246 = vmatpush1.msra.mxu0 %v1245
        %1247 = vmatprep.subr.mxu0 0.0
        %v1248 = vand.u32 %v582, 4294901760
        %1249 = vmatpush1.msra.mxu0 %v1248
        %1250 = vmatprep.subr.mxu0 0.0
        %v1251 = vand.u32 %v583, 4294901760
        %1252 = vmatpush1.msra.mxu0 %v1251
        %1253 = vmatprep.subr.mxu0 0.0
        %v1254 = vand.u32 %v584, 4294901760
        %1255 = vmatpush1.msra.mxu0 %v1254
        %v1256 = vand.u32 %v546, 4294901760
        %v1257 = vsub.f32 %v546, %v1256
        %v1258 = vand.u32 %v1257, 4294901760
        %1259 = vmatprep.mubr.f32.mxu0 %v1258
        %v1260 = vand.u32 %v545, 4294901760
        %v1261 = vsub.f32 %v545, %v1260
        %v1262 = vand.u32 %v1261, 4294901760
        %1263 = vmatmul.mubr.f32.gmra.mrb[0].mxu0 %v1262
        %v1264 = vpop.f32.mrb[0].mxu0
        %v1265 = vadd.f32 %v1130, %v1264
        %v1266 = vpop.f32.mrb[0].mxu0
        %v1267 = vand.u32 %v548, 4294901760
        %v1268 = vsub.f32 %v548, %v1267
        %v1269 = vand.u32 %v1268, 4294901760
        %1270 = vmatprep.mubr.f32.mxu0 %v1269
        %v1271 = vand.u32 %v547, 4294901760
        %v1272 = vsub.f32 %v547, %v1271
        %v1273 = vand.u32 %v1272, 4294901760
        %1274 = vmatmul.mubr.f32.gmra.mrb[0].mxu0 %v1273
        %v1275 = vpop.f32.mrb[0].mxu0
        %v1276 = vadd.f32 %v1139, %v1275
        %v1277 = vpop.f32.mrb[0].mxu0
        %v1278 = vand.u32 %v550, 4294901760
        %v1279 = vsub.f32 %v550, %v1278
        %v1280 = vand.u32 %v1279, 4294901760
        %1281 = vmatprep.mubr.f32.mxu0 %v1280
        %v1282 = vand.u32 %v549, 4294901760
        %v1283 = vsub.f32 %v549, %v1282
        %v1284 = vand.u32 %v1283, 4294901760
        %1285 = vmatmul.mubr.f32.gmra.mrb[0].mxu0 %v1284
        %v1286 = vpop.f32.mrb[0].mxu0
        %v1287 = vadd.f32 %v1148, %v1286
        %v1288 = vpop.f32.mrb[0].mxu0
        %v1289 = vand.u32 %v552, 4294901760
        %v1290 = vsub.f32 %v552, %v1289
        %v1291 = vand.u32 %v1290, 4294901760
        %1292 = vmatprep.mubr.f32.mxu0 %v1291
        %v1293 = vand.u32 %v551, 4294901760
        %v1294 = vsub.f32 %v551, %v1293
        %v1295 = vand.u32 %v1294, 4294901760
        %1296 = vmatmul.mubr.f32.gmra.mrb[0].mxu0 %v1295
        %v1297 = vpop.f32.mrb[0].mxu0
        %v1298 = vadd.f32 %v1157, %v1297
        %v1299 = vpop.f32.mrb[0].mxu0
        %1300 = vdwg.mxu0
        %1301 = vmatprep.subr.mxu0 0.0
        %v1302 = vand.u32 %v553, 4294901760
        %v1303 = vsub.f32 %v553, %v1302
        %v1304 = vand.u32 %v1303, 4294901760
        %1305 = vmatpush1.msra.mxu0 %v1304
        %1306 = vmatprep.subr.mxu0 0.0
        %v1307 = vand.u32 %v554, 4294901760
        %v1308 = vsub.f32 %v554, %v1307
        %v1309 = vand.u32 %v1308, 4294901760
        %1310 = vmatpush1.msra.mxu0 %v1309
        %1311 = vmatprep.subr.mxu0 0.0
        %v1312 = vand.u32 %v555, 4294901760
        %v1313 = vsub.f32 %v555, %v1312
        %v1314 = vand.u32 %v1313, 4294901760
        %1315 = vmatpush1.msra.mxu0 %v1314
        %1316 = vmatprep.subr.mxu0 0.0
        %v1317 = vand.u32 %v556, 4294901760
        %v1318 = vsub.f32 %v556, %v1317
        %v1319 = vand.u32 %v1318, 4294901760
        %1320 = vmatpush1.msra.mxu0 %v1319
        %1321 = vmatprep.subr.mxu0 0.0
        %v1322 = vand.u32 %v557, 4294901760
        %v1323 = vsub.f32 %v557, %v1322
        %v1324 = vand.u32 %v1323, 4294901760
        %1325 = vmatpush1.msra.mxu0 %v1324
        %1326 = vmatprep.subr.mxu0 0.0
        %v1327 = vand.u32 %v558, 4294901760
        %v1328 = vsub.f32 %v558, %v1327
        %v1329 = vand.u32 %v1328, 4294901760
        %1330 = vmatpush1.msra.mxu0 %v1329
        %1331 = vmatprep.subr.mxu0 0.0
        %v1332 = vand.u32 %v559, 4294901760
        %v1333 = vsub.f32 %v559, %v1332
        %v1334 = vand.u32 %v1333, 4294901760
        %1335 = vmatpush1.msra.mxu0 %v1334
        %1336 = vmatprep.subr.mxu0 0.0
        %v1337 = vand.u32 %v560, 4294901760
        %v1338 = vsub.f32 %v560, %v1337
        %v1339 = vand.u32 %v1338, 4294901760
        %1340 = vmatpush1.msra.mxu0 %v1339
        %1341 = vmatprep.subr.mxu0 0.0
        %v1342 = vand.u32 %v561, 4294901760
        %v1343 = vsub.f32 %v561, %v1342
        %v1344 = vand.u32 %v1343, 4294901760
        %1345 = vmatpush1.msra.mxu0 %v1344
        %1346 = vmatprep.subr.mxu0 0.0
        %v1347 = vand.u32 %v562, 4294901760
        %v1348 = vsub.f32 %v562, %v1347
        %v1349 = vand.u32 %v1348, 4294901760
        %1350 = vmatpush1.msra.mxu0 %v1349
        %1351 = vmatprep.subr.mxu0 0.0
        %v1352 = vand.u32 %v563, 4294901760
        %v1353 = vsub.f32 %v563, %v1352
        %v1354 = vand.u32 %v1353, 4294901760
        %1355 = vmatpush1.msra.mxu0 %v1354
        %1356 = vmatprep.subr.mxu0 0.0
        %v1357 = vand.u32 %v564, 4294901760
        %v1358 = vsub.f32 %v564, %v1357
        %v1359 = vand.u32 %v1358, 4294901760
        %1360 = vmatpush1.msra.mxu0 %v1359
        %1361 = vmatprep.subr.mxu0 0.0
        %v1362 = vand.u32 %v565, 4294901760
        %v1363 = vsub.f32 %v565, %v1362
        %v1364 = vand.u32 %v1363, 4294901760
        %1365 = vmatpush1.msra.mxu0 %v1364
        %1366 = vmatprep.subr.mxu0 0.0
        %v1367 = vand.u32 %v566, 4294901760
        %v1368 = vsub.f32 %v566, %v1367
        %v1369 = vand.u32 %v1368, 4294901760
        %1370 = vmatpush1.msra.mxu0 %v1369
        %1371 = vmatprep.subr.mxu0 0.0
        %v1372 = vand.u32 %v567, 4294901760
        %v1373 = vsub.f32 %v567, %v1372
        %v1374 = vand.u32 %v1373, 4294901760
        %1375 = vmatpush1.msra.mxu0 %v1374
        %1376 = vmatprep.subr.mxu0 0.0
        %v1377 = vand.u32 %v568, 4294901760
        %v1378 = vsub.f32 %v568, %v1377
        %v1379 = vand.u32 %v1378, 4294901760
        %1380 = vmatpush1.msra.mxu0 %v1379
        %1381 = vmatprep.subr.mxu0 0.0
        %v1382 = vand.u32 %v569, 4294901760
        %v1383 = vsub.f32 %v569, %v1382
        %v1384 = vand.u32 %v1383, 4294901760
        %1385 = vmatpush1.msra.mxu0 %v1384
        %1386 = vmatprep.subr.mxu0 0.0
        %v1387 = vand.u32 %v570, 4294901760
        %v1388 = vsub.f32 %v570, %v1387
        %v1389 = vand.u32 %v1388, 4294901760
        %1390 = vmatpush1.msra.mxu0 %v1389
        %1391 = vmatprep.subr.mxu0 0.0
        %v1392 = vand.u32 %v571, 4294901760
        %v1393 = vsub.f32 %v571, %v1392
        %v1394 = vand.u32 %v1393, 4294901760
        %1395 = vmatpush1.msra.mxu0 %v1394
        %1396 = vmatprep.subr.mxu0 0.0
        %v1397 = vand.u32 %v572, 4294901760
        %v1398 = vsub.f32 %v572, %v1397
        %v1399 = vand.u32 %v1398, 4294901760
        %1400 = vmatpush1.msra.mxu0 %v1399
        %1401 = vmatprep.subr.mxu0 0.0
        %v1402 = vand.u32 %v573, 4294901760
        %v1403 = vsub.f32 %v573, %v1402
        %v1404 = vand.u32 %v1403, 4294901760
        %1405 = vmatpush1.msra.mxu0 %v1404
        %1406 = vmatprep.subr.mxu0 0.0
        %v1407 = vand.u32 %v574, 4294901760
        %v1408 = vsub.f32 %v574, %v1407
        %v1409 = vand.u32 %v1408, 4294901760
        %1410 = vmatpush1.msra.mxu0 %v1409
        %1411 = vmatprep.subr.mxu0 0.0
        %v1412 = vand.u32 %v575, 4294901760
        %v1413 = vsub.f32 %v575, %v1412
        %v1414 = vand.u32 %v1413, 4294901760
        %1415 = vmatpush1.msra.mxu0 %v1414
        %1416 = vmatprep.subr.mxu0 0.0
        %v1417 = vand.u32 %v576, 4294901760
        %v1418 = vsub.f32 %v576, %v1417
        %v1419 = vand.u32 %v1418, 4294901760
        %1420 = vmatpush1.msra.mxu0 %v1419
        %1421 = vmatprep.subr.mxu0 0.0
        %v1422 = vand.u32 %v577, 4294901760
        %v1423 = vsub.f32 %v577, %v1422
        %v1424 = vand.u32 %v1423, 4294901760
        %1425 = vmatpush1.msra.mxu0 %v1424
        %1426 = vmatprep.subr.mxu0 0.0
        %v1427 = vand.u32 %v578, 4294901760
        %v1428 = vsub.f32 %v578, %v1427
        %v1429 = vand.u32 %v1428, 4294901760
        %1430 = vmatpush1.msra.mxu0 %v1429
        %1431 = vmatprep.subr.mxu0 0.0
        %v1432 = vand.u32 %v579, 4294901760
        %v1433 = vsub.f32 %v579, %v1432
        %v1434 = vand.u32 %v1433, 4294901760
        %1435 = vmatpush1.msra.mxu0 %v1434
        %1436 = vmatprep.subr.mxu0 0.0
        %v1437 = vand.u32 %v580, 4294901760
        %v1438 = vsub.f32 %v580, %v1437
        %v1439 = vand.u32 %v1438, 4294901760
        %1440 = vmatpush1.msra.mxu0 %v1439
        %1441 = vmatprep.subr.mxu0 0.0
        %v1442 = vand.u32 %v581, 4294901760
        %v1443 = vsub.f32 %v581, %v1442
        %v1444 = vand.u32 %v1443, 4294901760
        %1445 = vmatpush1.msra.mxu0 %v1444
        %1446 = vmatprep.subr.mxu0 0.0
        %v1447 = vand.u32 %v582, 4294901760
        %v1448 = vsub.f32 %v582, %v1447
        %v1449 = vand.u32 %v1448, 4294901760
        %1450 = vmatpush1.msra.mxu0 %v1449
        %1451 = vmatprep.subr.mxu0 0.0
        %v1452 = vand.u32 %v583, 4294901760
        %v1453 = vsub.f32 %v583, %v1452
        %v1454 = vand.u32 %v1453, 4294901760
        %1455 = vmatpush1.msra.mxu0 %v1454
        %1456 = vmatprep.subr.mxu0 0.0
        %v1457 = vand.u32 %v584, 4294901760
        %v1458 = vsub.f32 %v584, %v1457
        %v1459 = vand.u32 %v1458, 4294901760
        %1460 = vmatpush1.msra.mxu0 %v1459
        %v1461 = vand.u32 %v546, 4294901760
        %1462 = vmatprep.mubr.f32.mxu0 %v1461
        %v1463 = vand.u32 %v545, 4294901760
        %1464 = vmatmul.mubr.f32.gmra.mrb[0].mxu0 %v1463
        %v1465 = vpop.f32.mrb[0].mxu0
        %v1466 = vadd.f32 %v1265, %v1465
        %v1467 = vpop.f32.mrb[0].mxu0
        %v1468 = vand.u32 %v548, 4294901760
        %1469 = vmatprep.mubr.f32.mxu0 %v1468
        %v1470 = vand.u32 %v547, 4294901760
        %1471 = vmatmul.mubr.f32.gmra.mrb[0].mxu0 %v1470
        %v1472 = vpop.f32.mrb[0].mxu0
        %v1473 = vadd.f32 %v1276, %v1472
        %v1474 = vpop.f32.mrb[0].mxu0
        %v1475 = vand.u32 %v550, 4294901760
        %1476 = vmatprep.mubr.f32.mxu0 %v1475
        %v1477 = vand.u32 %v549, 4294901760
        %1478 = vmatmul.mubr.f32.gmra.mrb[0].mxu0 %v1477
        %v1479 = vpop.f32.mrb[0].mxu0
        %v1480 = vadd.f32 %v1287, %v1479
        %v1481 = vpop.f32.mrb[0].mxu0
        %v1482 = vand.u32 %v552, 4294901760
        %1483 = vmatprep.mubr.f32.mxu0 %v1482
        %v1484 = vand.u32 %v551, 4294901760
        %1485 = vmatmul.mubr.f32.gmra.mrb[0].mxu0 %v1484
        %v1486 = vpop.f32.mrb[0].mxu0
        %v1487 = vadd.f32 %v1298, %v1486
        %v1488 = vpop.f32.mrb[0].mxu0
        %1489 = vdwg.mxu0
        %1490 = vmatprep.subr.mxu0 0.0
        %v1491 = vand.u32 %v553, 4294901760
        %1492 = vmatpush1.msra.mxu0 %v1491
        %1493 = vmatprep.subr.mxu0 0.0
        %v1494 = vand.u32 %v554, 4294901760
        %1495 = vmatpush1.msra.mxu0 %v1494
        %1496 = vmatprep.subr.mxu0 0.0
        %v1497 = vand.u32 %v555, 4294901760
        %1498 = vmatpush1.msra.mxu0 %v1497
        %1499 = vmatprep.subr.mxu0 0.0
        %v1500 = vand.u32 %v556, 4294901760
        %1501 = vmatpush1.msra.mxu0 %v1500
        %1502 = vmatprep.subr.mxu0 0.0
        %v1503 = vand.u32 %v557, 4294901760
        %1504 = vmatpush1.msra.mxu0 %v1503
        %1505 = vmatprep.subr.mxu0 0.0
        %v1506 = vand.u32 %v558, 4294901760
        %1507 = vmatpush1.msra.mxu0 %v1506
        %1508 = vmatprep.subr.mxu0 0.0
        %v1509 = vand.u32 %v559, 4294901760
        %1510 = vmatpush1.msra.mxu0 %v1509
        %1511 = vmatprep.subr.mxu0 0.0
        %v1512 = vand.u32 %v560, 4294901760
        %1513 = vmatpush1.msra.mxu0 %v1512
        %1514 = vmatprep.subr.mxu0 0.0
        %v1515 = vand.u32 %v561, 4294901760
        %1516 = vmatpush1.msra.mxu0 %v1515
        %1517 = vmatprep.subr.mxu0 0.0
        %v1518 = vand.u32 %v562, 4294901760
        %1519 = vmatpush1.msra.mxu0 %v1518
        %1520 = vmatprep.subr.mxu0 0.0
        %v1521 = vand.u32 %v563, 4294901760
        %1522 = vmatpush1.msra.mxu0 %v1521
        %1523 = vmatprep.subr.mxu0 0.0
        %v1524 = vand.u32 %v564, 4294901760
        %1525 = vmatpush1.msra.mxu0 %v1524
        %1526 = vmatprep.subr.mxu0 0.0
        %v1527 = vand.u32 %v565, 4294901760
        %1528 = vmatpush1.msra.mxu0 %v1527
        %1529 = vmatprep.subr.mxu0 0.0
        %v1530 = vand.u32 %v566, 4294901760
        %1531 = vmatpush1.msra.mxu0 %v1530
        %1532 = vmatprep.subr.mxu0 0.0
        %v1533 = vand.u32 %v567, 4294901760
        %1534 = vmatpush1.msra.mxu0 %v1533
        %1535 = vmatprep.subr.mxu0 0.0
        %v1536 = vand.u32 %v568, 4294901760
        %1537 = vmatpush1.msra.mxu0 %v1536
        %1538 = vmatprep.subr.mxu0 0.0
        %v1539 = vand.u32 %v569, 4294901760
        %1540 = vmatpush1.msra.mxu0 %v1539
        %1541 = vmatprep.subr.mxu0 0.0
        %v1542 = vand.u32 %v570, 4294901760
        %1543 = vmatpush1.msra.mxu0 %v1542
        %1544 = vmatprep.subr.mxu0 0.0
        %v1545 = vand.u32 %v571, 4294901760
        %1546 = vmatpush1.msra.mxu0 %v1545
        %1547 = vmatprep.subr.mxu0 0.0
        %v1548 = vand.u32 %v572, 4294901760
        %1549 = vmatpush1.msra.mxu0 %v1548
        %1550 = vmatprep.subr.mxu0 0.0
        %v1551 = vand.u32 %v573, 4294901760
        %1552 = vmatpush1.msra.mxu0 %v1551
        %1553 = vmatprep.subr.mxu0 0.0
        %v1554 = vand.u32 %v574, 4294901760
        %1555 = vmatpush1.msra.mxu0 %v1554
        %1556 = vmatprep.subr.mxu0 0.0
        %v1557 = vand.u32 %v575, 4294901760
        %1558 = vmatpush1.msra.mxu0 %v1557
        %1559 = vmatprep.subr.mxu0 0.0
        %v1560 = vand.u32 %v576, 4294901760
        %1561 = vmatpush1.msra.mxu0 %v1560
        %1562 = vmatprep.subr.mxu0 0.0
        %v1563 = vand.u32 %v577, 4294901760
        %1564 = vmatpush1.msra.mxu0 %v1563
        %1565 = vmatprep.subr.mxu0 0.0
        %v1566 = vand.u32 %v578, 4294901760
        %1567 = vmatpush1.msra.mxu0 %v1566
        %1568 = vmatprep.subr.mxu0 0.0
        %v1569 = vand.u32 %v579, 4294901760
        %1570 = vmatpush1.msra.mxu0 %v1569
        %1571 = vmatprep.subr.mxu0 0.0
        %v1572 = vand.u32 %v580, 4294901760
        %1573 = vmatpush1.msra.mxu0 %v1572
        %1574 = vmatprep.subr.mxu0 0.0
        %v1575 = vand.u32 %v581, 4294901760
        %1576 = vmatpush1.msra.mxu0 %v1575
        %1577 = vmatprep.subr.mxu0 0.0
        %v1578 = vand.u32 %v582, 4294901760
        %1579 = vmatpush1.msra.mxu0 %v1578
        %1580 = vmatprep.subr.mxu0 0.0
        %v1581 = vand.u32 %v583, 4294901760
        %1582 = vmatpush1.msra.mxu0 %v1581
        %1583 = vmatprep.subr.mxu0 0.0
        %v1584 = vand.u32 %v584, 4294901760
        %1585 = vmatpush1.msra.mxu0 %v1584
        %v1586 = vand.u32 %v546, 4294901760
        %1587 = vmatprep.mubr.f32.mxu0 %v1586
        %v1588 = vand.u32 %v545, 4294901760
        %1589 = vmatmul.mubr.f32.gmra.mrb[0].mxu0 %v1588
        %v1590 = vpop.f32.mrb[0].mxu0
        %v1591 = vadd.f32 %v1466, %v1590
        %v1592 = vpop.f32.mrb[0].mxu0
        %v1593 = vand.u32 %v548, 4294901760
        %1594 = vmatprep.mubr.f32.mxu0 %v1593
        %v1595 = vand.u32 %v547, 4294901760
        %1596 = vmatmul.mubr.f32.gmra.mrb[0].mxu0 %v1595
        %v1597 = vpop.f32.mrb[0].mxu0
        %v1598 = vadd.f32 %v1473, %v1597
        %v1599 = vpop.f32.mrb[0].mxu0
        %v1600 = vand.u32 %v550, 4294901760
        %1601 = vmatprep.mubr.f32.mxu0 %v1600
        %v1602 = vand.u32 %v549, 4294901760
        %1603 = vmatmul.mubr.f32.gmra.mrb[0].mxu0 %v1602
        %v1604 = vpop.f32.mrb[0].mxu0
        %v1605 = vadd.f32 %v1480, %v1604
        %v1606 = vpop.f32.mrb[0].mxu0
        %v1607 = vand.u32 %v552, 4294901760
        %1608 = vmatprep.mubr.f32.mxu0 %v1607
        %v1609 = vand.u32 %v551, 4294901760
        %1610 = vmatmul.mubr.f32.gmra.mrb[0].mxu0 %v1609
        %v1611 = vpop.f32.mrb[0].mxu0
        %v1612 = vadd.f32 %v1487, %v1611
        %v1613 = vpop.f32.mrb[0].mxu0
        %1614 = vdwg.mxu0
        %v1615 = vld [vmem:[%s2] sm:$0x1]
        %v1616 = vld [vmem:[%s3] sm:$0x1]
        %v1617 = vld [vmem:[%s4] sm:$0x1]
        %vm1618 = vcmp.gt.f32.partialorder %v1591, 0.0
        %vm1619 = vcmp.gt.f32.partialorder %v1598, 0.0
        %vm1620 = vcmp.gt.f32.partialorder %v1605, 0.0
        %vm1621 = vcmp.gt.f32.partialorder %v1612, 0.0
        %v1623 = vlaneseq
        %v1624 = vshrl.u32 %v1623, 7
        %v1625 = vsub.s32 0, %v1624
        %v1626 = vrot.slane %v1615, %v1625
        %v1628 = vmul.f32 %v1626, %v1591
        %v1629 = vmul.f32 %v1626, %v1598
        %v1630 = vmul.f32 %v1626, %v1605
        %v1631 = vmul.f32 %v1626, %v1612
        %v1632 = vsel %vm1618, %v1591, %v1628
        %v1633 = vsel %vm1619, %v1598, %v1629
        %v1634 = vsel %vm1620, %v1605, %v1630
        %v1635 = vsel %vm1621, %v1612, %v1631
        %vm1636 = vcmask 523264
        %v1637 = vsel %vm1636, %v1632, 0.0
        %1638 = vadd.xlane.f32.xlu0 %v1637
        %v1639 = vpop.xlane.xlu0 %1638
        %v1640 = vsel %vm1636, %v1633, 0.0
        %1641 = vadd.xlane.f32.xlu0 %v1640
        %v1642 = vpop.xlane.xlu0 %1641
        %v1643 = vsel %vm1636, %v1634, 0.0
        %1644 = vadd.xlane.f32.xlu0 %v1643
        %v1645 = vpop.xlane.xlu0 %1644
        %v1646 = vsel %vm1636, %v1635, 0.0
        %1647 = vadd.xlane.f32.xlu0 %v1646
        %v1648 = vpop.xlane.xlu0 %1647
        %v1649 = vmul.f32 %v1632, %v1632
        %v1650 = vmul.f32 %v1633, %v1633
        %v1651 = vmul.f32 %v1634, %v1634
        %v1652 = vmul.f32 %v1635, %v1635
        %v1653 = vsel %vm1636, %v1649, 0.0
        %1654 = vadd.xlane.f32.xlu0 %v1653
        %v1655 = vpop.xlane.xlu0 %1654
        %v1656 = vsel %vm1636, %v1650, 0.0
        %1657 = vadd.xlane.f32.xlu0 %v1656
        %v1658 = vpop.xlane.xlu0 %1657
        %v1659 = vsel %vm1636, %v1651, 0.0
        %1660 = vadd.xlane.f32.xlu0 %v1659
        %v1661 = vpop.xlane.xlu0 %1660
        %v1662 = vsel %vm1636, %v1652, 0.0
        %1663 = vadd.xlane.f32.xlu0 %v1662
        %v1664 = vpop.xlane.xlu0 %1663
        %v1665 = vrot.slane %v1639, 7
        %v1666 = vrot.slane %v1642, 7
        %v1667 = vrot.slane %v1645, 7
        %v1668 = vrot.slane %v1648, 7
        %vm1669 = vcmp.lt.s32.totalorder %v521, 1
        %v1670 = vsel %vm1669, %v1667, %v1668
        %v1671 = vsel %vm1669, %v1666, %v1667
        %v1672 = vsel %vm1669, %v1665, %v1666
        %v1673 = vsel %vm1669, %v1668, %v1665
        %vm1674 = vcmp.ge.s32.totalorder %v521, 1
        %vm1675 = vcmp.ge.s32.totalorder %v522, 1
        %vm1676 = vcmp.ge.s32.totalorder %v523, 1
        %vm1677 = vcmp.ge.s32.totalorder %v524, 1
        %v1678 = vsel %vm1674, %v1673, 0.0
        %v1679 = vsel %vm1675, %v1672, 0.0
        %v1680 = vsel %vm1676, %v1671, 0.0
        %v1681 = vsel %vm1677, %v1670, 0.0
        %v1682 = vadd.f32 %v1639, %v1678
        %v1683 = vadd.f32 %v1642, %v1679
        %v1684 = vadd.f32 %v1645, %v1680
        %v1685 = vadd.f32 %v1648, %v1681
        %v1686 = vrot.slane %v1682, 6
        %v1687 = vrot.slane %v1683, 6
        %v1688 = vrot.slane %v1684, 6
        %v1689 = vrot.slane %v1685, 6
        %vm1690 = vcmp.lt.s32.totalorder %v521, 2
        %v1691 = vsel %vm1690, %v1688, %v1689
        %v1692 = vsel %vm1690, %v1687, %v1688
        %v1693 = vsel %vm1690, %v1686, %v1687
        %v1694 = vsel %vm1690, %v1689, %v1686
        %vm1695 = vcmp.ge.s32.totalorder %v521, 2
        %vm1696 = vcmp.ge.s32.totalorder %v522, 2
        %vm1697 = vcmp.ge.s32.totalorder %v523, 2
        %vm1698 = vcmp.ge.s32.totalorder %v524, 2
        %v1699 = vsel %vm1695, %v1694, 0.0
        %v1700 = vsel %vm1696, %v1693, 0.0
        %v1701 = vsel %vm1697, %v1692, 0.0
        %v1702 = vsel %vm1698, %v1691, 0.0
        %v1703 = vadd.f32 %v1682, %v1699
        %v1704 = vadd.f32 %v1683, %v1700
        %v1705 = vadd.f32 %v1684, %v1701
        %v1706 = vadd.f32 %v1685, %v1702
        %v1707 = vrot.slane %v1703, 4
        %v1708 = vrot.slane %v1704, 4
        %v1709 = vrot.slane %v1705, 4
        %v1710 = vrot.slane %v1706, 4
        %vm1711 = vcmp.lt.s32.totalorder %v521, 4
        %v1712 = vsel %vm1711, %v1709, %v1710
        %v1713 = vsel %vm1711, %v1708, %v1709
        %v1714 = vsel %vm1711, %v1707, %v1708
        %v1715 = vsel %vm1711, %v1710, %v1707
        %vm1716 = vcmp.ge.s32.totalorder %v521, 4
        %vm1717 = vcmp.ge.s32.totalorder %v522, 4
        %vm1718 = vcmp.ge.s32.totalorder %v523, 4
        %vm1719 = vcmp.ge.s32.totalorder %v524, 4
        %v1720 = vsel %vm1716, %v1715, 0.0
        %v1721 = vsel %vm1717, %v1714, 0.0
        %v1722 = vsel %vm1718, %v1713, 0.0
        %v1723 = vsel %vm1719, %v1712, 0.0
        %v1724 = vadd.f32 %v1703, %v1720
        %v1725 = vadd.f32 %v1704, %v1721
        %v1726 = vadd.f32 %v1705, %v1722
        %v1727 = vadd.f32 %v1706, %v1723
        %vm1728 = vcmp.ge.s32.totalorder %v521, 8
        %vm1729 = vcmp.ge.s32.totalorder %v522, 8
        %vm1730 = vcmp.ge.s32.totalorder %v523, 8
        %vm1731 = vcmp.ge.s32.totalorder %v524, 8
        %v1732 = vsel %vm1728, %v1727, 0.0
        %v1733 = vsel %vm1729, %v1724, 0.0
        %v1734 = vsel %vm1730, %v1725, 0.0
        %v1735 = vsel %vm1731, %v1726, 0.0
        %v1736 = vadd.f32 %v1724, %v1732
        %v1737 = vadd.f32 %v1725, %v1733
        %v1738 = vadd.f32 %v1726, %v1734
        %v1739 = vadd.f32 %v1727, %v1735
        %vm1740 = vcmp.ge.s32.totalorder %v521, 16
        %vm1741 = vcmp.ge.s32.totalorder %v522, 16
        %vm1742 = vcmp.ge.s32.totalorder %v523, 16
        %vm1743 = vcmp.ge.s32.totalorder %v524, 16
        %v1744 = vsel %vm1740, %v1738, 0.0
        %v1745 = vsel %vm1741, %v1739, 0.0
        %v1746 = vsel %vm1742, %v1736, 0.0
        %v1747 = vsel %vm1743, %v1737, 0.0
        %v1748 = vadd.f32 %v1736, %v1744
        %v1749 = vadd.f32 %v1737, %v1745
        %v1750 = vadd.f32 %v1738, %v1746
        %v1751 = vadd.f32 %v1739, %v1747
        %v1752 = vrot.slane %v1655, 7
        %v1753 = vrot.slane %v1658, 7
        %v1754 = vrot.slane %v1661, 7
        %v1755 = vrot.slane %v1664, 7
        %v1756 = vsel %vm1669, %v1754, %v1755
        %v1757 = vsel %vm1669, %v1753, %v1754
        %v1758 = vsel %vm1669, %v1752, %v1753
        %v1759 = vsel %vm1669, %v1755, %v1752
        %v1760 = vsel %vm1674, %v1759, 0.0
        %v1761 = vsel %vm1675, %v1758, 0.0
        %v1762 = vsel %vm1676, %v1757, 0.0
        %v1763 = vsel %vm1677, %v1756, 0.0
        %v1764 = vadd.f32 %v1655, %v1760
        %v1765 = vadd.f32 %v1658, %v1761
        %v1766 = vadd.f32 %v1661, %v1762
        %v1767 = vadd.f32 %v1664, %v1763
        %v1768 = vrot.slane %v1764, 6
        %v1769 = vrot.slane %v1765, 6
        %v1770 = vrot.slane %v1766, 6
        %v1771 = vrot.slane %v1767, 6
        %v1772 = vsel %vm1690, %v1770, %v1771
        %v1773 = vsel %vm1690, %v1769, %v1770
        %v1774 = vsel %vm1690, %v1768, %v1769
        %v1775 = vsel %vm1690, %v1771, %v1768
        %v1776 = vsel %vm1695, %v1775, 0.0
        %v1777 = vsel %vm1696, %v1774, 0.0
        %v1778 = vsel %vm1697, %v1773, 0.0
        %v1779 = vsel %vm1698, %v1772, 0.0
        %v1780 = vadd.f32 %v1764, %v1776
        %v1781 = vadd.f32 %v1765, %v1777
        %v1782 = vadd.f32 %v1766, %v1778
        %v1783 = vadd.f32 %v1767, %v1779
        %v1784 = vrot.slane %v1780, 4
        %v1785 = vrot.slane %v1781, 4
        %v1786 = vrot.slane %v1782, 4
        %v1787 = vrot.slane %v1783, 4
        %v1788 = vsel %vm1711, %v1786, %v1787
        %v1789 = vsel %vm1711, %v1785, %v1786
        %v1790 = vsel %vm1711, %v1784, %v1785
        %v1791 = vsel %vm1711, %v1787, %v1784
        %v1792 = vsel %vm1716, %v1791, 0.0
        %v1793 = vsel %vm1717, %v1790, 0.0
        %v1794 = vsel %vm1718, %v1789, 0.0
        %v1795 = vsel %vm1719, %v1788, 0.0
        %v1796 = vadd.f32 %v1780, %v1792
        %v1797 = vadd.f32 %v1781, %v1793
        %v1798 = vadd.f32 %v1782, %v1794
        %v1799 = vadd.f32 %v1783, %v1795
        %v1800 = vsel %vm1728, %v1799, 0.0
        %v1801 = vsel %vm1729, %v1796, 0.0
        %v1802 = vsel %vm1730, %v1797, 0.0
        %v1803 = vsel %vm1731, %v1798, 0.0
        %v1804 = vadd.f32 %v1796, %v1800
        %v1805 = vadd.f32 %v1797, %v1801
        %v1806 = vadd.f32 %v1798, %v1802
        %v1807 = vadd.f32 %v1799, %v1803
        %v1808 = vsel %vm1740, %v1806, 0.0
        %v1809 = vsel %vm1741, %v1807, 0.0
        %v1810 = vsel %vm1742, %v1804, 0.0
        %v1811 = vsel %vm1743, %v1805, 0.0
        %v1812 = vadd.f32 %v1804, %v1808
        %v1813 = vadd.f32 %v1805, %v1809
        %v1814 = vadd.f32 %v1806, %v1810
        %v1815 = vadd.f32 %v1807, %v1811
        %v1816 = vmul.f32 %v1748, %v538
        %v1817 = vmul.f32 %v1749, %v540
        %v1818 = vmul.f32 %v1750, %v542
        %v1819 = vmul.f32 %v1751, %v544
        %v1820 = vmul.f32 %v1812, %v538
        %v1821 = vmul.f32 %v1813, %v540
        %v1822 = vmul.f32 %v1814, %v542
        %v1823 = vmul.f32 %v1815, %v544
        %v1824 = vmul.f32 %v1816, %v1816
        %v1825 = vmul.f32 %v1817, %v1817
        %v1826 = vmul.f32 %v1818, %v1818
        %v1827 = vmul.f32 %v1819, %v1819
        %v1828 = vsub.f32 %v1820, %v1824
        %v1829 = vsub.f32 %v1821, %v1825
        %v1830 = vsub.f32 %v1822, %v1826
        %v1831 = vsub.f32 %v1823, %v1827
        %v1832 = vmax.f32 %v1828, 0.0
        %v1833 = vmax.f32 %v1829, 0.0
        %v1834 = vmax.f32 %v1830, 0.0
        %v1835 = vmax.f32 %v1831, 0.0
        %v1836 = vadd.f32 %v1832, 1e-05
        %v1837 = vadd.f32 %v1833, 1e-05
        %v1838 = vadd.f32 %v1834, 1e-05
        %v1839 = vadd.f32 %v1835, 1e-05
        %v1840 = vrsqrt.pop %v1836
        %v1841 = vmul.f32 %v1836, %v1840
        %vm1842 = vcmp.eq.f32.partialorder %v1836, inf
        %v1843 = vsel %vm1842, %v1836, %v1841
        %vm1844 = vcmp.eq.f32.partialorder %v1836, 0.0
        %v1845 = vand.u32 %v1836, 2147483648
        %v1846 = vsel %vm1844, %v1845, %v1843
        %v1847 = vrsqrt.pop %v1837
        %v1848 = vmul.f32 %v1837, %v1847
        %vm1849 = vcmp.eq.f32.partialorder %v1837, inf
        %v1850 = vsel %vm1849, %v1837, %v1848
        %vm1851 = vcmp.eq.f32.partialorder %v1837, 0.0
        %v1852 = vand.u32 %v1837, 2147483648
        %v1853 = vsel %vm1851, %v1852, %v1850
        %v1854 = vrsqrt.pop %v1838
        %v1855 = vmul.f32 %v1838, %v1854
        %vm1856 = vcmp.eq.f32.partialorder %v1838, inf
        %v1857 = vsel %vm1856, %v1838, %v1855
        %vm1858 = vcmp.eq.f32.partialorder %v1838, 0.0
        %v1859 = vand.u32 %v1838, 2147483648
        %v1860 = vsel %vm1858, %v1859, %v1857
        %v1861 = vrsqrt.pop %v1839
        %v1862 = vmul.f32 %v1839, %v1861
        %vm1863 = vcmp.eq.f32.partialorder %v1839, inf
        %v1864 = vsel %vm1863, %v1839, %v1862
        %vm1865 = vcmp.eq.f32.partialorder %v1839, 0.0
        %v1866 = vand.u32 %v1839, 2147483648
        %v1867 = vsel %vm1865, %v1866, %v1864
        %1869 = vset.pattern.permute.xlu0 0
        %1870 = vperm.xlu0 %1869, %v1816
        %v1871 = vpop.permute.xlu0 %1870
        %1874 = vset.pattern.permute.xlu0 0
        %1875 = vperm.xlu0 %1874, %v1817
        %v1876 = vpop.permute.xlu0 %1875
        %1879 = vset.pattern.permute.xlu0 0
        %1880 = vperm.xlu0 %1879, %v1818
        %v1881 = vpop.permute.xlu0 %1880
        %1884 = vset.pattern.permute.xlu0 0
        %1885 = vperm.xlu0 %1884, %v1819
        %v1886 = vpop.permute.xlu0 %1885
        %v1888 = vsub.f32 %v1632, %v1871
        %v1889 = vsub.f32 %v1633, %v1876
        %v1890 = vsub.f32 %v1634, %v1881
        %v1891 = vsub.f32 %v1635, %v1886
        %1893 = vset.pattern.permute.xlu0 0
        %1894 = vperm.xlu0 %1893, %v1846
        %v1895 = vpop.permute.xlu0 %1894
        %1898 = vset.pattern.permute.xlu0 0
        %1899 = vperm.xlu0 %1898, %v1853
        %v1900 = vpop.permute.xlu0 %1899
        %1903 = vset.pattern.permute.xlu0 0
        %1904 = vperm.xlu0 %1903, %v1860
        %v1905 = vpop.permute.xlu0 %1904
        %1908 = vset.pattern.permute.xlu0 0
        %1909 = vperm.xlu0 %1908, %v1867
        %v1910 = vpop.permute.xlu0 %1909
        %v1912 = vrcp.pop %v1895
        %v1913 = vmul.f32 %v1888, %v1912
        %v1914 = vrcp.pop %v1900
        %v1915 = vmul.f32 %v1889, %v1914
        %v1916 = vrcp.pop %v1905
        %v1917 = vmul.f32 %v1890, %v1916
        %v1918 = vrcp.pop %v1910
        %v1919 = vmul.f32 %v1891, %v1918
        %v1921 = vlaneseq
        %v1922 = vshrl.u32 %v1921, 7
        %v1923 = vsub.s32 0, %v1922
        %v1924 = vrot.slane %v1616, %v1923
        %v1926 = vmul.f32 %v1913, %v1924
        %v1927 = vmul.f32 %v1915, %v1924
        %v1928 = vmul.f32 %v1917, %v1924
        %v1929 = vmul.f32 %v1919, %v1924
        %v1931 = vlaneseq
        %v1932 = vshrl.u32 %v1931, 7
        %v1933 = vsub.s32 0, %v1932
        %v1934 = vrot.slane %v1617, %v1933
        %v1936 = vadd.f32 %v1926, %v1934
        %v1937 = vadd.f32 %v1927, %v1934
        %v1938 = vadd.f32 %v1928, %v1934
        %v1939 = vadd.f32 %v1929, %v1934
        %v1940 = vld [vmem:[%s5] sm:$0x1]
        %v1942 = vlaneseq
        %v1943 = vshrl.u32 %v1942, 7
        %v1944 = vsub.s32 0, %v1943
        %v1945 = vrot.slane %v1940, %v1944
        %v1947 = vmul.f32 %v1945, %v1936
        %v1948 = vmul.f32 %v1945, %v1937
        %v1949 = vmul.f32 %v1945, %v1938
        %v1950 = vmul.f32 %v1945, %v1939
        %v1951 = vrot.slane %v1947, 4
        %v1952 = vrot.slane %v1948, 4
        %v1953 = vrot.slane %v1949, 4
        %v1954 = vrot.slane %v1950, 4
        %v1955 = vsel %vm1711, %v1953, %v1954
        %v1956 = vsel %vm1711, %v1952, %v1953
        %v1957 = vsel %vm1711, %v1951, %v1952
        %v1958 = vsel %vm1711, %v1954, %v1951
        %v1959 = vsel %vm1716, %v1958, 0.0
        %v1960 = vsel %vm1717, %v1957, 0.0
        %v1961 = vsel %vm1718, %v1956, 0.0
        %v1962 = vsel %vm1719, %v1955, 0.0
        %v1963 = vrot.slane %v1947, 5
        %v1964 = vrot.slane %v1948, 5
        %v1965 = vrot.slane %v1949, 5
        %v1966 = vrot.slane %v1950, 5
        %vm1967 = vcmp.lt.s32.totalorder %v521, 3
        %v1968 = vsel %vm1967, %v1965, %v1966
        %v1969 = vsel %vm1967, %v1964, %v1965
        %v1970 = vsel %vm1967, %v1963, %v1964
        %v1971 = vsel %vm1967, %v1966, %v1963
        %vm1972 = vcmp.ge.s32.totalorder %v521, 3
        %vm1973 = vcmp.ge.s32.totalorder %v522, 3
        %vm1974 = vcmp.ge.s32.totalorder %v523, 3
        %vm1975 = vcmp.ge.s32.totalorder %v524, 3
        %v1976 = vsel %vm1972, %v1971, 0.0
        %v1977 = vsel %vm1973, %v1970, 0.0
        %v1978 = vsel %vm1974, %v1969, 0.0
        %v1979 = vsel %vm1975, %v1968, 0.0
        %v1980 = vrot.slane %v1947, 6
        %v1981 = vrot.slane %v1948, 6
        %v1982 = vrot.slane %v1949, 6
        %v1983 = vrot.slane %v1950, 6
        %v1984 = vsel %vm1690, %v1982, %v1983
        %v1985 = vsel %vm1690, %v1981, %v1982
        %v1986 = vsel %vm1690, %v1980, %v1981
        %v1987 = vsel %vm1690, %v1983, %v1980
        %v1988 = vsel %vm1695, %v1987, 0.0
        %v1989 = vsel %vm1696, %v1986, 0.0
        %v1990 = vsel %vm1697, %v1985, 0.0
        %v1991 = vsel %vm1698, %v1984, 0.0
        %v1992 = vrot.slane %v1947, 7
        %v1993 = vrot.slane %v1948, 7
        %v1994 = vrot.slane %v1949, 7
        %v1995 = vrot.slane %v1950, 7
        %v1996 = vsel %vm1669, %v1994, %v1995
        %v1997 = vsel %vm1669, %v1993, %v1994
        %v1998 = vsel %vm1669, %v1992, %v1993
        %v1999 = vsel %vm1669, %v1995, %v1992
        %v2000 = vsel %vm1674, %v1999, 0.0
        %v2001 = vsel %vm1675, %v1998, 0.0
        %v2002 = vsel %vm1676, %v1997, 0.0
        %v2003 = vsel %vm1677, %v1996, 0.0
        %2008 = vrot.lane.b32.xlu0 %v1976, 64
        %v2009 = vpop.permute.xlu0 %2008
        %2010 = vrot.lane.b32.xlu0 %v1977, 64
        %v2011 = vpop.permute.xlu0 %2010
        %2012 = vrot.lane.b32.xlu0 %v1978, 64
        %v2013 = vpop.permute.xlu0 %2012
        %2014 = vrot.lane.b32.xlu0 %v1979, 64
        %v2015 = vpop.permute.xlu0 %2014
        %2024 = vrot.lane.b32.xlu0 %v2000, 64
        %v2025 = vpop.permute.xlu0 %2024
        %2026 = vrot.lane.b32.xlu0 %v2001, 64
        %v2027 = vpop.permute.xlu0 %2026
        %2028 = vrot.lane.b32.xlu0 %v2002, 64
        %v2029 = vpop.permute.xlu0 %2028
        %2030 = vrot.lane.b32.xlu0 %v2003, 64
        %v2031 = vpop.permute.xlu0 %2030
        %v2036 = vsel %vm1636, %v1959, %v2009
        %v2037 = vsel %vm1636, %v1960, %v2011
        %v2038 = vsel %vm1636, %v1961, %v2013
        %v2039 = vsel %vm1636, %v1962, %v2015
        %v2040 = vsel %vm1636, %v1988, %v2025
        %v2041 = vsel %vm1636, %v1989, %v2027
        %v2042 = vsel %vm1636, %v1990, %v2029
        %v2043 = vsel %vm1636, %v1991, %v2031
        %v2044 = vld [vmem:[%s6] sm:$0xff]
        %v2045 = vld [vmem:[%s6 + $0x8] sm:$0xff]
        %v2046 = vld [vmem:[%s6 + $0x10] sm:$0xff]
        %v2047 = vld [vmem:[%s6 + $0x18] sm:$0xff]
        %v2048 = vld [vmem:[%s6 + $0x20] sm:$0xff]
        %v2049 = vld [vmem:[%s6 + $0x28] sm:$0xff]
        %v2050 = vld [vmem:[%s6 + $0x30] sm:$0xff]
        %v2051 = vld [vmem:[%s6 + $0x38] sm:$0xff]
        %v2052 = vld [vmem:[%s6 + $0x40] sm:$0xff]
        %v2053 = vld [vmem:[%s6 + $0x48] sm:$0xff]
        %v2054 = vld [vmem:[%s6 + $0x50] sm:$0xff]
        %v2055 = vld [vmem:[%s6 + $0x58] sm:$0xff]
        %v2056 = vld [vmem:[%s6 + $0x60] sm:$0xff]
        %v2057 = vld [vmem:[%s6 + $0x68] sm:$0xff]
        %v2058 = vld [vmem:[%s6 + $0x70] sm:$0xff]
        %v2059 = vld [vmem:[%s6 + $0x78] sm:$0xff]
        %v2060 = vld [vmem:[%s6 + $0x80] sm:$0xff]
        %v2061 = vld [vmem:[%s6 + $0x88] sm:$0xff]
        %v2062 = vld [vmem:[%s6 + $0x90] sm:$0xff]
        %v2063 = vld [vmem:[%s6 + $0x98] sm:$0xff]
        %v2064 = vld [vmem:[%s6 + $0xa0] sm:$0xff]
        %v2065 = vld [vmem:[%s6 + $0xa8] sm:$0xff]
        %v2066 = vld [vmem:[%s6 + $0xb0] sm:$0xff]
        %v2067 = vld [vmem:[%s6 + $0xb8] sm:$0xff]
        %v2068 = vld [vmem:[%s6 + $0xc0] sm:$0xff]
        %v2069 = vld [vmem:[%s6 + $0xc8] sm:$0xff]
        %v2070 = vld [vmem:[%s6 + $0xd0] sm:$0xff]
        %v2071 = vld [vmem:[%s6 + $0xd8] sm:$0xff]
        %v2072 = vld [vmem:[%s6 + $0xe0] sm:$0xff]
        %v2073 = vld [vmem:[%s6 + $0xe8] sm:$0xff]
        %v2074 = vld [vmem:[%s6 + $0xf0] sm:$0xff]
        %v2075 = vld [vmem:[%s6 + $0xf8] sm:$0xff]
        %v2076 = vld [vmem:[%s6 + $0x100] sm:$0xff]
        %v2077 = vld [vmem:[%s6 + $0x108] sm:$0xff]
        %v2078 = vld [vmem:[%s6 + $0x110] sm:$0xff]
        %v2079 = vld [vmem:[%s6 + $0x118] sm:$0xff]
        %v2080 = vld [vmem:[%s6 + $0x120] sm:$0xff]
        %v2081 = vld [vmem:[%s6 + $0x128] sm:$0xff]
        %v2082 = vld [vmem:[%s6 + $0x130] sm:$0xff]
        %v2083 = vld [vmem:[%s6 + $0x138] sm:$0xff]
        %v2085 = vsel %vm1636, %v1947, 0
        %v2088 = vsel %vm1636, %v1948, 0
        %v2091 = vsel %vm1636, %v1949, 0
        %v2094 = vsel %vm1636, %v1950, 0
        %2096 = vmatprep.subr.mxu0 0.0
        %v2097 = vand.u32 %v2044, 4294901760
        %2098 = vmatpush1.msra.mxu0 %v2097
        %2099 = vmatprep.subr.mxu0 0.0
        %v2100 = vand.u32 %v2045, 4294901760
        %2101 = vmatpush1.msra.mxu0 %v2100
        %2102 = vmatprep.subr.mxu0 0.0
        %v2103 = vand.u32 %v2046, 4294901760
        %2104 = vmatpush1.msra.mxu0 %v2103
        %2105 = vmatprep.subr.mxu0 0.0
        %v2106 = vand.u32 %v2047, 4294901760
        %2107 = vmatpush1.msra.mxu0 %v2106
        %2108 = vmatprep.subr.mxu0 0.0
        %v2109 = vand.u32 %v2048, 4294901760
        %2110 = vmatpush1.msra.mxu0 %v2109
        %2111 = vmatprep.subr.mxu0 0.0
        %v2112 = vand.u32 %v2049, 4294901760
        %2113 = vmatpush1.msra.mxu0 %v2112
        %2114 = vmatprep.subr.mxu0 0.0
        %v2115 = vand.u32 %v2050, 4294901760
        %2116 = vmatpush1.msra.mxu0 %v2115
        %2117 = vmatprep.subr.mxu0 0.0
        %v2118 = vand.u32 %v2051, 4294901760
        %2119 = vmatpush1.msra.mxu0 %v2118
        %2120 = vmatprep.subr.mxu0 0.0
        %v2121 = vand.u32 %v2052, 4294901760
        %2122 = vmatpush1.msra.mxu0 %v2121
        %2123 = vmatprep.subr.mxu0 0.0
        %v2124 = vand.u32 %v2053, 4294901760
        %2125 = vmatpush1.msra.mxu0 %v2124
        %2126 = vmatprep.subr.mxu0 0.0
        %v2127 = vand.u32 %v2054, 4294901760
        %2128 = vmatpush1.msra.mxu0 %v2127
        %2129 = vmatprep.subr.mxu0 0.0
        %v2130 = vand.u32 %v2055, 4294901760
        %2131 = vmatpush1.msra.mxu0 %v2130
        %2132 = vmatprep.subr.mxu0 0.0
        %v2133 = vand.u32 %v2056, 4294901760
        %2134 = vmatpush1.msra.mxu0 %v2133
        %2135 = vmatprep.subr.mxu0 0.0
        %v2136 = vand.u32 %v2057, 4294901760
        %2137 = vmatpush1.msra.mxu0 %v2136
        %2138 = vmatprep.subr.mxu0 0.0
        %v2139 = vand.u32 %v2058, 4294901760
        %2140 = vmatpush1.msra.mxu0 %v2139
        %2141 = vmatprep.subr.mxu0 0.0
        %v2142 = vand.u32 %v2059, 4294901760
        %2143 = vmatpush1.msra.mxu0 %v2142
        %2144 = vmatprep.subr.mxu0 0.0
        %v2145 = vand.u32 %v2060, 4294901760
        %2146 = vmatpush1.msra.mxu0 %v2145
        %2147 = vmatprep.subr.mxu0 0.0
        %v2148 = vand.u32 %v2061, 4294901760
        %2149 = vmatpush1.msra.mxu0 %v2148
        %2150 = vmatprep.subr.mxu0 0.0
        %v2151 = vand.u32 %v2062, 4294901760
        %2152 = vmatpush1.msra.mxu0 %v2151
        %2153 = vmatprep.subr.mxu0 0.0
        %v2154 = vand.u32 %v2063, 4294901760
        %2155 = vmatpush1.msra.mxu0 %v2154
        %2156 = vmatprep.subr.mxu0 0.0
        %v2157 = vand.u32 %v2064, 4294901760
        %2158 = vmatpush1.msra.mxu0 %v2157
        %2159 = vmatprep.subr.mxu0 0.0
        %v2160 = vand.u32 %v2065, 4294901760
        %2161 = vmatpush1.msra.mxu0 %v2160
        %2162 = vmatprep.subr.mxu0 0.0
        %v2163 = vand.u32 %v2066, 4294901760
        %2164 = vmatpush1.msra.mxu0 %v2163
        %2165 = vmatprep.subr.mxu0 0.0
        %v2166 = vand.u32 %v2067, 4294901760
        %2167 = vmatpush1.msra.mxu0 %v2166
        %2168 = vmatprep.subr.mxu0 0.0
        %v2169 = vand.u32 %v2068, 4294901760
        %2170 = vmatpush1.msra.mxu0 %v2169
        %2171 = vmatprep.subr.mxu0 0.0
        %v2172 = vand.u32 %v2069, 4294901760
        %2173 = vmatpush1.msra.mxu0 %v2172
        %2174 = vmatprep.subr.mxu0 0.0
        %v2175 = vand.u32 %v2070, 4294901760
        %2176 = vmatpush1.msra.mxu0 %v2175
        %2177 = vmatprep.subr.mxu0 0.0
        %v2178 = vand.u32 %v2071, 4294901760
        %2179 = vmatpush1.msra.mxu0 %v2178
        %2180 = vmatprep.subr.mxu0 0.0
        %v2181 = vand.u32 %v2072, 4294901760
        %2182 = vmatpush1.msra.mxu0 %v2181
        %2183 = vmatprep.subr.mxu0 0.0
        %v2184 = vand.u32 %v2073, 4294901760
        %2185 = vmatpush1.msra.mxu0 %v2184
        %2186 = vmatprep.subr.mxu0 0.0
        %v2187 = vand.u32 %v2074, 4294901760
        %2188 = vmatpush1.msra.mxu0 %v2187
        %2189 = vmatprep.subr.mxu0 0.0
        %v2190 = vand.u32 %v2075, 4294901760
        %2191 = vmatpush1.msra.mxu0 %v2190
        %v2192 = vand.u32 %v2040, 4294901760
        %v2193 = vsub.f32 %v2040, %v2192
        %v2194 = vand.u32 %v2193, 4294901760
        %v2195 = vsub.f32 %v2193, %v2194
        %v2196 = vand.u32 %v2195, 4294901760
        %2197 = vmatprep.mubr.f32.mxu0 %v2196
        %v2198 = vand.u32 %v2036, 4294901760
        %v2199 = vsub.f32 %v2036, %v2198
        %v2200 = vand.u32 %v2199, 4294901760
        %v2201 = vsub.f32 %v2199, %v2200
        %v2202 = vand.u32 %v2201, 4294901760
        %2203 = vmatmul.mubr.f32.gmra.mrb[0].mxu0 %v2202
        %v2204 = vpop.f32.mrb[0].mxu0
        %v2205 = vadd.f32 0.0, %v2204
        %v2206 = vpop.f32.mrb[0].mxu0
        %v2207 = vand.u32 %v2041, 4294901760
        %v2208 = vsub.f32 %v2041, %v2207
        %v2209 = vand.u32 %v2208, 4294901760
        %v2210 = vsub.f32 %v2208, %v2209
        %v2211 = vand.u32 %v2210, 4294901760
        %2212 = vmatprep.mubr.f32.mxu0 %v2211
        %v2213 = vand.u32 %v2037, 4294901760
        %v2214 = vsub.f32 %v2037, %v2213
        %v2215 = vand.u32 %v2214, 4294901760
        %v2216 = vsub.f32 %v2214, %v2215
        %v2217 = vand.u32 %v2216, 4294901760
        %2218 = vmatmul.mubr.f32.gmra.mrb[0].mxu0 %v2217
        %v2219 = vpop.f32.mrb[0].mxu0
        %v2220 = vadd.f32 0.0, %v2219
        %v2221 = vpop.f32.mrb[0].mxu0
        %v2222 = vand.u32 %v2042, 4294901760
        %v2223 = vsub.f32 %v2042, %v2222
        %v2224 = vand.u32 %v2223, 4294901760
        %v2225 = vsub.f32 %v2223, %v2224
        %v2226 = vand.u32 %v2225, 4294901760
        %2227 = vmatprep.mubr.f32.mxu0 %v2226
        %v2228 = vand.u32 %v2038, 4294901760
        %v2229 = vsub.f32 %v2038, %v2228
        %v2230 = vand.u32 %v2229, 4294901760
        %v2231 = vsub.f32 %v2229, %v2230
        %v2232 = vand.u32 %v2231, 4294901760
        %2233 = vmatmul.mubr.f32.gmra.mrb[0].mxu0 %v2232
        %v2234 = vpop.f32.mrb[0].mxu0
        %v2235 = vadd.f32 0.0, %v2234
        %v2236 = vpop.f32.mrb[0].mxu0
        %v2237 = vand.u32 %v2043, 4294901760
        %v2238 = vsub.f32 %v2043, %v2237
        %v2239 = vand.u32 %v2238, 4294901760
        %v2240 = vsub.f32 %v2238, %v2239
        %v2241 = vand.u32 %v2240, 4294901760
        %2242 = vmatprep.mubr.f32.mxu0 %v2241
        %v2243 = vand.u32 %v2039, 4294901760
        %v2244 = vsub.f32 %v2039, %v2243
        %v2245 = vand.u32 %v2244, 4294901760
        %v2246 = vsub.f32 %v2244, %v2245
        %v2247 = vand.u32 %v2246, 4294901760
        %2248 = vmatmul.mubr.f32.gmra.mrb[0].mxu0 %v2247
        %v2249 = vpop.f32.mrb[0].mxu0
        %v2250 = vadd.f32 0.0, %v2249
        %v2251 = vpop.f32.mrb[0].mxu0
        %2252 = vdwg.mxu0
        %2253 = vmatprep.subr.mxu0 0.0
        %v2254 = vand.u32 %v2044, 4294901760
        %v2255 = vsub.f32 %v2044, %v2254
        %v2256 = vand.u32 %v2255, 4294901760
        %v2257 = vsub.f32 %v2255, %v2256
        %v2258 = vand.u32 %v2257, 4294901760
        %2259 = vmatpush1.msra.mxu0 %v2258
        %2260 = vmatprep.subr.mxu0 0.0
        %v2261 = vand.u32 %v2045, 4294901760
        %v2262 = vsub.f32 %v2045, %v2261
        %v2263 = vand.u32 %v2262, 4294901760
        %v2264 = vsub.f32 %v2262, %v2263
        %v2265 = vand.u32 %v2264, 4294901760
        %2266 = vmatpush1.msra.mxu0 %v2265
        %2267 = vmatprep.subr.mxu0 0.0
        %v2268 = vand.u32 %v2046, 4294901760
        %v2269 = vsub.f32 %v2046, %v2268
        %v2270 = vand.u32 %v2269, 4294901760
        %v2271 = vsub.f32 %v2269, %v2270
        %v2272 = vand.u32 %v2271, 4294901760
        %2273 = vmatpush1.msra.mxu0 %v2272
        %2274 = vmatprep.subr.mxu0 0.0
        %v2275 = vand.u32 %v2047, 4294901760
        %v2276 = vsub.f32 %v2047, %v2275
        %v2277 = vand.u32 %v2276, 4294901760
        %v2278 = vsub.f32 %v2276, %v2277
        %v2279 = vand.u32 %v2278, 4294901760
        %2280 = vmatpush1.msra.mxu0 %v2279
        %2281 = vmatprep.subr.mxu0 0.0
        %v2282 = vand.u32 %v2048, 4294901760
        %v2283 = vsub.f32 %v2048, %v2282
        %v2284 = vand.u32 %v2283, 4294901760
        %v2285 = vsub.f32 %v2283, %v2284
        %v2286 = vand.u32 %v2285, 4294901760
        %2287 = vmatpush1.msra.mxu0 %v2286
        %2288 = vmatprep.subr.mxu0 0.0
        %v2289 = vand.u32 %v2049, 4294901760
        %v2290 = vsub.f32 %v2049, %v2289
        %v2291 = vand.u32 %v2290, 4294901760
        %v2292 = vsub.f32 %v2290, %v2291
        %v2293 = vand.u32 %v2292, 4294901760
        %2294 = vmatpush1.msra.mxu0 %v2293
        %2295 = vmatprep.subr.mxu0 0.0
        %v2296 = vand.u32 %v2050, 4294901760
        %v2297 = vsub.f32 %v2050, %v2296
        %v2298 = vand.u32 %v2297, 4294901760
        %v2299 = vsub.f32 %v2297, %v2298
        %v2300 = vand.u32 %v2299, 4294901760
        %2301 = vmatpush1.msra.mxu0 %v2300
        %2302 = vmatprep.subr.mxu0 0.0
        %v2303 = vand.u32 %v2051, 4294901760
        %v2304 = vsub.f32 %v2051, %v2303
        %v2305 = vand.u32 %v2304, 4294901760
        %v2306 = vsub.f32 %v2304, %v2305
        %v2307 = vand.u32 %v2306, 4294901760
        %2308 = vmatpush1.msra.mxu0 %v2307
        %2309 = vmatprep.subr.mxu0 0.0
        %v2310 = vand.u32 %v2052, 4294901760
        %v2311 = vsub.f32 %v2052, %v2310
        %v2312 = vand.u32 %v2311, 4294901760
        %v2313 = vsub.f32 %v2311, %v2312
        %v2314 = vand.u32 %v2313, 4294901760
        %2315 = vmatpush1.msra.mxu0 %v2314
        %2316 = vmatprep.subr.mxu0 0.0
        %v2317 = vand.u32 %v2053, 4294901760
        %v2318 = vsub.f32 %v2053, %v2317
        %v2319 = vand.u32 %v2318, 4294901760
        %v2320 = vsub.f32 %v2318, %v2319
        %v2321 = vand.u32 %v2320, 4294901760
        %2322 = vmatpush1.msra.mxu0 %v2321
        %2323 = vmatprep.subr.mxu0 0.0
        %v2324 = vand.u32 %v2054, 4294901760
        %v2325 = vsub.f32 %v2054, %v2324
        %v2326 = vand.u32 %v2325, 4294901760
        %v2327 = vsub.f32 %v2325, %v2326
        %v2328 = vand.u32 %v2327, 4294901760
        %2329 = vmatpush1.msra.mxu0 %v2328
        %2330 = vmatprep.subr.mxu0 0.0
        %v2331 = vand.u32 %v2055, 4294901760
        %v2332 = vsub.f32 %v2055, %v2331
        %v2333 = vand.u32 %v2332, 4294901760
        %v2334 = vsub.f32 %v2332, %v2333
        %v2335 = vand.u32 %v2334, 4294901760
        %2336 = vmatpush1.msra.mxu0 %v2335
        %2337 = vmatprep.subr.mxu0 0.0
        %v2338 = vand.u32 %v2056, 4294901760
        %v2339 = vsub.f32 %v2056, %v2338
        %v2340 = vand.u32 %v2339, 4294901760
        %v2341 = vsub.f32 %v2339, %v2340
        %v2342 = vand.u32 %v2341, 4294901760
        %2343 = vmatpush1.msra.mxu0 %v2342
        %2344 = vmatprep.subr.mxu0 0.0
        %v2345 = vand.u32 %v2057, 4294901760
        %v2346 = vsub.f32 %v2057, %v2345
        %v2347 = vand.u32 %v2346, 4294901760
        %v2348 = vsub.f32 %v2346, %v2347
        %v2349 = vand.u32 %v2348, 4294901760
        %2350 = vmatpush1.msra.mxu0 %v2349
        %2351 = vmatprep.subr.mxu0 0.0
        %v2352 = vand.u32 %v2058, 4294901760
        %v2353 = vsub.f32 %v2058, %v2352
        %v2354 = vand.u32 %v2353, 4294901760
        %v2355 = vsub.f32 %v2353, %v2354
        %v2356 = vand.u32 %v2355, 4294901760
        %2357 = vmatpush1.msra.mxu0 %v2356
        %2358 = vmatprep.subr.mxu0 0.0
        %v2359 = vand.u32 %v2059, 4294901760
        %v2360 = vsub.f32 %v2059, %v2359
        %v2361 = vand.u32 %v2360, 4294901760
        %v2362 = vsub.f32 %v2360, %v2361
        %v2363 = vand.u32 %v2362, 4294901760
        %2364 = vmatpush1.msra.mxu0 %v2363
        %2365 = vmatprep.subr.mxu0 0.0
        %v2366 = vand.u32 %v2060, 4294901760
        %v2367 = vsub.f32 %v2060, %v2366
        %v2368 = vand.u32 %v2367, 4294901760
        %v2369 = vsub.f32 %v2367, %v2368
        %v2370 = vand.u32 %v2369, 4294901760
        %2371 = vmatpush1.msra.mxu0 %v2370
        %2372 = vmatprep.subr.mxu0 0.0
        %v2373 = vand.u32 %v2061, 4294901760
        %v2374 = vsub.f32 %v2061, %v2373
        %v2375 = vand.u32 %v2374, 4294901760
        %v2376 = vsub.f32 %v2374, %v2375
        %v2377 = vand.u32 %v2376, 4294901760
        %2378 = vmatpush1.msra.mxu0 %v2377
        %2379 = vmatprep.subr.mxu0 0.0
        %v2380 = vand.u32 %v2062, 4294901760
        %v2381 = vsub.f32 %v2062, %v2380
        %v2382 = vand.u32 %v2381, 4294901760
        %v2383 = vsub.f32 %v2381, %v2382
        %v2384 = vand.u32 %v2383, 4294901760
        %2385 = vmatpush1.msra.mxu0 %v2384
        %2386 = vmatprep.subr.mxu0 0.0
        %v2387 = vand.u32 %v2063, 4294901760
        %v2388 = vsub.f32 %v2063, %v2387
        %v2389 = vand.u32 %v2388, 4294901760
        %v2390 = vsub.f32 %v2388, %v2389
        %v2391 = vand.u32 %v2390, 4294901760
        %2392 = vmatpush1.msra.mxu0 %v2391
        %2393 = vmatprep.subr.mxu0 0.0
        %v2394 = vand.u32 %v2064, 4294901760
        %v2395 = vsub.f32 %v2064, %v2394
        %v2396 = vand.u32 %v2395, 4294901760
        %v2397 = vsub.f32 %v2395, %v2396
        %v2398 = vand.u32 %v2397, 4294901760
        %2399 = vmatpush1.msra.mxu0 %v2398
        %2400 = vmatprep.subr.mxu0 0.0
        %v2401 = vand.u32 %v2065, 4294901760
        %v2402 = vsub.f32 %v2065, %v2401
        %v2403 = vand.u32 %v2402, 4294901760
        %v2404 = vsub.f32 %v2402, %v2403
        %v2405 = vand.u32 %v2404, 4294901760
        %2406 = vmatpush1.msra.mxu0 %v2405
        %2407 = vmatprep.subr.mxu0 0.0
        %v2408 = vand.u32 %v2066, 4294901760
        %v2409 = vsub.f32 %v2066, %v2408
        %v2410 = vand.u32 %v2409, 4294901760
        %v2411 = vsub.f32 %v2409, %v2410
        %v2412 = vand.u32 %v2411, 4294901760
        %2413 = vmatpush1.msra.mxu0 %v2412
        %2414 = vmatprep.subr.mxu0 0.0
        %v2415 = vand.u32 %v2067, 4294901760
        %v2416 = vsub.f32 %v2067, %v2415
        %v2417 = vand.u32 %v2416, 4294901760
        %v2418 = vsub.f32 %v2416, %v2417
        %v2419 = vand.u32 %v2418, 4294901760
        %2420 = vmatpush1.msra.mxu0 %v2419
        %2421 = vmatprep.subr.mxu0 0.0
        %v2422 = vand.u32 %v2068, 4294901760
        %v2423 = vsub.f32 %v2068, %v2422
        %v2424 = vand.u32 %v2423, 4294901760
        %v2425 = vsub.f32 %v2423, %v2424
        %v2426 = vand.u32 %v2425, 4294901760
        %2427 = vmatpush1.msra.mxu0 %v2426
        %2428 = vmatprep.subr.mxu0 0.0
        %v2429 = vand.u32 %v2069, 4294901760
        %v2430 = vsub.f32 %v2069, %v2429
        %v2431 = vand.u32 %v2430, 4294901760
        %v2432 = vsub.f32 %v2430, %v2431
        %v2433 = vand.u32 %v2432, 4294901760
        %2434 = vmatpush1.msra.mxu0 %v2433
        %2435 = vmatprep.subr.mxu0 0.0
        %v2436 = vand.u32 %v2070, 4294901760
        %v2437 = vsub.f32 %v2070, %v2436
        %v2438 = vand.u32 %v2437, 4294901760
        %v2439 = vsub.f32 %v2437, %v2438
        %v2440 = vand.u32 %v2439, 4294901760
        %2441 = vmatpush1.msra.mxu0 %v2440
        %2442 = vmatprep.subr.mxu0 0.0
        %v2443 = vand.u32 %v2071, 4294901760
        %v2444 = vsub.f32 %v2071, %v2443
        %v2445 = vand.u32 %v2444, 4294901760
        %v2446 = vsub.f32 %v2444, %v2445
        %v2447 = vand.u32 %v2446, 4294901760
        %2448 = vmatpush1.msra.mxu0 %v2447
        %2449 = vmatprep.subr.mxu0 0.0
        %v2450 = vand.u32 %v2072, 4294901760
        %v2451 = vsub.f32 %v2072, %v2450
        %v2452 = vand.u32 %v2451, 4294901760
        %v2453 = vsub.f32 %v2451, %v2452
        %v2454 = vand.u32 %v2453, 4294901760
        %2455 = vmatpush1.msra.mxu0 %v2454
        %2456 = vmatprep.subr.mxu0 0.0
        %v2457 = vand.u32 %v2073, 4294901760
        %v2458 = vsub.f32 %v2073, %v2457
        %v2459 = vand.u32 %v2458, 4294901760
        %v2460 = vsub.f32 %v2458, %v2459
        %v2461 = vand.u32 %v2460, 4294901760
        %2462 = vmatpush1.msra.mxu0 %v2461
        %2463 = vmatprep.subr.mxu0 0.0
        %v2464 = vand.u32 %v2074, 4294901760
        %v2465 = vsub.f32 %v2074, %v2464
        %v2466 = vand.u32 %v2465, 4294901760
        %v2467 = vsub.f32 %v2465, %v2466
        %v2468 = vand.u32 %v2467, 4294901760
        %2469 = vmatpush1.msra.mxu0 %v2468
        %2470 = vmatprep.subr.mxu0 0.0
        %v2471 = vand.u32 %v2075, 4294901760
        %v2472 = vsub.f32 %v2075, %v2471
        %v2473 = vand.u32 %v2472, 4294901760
        %v2474 = vsub.f32 %v2472, %v2473
        %v2475 = vand.u32 %v2474, 4294901760
        %2476 = vmatpush1.msra.mxu0 %v2475
        %v2477 = vand.u32 %v2040, 4294901760
        %2478 = vmatprep.mubr.f32.mxu0 %v2477
        %v2479 = vand.u32 %v2036, 4294901760
        %2480 = vmatmul.mubr.f32.gmra.mrb[0].mxu0 %v2479
        %v2481 = vpop.f32.mrb[0].mxu0
        %v2482 = vadd.f32 %v2205, %v2481
        %v2483 = vpop.f32.mrb[0].mxu0
        %v2484 = vand.u32 %v2041, 4294901760
        %2485 = vmatprep.mubr.f32.mxu0 %v2484
        %v2486 = vand.u32 %v2037, 4294901760
        %2487 = vmatmul.mubr.f32.gmra.mrb[0].mxu0 %v2486
        %v2488 = vpop.f32.mrb[0].mxu0
        %v2489 = vadd.f32 %v2220, %v2488
        %v2490 = vpop.f32.mrb[0].mxu0
        %v2491 = vand.u32 %v2042, 4294901760
        %2492 = vmatprep.mubr.f32.mxu0 %v2491
        %v2493 = vand.u32 %v2038, 4294901760
        %2494 = vmatmul.mubr.f32.gmra.mrb[0].mxu0 %v2493
        %v2495 = vpop.f32.mrb[0].mxu0
        %v2496 = vadd.f32 %v2235, %v2495
        %v2497 = vpop.f32.mrb[0].mxu0
        %v2498 = vand.u32 %v2043, 4294901760
        %2499 = vmatprep.mubr.f32.mxu0 %v2498
        %v2500 = vand.u32 %v2039, 4294901760
        %2501 = vmatmul.mubr.f32.gmra.mrb[0].mxu0 %v2500
        %v2502 = vpop.f32.mrb[0].mxu0
        %v2503 = vadd.f32 %v2250, %v2502
        %v2504 = vpop.f32.mrb[0].mxu0
        %2505 = vdwg.mxu0
        %2506 = vmatprep.subr.mxu0 0.0
        %v2507 = vand.u32 %v2044, 4294901760
        %v2508 = vsub.f32 %v2044, %v2507
        %2509 = vmatpush1.msra.mxu0 %v2508
        %2510 = vmatprep.subr.mxu0 0.0
        %v2511 = vand.u32 %v2045, 4294901760
        %v2512 = vsub.f32 %v2045, %v2511
        %2513 = vmatpush1.msra.mxu0 %v2512
        %2514 = vmatprep.subr.mxu0 0.0
        %v2515 = vand.u32 %v2046, 4294901760
        %v2516 = vsub.f32 %v2046, %v2515
        %2517 = vmatpush1.msra.mxu0 %v2516
        %2518 = vmatprep.subr.mxu0 0.0
        %v2519 = vand.u32 %v2047, 4294901760
        %v2520 = vsub.f32 %v2047, %v2519
        %2521 = vmatpush1.msra.mxu0 %v2520
        %2522 = vmatprep.subr.mxu0 0.0
        %v2523 = vand.u32 %v2048, 4294901760
        %v2524 = vsub.f32 %v2048, %v2523
        %2525 = vmatpush1.msra.mxu0 %v2524
        %2526 = vmatprep.subr.mxu0 0.0
        %v2527 = vand.u32 %v2049, 4294901760
        %v2528 = vsub.f32 %v2049, %v2527
        %2529 = vmatpush1.msra.mxu0 %v2528
        %2530 = vmatprep.subr.mxu0 0.0
        %v2531 = vand.u32 %v2050, 4294901760
        %v2532 = vsub.f32 %v2050, %v2531
        %2533 = vmatpush1.msra.mxu0 %v2532
        %2534 = vmatprep.subr.mxu0 0.0
        %v2535 = vand.u32 %v2051, 4294901760
        %v2536 = vsub.f32 %v2051, %v2535
        %2537 = vmatpush1.msra.mxu0 %v2536
        %2538 = vmatprep.subr.mxu0 0.0
        %v2539 = vand.u32 %v2052, 4294901760
        %v2540 = vsub.f32 %v2052, %v2539
        %2541 = vmatpush1.msra.mxu0 %v2540
        %2542 = vmatprep.subr.mxu0 0.0
        %v2543 = vand.u32 %v2053, 4294901760
        %v2544 = vsub.f32 %v2053, %v2543
        %2545 = vmatpush1.msra.mxu0 %v2544
        %2546 = vmatprep.subr.mxu0 0.0
        %v2547 = vand.u32 %v2054, 4294901760
        %v2548 = vsub.f32 %v2054, %v2547
        %2549 = vmatpush1.msra.mxu0 %v2548
        %2550 = vmatprep.subr.mxu0 0.0
        %v2551 = vand.u32 %v2055, 4294901760
        %v2552 = vsub.f32 %v2055, %v2551
        %2553 = vmatpush1.msra.mxu0 %v2552
        %2554 = vmatprep.subr.mxu0 0.0
        %v2555 = vand.u32 %v2056, 4294901760
        %v2556 = vsub.f32 %v2056, %v2555
        %2557 = vmatpush1.msra.mxu0 %v2556
        %2558 = vmatprep.subr.mxu0 0.0
        %v2559 = vand.u32 %v2057, 4294901760
        %v2560 = vsub.f32 %v2057, %v2559
        %2561 = vmatpush1.msra.mxu0 %v2560
        %2562 = vmatprep.subr.mxu0 0.0
        %v2563 = vand.u32 %v2058, 4294901760
        %v2564 = vsub.f32 %v2058, %v2563
        %2565 = vmatpush1.msra.mxu0 %v2564
        %2566 = vmatprep.subr.mxu0 0.0
        %v2567 = vand.u32 %v2059, 4294901760
        %v2568 = vsub.f32 %v2059, %v2567
        %2569 = vmatpush1.msra.mxu0 %v2568
        %2570 = vmatprep.subr.mxu0 0.0
        %v2571 = vand.u32 %v2060, 4294901760
        %v2572 = vsub.f32 %v2060, %v2571
        %2573 = vmatpush1.msra.mxu0 %v2572
        %2574 = vmatprep.subr.mxu0 0.0
        %v2575 = vand.u32 %v2061, 4294901760
        %v2576 = vsub.f32 %v2061, %v2575
        %2577 = vmatpush1.msra.mxu0 %v2576
        %2578 = vmatprep.subr.mxu0 0.0
        %v2579 = vand.u32 %v2062, 4294901760
        %v2580 = vsub.f32 %v2062, %v2579
        %2581 = vmatpush1.msra.mxu0 %v2580
        %2582 = vmatprep.subr.mxu0 0.0
        %v2583 = vand.u32 %v2063, 4294901760
        %v2584 = vsub.f32 %v2063, %v2583
        %2585 = vmatpush1.msra.mxu0 %v2584
        %2586 = vmatprep.subr.mxu0 0.0
        %v2587 = vand.u32 %v2064, 4294901760
        %v2588 = vsub.f32 %v2064, %v2587
        %2589 = vmatpush1.msra.mxu0 %v2588
        %2590 = vmatprep.subr.mxu0 0.0
        %v2591 = vand.u32 %v2065, 4294901760
        %v2592 = vsub.f32 %v2065, %v2591
        %2593 = vmatpush1.msra.mxu0 %v2592
        %2594 = vmatprep.subr.mxu0 0.0
        %v2595 = vand.u32 %v2066, 4294901760
        %v2596 = vsub.f32 %v2066, %v2595
        %2597 = vmatpush1.msra.mxu0 %v2596
        %2598 = vmatprep.subr.mxu0 0.0
        %v2599 = vand.u32 %v2067, 4294901760
        %v2600 = vsub.f32 %v2067, %v2599
        %2601 = vmatpush1.msra.mxu0 %v2600
        %2602 = vmatprep.subr.mxu0 0.0
        %v2603 = vand.u32 %v2068, 4294901760
        %v2604 = vsub.f32 %v2068, %v2603
        %2605 = vmatpush1.msra.mxu0 %v2604
        %2606 = vmatprep.subr.mxu0 0.0
        %v2607 = vand.u32 %v2069, 4294901760
        %v2608 = vsub.f32 %v2069, %v2607
        %2609 = vmatpush1.msra.mxu0 %v2608
        %2610 = vmatprep.subr.mxu0 0.0
        %v2611 = vand.u32 %v2070, 4294901760
        %v2612 = vsub.f32 %v2070, %v2611
        %2613 = vmatpush1.msra.mxu0 %v2612
        %2614 = vmatprep.subr.mxu0 0.0
        %v2615 = vand.u32 %v2071, 4294901760
        %v2616 = vsub.f32 %v2071, %v2615
        %2617 = vmatpush1.msra.mxu0 %v2616
        %2618 = vmatprep.subr.mxu0 0.0
        %v2619 = vand.u32 %v2072, 4294901760
        %v2620 = vsub.f32 %v2072, %v2619
        %2621 = vmatpush1.msra.mxu0 %v2620
        %2622 = vmatprep.subr.mxu0 0.0
        %v2623 = vand.u32 %v2073, 4294901760
        %v2624 = vsub.f32 %v2073, %v2623
        %2625 = vmatpush1.msra.mxu0 %v2624
        %2626 = vmatprep.subr.mxu0 0.0
        %v2627 = vand.u32 %v2074, 4294901760
        %v2628 = vsub.f32 %v2074, %v2627
        %2629 = vmatpush1.msra.mxu0 %v2628
        %2630 = vmatprep.subr.mxu0 0.0
        %v2631 = vand.u32 %v2075, 4294901760
        %v2632 = vsub.f32 %v2075, %v2631
        %2633 = vmatpush1.msra.mxu0 %v2632
        %v2634 = vand.u32 %v2040, 4294901760
        %v2635 = vsub.f32 %v2040, %v2634
        %2636 = vmatprep.mubr.f32.mxu0 %v2635
        %v2637 = vand.u32 %v2036, 4294901760
        %v2638 = vsub.f32 %v2036, %v2637
        %2639 = vmatmul.mubr.f32.gmra.mrb[0].mxu0 %v2638
        %v2640 = vpop.f32.mrb[0].mxu0
        %v2641 = vadd.f32 %v2482, %v2640
        %v2642 = vpop.f32.mrb[0].mxu0
        %v2643 = vand.u32 %v2041, 4294901760
        %v2644 = vsub.f32 %v2041, %v2643
        %2645 = vmatprep.mubr.f32.mxu0 %v2644
        %v2646 = vand.u32 %v2037, 4294901760
        %v2647 = vsub.f32 %v2037, %v2646
        %2648 = vmatmul.mubr.f32.gmra.mrb[0].mxu0 %v2647
        %v2649 = vpop.f32.mrb[0].mxu0
        %v2650 = vadd.f32 %v2489, %v2649
        %v2651 = vpop.f32.mrb[0].mxu0
        %v2652 = vand.u32 %v2042, 4294901760
        %v2653 = vsub.f32 %v2042, %v2652
        %2654 = vmatprep.mubr.f32.mxu0 %v2653
        %v2655 = vand.u32 %v2038, 4294901760
        %v2656 = vsub.f32 %v2038, %v2655
        %2657 = vmatmul.mubr.f32.gmra.mrb[0].mxu0 %v2656
        %v2658 = vpop.f32.mrb[0].mxu0
        %v2659 = vadd.f32 %v2496, %v2658
        %v2660 = vpop.f32.mrb[0].mxu0
        %v2661 = vand.u32 %v2043, 4294901760
        %v2662 = vsub.f32 %v2043, %v2661
        %2663 = vmatprep.mubr.f32.mxu0 %v2662
        %v2664 = vand.u32 %v2039, 4294901760
        %v2665 = vsub.f32 %v2039, %v2664
        %2666 = vmatmul.mubr.f32.gmra.mrb[0].mxu0 %v2665
        %v2667 = vpop.f32.mrb[0].mxu0
        %v2668 = vadd.f32 %v2503, %v2667
        %v2669 = vpop.f32.mrb[0].mxu0
        %2670 = vdwg.mxu0
        %2671 = vmatprep.subr.mxu0 0.0
        %v2672 = vand.u32 %v2044, 4294901760
        %2673 = vmatpush1.msra.mxu0 %v2672
        %2674 = vmatprep.subr.mxu0 0.0
        %v2675 = vand.u32 %v2045, 4294901760
        %2676 = vmatpush1.msra.mxu0 %v2675
        %2677 = vmatprep.subr.mxu0 0.0
        %v2678 = vand.u32 %v2046, 4294901760
        %2679 = vmatpush1.msra.mxu0 %v2678
        %2680 = vmatprep.subr.mxu0 0.0
        %v2681 = vand.u32 %v2047, 4294901760
        %2682 = vmatpush1.msra.mxu0 %v2681
        %2683 = vmatprep.subr.mxu0 0.0
        %v2684 = vand.u32 %v2048, 4294901760
        %2685 = vmatpush1.msra.mxu0 %v2684
        %2686 = vmatprep.subr.mxu0 0.0
        %v2687 = vand.u32 %v2049, 4294901760
        %2688 = vmatpush1.msra.mxu0 %v2687
        %2689 = vmatprep.subr.mxu0 0.0
        %v2690 = vand.u32 %v2050, 4294901760
        %2691 = vmatpush1.msra.mxu0 %v2690
        %2692 = vmatprep.subr.mxu0 0.0
        %v2693 = vand.u32 %v2051, 4294901760
        %2694 = vmatpush1.msra.mxu0 %v2693
        %2695 = vmatprep.subr.mxu0 0.0
        %v2696 = vand.u32 %v2052, 4294901760
        %2697 = vmatpush1.msra.mxu0 %v2696
        %2698 = vmatprep.subr.mxu0 0.0
        %v2699 = vand.u32 %v2053, 4294901760
        %2700 = vmatpush1.msra.mxu0 %v2699
        %2701 = vmatprep.subr.mxu0 0.0
        %v2702 = vand.u32 %v2054, 4294901760
        %2703 = vmatpush1.msra.mxu0 %v2702
        %2704 = vmatprep.subr.mxu0 0.0
        %v2705 = vand.u32 %v2055, 4294901760
        %2706 = vmatpush1.msra.mxu0 %v2705
        %2707 = vmatprep.subr.mxu0 0.0
        %v2708 = vand.u32 %v2056, 4294901760
        %2709 = vmatpush1.msra.mxu0 %v2708
        %2710 = vmatprep.subr.mxu0 0.0
        %v2711 = vand.u32 %v2057, 4294901760
        %2712 = vmatpush1.msra.mxu0 %v2711
        %2713 = vmatprep.subr.mxu0 0.0
        %v2714 = vand.u32 %v2058, 4294901760
        %2715 = vmatpush1.msra.mxu0 %v2714
        %2716 = vmatprep.subr.mxu0 0.0
        %v2717 = vand.u32 %v2059, 4294901760
        %2718 = vmatpush1.msra.mxu0 %v2717
        %2719 = vmatprep.subr.mxu0 0.0
        %v2720 = vand.u32 %v2060, 4294901760
        %2721 = vmatpush1.msra.mxu0 %v2720
        %2722 = vmatprep.subr.mxu0 0.0
        %v2723 = vand.u32 %v2061, 4294901760
        %2724 = vmatpush1.msra.mxu0 %v2723
        %2725 = vmatprep.subr.mxu0 0.0
        %v2726 = vand.u32 %v2062, 4294901760
        %2727 = vmatpush1.msra.mxu0 %v2726
        %2728 = vmatprep.subr.mxu0 0.0
        %v2729 = vand.u32 %v2063, 4294901760
        %2730 = vmatpush1.msra.mxu0 %v2729
        %2731 = vmatprep.subr.mxu0 0.0
        %v2732 = vand.u32 %v2064, 4294901760
        %2733 = vmatpush1.msra.mxu0 %v2732
        %2734 = vmatprep.subr.mxu0 0.0
        %v2735 = vand.u32 %v2065, 4294901760
        %2736 = vmatpush1.msra.mxu0 %v2735
        %2737 = vmatprep.subr.mxu0 0.0
        %v2738 = vand.u32 %v2066, 4294901760
        %2739 = vmatpush1.msra.mxu0 %v2738
        %2740 = vmatprep.subr.mxu0 0.0
        %v2741 = vand.u32 %v2067, 4294901760
        %2742 = vmatpush1.msra.mxu0 %v2741
        %2743 = vmatprep.subr.mxu0 0.0
        %v2744 = vand.u32 %v2068, 4294901760
        %2745 = vmatpush1.msra.mxu0 %v2744
        %2746 = vmatprep.subr.mxu0 0.0
        %v2747 = vand.u32 %v2069, 4294901760
        %2748 = vmatpush1.msra.mxu0 %v2747
        %2749 = vmatprep.subr.mxu0 0.0
        %v2750 = vand.u32 %v2070, 4294901760
        %2751 = vmatpush1.msra.mxu0 %v2750
        %2752 = vmatprep.subr.mxu0 0.0
        %v2753 = vand.u32 %v2071, 4294901760
        %2754 = vmatpush1.msra.mxu0 %v2753
        %2755 = vmatprep.subr.mxu0 0.0
        %v2756 = vand.u32 %v2072, 4294901760
        %2757 = vmatpush1.msra.mxu0 %v2756
        %2758 = vmatprep.subr.mxu0 0.0
        %v2759 = vand.u32 %v2073, 4294901760
        %2760 = vmatpush1.msra.mxu0 %v2759
        %2761 = vmatprep.subr.mxu0 0.0
        %v2762 = vand.u32 %v2074, 4294901760
        %2763 = vmatpush1.msra.mxu0 %v2762
        %2764 = vmatprep.subr.mxu0 0.0
        %v2765 = vand.u32 %v2075, 4294901760
        %2766 = vmatpush1.msra.mxu0 %v2765
        %v2767 = vand.u32 %v2040, 4294901760
        %v2768 = vsub.f32 %v2040, %v2767
        %v2769 = vand.u32 %v2768, 4294901760
        %2770 = vmatprep.mubr.f32.mxu0 %v2769
        %v2771 = vand.u32 %v2036, 4294901760
        %v2772 = vsub.f32 %v2036, %v2771
        %v2773 = vand.u32 %v2772, 4294901760
        %2774 = vmatmul.mubr.f32.gmra.mrb[0].mxu0 %v2773
        %v2775 = vpop.f32.mrb[0].mxu0
        %v2776 = vadd.f32 %v2641, %v2775
        %v2777 = vpop.f32.mrb[0].mxu0
        %v2778 = vand.u32 %v2041, 4294901760
        %v2779 = vsub.f32 %v2041, %v2778
        %v2780 = vand.u32 %v2779, 4294901760
        %2781 = vmatprep.mubr.f32.mxu0 %v2780
        %v2782 = vand.u32 %v2037, 4294901760
        %v2783 = vsub.f32 %v2037, %v2782
        %v2784 = vand.u32 %v2783, 4294901760
        %2785 = vmatmul.mubr.f32.gmra.mrb[0].mxu0 %v2784
        %v2786 = vpop.f32.mrb[0].mxu0
        %v2787 = vadd.f32 %v2650, %v2786
        %v2788 = vpop.f32.mrb[0].mxu0
        %v2789 = vand.u32 %v2042, 4294901760
        %v2790 = vsub.f32 %v2042, %v2789
        %v2791 = vand.u32 %v2790, 4294901760
        %2792 = vmatprep.mubr.f32.mxu0 %v2791
        %v2793 = vand.u32 %v2038, 4294901760
        %v2794 = vsub.f32 %v2038, %v2793
        %v2795 = vand.u32 %v2794, 4294901760
        %2796 = vmatmul.mubr.f32.gmra.mrb[0].mxu0 %v2795
        %v2797 = vpop.f32.mrb[0].mxu0
        %v2798 = vadd.f32 %v2659, %v2797
        %v2799 = vpop.f32.mrb[0].mxu0
        %v2800 = vand.u32 %v2043, 4294901760
        %v2801 = vsub.f32 %v2043, %v2800
        %v2802 = vand.u32 %v2801, 4294901760
        %2803 = vmatprep.mubr.f32.mxu0 %v2802
        %v2804 = vand.u32 %v2039, 4294901760
        %v2805 = vsub.f32 %v2039, %v2804
        %v2806 = vand.u32 %v2805, 4294901760
        %2807 = vmatmul.mubr.f32.gmra.mrb[0].mxu0 %v2806
        %v2808 = vpop.f32.mrb[0].mxu0
        %v2809 = vadd.f32 %v2668, %v2808
        %v2810 = vpop.f32.mrb[0].mxu0
        %2811 = vdwg.mxu0
        %2812 = vmatprep.subr.mxu0 0.0
        %v2813 = vand.u32 %v2044, 4294901760
        %v2814 = vsub.f32 %v2044, %v2813
        %v2815 = vand.u32 %v2814, 4294901760
        %2816 = vmatpush1.msra.mxu0 %v2815
        %2817 = vmatprep.subr.mxu0 0.0
        %v2818 = vand.u32 %v2045, 4294901760
        %v2819 = vsub.f32 %v2045, %v2818
        %v2820 = vand.u32 %v2819, 4294901760
        %2821 = vmatpush1.msra.mxu0 %v2820
        %2822 = vmatprep.subr.mxu0 0.0
        %v2823 = vand.u32 %v2046, 4294901760
        %v2824 = vsub.f32 %v2046, %v2823
        %v2825 = vand.u32 %v2824, 4294901760
        %2826 = vmatpush1.msra.mxu0 %v2825
        %2827 = vmatprep.subr.mxu0 0.0
        %v2828 = vand.u32 %v2047, 4294901760
        %v2829 = vsub.f32 %v2047, %v2828
        %v2830 = vand.u32 %v2829, 4294901760
        %2831 = vmatpush1.msra.mxu0 %v2830
        %2832 = vmatprep.subr.mxu0 0.0
        %v2833 = vand.u32 %v2048, 4294901760
        %v2834 = vsub.f32 %v2048, %v2833
        %v2835 = vand.u32 %v2834, 4294901760
        %2836 = vmatpush1.msra.mxu0 %v2835
        %2837 = vmatprep.subr.mxu0 0.0
        %v2838 = vand.u32 %v2049, 4294901760
        %v2839 = vsub.f32 %v2049, %v2838
        %v2840 = vand.u32 %v2839, 4294901760
        %2841 = vmatpush1.msra.mxu0 %v2840
        %2842 = vmatprep.subr.mxu0 0.0
        %v2843 = vand.u32 %v2050, 4294901760
        %v2844 = vsub.f32 %v2050, %v2843
        %v2845 = vand.u32 %v2844, 4294901760
        %2846 = vmatpush1.msra.mxu0 %v2845
        %2847 = vmatprep.subr.mxu0 0.0
        %v2848 = vand.u32 %v2051, 4294901760
        %v2849 = vsub.f32 %v2051, %v2848
        %v2850 = vand.u32 %v2849, 4294901760
        %2851 = vmatpush1.msra.mxu0 %v2850
        %2852 = vmatprep.subr.mxu0 0.0
        %v2853 = vand.u32 %v2052, 4294901760
        %v2854 = vsub.f32 %v2052, %v2853
        %v2855 = vand.u32 %v2854, 4294901760
        %2856 = vmatpush1.msra.mxu0 %v2855
        %2857 = vmatprep.subr.mxu0 0.0
        %v2858 = vand.u32 %v2053, 4294901760
        %v2859 = vsub.f32 %v2053, %v2858
        %v2860 = vand.u32 %v2859, 4294901760
        %2861 = vmatpush1.msra.mxu0 %v2860
        %2862 = vmatprep.subr.mxu0 0.0
        %v2863 = vand.u32 %v2054, 4294901760
        %v2864 = vsub.f32 %v2054, %v2863
        %v2865 = vand.u32 %v2864, 4294901760
        %2866 = vmatpush1.msra.mxu0 %v2865
        %2867 = vmatprep.subr.mxu0 0.0
        %v2868 = vand.u32 %v2055, 4294901760
        %v2869 = vsub.f32 %v2055, %v2868
        %v2870 = vand.u32 %v2869, 4294901760
        %2871 = vmatpush1.msra.mxu0 %v2870
        %2872 = vmatprep.subr.mxu0 0.0
        %v2873 = vand.u32 %v2056, 4294901760
        %v2874 = vsub.f32 %v2056, %v2873
        %v2875 = vand.u32 %v2874, 4294901760
        %2876 = vmatpush1.msra.mxu0 %v2875
        %2877 = vmatprep.subr.mxu0 0.0
        %v2878 = vand.u32 %v2057, 4294901760
        %v2879 = vsub.f32 %v2057, %v2878
        %v2880 = vand.u32 %v2879, 4294901760
        %2881 = vmatpush1.msra.mxu0 %v2880
        %2882 = vmatprep.subr.mxu0 0.0
        %v2883 = vand.u32 %v2058, 4294901760
        %v2884 = vsub.f32 %v2058, %v2883
        %v2885 = vand.u32 %v2884, 4294901760
        %2886 = vmatpush1.msra.mxu0 %v2885
        %2887 = vmatprep.subr.mxu0 0.0
        %v2888 = vand.u32 %v2059, 4294901760
        %v2889 = vsub.f32 %v2059, %v2888
        %v2890 = vand.u32 %v2889, 4294901760
        %2891 = vmatpush1.msra.mxu0 %v2890
        %2892 = vmatprep.subr.mxu0 0.0
        %v2893 = vand.u32 %v2060, 4294901760
        %v2894 = vsub.f32 %v2060, %v2893
        %v2895 = vand.u32 %v2894, 4294901760
        %2896 = vmatpush1.msra.mxu0 %v2895
        %2897 = vmatprep.subr.mxu0 0.0
        %v2898 = vand.u32 %v2061, 4294901760
        %v2899 = vsub.f32 %v2061, %v2898
        %v2900 = vand.u32 %v2899, 4294901760
        %2901 = vmatpush1.msra.mxu0 %v2900
        %2902 = vmatprep.subr.mxu0 0.0
        %v2903 = vand.u32 %v2062, 4294901760
        %v2904 = vsub.f32 %v2062, %v2903
        %v2905 = vand.u32 %v2904, 4294901760
        %2906 = vmatpush1.msra.mxu0 %v2905
        %2907 = vmatprep.subr.mxu0 0.0
        %v2908 = vand.u32 %v2063, 4294901760
        %v2909 = vsub.f32 %v2063, %v2908
        %v2910 = vand.u32 %v2909, 4294901760
        %2911 = vmatpush1.msra.mxu0 %v2910
        %2912 = vmatprep.subr.mxu0 0.0
        %v2913 = vand.u32 %v2064, 4294901760
        %v2914 = vsub.f32 %v2064, %v2913
        %v2915 = vand.u32 %v2914, 4294901760
        %2916 = vmatpush1.msra.mxu0 %v2915
        %2917 = vmatprep.subr.mxu0 0.0
        %v2918 = vand.u32 %v2065, 4294901760
        %v2919 = vsub.f32 %v2065, %v2918
        %v2920 = vand.u32 %v2919, 4294901760
        %2921 = vmatpush1.msra.mxu0 %v2920
        %2922 = vmatprep.subr.mxu0 0.0
        %v2923 = vand.u32 %v2066, 4294901760
        %v2924 = vsub.f32 %v2066, %v2923
        %v2925 = vand.u32 %v2924, 4294901760
        %2926 = vmatpush1.msra.mxu0 %v2925
        %2927 = vmatprep.subr.mxu0 0.0
        %v2928 = vand.u32 %v2067, 4294901760
        %v2929 = vsub.f32 %v2067, %v2928
        %v2930 = vand.u32 %v2929, 4294901760
        %2931 = vmatpush1.msra.mxu0 %v2930
        %2932 = vmatprep.subr.mxu0 0.0
        %v2933 = vand.u32 %v2068, 4294901760
        %v2934 = vsub.f32 %v2068, %v2933
        %v2935 = vand.u32 %v2934, 4294901760
        %2936 = vmatpush1.msra.mxu0 %v2935
        %2937 = vmatprep.subr.mxu0 0.0
        %v2938 = vand.u32 %v2069, 4294901760
        %v2939 = vsub.f32 %v2069, %v2938
        %v2940 = vand.u32 %v2939, 4294901760
        %2941 = vmatpush1.msra.mxu0 %v2940
        %2942 = vmatprep.subr.mxu0 0.0
        %v2943 = vand.u32 %v2070, 4294901760
        %v2944 = vsub.f32 %v2070, %v2943
        %v2945 = vand.u32 %v2944, 4294901760
        %2946 = vmatpush1.msra.mxu0 %v2945
        %2947 = vmatprep.subr.mxu0 0.0
        %v2948 = vand.u32 %v2071, 4294901760
        %v2949 = vsub.f32 %v2071, %v2948
        %v2950 = vand.u32 %v2949, 4294901760
        %2951 = vmatpush1.msra.mxu0 %v2950
        %2952 = vmatprep.subr.mxu0 0.0
        %v2953 = vand.u32 %v2072, 4294901760
        %v2954 = vsub.f32 %v2072, %v2953
        %v2955 = vand.u32 %v2954, 4294901760
        %2956 = vmatpush1.msra.mxu0 %v2955
        %2957 = vmatprep.subr.mxu0 0.0
        %v2958 = vand.u32 %v2073, 4294901760
        %v2959 = vsub.f32 %v2073, %v2958
        %v2960 = vand.u32 %v2959, 4294901760
        %2961 = vmatpush1.msra.mxu0 %v2960
        %2962 = vmatprep.subr.mxu0 0.0
        %v2963 = vand.u32 %v2074, 4294901760
        %v2964 = vsub.f32 %v2074, %v2963
        %v2965 = vand.u32 %v2964, 4294901760
        %2966 = vmatpush1.msra.mxu0 %v2965
        %2967 = vmatprep.subr.mxu0 0.0
        %v2968 = vand.u32 %v2075, 4294901760
        %v2969 = vsub.f32 %v2075, %v2968
        %v2970 = vand.u32 %v2969, 4294901760
        %2971 = vmatpush1.msra.mxu0 %v2970
        %v2972 = vand.u32 %v2040, 4294901760
        %2973 = vmatprep.mubr.f32.mxu0 %v2972
        %v2974 = vand.u32 %v2036, 4294901760
        %2975 = vmatmul.mubr.f32.gmra.mrb[0].mxu0 %v2974
        %v2976 = vpop.f32.mrb[0].mxu0
        %v2977 = vadd.f32 %v2776, %v2976
        %v2978 = vpop.f32.mrb[0].mxu0
        %v2979 = vand.u32 %v2041, 4294901760
        %2980 = vmatprep.mubr.f32.mxu0 %v2979
        %v2981 = vand.u32 %v2037, 4294901760
        %2982 = vmatmul.mubr.f32.gmra.mrb[0].mxu0 %v2981
        %v2983 = vpop.f32.mrb[0].mxu0
        %v2984 = vadd.f32 %v2787, %v2983
        %v2985 = vpop.f32.mrb[0].mxu0
        %v2986 = vand.u32 %v2042, 4294901760
        %2987 = vmatprep.mubr.f32.mxu0 %v2986
        %v2988 = vand.u32 %v2038, 4294901760
        %2989 = vmatmul.mubr.f32.gmra.mrb[0].mxu0 %v2988
        %v2990 = vpop.f32.mrb[0].mxu0
        %v2991 = vadd.f32 %v2798, %v2990
        %v2992 = vpop.f32.mrb[0].mxu0
        %v2993 = vand.u32 %v2043, 4294901760
        %2994 = vmatprep.mubr.f32.mxu0 %v2993
        %v2995 = vand.u32 %v2039, 4294901760
        %2996 = vmatmul.mubr.f32.gmra.mrb[0].mxu0 %v2995
        %v2997 = vpop.f32.mrb[0].mxu0
        %v2998 = vadd.f32 %v2809, %v2997
        %v2999 = vpop.f32.mrb[0].mxu0
        %3000 = vdwg.mxu0
        %3001 = vmatprep.subr.mxu0 0.0
        %v3002 = vand.u32 %v2044, 4294901760
        %3003 = vmatpush1.msra.mxu0 %v3002
        %3004 = vmatprep.subr.mxu0 0.0
        %v3005 = vand.u32 %v2045, 4294901760
        %3006 = vmatpush1.msra.mxu0 %v3005
        %3007 = vmatprep.subr.mxu0 0.0
        %v3008 = vand.u32 %v2046, 4294901760
        %3009 = vmatpush1.msra.mxu0 %v3008
        %3010 = vmatprep.subr.mxu0 0.0
        %v3011 = vand.u32 %v2047, 4294901760
        %3012 = vmatpush1.msra.mxu0 %v3011
        %3013 = vmatprep.subr.mxu0 0.0
        %v3014 = vand.u32 %v2048, 4294901760
        %3015 = vmatpush1.msra.mxu0 %v3014
        %3016 = vmatprep.subr.mxu0 0.0
        %v3017 = vand.u32 %v2049, 4294901760
        %3018 = vmatpush1.msra.mxu0 %v3017
        %3019 = vmatprep.subr.mxu0 0.0
        %v3020 = vand.u32 %v2050, 4294901760
        %3021 = vmatpush1.msra.mxu0 %v3020
        %3022 = vmatprep.subr.mxu0 0.0
        %v3023 = vand.u32 %v2051, 4294901760
        %3024 = vmatpush1.msra.mxu0 %v3023
        %3025 = vmatprep.subr.mxu0 0.0
        %v3026 = vand.u32 %v2052, 4294901760
        %3027 = vmatpush1.msra.mxu0 %v3026
        %3028 = vmatprep.subr.mxu0 0.0
        %v3029 = vand.u32 %v2053, 4294901760
        %3030 = vmatpush1.msra.mxu0 %v3029
        %3031 = vmatprep.subr.mxu0 0.0
        %v3032 = vand.u32 %v2054, 4294901760
        %3033 = vmatpush1.msra.mxu0 %v3032
        %3034 = vmatprep.subr.mxu0 0.0
        %v3035 = vand.u32 %v2055, 4294901760
        %3036 = vmatpush1.msra.mxu0 %v3035
        %3037 = vmatprep.subr.mxu0 0.0
        %v3038 = vand.u32 %v2056, 4294901760
        %3039 = vmatpush1.msra.mxu0 %v3038
        %3040 = vmatprep.subr.mxu0 0.0
        %v3041 = vand.u32 %v2057, 4294901760
        %3042 = vmatpush1.msra.mxu0 %v3041
        %3043 = vmatprep.subr.mxu0 0.0
        %v3044 = vand.u32 %v2058, 4294901760
        %3045 = vmatpush1.msra.mxu0 %v3044
        %3046 = vmatprep.subr.mxu0 0.0
        %v3047 = vand.u32 %v2059, 4294901760
        %3048 = vmatpush1.msra.mxu0 %v3047
        %3049 = vmatprep.subr.mxu0 0.0
        %v3050 = vand.u32 %v2060, 4294901760
        %3051 = vmatpush1.msra.mxu0 %v3050
        %3052 = vmatprep.subr.mxu0 0.0
        %v3053 = vand.u32 %v2061, 4294901760
        %3054 = vmatpush1.msra.mxu0 %v3053
        %3055 = vmatprep.subr.mxu0 0.0
        %v3056 = vand.u32 %v2062, 4294901760
        %3057 = vmatpush1.msra.mxu0 %v3056
        %3058 = vmatprep.subr.mxu0 0.0
        %v3059 = vand.u32 %v2063, 4294901760
        %3060 = vmatpush1.msra.mxu0 %v3059
        %3061 = vmatprep.subr.mxu0 0.0
        %v3062 = vand.u32 %v2064, 4294901760
        %3063 = vmatpush1.msra.mxu0 %v3062
        %3064 = vmatprep.subr.mxu0 0.0
        %v3065 = vand.u32 %v2065, 4294901760
        %3066 = vmatpush1.msra.mxu0 %v3065
        %3067 = vmatprep.subr.mxu0 0.0
        %v3068 = vand.u32 %v2066, 4294901760
        %3069 = vmatpush1.msra.mxu0 %v3068
        %3070 = vmatprep.subr.mxu0 0.0
        %v3071 = vand.u32 %v2067, 4294901760
        %3072 = vmatpush1.msra.mxu0 %v3071
        %3073 = vmatprep.subr.mxu0 0.0
        %v3074 = vand.u32 %v2068, 4294901760
        %3075 = vmatpush1.msra.mxu0 %v3074
        %3076 = vmatprep.subr.mxu0 0.0
        %v3077 = vand.u32 %v2069, 4294901760
        %3078 = vmatpush1.msra.mxu0 %v3077
        %3079 = vmatprep.subr.mxu0 0.0
        %v3080 = vand.u32 %v2070, 4294901760
        %3081 = vmatpush1.msra.mxu0 %v3080
        %3082 = vmatprep.subr.mxu0 0.0
        %v3083 = vand.u32 %v2071, 4294901760
        %3084 = vmatpush1.msra.mxu0 %v3083
        %3085 = vmatprep.subr.mxu0 0.0
        %v3086 = vand.u32 %v2072, 4294901760
        %3087 = vmatpush1.msra.mxu0 %v3086
        %3088 = vmatprep.subr.mxu0 0.0
        %v3089 = vand.u32 %v2073, 4294901760
        %3090 = vmatpush1.msra.mxu0 %v3089
        %3091 = vmatprep.subr.mxu0 0.0
        %v3092 = vand.u32 %v2074, 4294901760
        %3093 = vmatpush1.msra.mxu0 %v3092
        %3094 = vmatprep.subr.mxu0 0.0
        %v3095 = vand.u32 %v2075, 4294901760
        %3096 = vmatpush1.msra.mxu0 %v3095
        %v3097 = vand.u32 %v2040, 4294901760
        %3098 = vmatprep.mubr.f32.mxu0 %v3097
        %v3099 = vand.u32 %v2036, 4294901760
        %3100 = vmatmul.mubr.f32.gmra.mrb[0].mxu0 %v3099
        %v3101 = vpop.f32.mrb[0].mxu0
        %v3102 = vadd.f32 %v2977, %v3101
        %v3103 = vpop.f32.mrb[0].mxu0
        %v3104 = vand.u32 %v2041, 4294901760
        %3105 = vmatprep.mubr.f32.mxu0 %v3104
        %v3106 = vand.u32 %v2037, 4294901760
        %3107 = vmatmul.mubr.f32.gmra.mrb[0].mxu0 %v3106
        %v3108 = vpop.f32.mrb[0].mxu0
        %v3109 = vadd.f32 %v2984, %v3108
        %v3110 = vpop.f32.mrb[0].mxu0
        %v3111 = vand.u32 %v2042, 4294901760
        %3112 = vmatprep.mubr.f32.mxu0 %v3111
        %v3113 = vand.u32 %v2038, 4294901760
        %3114 = vmatmul.mubr.f32.gmra.mrb[0].mxu0 %v3113
        %v3115 = vpop.f32.mrb[0].mxu0
        %v3116 = vadd.f32 %v2991, %v3115
        %v3117 = vpop.f32.mrb[0].mxu0
        %v3118 = vand.u32 %v2043, 4294901760
        %3119 = vmatprep.mubr.f32.mxu0 %v3118
        %v3120 = vand.u32 %v2039, 4294901760
        %3121 = vmatmul.mubr.f32.gmra.mrb[0].mxu0 %v3120
        %v3122 = vpop.f32.mrb[0].mxu0
        %v3123 = vadd.f32 %v2998, %v3122
        %v3124 = vpop.f32.mrb[0].mxu0
        %3125 = vdwg.mxu0
        %3126 = vmatprep.subr.mxu0 0.0
        %v3127 = vand.u32 %v2076, 4294901760
        %3128 = vmatpush1.msra.mxu0 %v3127
        %3129 = vmatprep.subr.mxu0 0.0
        %v3130 = vand.u32 %v2077, 4294901760
        %3131 = vmatpush1.msra.mxu0 %v3130
        %3132 = vmatprep.subr.mxu0 0.0
        %v3133 = vand.u32 %v2078, 4294901760
        %3134 = vmatpush1.msra.mxu0 %v3133
        %3135 = vmatprep.subr.mxu0 0.0
        %v3136 = vand.u32 %v2079, 4294901760
        %3137 = vmatpush1.msra.mxu0 %v3136
        %3138 = vmatprep.subr.mxu0 0.0
        %v3139 = vand.u32 %v2080, 4294901760
        %3140 = vmatpush1.msra.mxu0 %v3139
        %3141 = vmatprep.subr.mxu0 0.0
        %v3142 = vand.u32 %v2081, 4294901760
        %3143 = vmatpush1.msra.mxu0 %v3142
        %3144 = vmatprep.subr.mxu0 0.0
        %v3145 = vand.u32 %v2082, 4294901760
        %3146 = vmatpush1.msra.mxu0 %v3145
        %3147 = vmatprep.subr.mxu0 0.0
        %v3148 = vand.u32 %v2083, 4294901760
        %3149 = vmatpush1.msra.mxu0 %v3148
        %3150 = vmatprep.subr.mxu0 0.0
        %3151 = vmatpush1.msra.mxu0 0.0
        %3152 = vmatprep.subr.mxu0 0.0
        %3153 = vmatpush1.msra.mxu0 0.0
        %3154 = vmatprep.subr.mxu0 0.0
        %3155 = vmatpush1.msra.mxu0 0.0
        %3156 = vmatprep.subr.mxu0 0.0
        %3157 = vmatpush1.msra.mxu0 0.0
        %3158 = vmatprep.subr.mxu0 0.0
        %3159 = vmatpush1.msra.mxu0 0.0
        %3160 = vmatprep.subr.mxu0 0.0
        %3161 = vmatpush1.msra.mxu0 0.0
        %3162 = vmatprep.subr.mxu0 0.0
        %3163 = vmatpush1.msra.mxu0 0.0
        %3164 = vmatprep.subr.mxu0 0.0
        %3165 = vmatpush1.msra.mxu0 0.0
        %3166 = vmatprep.subr.mxu0 0.0
        %3167 = vmatpush1.msra.mxu0 0.0
        %3168 = vmatprep.subr.mxu0 0.0
        %3169 = vmatpush1.msra.mxu0 0.0
        %3170 = vmatprep.subr.mxu0 0.0
        %3171 = vmatpush1.msra.mxu0 0.0
        %3172 = vmatprep.subr.mxu0 0.0
        %3173 = vmatpush1.msra.mxu0 0.0
        %3174 = vmatprep.subr.mxu0 0.0
        %3175 = vmatpush1.msra.mxu0 0.0
        %3176 = vmatprep.subr.mxu0 0.0
        %3177 = vmatpush1.msra.mxu0 0.0
        %3178 = vmatprep.subr.mxu0 0.0
        %3179 = vmatpush1.msra.mxu0 0.0
        %3180 = vmatprep.subr.mxu0 0.0
        %3181 = vmatpush1.msra.mxu0 0.0
        %3182 = vmatprep.subr.mxu0 0.0
        %3183 = vmatpush1.msra.mxu0 0.0
        %3184 = vmatprep.subr.mxu0 0.0
        %3185 = vmatpush1.msra.mxu0 0.0
        %3186 = vmatprep.subr.mxu0 0.0
        %3187 = vmatpush1.msra.mxu0 0.0
        %3188 = vmatprep.subr.mxu0 0.0
        %3189 = vmatpush1.msra.mxu0 0.0
        %3190 = vmatprep.subr.mxu0 0.0
        %3191 = vmatpush1.msra.mxu0 0.0
        %3192 = vmatprep.subr.mxu0 0.0
        %3193 = vmatpush1.msra.mxu0 0.0
        %3194 = vmatprep.subr.mxu0 0.0
        %3195 = vmatpush1.msra.mxu0 0.0
        %3196 = vmatprep.subr.mxu0 0.0
        %3197 = vmatpush1.msra.mxu0 0.0
        %3198 = vmatprep.mubr.f32.mxu0 0.0
        %v3199 = vand.u32 %v2085, 4294901760
        %v3200 = vsub.f32 %v2085, %v3199
        %v3201 = vand.u32 %v3200, 4294901760
        %v3202 = vsub.f32 %v3200, %v3201
        %v3203 = vand.u32 %v3202, 4294901760
        %3204 = vmatmul.mubr.f32.gmra.mrb[0].mxu0 %v3203
        %v3205 = vpop.f32.mrb[0].mxu0
        %v3206 = vadd.f32 %v3102, %v3205
        %v3207 = vpop.f32.mrb[0].mxu0
        %3208 = vmatprep.mubr.f32.mxu0 0.0
        %v3209 = vand.u32 %v2088, 4294901760
        %v3210 = vsub.f32 %v2088, %v3209
        %v3211 = vand.u32 %v3210, 4294901760
        %v3212 = vsub.f32 %v3210, %v3211
        %v3213 = vand.u32 %v3212, 4294901760
        %3214 = vmatmul.mubr.f32.gmra.mrb[0].mxu0 %v3213
        %v3215 = vpop.f32.mrb[0].mxu0
        %v3216 = vadd.f32 %v3109, %v3215
        %v3217 = vpop.f32.mrb[0].mxu0
        %3218 = vmatprep.mubr.f32.mxu0 0.0
        %v3219 = vand.u32 %v2091, 4294901760
        %v3220 = vsub.f32 %v2091, %v3219
        %v3221 = vand.u32 %v3220, 4294901760
        %v3222 = vsub.f32 %v3220, %v3221
        %v3223 = vand.u32 %v3222, 4294901760
        %3224 = vmatmul.mubr.f32.gmra.mrb[0].mxu0 %v3223
        %v3225 = vpop.f32.mrb[0].mxu0
        %v3226 = vadd.f32 %v3116, %v3225
        %v3227 = vpop.f32.mrb[0].mxu0
        %3228 = vmatprep.mubr.f32.mxu0 0.0
        %v3229 = vand.u32 %v2094, 4294901760
        %v3230 = vsub.f32 %v2094, %v3229
        %v3231 = vand.u32 %v3230, 4294901760
        %v3232 = vsub.f32 %v3230, %v3231
        %v3233 = vand.u32 %v3232, 4294901760
        %3234 = vmatmul.mubr.f32.gmra.mrb[0].mxu0 %v3233
        %v3235 = vpop.f32.mrb[0].mxu0
        %v3236 = vadd.f32 %v3123, %v3235
        %v3237 = vpop.f32.mrb[0].mxu0
        %3238 = vdwg.mxu0
        %3239 = vmatprep.subr.mxu0 0.0
        %v3240 = vand.u32 %v2076, 4294901760
        %v3241 = vsub.f32 %v2076, %v3240
        %v3242 = vand.u32 %v3241, 4294901760
        %v3243 = vsub.f32 %v3241, %v3242
        %v3244 = vand.u32 %v3243, 4294901760
        %3245 = vmatpush1.msra.mxu0 %v3244
        %3246 = vmatprep.subr.mxu0 0.0
        %v3247 = vand.u32 %v2077, 4294901760
        %v3248 = vsub.f32 %v2077, %v3247
        %v3249 = vand.u32 %v3248, 4294901760
        %v3250 = vsub.f32 %v3248, %v3249
        %v3251 = vand.u32 %v3250, 4294901760
        %3252 = vmatpush1.msra.mxu0 %v3251
        %3253 = vmatprep.subr.mxu0 0.0
        %v3254 = vand.u32 %v2078, 4294901760
        %v3255 = vsub.f32 %v2078, %v3254
        %v3256 = vand.u32 %v3255, 4294901760
        %v3257 = vsub.f32 %v3255, %v3256
        %v3258 = vand.u32 %v3257, 4294901760
        %3259 = vmatpush1.msra.mxu0 %v3258
        %3260 = vmatprep.subr.mxu0 0.0
        %v3261 = vand.u32 %v2079, 4294901760
        %v3262 = vsub.f32 %v2079, %v3261
        %v3263 = vand.u32 %v3262, 4294901760
        %v3264 = vsub.f32 %v3262, %v3263
        %v3265 = vand.u32 %v3264, 4294901760
        %3266 = vmatpush1.msra.mxu0 %v3265
        %3267 = vmatprep.subr.mxu0 0.0
        %v3268 = vand.u32 %v2080, 4294901760
        %v3269 = vsub.f32 %v2080, %v3268
        %v3270 = vand.u32 %v3269, 4294901760
        %v3271 = vsub.f32 %v3269, %v3270
        %v3272 = vand.u32 %v3271, 4294901760
        %3273 = vmatpush1.msra.mxu0 %v3272
        %3274 = vmatprep.subr.mxu0 0.0
        %v3275 = vand.u32 %v2081, 4294901760
        %v3276 = vsub.f32 %v2081, %v3275
        %v3277 = vand.u32 %v3276, 4294901760
        %v3278 = vsub.f32 %v3276, %v3277
        %v3279 = vand.u32 %v3278, 4294901760
        %3280 = vmatpush1.msra.mxu0 %v3279
        %3281 = vmatprep.subr.mxu0 0.0
        %v3282 = vand.u32 %v2082, 4294901760
        %v3283 = vsub.f32 %v2082, %v3282
        %v3284 = vand.u32 %v3283, 4294901760
        %v3285 = vsub.f32 %v3283, %v3284
        %v3286 = vand.u32 %v3285, 4294901760
        %3287 = vmatpush1.msra.mxu0 %v3286
        %3288 = vmatprep.subr.mxu0 0.0
        %v3289 = vand.u32 %v2083, 4294901760
        %v3290 = vsub.f32 %v2083, %v3289
        %v3291 = vand.u32 %v3290, 4294901760
        %v3292 = vsub.f32 %v3290, %v3291
        %v3293 = vand.u32 %v3292, 4294901760
        %3294 = vmatpush1.msra.mxu0 %v3293
        %3295 = vmatprep.subr.mxu0 0.0
        %3296 = vmatpush1.msra.mxu0 0.0
        %3297 = vmatprep.subr.mxu0 0.0
        %3298 = vmatpush1.msra.mxu0 0.0
        %3299 = vmatprep.subr.mxu0 0.0
        %3300 = vmatpush1.msra.mxu0 0.0
        %3301 = vmatprep.subr.mxu0 0.0
        %3302 = vmatpush1.msra.mxu0 0.0
        %3303 = vmatprep.subr.mxu0 0.0
        %3304 = vmatpush1.msra.mxu0 0.0
        %3305 = vmatprep.subr.mxu0 0.0
        %3306 = vmatpush1.msra.mxu0 0.0
        %3307 = vmatprep.subr.mxu0 0.0
        %3308 = vmatpush1.msra.mxu0 0.0
        %3309 = vmatprep.subr.mxu0 0.0
        %3310 = vmatpush1.msra.mxu0 0.0
        %3311 = vmatprep.subr.mxu0 0.0
        %3312 = vmatpush1.msra.mxu0 0.0
        %3313 = vmatprep.subr.mxu0 0.0
        %3314 = vmatpush1.msra.mxu0 0.0
        %3315 = vmatprep.subr.mxu0 0.0
        %3316 = vmatpush1.msra.mxu0 0.0
        %3317 = vmatprep.subr.mxu0 0.0
        %3318 = vmatpush1.msra.mxu0 0.0
        %3319 = vmatprep.subr.mxu0 0.0
        %3320 = vmatpush1.msra.mxu0 0.0
        %3321 = vmatprep.subr.mxu0 0.0
        %3322 = vmatpush1.msra.mxu0 0.0
        %3323 = vmatprep.subr.mxu0 0.0
        %3324 = vmatpush1.msra.mxu0 0.0
        %3325 = vmatprep.subr.mxu0 0.0
        %3326 = vmatpush1.msra.mxu0 0.0
        %3327 = vmatprep.subr.mxu0 0.0
        %3328 = vmatpush1.msra.mxu0 0.0
        %3329 = vmatprep.subr.mxu0 0.0
        %3330 = vmatpush1.msra.mxu0 0.0
        %3331 = vmatprep.subr.mxu0 0.0
        %3332 = vmatpush1.msra.mxu0 0.0
        %3333 = vmatprep.subr.mxu0 0.0
        %3334 = vmatpush1.msra.mxu0 0.0
        %3335 = vmatprep.subr.mxu0 0.0
        %3336 = vmatpush1.msra.mxu0 0.0
        %3337 = vmatprep.subr.mxu0 0.0
        %3338 = vmatpush1.msra.mxu0 0.0
        %3339 = vmatprep.subr.mxu0 0.0
        %3340 = vmatpush1.msra.mxu0 0.0
        %3341 = vmatprep.subr.mxu0 0.0
        %3342 = vmatpush1.msra.mxu0 0.0
        %3343 = vmatprep.mubr.f32.mxu0 0.0
        %v3344 = vand.u32 %v2085, 4294901760
        %3345 = vmatmul.mubr.f32.gmra.mrb[0].mxu0 %v3344
        %v3346 = vpop.f32.mrb[0].mxu0
        %v3347 = vadd.f32 %v3206, %v3346
        %v3348 = vpop.f32.mrb[0].mxu0
        %3349 = vmatprep.mubr.f32.mxu0 0.0
        %v3350 = vand.u32 %v2088, 4294901760
        %3351 = vmatmul.mubr.f32.gmra.mrb[0].mxu0 %v3350
        %v3352 = vpop.f32.mrb[0].mxu0
        %v3353 = vadd.f32 %v3216, %v3352
        %v3354 = vpop.f32.mrb[0].mxu0
        %3355 = vmatprep.mubr.f32.mxu0 0.0
        %v3356 = vand.u32 %v2091, 4294901760
        %3357 = vmatmul.mubr.f32.gmra.mrb[0].mxu0 %v3356
        %v3358 = vpop.f32.mrb[0].mxu0
        %v3359 = vadd.f32 %v3226, %v3358
        %v3360 = vpop.f32.mrb[0].mxu0
        %3361 = vmatprep.mubr.f32.mxu0 0.0
        %v3362 = vand.u32 %v2094, 4294901760
        %3363 = vmatmul.mubr.f32.gmra.mrb[0].mxu0 %v3362
        %v3364 = vpop.f32.mrb[0].mxu0
        %v3365 = vadd.f32 %v3236, %v3364
        %v3366 = vpop.f32.mrb[0].mxu0
        %3367 = vdwg.mxu0
        %3368 = vmatprep.subr.mxu0 0.0
        %v3369 = vand.u32 %v2076, 4294901760
        %v3370 = vsub.f32 %v2076, %v3369
        %3371 = vmatpush1.msra.mxu0 %v3370
        %3372 = vmatprep.subr.mxu0 0.0
        %v3373 = vand.u32 %v2077, 4294901760
        %v3374 = vsub.f32 %v2077, %v3373
        %3375 = vmatpush1.msra.mxu0 %v3374
        %3376 = vmatprep.subr.mxu0 0.0
        %v3377 = vand.u32 %v2078, 4294901760
        %v3378 = vsub.f32 %v2078, %v3377
        %3379 = vmatpush1.msra.mxu0 %v3378
        %3380 = vmatprep.subr.mxu0 0.0
        %v3381 = vand.u32 %v2079, 4294901760
        %v3382 = vsub.f32 %v2079, %v3381
        %3383 = vmatpush1.msra.mxu0 %v3382
        %3384 = vmatprep.subr.mxu0 0.0
        %v3385 = vand.u32 %v2080, 4294901760
        %v3386 = vsub.f32 %v2080, %v3385
        %3387 = vmatpush1.msra.mxu0 %v3386
        %3388 = vmatprep.subr.mxu0 0.0
        %v3389 = vand.u32 %v2081, 4294901760
        %v3390 = vsub.f32 %v2081, %v3389
        %3391 = vmatpush1.msra.mxu0 %v3390
        %3392 = vmatprep.subr.mxu0 0.0
        %v3393 = vand.u32 %v2082, 4294901760
        %v3394 = vsub.f32 %v2082, %v3393
        %3395 = vmatpush1.msra.mxu0 %v3394
        %3396 = vmatprep.subr.mxu0 0.0
        %v3397 = vand.u32 %v2083, 4294901760
        %v3398 = vsub.f32 %v2083, %v3397
        %3399 = vmatpush1.msra.mxu0 %v3398
        %3400 = vmatprep.subr.mxu0 0.0
        %3401 = vmatpush1.msra.mxu0 0.0
        %3402 = vmatprep.subr.mxu0 0.0
        %3403 = vmatpush1.msra.mxu0 0.0
        %3404 = vmatprep.subr.mxu0 0.0
        %3405 = vmatpush1.msra.mxu0 0.0
        %3406 = vmatprep.subr.mxu0 0.0
        %3407 = vmatpush1.msra.mxu0 0.0
        %3408 = vmatprep.subr.mxu0 0.0
        %3409 = vmatpush1.msra.mxu0 0.0
        %3410 = vmatprep.subr.mxu0 0.0
        %3411 = vmatpush1.msra.mxu0 0.0
        %3412 = vmatprep.subr.mxu0 0.0
        %3413 = vmatpush1.msra.mxu0 0.0
        %3414 = vmatprep.subr.mxu0 0.0
        %3415 = vmatpush1.msra.mxu0 0.0
        %3416 = vmatprep.subr.mxu0 0.0
        %3417 = vmatpush1.msra.mxu0 0.0
        %3418 = vmatprep.subr.mxu0 0.0
        %3419 = vmatpush1.msra.mxu0 0.0
        %3420 = vmatprep.subr.mxu0 0.0
        %3421 = vmatpush1.msra.mxu0 0.0
        %3422 = vmatprep.subr.mxu0 0.0
        %3423 = vmatpush1.msra.mxu0 0.0
        %3424 = vmatprep.subr.mxu0 0.0
        %3425 = vmatpush1.msra.mxu0 0.0
        %3426 = vmatprep.subr.mxu0 0.0
        %3427 = vmatpush1.msra.mxu0 0.0
        %3428 = vmatprep.subr.mxu0 0.0
        %3429 = vmatpush1.msra.mxu0 0.0
        %3430 = vmatprep.subr.mxu0 0.0
        %3431 = vmatpush1.msra.mxu0 0.0
        %3432 = vmatprep.subr.mxu0 0.0
        %3433 = vmatpush1.msra.mxu0 0.0
        %3434 = vmatprep.subr.mxu0 0.0
        %3435 = vmatpush1.msra.mxu0 0.0
        %3436 = vmatprep.subr.mxu0 0.0
        %3437 = vmatpush1.msra.mxu0 0.0
        %3438 = vmatprep.subr.mxu0 0.0
        %3439 = vmatpush1.msra.mxu0 0.0
        %3440 = vmatprep.subr.mxu0 0.0
        %3441 = vmatpush1.msra.mxu0 0.0
        %3442 = vmatprep.subr.mxu0 0.0
        %3443 = vmatpush1.msra.mxu0 0.0
        %3444 = vmatprep.subr.mxu0 0.0
        %3445 = vmatpush1.msra.mxu0 0.0
        %3446 = vmatprep.subr.mxu0 0.0
        %3447 = vmatpush1.msra.mxu0 0.0
        %3448 = vmatprep.mubr.f32.mxu0 0.0
        %v3449 = vand.u32 %v2085, 4294901760
        %v3450 = vsub.f32 %v2085, %v3449
        %3451 = vmatmul.mubr.f32.gmra.mrb[0].mxu0 %v3450
        %v3452 = vpop.f32.mrb[0].mxu0
        %v3453 = vadd.f32 %v3347, %v3452
        %v3454 = vpop.f32.mrb[0].mxu0
        %3455 = vmatprep.mubr.f32.mxu0 0.0
        %v3456 = vand.u32 %v2088, 4294901760
        %v3457 = vsub.f32 %v2088, %v3456
        %3458 = vmatmul.mubr.f32.gmra.mrb[0].mxu0 %v3457
        %v3459 = vpop.f32.mrb[0].mxu0
        %v3460 = vadd.f32 %v3353, %v3459
        %v3461 = vpop.f32.mrb[0].mxu0
        %3462 = vmatprep.mubr.f32.mxu0 0.0
        %v3463 = vand.u32 %v2091, 4294901760
        %v3464 = vsub.f32 %v2091, %v3463
        %3465 = vmatmul.mubr.f32.gmra.mrb[0].mxu0 %v3464
        %v3466 = vpop.f32.mrb[0].mxu0
        %v3467 = vadd.f32 %v3359, %v3466
        %v3468 = vpop.f32.mrb[0].mxu0
        %3469 = vmatprep.mubr.f32.mxu0 0.0
        %v3470 = vand.u32 %v2094, 4294901760
        %v3471 = vsub.f32 %v2094, %v3470
        %3472 = vmatmul.mubr.f32.gmra.mrb[0].mxu0 %v3471
        %v3473 = vpop.f32.mrb[0].mxu0
        %v3474 = vadd.f32 %v3365, %v3473
        %v3475 = vpop.f32.mrb[0].mxu0
        %3476 = vdwg.mxu0
        %3477 = vmatprep.subr.mxu0 0.0
        %v3478 = vand.u32 %v2076, 4294901760
        %3479 = vmatpush1.msra.mxu0 %v3478
        %3480 = vmatprep.subr.mxu0 0.0
        %v3481 = vand.u32 %v2077, 4294901760
        %3482 = vmatpush1.msra.mxu0 %v3481
        %3483 = vmatprep.subr.mxu0 0.0
        %v3484 = vand.u32 %v2078, 4294901760
        %3485 = vmatpush1.msra.mxu0 %v3484
        %3486 = vmatprep.subr.mxu0 0.0
        %v3487 = vand.u32 %v2079, 4294901760
        %3488 = vmatpush1.msra.mxu0 %v3487
        %3489 = vmatprep.subr.mxu0 0.0
        %v3490 = vand.u32 %v2080, 4294901760
        %3491 = vmatpush1.msra.mxu0 %v3490
        %3492 = vmatprep.subr.mxu0 0.0
        %v3493 = vand.u32 %v2081, 4294901760
        %3494 = vmatpush1.msra.mxu0 %v3493
        %3495 = vmatprep.subr.mxu0 0.0
        %v3496 = vand.u32 %v2082, 4294901760
        %3497 = vmatpush1.msra.mxu0 %v3496
        %3498 = vmatprep.subr.mxu0 0.0
        %v3499 = vand.u32 %v2083, 4294901760
        %3500 = vmatpush1.msra.mxu0 %v3499
        %3501 = vmatprep.subr.mxu0 0.0
        %3502 = vmatpush1.msra.mxu0 0.0
        %3503 = vmatprep.subr.mxu0 0.0
        %3504 = vmatpush1.msra.mxu0 0.0
        %3505 = vmatprep.subr.mxu0 0.0
        %3506 = vmatpush1.msra.mxu0 0.0
        %3507 = vmatprep.subr.mxu0 0.0
        %3508 = vmatpush1.msra.mxu0 0.0
        %3509 = vmatprep.subr.mxu0 0.0
        %3510 = vmatpush1.msra.mxu0 0.0
        %3511 = vmatprep.subr.mxu0 0.0
        %3512 = vmatpush1.msra.mxu0 0.0
        %3513 = vmatprep.subr.mxu0 0.0
        %3514 = vmatpush1.msra.mxu0 0.0
        %3515 = vmatprep.subr.mxu0 0.0
        %3516 = vmatpush1.msra.mxu0 0.0
        %3517 = vmatprep.subr.mxu0 0.0
        %3518 = vmatpush1.msra.mxu0 0.0
        %3519 = vmatprep.subr.mxu0 0.0
        %3520 = vmatpush1.msra.mxu0 0.0
        %3521 = vmatprep.subr.mxu0 0.0
        %3522 = vmatpush1.msra.mxu0 0.0
        %3523 = vmatprep.subr.mxu0 0.0
        %3524 = vmatpush1.msra.mxu0 0.0
        %3525 = vmatprep.subr.mxu0 0.0
        %3526 = vmatpush1.msra.mxu0 0.0
        %3527 = vmatprep.subr.mxu0 0.0
        %3528 = vmatpush1.msra.mxu0 0.0
        %3529 = vmatprep.subr.mxu0 0.0
        %3530 = vmatpush1.msra.mxu0 0.0
        %3531 = vmatprep.subr.mxu0 0.0
        %3532 = vmatpush1.msra.mxu0 0.0
        %3533 = vmatprep.subr.mxu0 0.0
        %3534 = vmatpush1.msra.mxu0 0.0
        %3535 = vmatprep.subr.mxu0 0.0
        %3536 = vmatpush1.msra.mxu0 0.0
        %3537 = vmatprep.subr.mxu0 0.0
        %3538 = vmatpush1.msra.mxu0 0.0
        %3539 = vmatprep.subr.mxu0 0.0
        %3540 = vmatpush1.msra.mxu0 0.0
        %3541 = vmatprep.subr.mxu0 0.0
        %3542 = vmatpush1.msra.mxu0 0.0
        %3543 = vmatprep.subr.mxu0 0.0
        %3544 = vmatpush1.msra.mxu0 0.0
        %3545 = vmatprep.subr.mxu0 0.0
        %3546 = vmatpush1.msra.mxu0 0.0
        %3547 = vmatprep.subr.mxu0 0.0
        %3548 = vmatpush1.msra.mxu0 0.0
        %3549 = vmatprep.mubr.f32.mxu0 0.0
        %v3550 = vand.u32 %v2085, 4294901760
        %v3551 = vsub.f32 %v2085, %v3550
        %v3552 = vand.u32 %v3551, 4294901760
        %3553 = vmatmul.mubr.f32.gmra.mrb[0].mxu0 %v3552
        %v3554 = vpop.f32.mrb[0].mxu0
        %v3555 = vadd.f32 %v3453, %v3554
        %v3556 = vpop.f32.mrb[0].mxu0
        %3557 = vmatprep.mubr.f32.mxu0 0.0
        %v3558 = vand.u32 %v2088, 4294901760
        %v3559 = vsub.f32 %v2088, %v3558
        %v3560 = vand.u32 %v3559, 4294901760
        %3561 = vmatmul.mubr.f32.gmra.mrb[0].mxu0 %v3560
        %v3562 = vpop.f32.mrb[0].mxu0
        %v3563 = vadd.f32 %v3460, %v3562
        %v3564 = vpop.f32.mrb[0].mxu0
        %3565 = vmatprep.mubr.f32.mxu0 0.0
        %v3566 = vand.u32 %v2091, 4294901760
        %v3567 = vsub.f32 %v2091, %v3566
        %v3568 = vand.u32 %v3567, 4294901760
        %3569 = vmatmul.mubr.f32.gmra.mrb[0].mxu0 %v3568
        %v3570 = vpop.f32.mrb[0].mxu0
        %v3571 = vadd.f32 %v3467, %v3570
        %v3572 = vpop.f32.mrb[0].mxu0
        %3573 = vmatprep.mubr.f32.mxu0 0.0
        %v3574 = vand.u32 %v2094, 4294901760
        %v3575 = vsub.f32 %v2094, %v3574
        %v3576 = vand.u32 %v3575, 4294901760
        %3577 = vmatmul.mubr.f32.gmra.mrb[0].mxu0 %v3576
        %v3578 = vpop.f32.mrb[0].mxu0
        %v3579 = vadd.f32 %v3474, %v3578
        %v3580 = vpop.f32.mrb[0].mxu0
        %3581 = vdwg.mxu0
        %3582 = vmatprep.subr.mxu0 0.0
        %v3583 = vand.u32 %v2076, 4294901760
        %v3584 = vsub.f32 %v2076, %v3583
        %v3585 = vand.u32 %v3584, 4294901760
        %3586 = vmatpush1.msra.mxu0 %v3585
        %3587 = vmatprep.subr.mxu0 0.0
        %v3588 = vand.u32 %v2077, 4294901760
        %v3589 = vsub.f32 %v2077, %v3588
        %v3590 = vand.u32 %v3589, 4294901760
        %3591 = vmatpush1.msra.mxu0 %v3590
        %3592 = vmatprep.subr.mxu0 0.0
        %v3593 = vand.u32 %v2078, 4294901760
        %v3594 = vsub.f32 %v2078, %v3593
        %v3595 = vand.u32 %v3594, 4294901760
        %3596 = vmatpush1.msra.mxu0 %v3595
        %3597 = vmatprep.subr.mxu0 0.0
        %v3598 = vand.u32 %v2079, 4294901760
        %v3599 = vsub.f32 %v2079, %v3598
        %v3600 = vand.u32 %v3599, 4294901760
        %3601 = vmatpush1.msra.mxu0 %v3600
        %3602 = vmatprep.subr.mxu0 0.0
        %v3603 = vand.u32 %v2080, 4294901760
        %v3604 = vsub.f32 %v2080, %v3603
        %v3605 = vand.u32 %v3604, 4294901760
        %3606 = vmatpush1.msra.mxu0 %v3605
        %3607 = vmatprep.subr.mxu0 0.0
        %v3608 = vand.u32 %v2081, 4294901760
        %v3609 = vsub.f32 %v2081, %v3608
        %v3610 = vand.u32 %v3609, 4294901760
        %3611 = vmatpush1.msra.mxu0 %v3610
        %3612 = vmatprep.subr.mxu0 0.0
        %v3613 = vand.u32 %v2082, 4294901760
        %v3614 = vsub.f32 %v2082, %v3613
        %v3615 = vand.u32 %v3614, 4294901760
        %3616 = vmatpush1.msra.mxu0 %v3615
        %3617 = vmatprep.subr.mxu0 0.0
        %v3618 = vand.u32 %v2083, 4294901760
        %v3619 = vsub.f32 %v2083, %v3618
        %v3620 = vand.u32 %v3619, 4294901760
        %3621 = vmatpush1.msra.mxu0 %v3620
        %3622 = vmatprep.subr.mxu0 0.0
        %3623 = vmatpush1.msra.mxu0 0.0
        %3624 = vmatprep.subr.mxu0 0.0
        %3625 = vmatpush1.msra.mxu0 0.0
        %3626 = vmatprep.subr.mxu0 0.0
        %3627 = vmatpush1.msra.mxu0 0.0
        %3628 = vmatprep.subr.mxu0 0.0
        %3629 = vmatpush1.msra.mxu0 0.0
        %3630 = vmatprep.subr.mxu0 0.0
        %3631 = vmatpush1.msra.mxu0 0.0
        %3632 = vmatprep.subr.mxu0 0.0
        %3633 = vmatpush1.msra.mxu0 0.0
        %3634 = vmatprep.subr.mxu0 0.0
        %3635 = vmatpush1.msra.mxu0 0.0
        %3636 = vmatprep.subr.mxu0 0.0
        %3637 = vmatpush1.msra.mxu0 0.0
        %3638 = vmatprep.subr.mxu0 0.0
        %3639 = vmatpush1.msra.mxu0 0.0
        %3640 = vmatprep.subr.mxu0 0.0
        %3641 = vmatpush1.msra.mxu0 0.0
        %3642 = vmatprep.subr.mxu0 0.0
        %3643 = vmatpush1.msra.mxu0 0.0
        %3644 = vmatprep.subr.mxu0 0.0
        %3645 = vmatpush1.msra.mxu0 0.0
        %3646 = vmatprep.subr.mxu0 0.0
        %3647 = vmatpush1.msra.mxu0 0.0
        %3648 = vmatprep.subr.mxu0 0.0
        %3649 = vmatpush1.msra.mxu0 0.0
        %3650 = vmatprep.subr.mxu0 0.0
        %3651 = vmatpush1.msra.mxu0 0.0
        %3652 = vmatprep.subr.mxu0 0.0
        %3653 = vmatpush1.msra.mxu0 0.0
        %3654 = vmatprep.subr.mxu0 0.0
        %3655 = vmatpush1.msra.mxu0 0.0
        %3656 = vmatprep.subr.mxu0 0.0
        %3657 = vmatpush1.msra.mxu0 0.0
        %3658 = vmatprep.subr.mxu0 0.0
        %3659 = vmatpush1.msra.mxu0 0.0
        %3660 = vmatprep.subr.mxu0 0.0
        %3661 = vmatpush1.msra.mxu0 0.0
        %3662 = vmatprep.subr.mxu0 0.0
        %3663 = vmatpush1.msra.mxu0 0.0
        %3664 = vmatprep.subr.mxu0 0.0
        %3665 = vmatpush1.msra.mxu0 0.0
        %3666 = vmatprep.subr.mxu0 0.0
        %3667 = vmatpush1.msra.mxu0 0.0
        %3668 = vmatprep.subr.mxu0 0.0
        %3669 = vmatpush1.msra.mxu0 0.0
        %3670 = vmatprep.mubr.f32.mxu0 0.0
        %v3671 = vand.u32 %v2085, 4294901760
        %3672 = vmatmul.mubr.f32.gmra.mrb[0].mxu0 %v3671
        %v3673 = vpop.f32.mrb[0].mxu0
        %v3674 = vadd.f32 %v3555, %v3673
        %v3675 = vpop.f32.mrb[0].mxu0
        %3676 = vmatprep.mubr.f32.mxu0 0.0
        %v3677 = vand.u32 %v2088, 4294901760
        %3678 = vmatmul.mubr.f32.gmra.mrb[0].mxu0 %v3677
        %v3679 = vpop.f32.mrb[0].mxu0
        %v3680 = vadd.f32 %v3563, %v3679
        %v3681 = vpop.f32.mrb[0].mxu0
        %3682 = vmatprep.mubr.f32.mxu0 0.0
        %v3683 = vand.u32 %v2091, 4294901760
        %3684 = vmatmul.mubr.f32.gmra.mrb[0].mxu0 %v3683
        %v3685 = vpop.f32.mrb[0].mxu0
        %v3686 = vadd.f32 %v3571, %v3685
        %v3687 = vpop.f32.mrb[0].mxu0
        %3688 = vmatprep.mubr.f32.mxu0 0.0
        %v3689 = vand.u32 %v2094, 4294901760
        %3690 = vmatmul.mubr.f32.gmra.mrb[0].mxu0 %v3689
        %v3691 = vpop.f32.mrb[0].mxu0
        %v3692 = vadd.f32 %v3579, %v3691
        %v3693 = vpop.f32.mrb[0].mxu0
        %3694 = vdwg.mxu0
        %3695 = vmatprep.subr.mxu0 0.0
        %v3696 = vand.u32 %v2076, 4294901760
        %3697 = vmatpush1.msra.mxu0 %v3696
        %3698 = vmatprep.subr.mxu0 0.0
        %v3699 = vand.u32 %v2077, 4294901760
        %3700 = vmatpush1.msra.mxu0 %v3699
        %3701 = vmatprep.subr.mxu0 0.0
        %v3702 = vand.u32 %v2078, 4294901760
        %3703 = vmatpush1.msra.mxu0 %v3702
        %3704 = vmatprep.subr.mxu0 0.0
        %v3705 = vand.u32 %v2079, 4294901760
        %3706 = vmatpush1.msra.mxu0 %v3705
        %3707 = vmatprep.subr.mxu0 0.0
        %v3708 = vand.u32 %v2080, 4294901760
        %3709 = vmatpush1.msra.mxu0 %v3708
        %3710 = vmatprep.subr.mxu0 0.0
        %v3711 = vand.u32 %v2081, 4294901760
        %3712 = vmatpush1.msra.mxu0 %v3711
        %3713 = vmatprep.subr.mxu0 0.0
        %v3714 = vand.u32 %v2082, 4294901760
        %3715 = vmatpush1.msra.mxu0 %v3714
        %3716 = vmatprep.subr.mxu0 0.0
        %v3717 = vand.u32 %v2083, 4294901760
        %3718 = vmatpush1.msra.mxu0 %v3717
        %3719 = vmatprep.subr.mxu0 0.0
        %3720 = vmatpush1.msra.mxu0 0.0
        %3721 = vmatprep.subr.mxu0 0.0
        %3722 = vmatpush1.msra.mxu0 0.0
        %3723 = vmatprep.subr.mxu0 0.0
        %3724 = vmatpush1.msra.mxu0 0.0
        %3725 = vmatprep.subr.mxu0 0.0
        %3726 = vmatpush1.msra.mxu0 0.0
        %3727 = vmatprep.subr.mxu0 0.0
        %3728 = vmatpush1.msra.mxu0 0.0
        %3729 = vmatprep.subr.mxu0 0.0
        %3730 = vmatpush1.msra.mxu0 0.0
        %3731 = vmatprep.subr.mxu0 0.0
        %3732 = vmatpush1.msra.mxu0 0.0
        %3733 = vmatprep.subr.mxu0 0.0
        %3734 = vmatpush1.msra.mxu0 0.0
        %3735 = vmatprep.subr.mxu0 0.0
        %3736 = vmatpush1.msra.mxu0 0.0
        %3737 = vmatprep.subr.mxu0 0.0
        %3738 = vmatpush1.msra.mxu0 0.0
        %3739 = vmatprep.subr.mxu0 0.0
        %3740 = vmatpush1.msra.mxu0 0.0
        %3741 = vmatprep.subr.mxu0 0.0
        %3742 = vmatpush1.msra.mxu0 0.0
        %3743 = vmatprep.subr.mxu0 0.0
        %3744 = vmatpush1.msra.mxu0 0.0
        %3745 = vmatprep.subr.mxu0 0.0
        %3746 = vmatpush1.msra.mxu0 0.0
        %3747 = vmatprep.subr.mxu0 0.0
        %3748 = vmatpush1.msra.mxu0 0.0
        %3749 = vmatprep.subr.mxu0 0.0
        %3750 = vmatpush1.msra.mxu0 0.0
        %3751 = vmatprep.subr.mxu0 0.0
        %3752 = vmatpush1.msra.mxu0 0.0
        %3753 = vmatprep.subr.mxu0 0.0
        %3754 = vmatpush1.msra.mxu0 0.0
        %3755 = vmatprep.subr.mxu0 0.0
        %3756 = vmatpush1.msra.mxu0 0.0
        %3757 = vmatprep.subr.mxu0 0.0
        %3758 = vmatpush1.msra.mxu0 0.0
        %3759 = vmatprep.subr.mxu0 0.0
        %3760 = vmatpush1.msra.mxu0 0.0
        %3761 = vmatprep.subr.mxu0 0.0
        %3762 = vmatpush1.msra.mxu0 0.0
        %3763 = vmatprep.subr.mxu0 0.0
        %3764 = vmatpush1.msra.mxu0 0.0
        %3765 = vmatprep.subr.mxu0 0.0
        %3766 = vmatpush1.msra.mxu0 0.0
        %3767 = vmatprep.mubr.f32.mxu0 0.0
        %v3768 = vand.u32 %v2085, 4294901760
        %3769 = vmatmul.mubr.f32.gmra.mrb[0].mxu0 %v3768
        %v3770 = vpop.f32.mrb[0].mxu0
        %v3771 = vadd.f32 %v3674, %v3770
        %v3772 = vpop.f32.mrb[0].mxu0
        %3773 = vmatprep.mubr.f32.mxu0 0.0
        %v3774 = vand.u32 %v2088, 4294901760
        %3775 = vmatmul.mubr.f32.gmra.mrb[0].mxu0 %v3774
        %v3776 = vpop.f32.mrb[0].mxu0
        %v3777 = vadd.f32 %v3680, %v3776
        %v3778 = vpop.f32.mrb[0].mxu0
        %3779 = vmatprep.mubr.f32.mxu0 0.0
        %v3780 = vand.u32 %v2091, 4294901760
        %3781 = vmatmul.mubr.f32.gmra.mrb[0].mxu0 %v3780
        %v3782 = vpop.f32.mrb[0].mxu0
        %v3783 = vadd.f32 %v3686, %v3782
        %v3784 = vpop.f32.mrb[0].mxu0
        %3785 = vmatprep.mubr.f32.mxu0 0.0
        %v3786 = vand.u32 %v2094, 4294901760
        %3787 = vmatmul.mubr.f32.gmra.mrb[0].mxu0 %v3786
        %v3788 = vpop.f32.mrb[0].mxu0
        %v3789 = vadd.f32 %v3692, %v3788
        %v3790 = vpop.f32.mrb[0].mxu0
        %3791 = vdwg.mxu0
        %v3792 = vld [vmem:[%s7] sm:$0x1]
        %v3793 = vld [vmem:[%s8] sm:$0x1]
        %v3794 = vld [vmem:[%s9] sm:$0x1]
        %v3796 = vlaneseq
        %v3797 = vshrl.u32 %v3796, 7
        %v3798 = vsub.s32 0, %v3797
        %v3799 = vrot.slane %v3792, %v3798
        %v3801 = vmul.f32 %v3799, %v1591
        %v3802 = vmul.f32 %v3799, %v1598
        %v3803 = vmul.f32 %v3799, %v1605
        %v3804 = vmul.f32 %v3799, %v1612
        %v3805 = vsel %vm1618, %v1591, %v3801
        %v3806 = vsel %vm1619, %v1598, %v3802
        %v3807 = vsel %vm1620, %v1605, %v3803
        %v3808 = vsel %vm1621, %v1612, %v3804
        %v3809 = vsel %vm1636, %v3805, 0.0
        %3810 = vadd.xlane.f32.xlu0 %v3809
        %v3811 = vpop.xlane.xlu0 %3810
        %v3812 = vsel %vm1636, %v3806, 0.0
        %3813 = vadd.xlane.f32.xlu0 %v3812
        %v3814 = vpop.xlane.xlu0 %3813
        %v3815 = vsel %vm1636, %v3807, 0.0
        %3816 = vadd.xlane.f32.xlu0 %v3815
        %v3817 = vpop.xlane.xlu0 %3816
        %v3818 = vsel %vm1636, %v3808, 0.0
        %3819 = vadd.xlane.f32.xlu0 %v3818
        %v3820 = vpop.xlane.xlu0 %3819
        %v3821 = vmul.f32 %v3805, %v3805
        %v3822 = vmul.f32 %v3806, %v3806
        %v3823 = vmul.f32 %v3807, %v3807
        %v3824 = vmul.f32 %v3808, %v3808
        %v3825 = vsel %vm1636, %v3821, 0.0
        %3826 = vadd.xlane.f32.xlu0 %v3825
        %v3827 = vpop.xlane.xlu0 %3826
        %v3828 = vsel %vm1636, %v3822, 0.0
        %3829 = vadd.xlane.f32.xlu0 %v3828
        %v3830 = vpop.xlane.xlu0 %3829
        %v3831 = vsel %vm1636, %v3823, 0.0
        %3832 = vadd.xlane.f32.xlu0 %v3831
        %v3833 = vpop.xlane.xlu0 %3832
        %v3834 = vsel %vm1636, %v3824, 0.0
        %3835 = vadd.xlane.f32.xlu0 %v3834
        %v3836 = vpop.xlane.xlu0 %3835
        %v3837 = vrot.slane %v3811, 7
        %v3838 = vrot.slane %v3814, 7
        %v3839 = vrot.slane %v3817, 7
        %v3840 = vrot.slane %v3820, 7
        %v3841 = vsel %vm1669, %v3839, %v3840
        %v3842 = vsel %vm1669, %v3838, %v3839
        %v3843 = vsel %vm1669, %v3837, %v3838
        %v3844 = vsel %vm1669, %v3840, %v3837
        %v3845 = vsel %vm1674, %v3844, 0.0
        %v3846 = vsel %vm1675, %v3843, 0.0
        %v3847 = vsel %vm1676, %v3842, 0.0
        %v3848 = vsel %vm1677, %v3841, 0.0
        %v3849 = vadd.f32 %v3811, %v3845
        %v3850 = vadd.f32 %v3814, %v3846
        %v3851 = vadd.f32 %v3817, %v3847
        %v3852 = vadd.f32 %v3820, %v3848
        %v3853 = vrot.slane %v3849, 6
        %v3854 = vrot.slane %v3850, 6
        %v3855 = vrot.slane %v3851, 6
        %v3856 = vrot.slane %v3852, 6
        %v3857 = vsel %vm1690, %v3855, %v3856
        %v3858 = vsel %vm1690, %v3854, %v3855
        %v3859 = vsel %vm1690, %v3853, %v3854
        %v3860 = vsel %vm1690, %v3856, %v3853
        %v3861 = vsel %vm1695, %v3860, 0.0
        %v3862 = vsel %vm1696, %v3859, 0.0
        %v3863 = vsel %vm1697, %v3858, 0.0
        %v3864 = vsel %vm1698, %v3857, 0.0
        %v3865 = vadd.f32 %v3849, %v3861
        %v3866 = vadd.f32 %v3850, %v3862
        %v3867 = vadd.f32 %v3851, %v3863
        %v3868 = vadd.f32 %v3852, %v3864
        %v3869 = vrot.slane %v3865, 4
        %v3870 = vrot.slane %v3866, 4
        %v3871 = vrot.slane %v3867, 4
        %v3872 = vrot.slane %v3868, 4
        %v3873 = vsel %vm1711, %v3871, %v3872
        %v3874 = vsel %vm1711, %v3870, %v3871
        %v3875 = vsel %vm1711, %v3869, %v3870
        %v3876 = vsel %vm1711, %v3872, %v3869
        %v3877 = vsel %vm1716, %v3876, 0.0
        %v3878 = vsel %vm1717, %v3875, 0.0
        %v3879 = vsel %vm1718, %v3874, 0.0
        %v3880 = vsel %vm1719, %v3873, 0.0
        %v3881 = vadd.f32 %v3865, %v3877
        %v3882 = vadd.f32 %v3866, %v3878
        %v3883 = vadd.f32 %v3867, %v3879
        %v3884 = vadd.f32 %v3868, %v3880
        %v3885 = vsel %vm1728, %v3884, 0.0
        %v3886 = vsel %vm1729, %v3881, 0.0
        %v3887 = vsel %vm1730, %v3882, 0.0
        %v3888 = vsel %vm1731, %v3883, 0.0
        %v3889 = vadd.f32 %v3881, %v3885
        %v3890 = vadd.f32 %v3882, %v3886
        %v3891 = vadd.f32 %v3883, %v3887
        %v3892 = vadd.f32 %v3884, %v3888
        %v3893 = vsel %vm1740, %v3891, 0.0
        %v3894 = vsel %vm1741, %v3892, 0.0
        %v3895 = vsel %vm1742, %v3889, 0.0
        %v3896 = vsel %vm1743, %v3890, 0.0
        %v3897 = vadd.f32 %v3889, %v3893
        %v3898 = vadd.f32 %v3890, %v3894
        %v3899 = vadd.f32 %v3891, %v3895
        %v3900 = vadd.f32 %v3892, %v3896
        %v3901 = vrot.slane %v3827, 7
        %v3902 = vrot.slane %v3830, 7
        %v3903 = vrot.slane %v3833, 7
        %v3904 = vrot.slane %v3836, 7
        %v3905 = vsel %vm1669, %v3903, %v3904
        %v3906 = vsel %vm1669, %v3902, %v3903
        %v3907 = vsel %vm1669, %v3901, %v3902
        %v3908 = vsel %vm1669, %v3904, %v3901
        %v3909 = vsel %vm1674, %v3908, 0.0
        %v3910 = vsel %vm1675, %v3907, 0.0
        %v3911 = vsel %vm1676, %v3906, 0.0
        %v3912 = vsel %vm1677, %v3905, 0.0
        %v3913 = vadd.f32 %v3827, %v3909
        %v3914 = vadd.f32 %v3830, %v3910
        %v3915 = vadd.f32 %v3833, %v3911
        %v3916 = vadd.f32 %v3836, %v3912
        %v3917 = vrot.slane %v3913, 6
        %v3918 = vrot.slane %v3914, 6
        %v3919 = vrot.slane %v3915, 6
        %v3920 = vrot.slane %v3916, 6
        %v3921 = vsel %vm1690, %v3919, %v3920
        %v3922 = vsel %vm1690, %v3918, %v3919
        %v3923 = vsel %vm1690, %v3917, %v3918
        %v3924 = vsel %vm1690, %v3920, %v3917
        %v3925 = vsel %vm1695, %v3924, 0.0
        %v3926 = vsel %vm1696, %v3923, 0.0
        %v3927 = vsel %vm1697, %v3922, 0.0
        %v3928 = vsel %vm1698, %v3921, 0.0
        %v3929 = vadd.f32 %v3913, %v3925
        %v3930 = vadd.f32 %v3914, %v3926
        %v3931 = vadd.f32 %v3915, %v3927
        %v3932 = vadd.f32 %v3916, %v3928
        %v3933 = vrot.slane %v3929, 4
        %v3934 = vrot.slane %v3930, 4
        %v3935 = vrot.slane %v3931, 4
        %v3936 = vrot.slane %v3932, 4
        %v3937 = vsel %vm1711, %v3935, %v3936
        %v3938 = vsel %vm1711, %v3934, %v3935
        %v3939 = vsel %vm1711, %v3933, %v3934
        %v3940 = vsel %vm1711, %v3936, %v3933
        %v3941 = vsel %vm1716, %v3940, 0.0
        %v3942 = vsel %vm1717, %v3939, 0.0
        %v3943 = vsel %vm1718, %v3938, 0.0
        %v3944 = vsel %vm1719, %v3937, 0.0
        %v3945 = vadd.f32 %v3929, %v3941
        %v3946 = vadd.f32 %v3930, %v3942
        %v3947 = vadd.f32 %v3931, %v3943
        %v3948 = vadd.f32 %v3932, %v3944
        %v3949 = vsel %vm1728, %v3948, 0.0
        %v3950 = vsel %vm1729, %v3945, 0.0
        %v3951 = vsel %vm1730, %v3946, 0.0
        %v3952 = vsel %vm1731, %v3947, 0.0
        %v3953 = vadd.f32 %v3945, %v3949
        %v3954 = vadd.f32 %v3946, %v3950
        %v3955 = vadd.f32 %v3947, %v3951
        %v3956 = vadd.f32 %v3948, %v3952
        %v3957 = vsel %vm1740, %v3955, 0.0
        %v3958 = vsel %vm1741, %v3956, 0.0
        %v3959 = vsel %vm1742, %v3953, 0.0
        %v3960 = vsel %vm1743, %v3954, 0.0
        %v3961 = vadd.f32 %v3953, %v3957
        %v3962 = vadd.f32 %v3954, %v3958
        %v3963 = vadd.f32 %v3955, %v3959
        %v3964 = vadd.f32 %v3956, %v3960
        %v3965 = vmul.f32 %v3897, %v538
        %v3966 = vmul.f32 %v3898, %v540
        %v3967 = vmul.f32 %v3899, %v542
        %v3968 = vmul.f32 %v3900, %v544
        %v3969 = vmul.f32 %v3961, %v538
        %v3970 = vmul.f32 %v3962, %v540
        %v3971 = vmul.f32 %v3963, %v542
        %v3972 = vmul.f32 %v3964, %v544
        %v3973 = vmul.f32 %v3965, %v3965
        %v3974 = vmul.f32 %v3966, %v3966
        %v3975 = vmul.f32 %v3967, %v3967
        %v3976 = vmul.f32 %v3968, %v3968
        %v3977 = vsub.f32 %v3969, %v3973
        %v3978 = vsub.f32 %v3970, %v3974
        %v3979 = vsub.f32 %v3971, %v3975
        %v3980 = vsub.f32 %v3972, %v3976
        %v3981 = vmax.f32 %v3977, 0.0
        %v3982 = vmax.f32 %v3978, 0.0
        %v3983 = vmax.f32 %v3979, 0.0
        %v3984 = vmax.f32 %v3980, 0.0
        %v3985 = vadd.f32 %v3981, 1e-05
        %v3986 = vadd.f32 %v3982, 1e-05
        %v3987 = vadd.f32 %v3983, 1e-05
        %v3988 = vadd.f32 %v3984, 1e-05
        %v3989 = vrsqrt.pop %v3985
        %v3990 = vmul.f32 %v3985, %v3989
        %vm3991 = vcmp.eq.f32.partialorder %v3985, inf
        %v3992 = vsel %vm3991, %v3985, %v3990
        %vm3993 = vcmp.eq.f32.partialorder %v3985, 0.0
        %v3994 = vand.u32 %v3985, 2147483648
        %v3995 = vsel %vm3993, %v3994, %v3992
        %v3996 = vrsqrt.pop %v3986
        %v3997 = vmul.f32 %v3986, %v3996
        %vm3998 = vcmp.eq.f32.partialorder %v3986, inf
        %v3999 = vsel %vm3998, %v3986, %v3997
        %vm4000 = vcmp.eq.f32.partialorder %v3986, 0.0
        %v4001 = vand.u32 %v3986, 2147483648
        %v4002 = vsel %vm4000, %v4001, %v3999
        %v4003 = vrsqrt.pop %v3987
        %v4004 = vmul.f32 %v3987, %v4003
        %vm4005 = vcmp.eq.f32.partialorder %v3987, inf
        %v4006 = vsel %vm4005, %v3987, %v4004
        %vm4007 = vcmp.eq.f32.partialorder %v3987, 0.0
        %v4008 = vand.u32 %v3987, 2147483648
        %v4009 = vsel %vm4007, %v4008, %v4006
        %v4010 = vrsqrt.pop %v3988
        %v4011 = vmul.f32 %v3988, %v4010
        %vm4012 = vcmp.eq.f32.partialorder %v3988, inf
        %v4013 = vsel %vm4012, %v3988, %v4011
        %vm4014 = vcmp.eq.f32.partialorder %v3988, 0.0
        %v4015 = vand.u32 %v3988, 2147483648
        %v4016 = vsel %vm4014, %v4015, %v4013
        %4018 = vset.pattern.permute.xlu0 0
        %4019 = vperm.xlu0 %4018, %v3965
        %v4020 = vpop.permute.xlu0 %4019
        %4023 = vset.pattern.permute.xlu0 0
        %4024 = vperm.xlu0 %4023, %v3966
        %v4025 = vpop.permute.xlu0 %4024
        %4028 = vset.pattern.permute.xlu0 0
        %4029 = vperm.xlu0 %4028, %v3967
        %v4030 = vpop.permute.xlu0 %4029
        %4033 = vset.pattern.permute.xlu0 0
        %4034 = vperm.xlu0 %4033, %v3968
        %v4035 = vpop.permute.xlu0 %4034
        %v4037 = vsub.f32 %v3805, %v4020
        %v4038 = vsub.f32 %v3806, %v4025
        %v4039 = vsub.f32 %v3807, %v4030
        %v4040 = vsub.f32 %v3808, %v4035
        %4042 = vset.pattern.permute.xlu0 0
        %4043 = vperm.xlu0 %4042, %v3995
        %v4044 = vpop.permute.xlu0 %4043
        %4047 = vset.pattern.permute.xlu0 0
        %4048 = vperm.xlu0 %4047, %v4002
        %v4049 = vpop.permute.xlu0 %4048
        %4052 = vset.pattern.permute.xlu0 0
        %4053 = vperm.xlu0 %4052, %v4009
        %v4054 = vpop.permute.xlu0 %4053
        %4057 = vset.pattern.permute.xlu0 0
        %4058 = vperm.xlu0 %4057, %v4016
        %v4059 = vpop.permute.xlu0 %4058
        %v4061 = vrcp.pop %v4044
        %v4062 = vmul.f32 %v4037, %v4061
        %v4063 = vrcp.pop %v4049
        %v4064 = vmul.f32 %v4038, %v4063
        %v4065 = vrcp.pop %v4054
        %v4066 = vmul.f32 %v4039, %v4065
        %v4067 = vrcp.pop %v4059
        %v4068 = vmul.f32 %v4040, %v4067
        %v4070 = vlaneseq
        %v4071 = vshrl.u32 %v4070, 7
        %v4072 = vsub.s32 0, %v4071
        %v4073 = vrot.slane %v3793, %v4072
        %v4075 = vmul.f32 %v4062, %v4073
        %v4076 = vmul.f32 %v4064, %v4073
        %v4077 = vmul.f32 %v4066, %v4073
        %v4078 = vmul.f32 %v4068, %v4073
        %v4080 = vlaneseq
        %v4081 = vshrl.u32 %v4080, 7
        %v4082 = vsub.s32 0, %v4081
        %v4083 = vrot.slane %v3794, %v4082
        %v4085 = vadd.f32 %v4075, %v4083
        %v4086 = vadd.f32 %v4076, %v4083
        %v4087 = vadd.f32 %v4077, %v4083
        %v4088 = vadd.f32 %v4078, %v4083
        %v4089 = vld [vmem:[%s10] sm:$0x1]
        %v4091 = vlaneseq
        %v4092 = vshrl.u32 %v4091, 7
        %v4093 = vsub.s32 0, %v4092
        %v4094 = vrot.slane %v4089, %v4093
        %v4096 = vmul.f32 %v4094, %v4085
        %v4097 = vmul.f32 %v4094, %v4086
        %v4098 = vmul.f32 %v4094, %v4087
        %v4099 = vmul.f32 %v4094, %v4088
        %v4100 = vrot.slane %v4096, 4
        %v4101 = vrot.slane %v4097, 4
        %v4102 = vrot.slane %v4098, 4
        %v4103 = vrot.slane %v4099, 4
        %v4104 = vsel %vm1711, %v4102, %v4103
        %v4105 = vsel %vm1711, %v4101, %v4102
        %v4106 = vsel %vm1711, %v4100, %v4101
        %v4107 = vsel %vm1711, %v4103, %v4100
        %v4108 = vsel %vm1716, %v4107, 0.0
        %v4109 = vsel %vm1717, %v4106, 0.0
        %v4110 = vsel %vm1718, %v4105, 0.0
        %v4111 = vsel %vm1719, %v4104, 0.0
        %v4112 = vrot.slane %v4096, 5
        %v4113 = vrot.slane %v4097, 5
        %v4114 = vrot.slane %v4098, 5
        %v4115 = vrot.slane %v4099, 5
        %v4116 = vsel %vm1967, %v4114, %v4115
        %v4117 = vsel %vm1967, %v4113, %v4114
        %v4118 = vsel %vm1967, %v4112, %v4113
        %v4119 = vsel %vm1967, %v4115, %v4112
        %v4120 = vsel %vm1972, %v4119, 0.0
        %v4121 = vsel %vm1973, %v4118, 0.0
        %v4122 = vsel %vm1974, %v4117, 0.0
        %v4123 = vsel %vm1975, %v4116, 0.0
        %v4124 = vrot.slane %v4096, 6
        %v4125 = vrot.slane %v4097, 6
        %v4126 = vrot.slane %v4098, 6
        %v4127 = vrot.slane %v4099, 6
        %v4128 = vsel %vm1690, %v4126, %v4127
        %v4129 = vsel %vm1690, %v4125, %v4126
        %v4130 = vsel %vm1690, %v4124, %v4125
        %v4131 = vsel %vm1690, %v4127, %v4124
        %v4132 = vsel %vm1695, %v4131, 0.0
        %v4133 = vsel %vm1696, %v4130, 0.0
        %v4134 = vsel %vm1697, %v4129, 0.0
        %v4135 = vsel %vm1698, %v4128, 0.0
        %v4136 = vrot.slane %v4096, 7
        %v4137 = vrot.slane %v4097, 7
        %v4138 = vrot.slane %v4098, 7
        %v4139 = vrot.slane %v4099, 7
        %v4140 = vsel %vm1669, %v4138, %v4139
        %v4141 = vsel %vm1669, %v4137, %v4138
        %v4142 = vsel %vm1669, %v4136, %v4137
        %v4143 = vsel %vm1669, %v4139, %v4136
        %v4144 = vsel %vm1674, %v4143, 0.0
        %v4145 = vsel %vm1675, %v4142, 0.0
        %v4146 = vsel %vm1676, %v4141, 0.0
        %v4147 = vsel %vm1677, %v4140, 0.0
        %4152 = vrot.lane.b32.xlu0 %v4120, 64
        %v4153 = vpop.permute.xlu0 %4152
        %4154 = vrot.lane.b32.xlu0 %v4121, 64
        %v4155 = vpop.permute.xlu0 %4154
        %4156 = vrot.lane.b32.xlu0 %v4122, 64
        %v4157 = vpop.permute.xlu0 %4156
        %4158 = vrot.lane.b32.xlu0 %v4123, 64
        %v4159 = vpop.permute.xlu0 %4158
        %4168 = vrot.lane.b32.xlu0 %v4144, 64
        %v4169 = vpop.permute.xlu0 %4168
        %4170 = vrot.lane.b32.xlu0 %v4145, 64
        %v4171 = vpop.permute.xlu0 %4170
        %4172 = vrot.lane.b32.xlu0 %v4146, 64
        %v4173 = vpop.permute.xlu0 %4172
        %4174 = vrot.lane.b32.xlu0 %v4147, 64
        %v4175 = vpop.permute.xlu0 %4174
        %v4180 = vsel %vm1636, %v4108, %v4153
        %v4181 = vsel %vm1636, %v4109, %v4155
        %v4182 = vsel %vm1636, %v4110, %v4157
        %v4183 = vsel %vm1636, %v4111, %v4159
        %v4184 = vsel %vm1636, %v4132, %v4169
        %v4185 = vsel %vm1636, %v4133, %v4171
        %v4186 = vsel %vm1636, %v4134, %v4173
        %v4187 = vsel %vm1636, %v4135, %v4175
        %v4188 = vld [vmem:[%s11] sm:$0xff]
        %v4189 = vld [vmem:[%s11 + $0x8] sm:$0xff]
        %v4190 = vld [vmem:[%s11 + $0x10] sm:$0xff]
        %v4191 = vld [vmem:[%s11 + $0x18] sm:$0xff]
        %v4192 = vld [vmem:[%s11 + $0x20] sm:$0xff]
        %v4193 = vld [vmem:[%s11 + $0x28] sm:$0xff]
        %v4194 = vld [vmem:[%s11 + $0x30] sm:$0xff]
        %v4195 = vld [vmem:[%s11 + $0x38] sm:$0xff]
        %v4196 = vld [vmem:[%s11 + $0x40] sm:$0xff]
        %v4197 = vld [vmem:[%s11 + $0x48] sm:$0xff]
        %v4198 = vld [vmem:[%s11 + $0x50] sm:$0xff]
        %v4199 = vld [vmem:[%s11 + $0x58] sm:$0xff]
        %v4200 = vld [vmem:[%s11 + $0x60] sm:$0xff]
        %v4201 = vld [vmem:[%s11 + $0x68] sm:$0xff]
        %v4202 = vld [vmem:[%s11 + $0x70] sm:$0xff]
        %v4203 = vld [vmem:[%s11 + $0x78] sm:$0xff]
        %v4204 = vld [vmem:[%s11 + $0x80] sm:$0xff]
        %v4205 = vld [vmem:[%s11 + $0x88] sm:$0xff]
        %v4206 = vld [vmem:[%s11 + $0x90] sm:$0xff]
        %v4207 = vld [vmem:[%s11 + $0x98] sm:$0xff]
        %v4208 = vld [vmem:[%s11 + $0xa0] sm:$0xff]
        %v4209 = vld [vmem:[%s11 + $0xa8] sm:$0xff]
        %v4210 = vld [vmem:[%s11 + $0xb0] sm:$0xff]
        %v4211 = vld [vmem:[%s11 + $0xb8] sm:$0xff]
        %v4212 = vld [vmem:[%s11 + $0xc0] sm:$0xff]
        %v4213 = vld [vmem:[%s11 + $0xc8] sm:$0xff]
        %v4214 = vld [vmem:[%s11 + $0xd0] sm:$0xff]
        %v4215 = vld [vmem:[%s11 + $0xd8] sm:$0xff]
        %v4216 = vld [vmem:[%s11 + $0xe0] sm:$0xff]
        %v4217 = vld [vmem:[%s11 + $0xe8] sm:$0xff]
        %v4218 = vld [vmem:[%s11 + $0xf0] sm:$0xff]
        %v4219 = vld [vmem:[%s11 + $0xf8] sm:$0xff]
        %v4220 = vld [vmem:[%s11 + $0x100] sm:$0xff]
        %v4221 = vld [vmem:[%s11 + $0x108] sm:$0xff]
        %v4222 = vld [vmem:[%s11 + $0x110] sm:$0xff]
        %v4223 = vld [vmem:[%s11 + $0x118] sm:$0xff]
        %v4224 = vld [vmem:[%s11 + $0x120] sm:$0xff]
        %v4225 = vld [vmem:[%s11 + $0x128] sm:$0xff]
        %v4226 = vld [vmem:[%s11 + $0x130] sm:$0xff]
        %v4227 = vld [vmem:[%s11 + $0x138] sm:$0xff]
        %v4229 = vsel %vm1636, %v4096, 0
        %v4232 = vsel %vm1636, %v4097, 0
        %v4235 = vsel %vm1636, %v4098, 0
        %v4238 = vsel %vm1636, %v4099, 0
        %4240 = vmatprep.subr.mxu0 0.0
        %v4241 = vand.u32 %v4188, 4294901760
        %4242 = vmatpush1.msra.mxu0 %v4241
        %4243 = vmatprep.subr.mxu0 0.0
        %v4244 = vand.u32 %v4189, 4294901760
        %4245 = vmatpush1.msra.mxu0 %v4244
        %4246 = vmatprep.subr.mxu0 0.0
        %v4247 = vand.u32 %v4190, 4294901760
        %4248 = vmatpush1.msra.mxu0 %v4247
        %4249 = vmatprep.subr.mxu0 0.0
        %v4250 = vand.u32 %v4191, 4294901760
        %4251 = vmatpush1.msra.mxu0 %v4250
        %4252 = vmatprep.subr.mxu0 0.0
        %v4253 = vand.u32 %v4192, 4294901760
        %4254 = vmatpush1.msra.mxu0 %v4253
        %4255 = vmatprep.subr.mxu0 0.0
        %v4256 = vand.u32 %v4193, 4294901760
        %4257 = vmatpush1.msra.mxu0 %v4256
        %4258 = vmatprep.subr.mxu0 0.0
        %v4259 = vand.u32 %v4194, 4294901760
        %4260 = vmatpush1.msra.mxu0 %v4259
        %4261 = vmatprep.subr.mxu0 0.0
        %v4262 = vand.u32 %v4195, 4294901760
        %4263 = vmatpush1.msra.mxu0 %v4262
        %4264 = vmatprep.subr.mxu0 0.0
        %v4265 = vand.u32 %v4196, 4294901760
        %4266 = vmatpush1.msra.mxu0 %v4265
        %4267 = vmatprep.subr.mxu0 0.0
        %v4268 = vand.u32 %v4197, 4294901760
        %4269 = vmatpush1.msra.mxu0 %v4268
        %4270 = vmatprep.subr.mxu0 0.0
        %v4271 = vand.u32 %v4198, 4294901760
        %4272 = vmatpush1.msra.mxu0 %v4271
        %4273 = vmatprep.subr.mxu0 0.0
        %v4274 = vand.u32 %v4199, 4294901760
        %4275 = vmatpush1.msra.mxu0 %v4274
        %4276 = vmatprep.subr.mxu0 0.0
        %v4277 = vand.u32 %v4200, 4294901760
        %4278 = vmatpush1.msra.mxu0 %v4277
        %4279 = vmatprep.subr.mxu0 0.0
        %v4280 = vand.u32 %v4201, 4294901760
        %4281 = vmatpush1.msra.mxu0 %v4280
        %4282 = vmatprep.subr.mxu0 0.0
        %v4283 = vand.u32 %v4202, 4294901760
        %4284 = vmatpush1.msra.mxu0 %v4283
        %4285 = vmatprep.subr.mxu0 0.0
        %v4286 = vand.u32 %v4203, 4294901760
        %4287 = vmatpush1.msra.mxu0 %v4286
        %4288 = vmatprep.subr.mxu0 0.0
        %v4289 = vand.u32 %v4204, 4294901760
        %4290 = vmatpush1.msra.mxu0 %v4289
        %4291 = vmatprep.subr.mxu0 0.0
        %v4292 = vand.u32 %v4205, 4294901760
        %4293 = vmatpush1.msra.mxu0 %v4292
        %4294 = vmatprep.subr.mxu0 0.0
        %v4295 = vand.u32 %v4206, 4294901760
        %4296 = vmatpush1.msra.mxu0 %v4295
        %4297 = vmatprep.subr.mxu0 0.0
        %v4298 = vand.u32 %v4207, 4294901760
        %4299 = vmatpush1.msra.mxu0 %v4298
        %4300 = vmatprep.subr.mxu0 0.0
        %v4301 = vand.u32 %v4208, 4294901760
        %4302 = vmatpush1.msra.mxu0 %v4301
        %4303 = vmatprep.subr.mxu0 0.0
        %v4304 = vand.u32 %v4209, 4294901760
        %4305 = vmatpush1.msra.mxu0 %v4304
        %4306 = vmatprep.subr.mxu0 0.0
        %v4307 = vand.u32 %v4210, 4294901760
        %4308 = vmatpush1.msra.mxu0 %v4307
        %4309 = vmatprep.subr.mxu0 0.0
        %v4310 = vand.u32 %v4211, 4294901760
        %4311 = vmatpush1.msra.mxu0 %v4310
        %4312 = vmatprep.subr.mxu0 0.0
        %v4313 = vand.u32 %v4212, 4294901760
        %4314 = vmatpush1.msra.mxu0 %v4313
        %4315 = vmatprep.subr.mxu0 0.0
        %v4316 = vand.u32 %v4213, 4294901760
        %4317 = vmatpush1.msra.mxu0 %v4316
        %4318 = vmatprep.subr.mxu0 0.0
        %v4319 = vand.u32 %v4214, 4294901760
        %4320 = vmatpush1.msra.mxu0 %v4319
        %4321 = vmatprep.subr.mxu0 0.0
        %v4322 = vand.u32 %v4215, 4294901760
        %4323 = vmatpush1.msra.mxu0 %v4322
        %4324 = vmatprep.subr.mxu0 0.0
        %v4325 = vand.u32 %v4216, 4294901760
        %4326 = vmatpush1.msra.mxu0 %v4325
        %4327 = vmatprep.subr.mxu0 0.0
        %v4328 = vand.u32 %v4217, 4294901760
        %4329 = vmatpush1.msra.mxu0 %v4328
        %4330 = vmatprep.subr.mxu0 0.0
        %v4331 = vand.u32 %v4218, 4294901760
        %4332 = vmatpush1.msra.mxu0 %v4331
        %4333 = vmatprep.subr.mxu0 0.0
        %v4334 = vand.u32 %v4219, 4294901760
        %4335 = vmatpush1.msra.mxu0 %v4334
        %v4336 = vand.u32 %v4184, 4294901760
        %v4337 = vsub.f32 %v4184, %v4336
        %v4338 = vand.u32 %v4337, 4294901760
        %v4339 = vsub.f32 %v4337, %v4338
        %v4340 = vand.u32 %v4339, 4294901760
        %4341 = vmatprep.mubr.f32.mxu0 %v4340
        %v4342 = vand.u32 %v4180, 4294901760
        %v4343 = vsub.f32 %v4180, %v4342
        %v4344 = vand.u32 %v4343, 4294901760
        %v4345 = vsub.f32 %v4343, %v4344
        %v4346 = vand.u32 %v4345, 4294901760
        %4347 = vmatmul.mubr.f32.gmra.mrb[0].mxu0 %v4346
        %v4348 = vpop.f32.mrb[0].mxu0
        %v4349 = vadd.f32 0.0, %v4348
        %v4350 = vpop.f32.mrb[0].mxu0
        %v4351 = vand.u32 %v4185, 4294901760
        %v4352 = vsub.f32 %v4185, %v4351
        %v4353 = vand.u32 %v4352, 4294901760
        %v4354 = vsub.f32 %v4352, %v4353
        %v4355 = vand.u32 %v4354, 4294901760
        %4356 = vmatprep.mubr.f32.mxu0 %v4355
        %v4357 = vand.u32 %v4181, 4294901760
        %v4358 = vsub.f32 %v4181, %v4357
        %v4359 = vand.u32 %v4358, 4294901760
        %v4360 = vsub.f32 %v4358, %v4359
        %v4361 = vand.u32 %v4360, 4294901760
        %4362 = vmatmul.mubr.f32.gmra.mrb[0].mxu0 %v4361
        %v4363 = vpop.f32.mrb[0].mxu0
        %v4364 = vadd.f32 0.0, %v4363
        %v4365 = vpop.f32.mrb[0].mxu0
        %v4366 = vand.u32 %v4186, 4294901760
        %v4367 = vsub.f32 %v4186, %v4366
        %v4368 = vand.u32 %v4367, 4294901760
        %v4369 = vsub.f32 %v4367, %v4368
        %v4370 = vand.u32 %v4369, 4294901760
        %4371 = vmatprep.mubr.f32.mxu0 %v4370
        %v4372 = vand.u32 %v4182, 4294901760
        %v4373 = vsub.f32 %v4182, %v4372
        %v4374 = vand.u32 %v4373, 4294901760
        %v4375 = vsub.f32 %v4373, %v4374
        %v4376 = vand.u32 %v4375, 4294901760
        %4377 = vmatmul.mubr.f32.gmra.mrb[0].mxu0 %v4376
        %v4378 = vpop.f32.mrb[0].mxu0
        %v4379 = vadd.f32 0.0, %v4378
        %v4380 = vpop.f32.mrb[0].mxu0
        %v4381 = vand.u32 %v4187, 4294901760
        %v4382 = vsub.f32 %v4187, %v4381
        %v4383 = vand.u32 %v4382, 4294901760
        %v4384 = vsub.f32 %v4382, %v4383
        %v4385 = vand.u32 %v4384, 4294901760
        %4386 = vmatprep.mubr.f32.mxu0 %v4385
        %v4387 = vand.u32 %v4183, 4294901760
        %v4388 = vsub.f32 %v4183, %v4387
        %v4389 = vand.u32 %v4388, 4294901760
        %v4390 = vsub.f32 %v4388, %v4389
        %v4391 = vand.u32 %v4390, 4294901760
        %4392 = vmatmul.mubr.f32.gmra.mrb[0].mxu0 %v4391
        %v4393 = vpop.f32.mrb[0].mxu0
        %v4394 = vadd.f32 0.0, %v4393
        %v4395 = vpop.f32.mrb[0].mxu0
        %4396 = vdwg.mxu0
        %4397 = vmatprep.subr.mxu0 0.0
        %v4398 = vand.u32 %v4188, 4294901760
        %v4399 = vsub.f32 %v4188, %v4398
        %v4400 = vand.u32 %v4399, 4294901760
        %v4401 = vsub.f32 %v4399, %v4400
        %v4402 = vand.u32 %v4401, 4294901760
        %4403 = vmatpush1.msra.mxu0 %v4402
        %4404 = vmatprep.subr.mxu0 0.0
        %v4405 = vand.u32 %v4189, 4294901760
        %v4406 = vsub.f32 %v4189, %v4405
        %v4407 = vand.u32 %v4406, 4294901760
        %v4408 = vsub.f32 %v4406, %v4407
        %v4409 = vand.u32 %v4408, 4294901760
        %4410 = vmatpush1.msra.mxu0 %v4409
        %4411 = vmatprep.subr.mxu0 0.0
        %v4412 = vand.u32 %v4190, 4294901760
        %v4413 = vsub.f32 %v4190, %v4412
        %v4414 = vand.u32 %v4413, 4294901760
        %v4415 = vsub.f32 %v4413, %v4414
        %v4416 = vand.u32 %v4415, 4294901760
        %4417 = vmatpush1.msra.mxu0 %v4416
        %4418 = vmatprep.subr.mxu0 0.0
        %v4419 = vand.u32 %v4191, 4294901760
        %v4420 = vsub.f32 %v4191, %v4419
        %v4421 = vand.u32 %v4420, 4294901760
        %v4422 = vsub.f32 %v4420, %v4421
        %v4423 = vand.u32 %v4422, 4294901760
        %4424 = vmatpush1.msra.mxu0 %v4423
        %4425 = vmatprep.subr.mxu0 0.0
        %v4426 = vand.u32 %v4192, 4294901760
        %v4427 = vsub.f32 %v4192, %v4426
        %v4428 = vand.u32 %v4427, 4294901760
        %v4429 = vsub.f32 %v4427, %v4428
        %v4430 = vand.u32 %v4429, 4294901760
        %4431 = vmatpush1.msra.mxu0 %v4430
        %4432 = vmatprep.subr.mxu0 0.0
        %v4433 = vand.u32 %v4193, 4294901760
        %v4434 = vsub.f32 %v4193, %v4433
        %v4435 = vand.u32 %v4434, 4294901760
        %v4436 = vsub.f32 %v4434, %v4435
        %v4437 = vand.u32 %v4436, 4294901760
        %4438 = vmatpush1.msra.mxu0 %v4437
        %4439 = vmatprep.subr.mxu0 0.0
        %v4440 = vand.u32 %v4194, 4294901760
        %v4441 = vsub.f32 %v4194, %v4440
        %v4442 = vand.u32 %v4441, 4294901760
        %v4443 = vsub.f32 %v4441, %v4442
        %v4444 = vand.u32 %v4443, 4294901760
        %4445 = vmatpush1.msra.mxu0 %v4444
        %4446 = vmatprep.subr.mxu0 0.0
        %v4447 = vand.u32 %v4195, 4294901760
        %v4448 = vsub.f32 %v4195, %v4447
        %v4449 = vand.u32 %v4448, 4294901760
        %v4450 = vsub.f32 %v4448, %v4449
        %v4451 = vand.u32 %v4450, 4294901760
        %4452 = vmatpush1.msra.mxu0 %v4451
        %4453 = vmatprep.subr.mxu0 0.0
        %v4454 = vand.u32 %v4196, 4294901760
        %v4455 = vsub.f32 %v4196, %v4454
        %v4456 = vand.u32 %v4455, 4294901760
        %v4457 = vsub.f32 %v4455, %v4456
        %v4458 = vand.u32 %v4457, 4294901760
        %4459 = vmatpush1.msra.mxu0 %v4458
        %4460 = vmatprep.subr.mxu0 0.0
        %v4461 = vand.u32 %v4197, 4294901760
        %v4462 = vsub.f32 %v4197, %v4461
        %v4463 = vand.u32 %v4462, 4294901760
        %v4464 = vsub.f32 %v4462, %v4463
        %v4465 = vand.u32 %v4464, 4294901760
        %4466 = vmatpush1.msra.mxu0 %v4465
        %4467 = vmatprep.subr.mxu0 0.0
        %v4468 = vand.u32 %v4198, 4294901760
        %v4469 = vsub.f32 %v4198, %v4468
        %v4470 = vand.u32 %v4469, 4294901760
        %v4471 = vsub.f32 %v4469, %v4470
        %v4472 = vand.u32 %v4471, 4294901760
        %4473 = vmatpush1.msra.mxu0 %v4472
        %4474 = vmatprep.subr.mxu0 0.0
        %v4475 = vand.u32 %v4199, 4294901760
        %v4476 = vsub.f32 %v4199, %v4475
        %v4477 = vand.u32 %v4476, 4294901760
        %v4478 = vsub.f32 %v4476, %v4477
        %v4479 = vand.u32 %v4478, 4294901760
        %4480 = vmatpush1.msra.mxu0 %v4479
        %4481 = vmatprep.subr.mxu0 0.0
        %v4482 = vand.u32 %v4200, 4294901760
        %v4483 = vsub.f32 %v4200, %v4482
        %v4484 = vand.u32 %v4483, 4294901760
        %v4485 = vsub.f32 %v4483, %v4484
        %v4486 = vand.u32 %v4485, 4294901760
        %4487 = vmatpush1.msra.mxu0 %v4486
        %4488 = vmatprep.subr.mxu0 0.0
        %v4489 = vand.u32 %v4201, 4294901760
        %v4490 = vsub.f32 %v4201, %v4489
        %v4491 = vand.u32 %v4490, 4294901760
        %v4492 = vsub.f32 %v4490, %v4491
        %v4493 = vand.u32 %v4492, 4294901760
        %4494 = vmatpush1.msra.mxu0 %v4493
        %4495 = vmatprep.subr.mxu0 0.0
        %v4496 = vand.u32 %v4202, 4294901760
        %v4497 = vsub.f32 %v4202, %v4496
        %v4498 = vand.u32 %v4497, 4294901760
        %v4499 = vsub.f32 %v4497, %v4498
        %v4500 = vand.u32 %v4499, 4294901760
        %4501 = vmatpush1.msra.mxu0 %v4500
        %4502 = vmatprep.subr.mxu0 0.0
        %v4503 = vand.u32 %v4203, 4294901760
        %v4504 = vsub.f32 %v4203, %v4503
        %v4505 = vand.u32 %v4504, 4294901760
        %v4506 = vsub.f32 %v4504, %v4505
        %v4507 = vand.u32 %v4506, 4294901760
        %4508 = vmatpush1.msra.mxu0 %v4507
        %4509 = vmatprep.subr.mxu0 0.0
        %v4510 = vand.u32 %v4204, 4294901760
        %v4511 = vsub.f32 %v4204, %v4510
        %v4512 = vand.u32 %v4511, 4294901760
        %v4513 = vsub.f32 %v4511, %v4512
        %v4514 = vand.u32 %v4513, 4294901760
        %4515 = vmatpush1.msra.mxu0 %v4514
        %4516 = vmatprep.subr.mxu0 0.0
        %v4517 = vand.u32 %v4205, 4294901760
        %v4518 = vsub.f32 %v4205, %v4517
        %v4519 = vand.u32 %v4518, 4294901760
        %v4520 = vsub.f32 %v4518, %v4519
        %v4521 = vand.u32 %v4520, 4294901760
        %4522 = vmatpush1.msra.mxu0 %v4521
        %4523 = vmatprep.subr.mxu0 0.0
        %v4524 = vand.u32 %v4206, 4294901760
        %v4525 = vsub.f32 %v4206, %v4524
        %v4526 = vand.u32 %v4525, 4294901760
        %v4527 = vsub.f32 %v4525, %v4526
        %v4528 = vand.u32 %v4527, 4294901760
        %4529 = vmatpush1.msra.mxu0 %v4528
        %4530 = vmatprep.subr.mxu0 0.0
        %v4531 = vand.u32 %v4207, 4294901760
        %v4532 = vsub.f32 %v4207, %v4531
        %v4533 = vand.u32 %v4532, 4294901760
        %v4534 = vsub.f32 %v4532, %v4533
        %v4535 = vand.u32 %v4534, 4294901760
        %4536 = vmatpush1.msra.mxu0 %v4535
        %4537 = vmatprep.subr.mxu0 0.0
        %v4538 = vand.u32 %v4208, 4294901760
        %v4539 = vsub.f32 %v4208, %v4538
        %v4540 = vand.u32 %v4539, 4294901760
        %v4541 = vsub.f32 %v4539, %v4540
        %v4542 = vand.u32 %v4541, 4294901760
        %4543 = vmatpush1.msra.mxu0 %v4542
        %4544 = vmatprep.subr.mxu0 0.0
        %v4545 = vand.u32 %v4209, 4294901760
        %v4546 = vsub.f32 %v4209, %v4545
        %v4547 = vand.u32 %v4546, 4294901760
        %v4548 = vsub.f32 %v4546, %v4547
        %v4549 = vand.u32 %v4548, 4294901760
        %4550 = vmatpush1.msra.mxu0 %v4549
        %4551 = vmatprep.subr.mxu0 0.0
        %v4552 = vand.u32 %v4210, 4294901760
        %v4553 = vsub.f32 %v4210, %v4552
        %v4554 = vand.u32 %v4553, 4294901760
        %v4555 = vsub.f32 %v4553, %v4554
        %v4556 = vand.u32 %v4555, 4294901760
        %4557 = vmatpush1.msra.mxu0 %v4556
        %4558 = vmatprep.subr.mxu0 0.0
        %v4559 = vand.u32 %v4211, 4294901760
        %v4560 = vsub.f32 %v4211, %v4559
        %v4561 = vand.u32 %v4560, 4294901760
        %v4562 = vsub.f32 %v4560, %v4561
        %v4563 = vand.u32 %v4562, 4294901760
        %4564 = vmatpush1.msra.mxu0 %v4563
        %4565 = vmatprep.subr.mxu0 0.0
        %v4566 = vand.u32 %v4212, 4294901760
        %v4567 = vsub.f32 %v4212, %v4566
        %v4568 = vand.u32 %v4567, 4294901760
        %v4569 = vsub.f32 %v4567, %v4568
        %v4570 = vand.u32 %v4569, 4294901760
        %4571 = vmatpush1.msra.mxu0 %v4570
        %4572 = vmatprep.subr.mxu0 0.0
        %v4573 = vand.u32 %v4213, 4294901760
        %v4574 = vsub.f32 %v4213, %v4573
        %v4575 = vand.u32 %v4574, 4294901760
        %v4576 = vsub.f32 %v4574, %v4575
        %v4577 = vand.u32 %v4576, 4294901760
        %4578 = vmatpush1.msra.mxu0 %v4577
        %4579 = vmatprep.subr.mxu0 0.0
        %v4580 = vand.u32 %v4214, 4294901760
        %v4581 = vsub.f32 %v4214, %v4580
        %v4582 = vand.u32 %v4581, 4294901760
        %v4583 = vsub.f32 %v4581, %v4582
        %v4584 = vand.u32 %v4583, 4294901760
        %4585 = vmatpush1.msra.mxu0 %v4584
        %4586 = vmatprep.subr.mxu0 0.0
        %v4587 = vand.u32 %v4215, 4294901760
        %v4588 = vsub.f32 %v4215, %v4587
        %v4589 = vand.u32 %v4588, 4294901760
        %v4590 = vsub.f32 %v4588, %v4589
        %v4591 = vand.u32 %v4590, 4294901760
        %4592 = vmatpush1.msra.mxu0 %v4591
        %4593 = vmatprep.subr.mxu0 0.0
        %v4594 = vand.u32 %v4216, 4294901760
        %v4595 = vsub.f32 %v4216, %v4594
        %v4596 = vand.u32 %v4595, 4294901760
        %v4597 = vsub.f32 %v4595, %v4596
        %v4598 = vand.u32 %v4597, 4294901760
        %4599 = vmatpush1.msra.mxu0 %v4598
        %4600 = vmatprep.subr.mxu0 0.0
        %v4601 = vand.u32 %v4217, 4294901760
        %v4602 = vsub.f32 %v4217, %v4601
        %v4603 = vand.u32 %v4602, 4294901760
        %v4604 = vsub.f32 %v4602, %v4603
        %v4605 = vand.u32 %v4604, 4294901760
        %4606 = vmatpush1.msra.mxu0 %v4605
        %4607 = vmatprep.subr.mxu0 0.0
        %v4608 = vand.u32 %v4218, 4294901760
        %v4609 = vsub.f32 %v4218, %v4608
        %v4610 = vand.u32 %v4609, 4294901760
        %v4611 = vsub.f32 %v4609, %v4610
        %v4612 = vand.u32 %v4611, 4294901760
        %4613 = vmatpush1.msra.mxu0 %v4612
        %4614 = vmatprep.subr.mxu0 0.0
        %v4615 = vand.u32 %v4219, 4294901760
        %v4616 = vsub.f32 %v4219, %v4615
        %v4617 = vand.u32 %v4616, 4294901760
        %v4618 = vsub.f32 %v4616, %v4617
        %v4619 = vand.u32 %v4618, 4294901760
        %4620 = vmatpush1.msra.mxu0 %v4619
        %v4621 = vand.u32 %v4184, 4294901760
        %4622 = vmatprep.mubr.f32.mxu0 %v4621
        %v4623 = vand.u32 %v4180, 4294901760
        %4624 = vmatmul.mubr.f32.gmra.mrb[0].mxu0 %v4623
        %v4625 = vpop.f32.mrb[0].mxu0
        %v4626 = vadd.f32 %v4349, %v4625
        %v4627 = vpop.f32.mrb[0].mxu0
        %v4628 = vand.u32 %v4185, 4294901760
        %4629 = vmatprep.mubr.f32.mxu0 %v4628
        %v4630 = vand.u32 %v4181, 4294901760
        %4631 = vmatmul.mubr.f32.gmra.mrb[0].mxu0 %v4630
        %v4632 = vpop.f32.mrb[0].mxu0
        %v4633 = vadd.f32 %v4364, %v4632
        %v4634 = vpop.f32.mrb[0].mxu0
        %v4635 = vand.u32 %v4186, 4294901760
        %4636 = vmatprep.mubr.f32.mxu0 %v4635
        %v4637 = vand.u32 %v4182, 4294901760
        %4638 = vmatmul.mubr.f32.gmra.mrb[0].mxu0 %v4637
        %v4639 = vpop.f32.mrb[0].mxu0
        %v4640 = vadd.f32 %v4379, %v4639
        %v4641 = vpop.f32.mrb[0].mxu0
        %v4642 = vand.u32 %v4187, 4294901760
        %4643 = vmatprep.mubr.f32.mxu0 %v4642
        %v4644 = vand.u32 %v4183, 4294901760
        %4645 = vmatmul.mubr.f32.gmra.mrb[0].mxu0 %v4644
        %v4646 = vpop.f32.mrb[0].mxu0
        %v4647 = vadd.f32 %v4394, %v4646
        %v4648 = vpop.f32.mrb[0].mxu0
        %4649 = vdwg.mxu0
        %4650 = vmatprep.subr.mxu0 0.0
        %v4651 = vand.u32 %v4188, 4294901760
        %v4652 = vsub.f32 %v4188, %v4651
        %4653 = vmatpush1.msra.mxu0 %v4652
        %4654 = vmatprep.subr.mxu0 0.0
        %v4655 = vand.u32 %v4189, 4294901760
        %v4656 = vsub.f32 %v4189, %v4655
        %4657 = vmatpush1.msra.mxu0 %v4656
        %4658 = vmatprep.subr.mxu0 0.0
        %v4659 = vand.u32 %v4190, 4294901760
        %v4660 = vsub.f32 %v4190, %v4659
        %4661 = vmatpush1.msra.mxu0 %v4660
        %4662 = vmatprep.subr.mxu0 0.0
        %v4663 = vand.u32 %v4191, 4294901760
        %v4664 = vsub.f32 %v4191, %v4663
        %4665 = vmatpush1.msra.mxu0 %v4664
        %4666 = vmatprep.subr.mxu0 0.0
        %v4667 = vand.u32 %v4192, 4294901760
        %v4668 = vsub.f32 %v4192, %v4667
        %4669 = vmatpush1.msra.mxu0 %v4668
        %4670 = vmatprep.subr.mxu0 0.0
        %v4671 = vand.u32 %v4193, 4294901760
        %v4672 = vsub.f32 %v4193, %v4671
        %4673 = vmatpush1.msra.mxu0 %v4672
        %4674 = vmatprep.subr.mxu0 0.0
        %v4675 = vand.u32 %v4194, 4294901760
        %v4676 = vsub.f32 %v4194, %v4675
        %4677 = vmatpush1.msra.mxu0 %v4676
        %4678 = vmatprep.subr.mxu0 0.0
        %v4679 = vand.u32 %v4195, 4294901760
        %v4680 = vsub.f32 %v4195, %v4679
        %4681 = vmatpush1.msra.mxu0 %v4680
        %4682 = vmatprep.subr.mxu0 0.0
        %v4683 = vand.u32 %v4196, 4294901760
        %v4684 = vsub.f32 %v4196, %v4683
        %4685 = vmatpush1.msra.mxu0 %v4684
        %4686 = vmatprep.subr.mxu0 0.0
        %v4687 = vand.u32 %v4197, 4294901760
        %v4688 = vsub.f32 %v4197, %v4687
        %4689 = vmatpush1.msra.mxu0 %v4688
        %4690 = vmatprep.subr.mxu0 0.0
        %v4691 = vand.u32 %v4198, 4294901760
        %v4692 = vsub.f32 %v4198, %v4691
        %4693 = vmatpush1.msra.mxu0 %v4692
        %4694 = vmatprep.subr.mxu0 0.0
        %v4695 = vand.u32 %v4199, 4294901760
        %v4696 = vsub.f32 %v4199, %v4695
        %4697 = vmatpush1.msra.mxu0 %v4696
        %4698 = vmatprep.subr.mxu0 0.0
        %v4699 = vand.u32 %v4200, 4294901760
        %v4700 = vsub.f32 %v4200, %v4699
        %4701 = vmatpush1.msra.mxu0 %v4700
        %4702 = vmatprep.subr.mxu0 0.0
        %v4703 = vand.u32 %v4201, 4294901760
        %v4704 = vsub.f32 %v4201, %v4703
        %4705 = vmatpush1.msra.mxu0 %v4704
        %4706 = vmatprep.subr.mxu0 0.0
        %v4707 = vand.u32 %v4202, 4294901760
        %v4708 = vsub.f32 %v4202, %v4707
        %4709 = vmatpush1.msra.mxu0 %v4708
        %4710 = vmatprep.subr.mxu0 0.0
        %v4711 = vand.u32 %v4203, 4294901760
        %v4712 = vsub.f32 %v4203, %v4711
        %4713 = vmatpush1.msra.mxu0 %v4712
        %4714 = vmatprep.subr.mxu0 0.0
        %v4715 = vand.u32 %v4204, 4294901760
        %v4716 = vsub.f32 %v4204, %v4715
        %4717 = vmatpush1.msra.mxu0 %v4716
        %4718 = vmatprep.subr.mxu0 0.0
        %v4719 = vand.u32 %v4205, 4294901760
        %v4720 = vsub.f32 %v4205, %v4719
        %4721 = vmatpush1.msra.mxu0 %v4720
        %4722 = vmatprep.subr.mxu0 0.0
        %v4723 = vand.u32 %v4206, 4294901760
        %v4724 = vsub.f32 %v4206, %v4723
        %4725 = vmatpush1.msra.mxu0 %v4724
        %4726 = vmatprep.subr.mxu0 0.0
        %v4727 = vand.u32 %v4207, 4294901760
        %v4728 = vsub.f32 %v4207, %v4727
        %4729 = vmatpush1.msra.mxu0 %v4728
        %4730 = vmatprep.subr.mxu0 0.0
        %v4731 = vand.u32 %v4208, 4294901760
        %v4732 = vsub.f32 %v4208, %v4731
        %4733 = vmatpush1.msra.mxu0 %v4732
        %4734 = vmatprep.subr.mxu0 0.0
        %v4735 = vand.u32 %v4209, 4294901760
        %v4736 = vsub.f32 %v4209, %v4735
        %4737 = vmatpush1.msra.mxu0 %v4736
        %4738 = vmatprep.subr.mxu0 0.0
        %v4739 = vand.u32 %v4210, 4294901760
        %v4740 = vsub.f32 %v4210, %v4739
        %4741 = vmatpush1.msra.mxu0 %v4740
        %4742 = vmatprep.subr.mxu0 0.0
        %v4743 = vand.u32 %v4211, 4294901760
        %v4744 = vsub.f32 %v4211, %v4743
        %4745 = vmatpush1.msra.mxu0 %v4744
        %4746 = vmatprep.subr.mxu0 0.0
        %v4747 = vand.u32 %v4212, 4294901760
        %v4748 = vsub.f32 %v4212, %v4747
        %4749 = vmatpush1.msra.mxu0 %v4748
        %4750 = vmatprep.subr.mxu0 0.0
        %v4751 = vand.u32 %v4213, 4294901760
        %v4752 = vsub.f32 %v4213, %v4751
        %4753 = vmatpush1.msra.mxu0 %v4752
        %4754 = vmatprep.subr.mxu0 0.0
        %v4755 = vand.u32 %v4214, 4294901760
        %v4756 = vsub.f32 %v4214, %v4755
        %4757 = vmatpush1.msra.mxu0 %v4756
        %4758 = vmatprep.subr.mxu0 0.0
        %v4759 = vand.u32 %v4215, 4294901760
        %v4760 = vsub.f32 %v4215, %v4759
        %4761 = vmatpush1.msra.mxu0 %v4760
        %4762 = vmatprep.subr.mxu0 0.0
        %v4763 = vand.u32 %v4216, 4294901760
        %v4764 = vsub.f32 %v4216, %v4763
        %4765 = vmatpush1.msra.mxu0 %v4764
        %4766 = vmatprep.subr.mxu0 0.0
        %v4767 = vand.u32 %v4217, 4294901760
        %v4768 = vsub.f32 %v4217, %v4767
        %4769 = vmatpush1.msra.mxu0 %v4768
        %4770 = vmatprep.subr.mxu0 0.0
        %v4771 = vand.u32 %v4218, 4294901760
        %v4772 = vsub.f32 %v4218, %v4771
        %4773 = vmatpush1.msra.mxu0 %v4772
        %4774 = vmatprep.subr.mxu0 0.0
        %v4775 = vand.u32 %v4219, 4294901760
        %v4776 = vsub.f32 %v4219, %v4775
        %4777 = vmatpush1.msra.mxu0 %v4776
        %v4778 = vand.u32 %v4184, 4294901760
        %v4779 = vsub.f32 %v4184, %v4778
        %4780 = vmatprep.mubr.f32.mxu0 %v4779
        %v4781 = vand.u32 %v4180, 4294901760
        %v4782 = vsub.f32 %v4180, %v4781
        %4783 = vmatmul.mubr.f32.gmra.mrb[0].mxu0 %v4782
        %v4784 = vpop.f32.mrb[0].mxu0
        %v4785 = vadd.f32 %v4626, %v4784
        %v4786 = vpop.f32.mrb[0].mxu0
        %v4787 = vand.u32 %v4185, 4294901760
        %v4788 = vsub.f32 %v4185, %v4787
        %4789 = vmatprep.mubr.f32.mxu0 %v4788
        %v4790 = vand.u32 %v4181, 4294901760
        %v4791 = vsub.f32 %v4181, %v4790
        %4792 = vmatmul.mubr.f32.gmra.mrb[0].mxu0 %v4791
        %v4793 = vpop.f32.mrb[0].mxu0
        %v4794 = vadd.f32 %v4633, %v4793
        %v4795 = vpop.f32.mrb[0].mxu0
        %v4796 = vand.u32 %v4186, 4294901760
        %v4797 = vsub.f32 %v4186, %v4796
        %4798 = vmatprep.mubr.f32.mxu0 %v4797
        %v4799 = vand.u32 %v4182, 4294901760
        %v4800 = vsub.f32 %v4182, %v4799
        %4801 = vmatmul.mubr.f32.gmra.mrb[0].mxu0 %v4800
        %v4802 = vpop.f32.mrb[0].mxu0
        %v4803 = vadd.f32 %v4640, %v4802
        %v4804 = vpop.f32.mrb[0].mxu0
        %v4805 = vand.u32 %v4187, 4294901760
        %v4806 = vsub.f32 %v4187, %v4805
        %4807 = vmatprep.mubr.f32.mxu0 %v4806
        %v4808 = vand.u32 %v4183, 4294901760
        %v4809 = vsub.f32 %v4183, %v4808
        %4810 = vmatmul.mubr.f32.gmra.mrb[0].mxu0 %v4809
        %v4811 = vpop.f32.mrb[0].mxu0
        %v4812 = vadd.f32 %v4647, %v4811
        %v4813 = vpop.f32.mrb[0].mxu0
        %4814 = vdwg.mxu0
        %4815 = vmatprep.subr.mxu0 0.0
        %v4816 = vand.u32 %v4188, 4294901760
        %4817 = vmatpush1.msra.mxu0 %v4816
        %4818 = vmatprep.subr.mxu0 0.0
        %v4819 = vand.u32 %v4189, 4294901760
        %4820 = vmatpush1.msra.mxu0 %v4819
        %4821 = vmatprep.subr.mxu0 0.0
        %v4822 = vand.u32 %v4190, 4294901760
        %4823 = vmatpush1.msra.mxu0 %v4822
        %4824 = vmatprep.subr.mxu0 0.0
        %v4825 = vand.u32 %v4191, 4294901760
        %4826 = vmatpush1.msra.mxu0 %v4825
        %4827 = vmatprep.subr.mxu0 0.0
        %v4828 = vand.u32 %v4192, 4294901760
        %4829 = vmatpush1.msra.mxu0 %v4828
        %4830 = vmatprep.subr.mxu0 0.0
        %v4831 = vand.u32 %v4193, 4294901760
        %4832 = vmatpush1.msra.mxu0 %v4831
        %4833 = vmatprep.subr.mxu0 0.0
        %v4834 = vand.u32 %v4194, 4294901760
        %4835 = vmatpush1.msra.mxu0 %v4834
        %4836 = vmatprep.subr.mxu0 0.0
        %v4837 = vand.u32 %v4195, 4294901760
        %4838 = vmatpush1.msra.mxu0 %v4837
        %4839 = vmatprep.subr.mxu0 0.0
        %v4840 = vand.u32 %v4196, 4294901760
        %4841 = vmatpush1.msra.mxu0 %v4840
        %4842 = vmatprep.subr.mxu0 0.0
        %v4843 = vand.u32 %v4197, 4294901760
        %4844 = vmatpush1.msra.mxu0 %v4843
        %4845 = vmatprep.subr.mxu0 0.0
        %v4846 = vand.u32 %v4198, 4294901760
        %4847 = vmatpush1.msra.mxu0 %v4846
        %4848 = vmatprep.subr.mxu0 0.0
        %v4849 = vand.u32 %v4199, 4294901760
        %4850 = vmatpush1.msra.mxu0 %v4849
        %4851 = vmatprep.subr.mxu0 0.0
        %v4852 = vand.u32 %v4200, 4294901760
        %4853 = vmatpush1.msra.mxu0 %v4852
        %4854 = vmatprep.subr.mxu0 0.0
        %v4855 = vand.u32 %v4201, 4294901760
        %4856 = vmatpush1.msra.mxu0 %v4855
        %4857 = vmatprep.subr.mxu0 0.0
        %v4858 = vand.u32 %v4202, 4294901760
        %4859 = vmatpush1.msra.mxu0 %v4858
        %4860 = vmatprep.subr.mxu0 0.0
        %v4861 = vand.u32 %v4203, 4294901760
        %4862 = vmatpush1.msra.mxu0 %v4861
        %4863 = vmatprep.subr.mxu0 0.0
        %v4864 = vand.u32 %v4204, 4294901760
        %4865 = vmatpush1.msra.mxu0 %v4864
        %4866 = vmatprep.subr.mxu0 0.0
        %v4867 = vand.u32 %v4205, 4294901760
        %4868 = vmatpush1.msra.mxu0 %v4867
        %4869 = vmatprep.subr.mxu0 0.0
        %v4870 = vand.u32 %v4206, 4294901760
        %4871 = vmatpush1.msra.mxu0 %v4870
        %4872 = vmatprep.subr.mxu0 0.0
        %v4873 = vand.u32 %v4207, 4294901760
        %4874 = vmatpush1.msra.mxu0 %v4873
        %4875 = vmatprep.subr.mxu0 0.0
        %v4876 = vand.u32 %v4208, 4294901760
        %4877 = vmatpush1.msra.mxu0 %v4876
        %4878 = vmatprep.subr.mxu0 0.0
        %v4879 = vand.u32 %v4209, 4294901760
        %4880 = vmatpush1.msra.mxu0 %v4879
        %4881 = vmatprep.subr.mxu0 0.0
        %v4882 = vand.u32 %v4210, 4294901760
        %4883 = vmatpush1.msra.mxu0 %v4882
        %4884 = vmatprep.subr.mxu0 0.0
        %v4885 = vand.u32 %v4211, 4294901760
        %4886 = vmatpush1.msra.mxu0 %v4885
        %4887 = vmatprep.subr.mxu0 0.0
        %v4888 = vand.u32 %v4212, 4294901760
        %4889 = vmatpush1.msra.mxu0 %v4888
        %4890 = vmatprep.subr.mxu0 0.0
        %v4891 = vand.u32 %v4213, 4294901760
        %4892 = vmatpush1.msra.mxu0 %v4891
        %4893 = vmatprep.subr.mxu0 0.0
        %v4894 = vand.u32 %v4214, 4294901760
        %4895 = vmatpush1.msra.mxu0 %v4894
        %4896 = vmatprep.subr.mxu0 0.0
        %v4897 = vand.u32 %v4215, 4294901760
        %4898 = vmatpush1.msra.mxu0 %v4897
        %4899 = vmatprep.subr.mxu0 0.0
        %v4900 = vand.u32 %v4216, 4294901760
        %4901 = vmatpush1.msra.mxu0 %v4900
        %4902 = vmatprep.subr.mxu0 0.0
        %v4903 = vand.u32 %v4217, 4294901760
        %4904 = vmatpush1.msra.mxu0 %v4903
        %4905 = vmatprep.subr.mxu0 0.0
        %v4906 = vand.u32 %v4218, 4294901760
        %4907 = vmatpush1.msra.mxu0 %v4906
        %4908 = vmatprep.subr.mxu0 0.0
        %v4909 = vand.u32 %v4219, 4294901760
        %4910 = vmatpush1.msra.mxu0 %v4909
        %v4911 = vand.u32 %v4184, 4294901760
        %v4912 = vsub.f32 %v4184, %v4911
        %v4913 = vand.u32 %v4912, 4294901760
        %4914 = vmatprep.mubr.f32.mxu0 %v4913
        %v4915 = vand.u32 %v4180, 4294901760
        %v4916 = vsub.f32 %v4180, %v4915
        %v4917 = vand.u32 %v4916, 4294901760
        %4918 = vmatmul.mubr.f32.gmra.mrb[0].mxu0 %v4917
        %v4919 = vpop.f32.mrb[0].mxu0
        %v4920 = vadd.f32 %v4785, %v4919
        %v4921 = vpop.f32.mrb[0].mxu0
        %v4922 = vand.u32 %v4185, 4294901760
        %v4923 = vsub.f32 %v4185, %v4922
        %v4924 = vand.u32 %v4923, 4294901760
        %4925 = vmatprep.mubr.f32.mxu0 %v4924
        %v4926 = vand.u32 %v4181, 4294901760
        %v4927 = vsub.f32 %v4181, %v4926
        %v4928 = vand.u32 %v4927, 4294901760
        %4929 = vmatmul.mubr.f32.gmra.mrb[0].mxu0 %v4928
        %v4930 = vpop.f32.mrb[0].mxu0
        %v4931 = vadd.f32 %v4794, %v4930
        %v4932 = vpop.f32.mrb[0].mxu0
        %v4933 = vand.u32 %v4186, 4294901760
        %v4934 = vsub.f32 %v4186, %v4933
        %v4935 = vand.u32 %v4934, 4294901760
        %4936 = vmatprep.mubr.f32.mxu0 %v4935
        %v4937 = vand.u32 %v4182, 4294901760
        %v4938 = vsub.f32 %v4182, %v4937
        %v4939 = vand.u32 %v4938, 4294901760
        %4940 = vmatmul.mubr.f32.gmra.mrb[0].mxu0 %v4939
        %v4941 = vpop.f32.mrb[0].mxu0
        %v4942 = vadd.f32 %v4803, %v4941
        %v4943 = vpop.f32.mrb[0].mxu0
        %v4944 = vand.u32 %v4187, 4294901760
        %v4945 = vsub.f32 %v4187, %v4944
        %v4946 = vand.u32 %v4945, 4294901760
        %4947 = vmatprep.mubr.f32.mxu0 %v4946
        %v4948 = vand.u32 %v4183, 4294901760
        %v4949 = vsub.f32 %v4183, %v4948
        %v4950 = vand.u32 %v4949, 4294901760
        %4951 = vmatmul.mubr.f32.gmra.mrb[0].mxu0 %v4950
        %v4952 = vpop.f32.mrb[0].mxu0
        %v4953 = vadd.f32 %v4812, %v4952
        %v4954 = vpop.f32.mrb[0].mxu0
        %4955 = vdwg.mxu0
        %4956 = vmatprep.subr.mxu0 0.0
        %v4957 = vand.u32 %v4188, 4294901760
        %v4958 = vsub.f32 %v4188, %v4957
        %v4959 = vand.u32 %v4958, 4294901760
        %4960 = vmatpush1.msra.mxu0 %v4959
        %4961 = vmatprep.subr.mxu0 0.0
        %v4962 = vand.u32 %v4189, 4294901760
        %v4963 = vsub.f32 %v4189, %v4962
        %v4964 = vand.u32 %v4963, 4294901760
        %4965 = vmatpush1.msra.mxu0 %v4964
        %4966 = vmatprep.subr.mxu0 0.0
        %v4967 = vand.u32 %v4190, 4294901760
        %v4968 = vsub.f32 %v4190, %v4967
        %v4969 = vand.u32 %v4968, 4294901760
        %4970 = vmatpush1.msra.mxu0 %v4969
        %4971 = vmatprep.subr.mxu0 0.0
        %v4972 = vand.u32 %v4191, 4294901760
        %v4973 = vsub.f32 %v4191, %v4972
        %v4974 = vand.u32 %v4973, 4294901760
        %4975 = vmatpush1.msra.mxu0 %v4974
        %4976 = vmatprep.subr.mxu0 0.0
        %v4977 = vand.u32 %v4192, 4294901760
        %v4978 = vsub.f32 %v4192, %v4977
        %v4979 = vand.u32 %v4978, 4294901760
        %4980 = vmatpush1.msra.mxu0 %v4979
        %4981 = vmatprep.subr.mxu0 0.0
        %v4982 = vand.u32 %v4193, 4294901760
        %v4983 = vsub.f32 %v4193, %v4982
        %v4984 = vand.u32 %v4983, 4294901760
        %4985 = vmatpush1.msra.mxu0 %v4984
        %4986 = vmatprep.subr.mxu0 0.0
        %v4987 = vand.u32 %v4194, 4294901760
        %v4988 = vsub.f32 %v4194, %v4987
        %v4989 = vand.u32 %v4988, 4294901760
        %4990 = vmatpush1.msra.mxu0 %v4989
        %4991 = vmatprep.subr.mxu0 0.0
        %v4992 = vand.u32 %v4195, 4294901760
        %v4993 = vsub.f32 %v4195, %v4992
        %v4994 = vand.u32 %v4993, 4294901760
        %4995 = vmatpush1.msra.mxu0 %v4994
        %4996 = vmatprep.subr.mxu0 0.0
        %v4997 = vand.u32 %v4196, 4294901760
        %v4998 = vsub.f32 %v4196, %v4997
        %v4999 = vand.u32 %v4998, 4294901760
        %5000 = vmatpush1.msra.mxu0 %v4999
        %5001 = vmatprep.subr.mxu0 0.0
        %v5002 = vand.u32 %v4197, 4294901760
        %v5003 = vsub.f32 %v4197, %v5002
        %v5004 = vand.u32 %v5003, 4294901760
        %5005 = vmatpush1.msra.mxu0 %v5004
        %5006 = vmatprep.subr.mxu0 0.0
        %v5007 = vand.u32 %v4198, 4294901760
        %v5008 = vsub.f32 %v4198, %v5007
        %v5009 = vand.u32 %v5008, 4294901760
        %5010 = vmatpush1.msra.mxu0 %v5009
        %5011 = vmatprep.subr.mxu0 0.0
        %v5012 = vand.u32 %v4199, 4294901760
        %v5013 = vsub.f32 %v4199, %v5012
        %v5014 = vand.u32 %v5013, 4294901760
        %5015 = vmatpush1.msra.mxu0 %v5014
        %5016 = vmatprep.subr.mxu0 0.0
        %v5017 = vand.u32 %v4200, 4294901760
        %v5018 = vsub.f32 %v4200, %v5017
        %v5019 = vand.u32 %v5018, 4294901760
        %5020 = vmatpush1.msra.mxu0 %v5019
        %5021 = vmatprep.subr.mxu0 0.0
        %v5022 = vand.u32 %v4201, 4294901760
        %v5023 = vsub.f32 %v4201, %v5022
        %v5024 = vand.u32 %v5023, 4294901760
        %5025 = vmatpush1.msra.mxu0 %v5024
        %5026 = vmatprep.subr.mxu0 0.0
        %v5027 = vand.u32 %v4202, 4294901760
        %v5028 = vsub.f32 %v4202, %v5027
        %v5029 = vand.u32 %v5028, 4294901760
        %5030 = vmatpush1.msra.mxu0 %v5029
        %5031 = vmatprep.subr.mxu0 0.0
        %v5032 = vand.u32 %v4203, 4294901760
        %v5033 = vsub.f32 %v4203, %v5032
        %v5034 = vand.u32 %v5033, 4294901760
        %5035 = vmatpush1.msra.mxu0 %v5034
        %5036 = vmatprep.subr.mxu0 0.0
        %v5037 = vand.u32 %v4204, 4294901760
        %v5038 = vsub.f32 %v4204, %v5037
        %v5039 = vand.u32 %v5038, 4294901760
        %5040 = vmatpush1.msra.mxu0 %v5039
        %5041 = vmatprep.subr.mxu0 0.0
        %v5042 = vand.u32 %v4205, 4294901760
        %v5043 = vsub.f32 %v4205, %v5042
        %v5044 = vand.u32 %v5043, 4294901760
        %5045 = vmatpush1.msra.mxu0 %v5044
        %5046 = vmatprep.subr.mxu0 0.0
        %v5047 = vand.u32 %v4206, 4294901760
        %v5048 = vsub.f32 %v4206, %v5047
        %v5049 = vand.u32 %v5048, 4294901760
        %5050 = vmatpush1.msra.mxu0 %v5049
        %5051 = vmatprep.subr.mxu0 0.0
        %v5052 = vand.u32 %v4207, 4294901760
        %v5053 = vsub.f32 %v4207, %v5052
        %v5054 = vand.u32 %v5053, 4294901760
        %5055 = vmatpush1.msra.mxu0 %v5054
        %5056 = vmatprep.subr.mxu0 0.0
        %v5057 = vand.u32 %v4208, 4294901760
        %v5058 = vsub.f32 %v4208, %v5057
        %v5059 = vand.u32 %v5058, 4294901760
        %5060 = vmatpush1.msra.mxu0 %v5059
        %5061 = vmatprep.subr.mxu0 0.0
        %v5062 = vand.u32 %v4209, 4294901760
        %v5063 = vsub.f32 %v4209, %v5062
        %v5064 = vand.u32 %v5063, 4294901760
        %5065 = vmatpush1.msra.mxu0 %v5064
        %5066 = vmatprep.subr.mxu0 0.0
        %v5067 = vand.u32 %v4210, 4294901760
        %v5068 = vsub.f32 %v4210, %v5067
        %v5069 = vand.u32 %v5068, 4294901760
        %5070 = vmatpush1.msra.mxu0 %v5069
        %5071 = vmatprep.subr.mxu0 0.0
        %v5072 = vand.u32 %v4211, 4294901760
        %v5073 = vsub.f32 %v4211, %v5072
        %v5074 = vand.u32 %v5073, 4294901760
        %5075 = vmatpush1.msra.mxu0 %v5074
        %5076 = vmatprep.subr.mxu0 0.0
        %v5077 = vand.u32 %v4212, 4294901760
        %v5078 = vsub.f32 %v4212, %v5077
        %v5079 = vand.u32 %v5078, 4294901760
        %5080 = vmatpush1.msra.mxu0 %v5079
        %5081 = vmatprep.subr.mxu0 0.0
        %v5082 = vand.u32 %v4213, 4294901760
        %v5083 = vsub.f32 %v4213, %v5082
        %v5084 = vand.u32 %v5083, 4294901760
        %5085 = vmatpush1.msra.mxu0 %v5084
        %5086 = vmatprep.subr.mxu0 0.0
        %v5087 = vand.u32 %v4214, 4294901760
        %v5088 = vsub.f32 %v4214, %v5087
        %v5089 = vand.u32 %v5088, 4294901760
        %5090 = vmatpush1.msra.mxu0 %v5089
        %5091 = vmatprep.subr.mxu0 0.0
        %v5092 = vand.u32 %v4215, 4294901760
        %v5093 = vsub.f32 %v4215, %v5092
        %v5094 = vand.u32 %v5093, 4294901760
        %5095 = vmatpush1.msra.mxu0 %v5094
        %5096 = vmatprep.subr.mxu0 0.0
        %v5097 = vand.u32 %v4216, 4294901760
        %v5098 = vsub.f32 %v4216, %v5097
        %v5099 = vand.u32 %v5098, 4294901760
        %5100 = vmatpush1.msra.mxu0 %v5099
        %5101 = vmatprep.subr.mxu0 0.0
        %v5102 = vand.u32 %v4217, 4294901760
        %v5103 = vsub.f32 %v4217, %v5102
        %v5104 = vand.u32 %v5103, 4294901760
        %5105 = vmatpush1.msra.mxu0 %v5104
        %5106 = vmatprep.subr.mxu0 0.0
        %v5107 = vand.u32 %v4218, 4294901760
        %v5108 = vsub.f32 %v4218, %v5107
        %v5109 = vand.u32 %v5108, 4294901760
        %5110 = vmatpush1.msra.mxu0 %v5109
        %5111 = vmatprep.subr.mxu0 0.0
        %v5112 = vand.u32 %v4219, 4294901760
        %v5113 = vsub.f32 %v4219, %v5112
        %v5114 = vand.u32 %v5113, 4294901760
        %5115 = vmatpush1.msra.mxu0 %v5114
        %v5116 = vand.u32 %v4184, 4294901760
        %5117 = vmatprep.mubr.f32.mxu0 %v5116
        %v5118 = vand.u32 %v4180, 4294901760
        %5119 = vmatmul.mubr.f32.gmra.mrb[0].mxu0 %v5118
        %v5120 = vpop.f32.mrb[0].mxu0
        %v5121 = vadd.f32 %v4920, %v5120
        %v5122 = vpop.f32.mrb[0].mxu0
        %v5123 = vand.u32 %v4185, 4294901760
        %5124 = vmatprep.mubr.f32.mxu0 %v5123
        %v5125 = vand.u32 %v4181, 4294901760
        %5126 = vmatmul.mubr.f32.gmra.mrb[0].mxu0 %v5125
        %v5127 = vpop.f32.mrb[0].mxu0
        %v5128 = vadd.f32 %v4931, %v5127
        %v5129 = vpop.f32.mrb[0].mxu0
        %v5130 = vand.u32 %v4186, 4294901760
        %5131 = vmatprep.mubr.f32.mxu0 %v5130
        %v5132 = vand.u32 %v4182, 4294901760
        %5133 = vmatmul.mubr.f32.gmra.mrb[0].mxu0 %v5132
        %v5134 = vpop.f32.mrb[0].mxu0
        %v5135 = vadd.f32 %v4942, %v5134
        %v5136 = vpop.f32.mrb[0].mxu0
        %v5137 = vand.u32 %v4187, 4294901760
        %5138 = vmatprep.mubr.f32.mxu0 %v5137
        %v5139 = vand.u32 %v4183, 4294901760
        %5140 = vmatmul.mubr.f32.gmra.mrb[0].mxu0 %v5139
        %v5141 = vpop.f32.mrb[0].mxu0
        %v5142 = vadd.f32 %v4953, %v5141
        %v5143 = vpop.f32.mrb[0].mxu0
        %5144 = vdwg.mxu0
        %5145 = vmatprep.subr.mxu0 0.0
        %v5146 = vand.u32 %v4188, 4294901760
        %5147 = vmatpush1.msra.mxu0 %v5146
        %5148 = vmatprep.subr.mxu0 0.0
        %v5149 = vand.u32 %v4189, 4294901760
        %5150 = vmatpush1.msra.mxu0 %v5149
        %5151 = vmatprep.subr.mxu0 0.0
        %v5152 = vand.u32 %v4190, 4294901760
        %5153 = vmatpush1.msra.mxu0 %v5152
        %5154 = vmatprep.subr.mxu0 0.0
        %v5155 = vand.u32 %v4191, 4294901760
        %5156 = vmatpush1.msra.mxu0 %v5155
        %5157 = vmatprep.subr.mxu0 0.0
        %v5158 = vand.u32 %v4192, 4294901760
        %5159 = vmatpush1.msra.mxu0 %v5158
        %5160 = vmatprep.subr.mxu0 0.0
        %v5161 = vand.u32 %v4193, 4294901760
        %5162 = vmatpush1.msra.mxu0 %v5161
        %5163 = vmatprep.subr.mxu0 0.0
        %v5164 = vand.u32 %v4194, 4294901760
        %5165 = vmatpush1.msra.mxu0 %v5164
        %5166 = vmatprep.subr.mxu0 0.0
        %v5167 = vand.u32 %v4195, 4294901760
        %5168 = vmatpush1.msra.mxu0 %v5167
        %5169 = vmatprep.subr.mxu0 0.0
        %v5170 = vand.u32 %v4196, 4294901760
        %5171 = vmatpush1.msra.mxu0 %v5170
        %5172 = vmatprep.subr.mxu0 0.0
        %v5173 = vand.u32 %v4197, 4294901760
        %5174 = vmatpush1.msra.mxu0 %v5173
        %5175 = vmatprep.subr.mxu0 0.0
        %v5176 = vand.u32 %v4198, 4294901760
        %5177 = vmatpush1.msra.mxu0 %v5176
        %5178 = vmatprep.subr.mxu0 0.0
        %v5179 = vand.u32 %v4199, 4294901760
        %5180 = vmatpush1.msra.mxu0 %v5179
        %5181 = vmatprep.subr.mxu0 0.0
        %v5182 = vand.u32 %v4200, 4294901760
        %5183 = vmatpush1.msra.mxu0 %v5182
        %5184 = vmatprep.subr.mxu0 0.0
        %v5185 = vand.u32 %v4201, 4294901760
        %5186 = vmatpush1.msra.mxu0 %v5185
        %5187 = vmatprep.subr.mxu0 0.0
        %v5188 = vand.u32 %v4202, 4294901760
        %5189 = vmatpush1.msra.mxu0 %v5188
        %5190 = vmatprep.subr.mxu0 0.0
        %v5191 = vand.u32 %v4203, 4294901760
        %5192 = vmatpush1.msra.mxu0 %v5191
        %5193 = vmatprep.subr.mxu0 0.0
        %v5194 = vand.u32 %v4204, 4294901760
        %5195 = vmatpush1.msra.mxu0 %v5194
        %5196 = vmatprep.subr.mxu0 0.0
        %v5197 = vand.u32 %v4205, 4294901760
        %5198 = vmatpush1.msra.mxu0 %v5197
        %5199 = vmatprep.subr.mxu0 0.0
        %v5200 = vand.u32 %v4206, 4294901760
        %5201 = vmatpush1.msra.mxu0 %v5200
        %5202 = vmatprep.subr.mxu0 0.0
        %v5203 = vand.u32 %v4207, 4294901760
        %5204 = vmatpush1.msra.mxu0 %v5203
        %5205 = vmatprep.subr.mxu0 0.0
        %v5206 = vand.u32 %v4208, 4294901760
        %5207 = vmatpush1.msra.mxu0 %v5206
        %5208 = vmatprep.subr.mxu0 0.0
        %v5209 = vand.u32 %v4209, 4294901760
        %5210 = vmatpush1.msra.mxu0 %v5209
        %5211 = vmatprep.subr.mxu0 0.0
        %v5212 = vand.u32 %v4210, 4294901760
        %5213 = vmatpush1.msra.mxu0 %v5212
        %5214 = vmatprep.subr.mxu0 0.0
        %v5215 = vand.u32 %v4211, 4294901760
        %5216 = vmatpush1.msra.mxu0 %v5215
        %5217 = vmatprep.subr.mxu0 0.0
        %v5218 = vand.u32 %v4212, 4294901760
        %5219 = vmatpush1.msra.mxu0 %v5218
        %5220 = vmatprep.subr.mxu0 0.0
        %v5221 = vand.u32 %v4213, 4294901760
        %5222 = vmatpush1.msra.mxu0 %v5221
        %5223 = vmatprep.subr.mxu0 0.0
        %v5224 = vand.u32 %v4214, 4294901760
        %5225 = vmatpush1.msra.mxu0 %v5224
        %5226 = vmatprep.subr.mxu0 0.0
        %v5227 = vand.u32 %v4215, 4294901760
        %5228 = vmatpush1.msra.mxu0 %v5227
        %5229 = vmatprep.subr.mxu0 0.0
        %v5230 = vand.u32 %v4216, 4294901760
        %5231 = vmatpush1.msra.mxu0 %v5230
        %5232 = vmatprep.subr.mxu0 0.0
        %v5233 = vand.u32 %v4217, 4294901760
        %5234 = vmatpush1.msra.mxu0 %v5233
        %5235 = vmatprep.subr.mxu0 0.0
        %v5236 = vand.u32 %v4218, 4294901760
        %5237 = vmatpush1.msra.mxu0 %v5236
        %5238 = vmatprep.subr.mxu0 0.0
        %v5239 = vand.u32 %v4219, 4294901760
        %5240 = vmatpush1.msra.mxu0 %v5239
        %v5241 = vand.u32 %v4184, 4294901760
        %5242 = vmatprep.mubr.f32.mxu0 %v5241
        %v5243 = vand.u32 %v4180, 4294901760
        %5244 = vmatmul.mubr.f32.gmra.mrb[0].mxu0 %v5243
        %v5245 = vpop.f32.mrb[0].mxu0
        %v5246 = vadd.f32 %v5121, %v5245
        %v5247 = vpop.f32.mrb[0].mxu0
        %v5248 = vand.u32 %v4185, 4294901760
        %5249 = vmatprep.mubr.f32.mxu0 %v5248
        %v5250 = vand.u32 %v4181, 4294901760
        %5251 = vmatmul.mubr.f32.gmra.mrb[0].mxu0 %v5250
        %v5252 = vpop.f32.mrb[0].mxu0
        %v5253 = vadd.f32 %v5128, %v5252
        %v5254 = vpop.f32.mrb[0].mxu0
        %v5255 = vand.u32 %v4186, 4294901760
        %5256 = vmatprep.mubr.f32.mxu0 %v5255
        %v5257 = vand.u32 %v4182, 4294901760
        %5258 = vmatmul.mubr.f32.gmra.mrb[0].mxu0 %v5257
        %v5259 = vpop.f32.mrb[0].mxu0
        %v5260 = vadd.f32 %v5135, %v5259
        %v5261 = vpop.f32.mrb[0].mxu0
        %v5262 = vand.u32 %v4187, 4294901760
        %5263 = vmatprep.mubr.f32.mxu0 %v5262
        %v5264 = vand.u32 %v4183, 4294901760
        %5265 = vmatmul.mubr.f32.gmra.mrb[0].mxu0 %v5264
        %v5266 = vpop.f32.mrb[0].mxu0
        %v5267 = vadd.f32 %v5142, %v5266
        %v5268 = vpop.f32.mrb[0].mxu0
        %5269 = vdwg.mxu0
        %5270 = vmatprep.subr.mxu0 0.0
        %v5271 = vand.u32 %v4220, 4294901760
        %5272 = vmatpush1.msra.mxu0 %v5271
        %5273 = vmatprep.subr.mxu0 0.0
        %v5274 = vand.u32 %v4221, 4294901760
        %5275 = vmatpush1.msra.mxu0 %v5274
        %5276 = vmatprep.subr.mxu0 0.0
        %v5277 = vand.u32 %v4222, 4294901760
        %5278 = vmatpush1.msra.mxu0 %v5277
        %5279 = vmatprep.subr.mxu0 0.0
        %v5280 = vand.u32 %v4223, 4294901760
        %5281 = vmatpush1.msra.mxu0 %v5280
        %5282 = vmatprep.subr.mxu0 0.0
        %v5283 = vand.u32 %v4224, 4294901760
        %5284 = vmatpush1.msra.mxu0 %v5283
        %5285 = vmatprep.subr.mxu0 0.0
        %v5286 = vand.u32 %v4225, 4294901760
        %5287 = vmatpush1.msra.mxu0 %v5286
        %5288 = vmatprep.subr.mxu0 0.0
        %v5289 = vand.u32 %v4226, 4294901760
        %5290 = vmatpush1.msra.mxu0 %v5289
        %5291 = vmatprep.subr.mxu0 0.0
        %v5292 = vand.u32 %v4227, 4294901760
        %5293 = vmatpush1.msra.mxu0 %v5292
        %5294 = vmatprep.subr.mxu0 0.0
        %5295 = vmatpush1.msra.mxu0 0.0
        %5296 = vmatprep.subr.mxu0 0.0
        %5297 = vmatpush1.msra.mxu0 0.0
        %5298 = vmatprep.subr.mxu0 0.0
        %5299 = vmatpush1.msra.mxu0 0.0
        %5300 = vmatprep.subr.mxu0 0.0
        %5301 = vmatpush1.msra.mxu0 0.0
        %5302 = vmatprep.subr.mxu0 0.0
        %5303 = vmatpush1.msra.mxu0 0.0
        %5304 = vmatprep.subr.mxu0 0.0
        %5305 = vmatpush1.msra.mxu0 0.0
        %5306 = vmatprep.subr.mxu0 0.0
        %5307 = vmatpush1.msra.mxu0 0.0
        %5308 = vmatprep.subr.mxu0 0.0
        %5309 = vmatpush1.msra.mxu0 0.0
        %5310 = vmatprep.subr.mxu0 0.0
        %5311 = vmatpush1.msra.mxu0 0.0
        %5312 = vmatprep.subr.mxu0 0.0
        %5313 = vmatpush1.msra.mxu0 0.0
        %5314 = vmatprep.subr.mxu0 0.0
        %5315 = vmatpush1.msra.mxu0 0.0
        %5316 = vmatprep.subr.mxu0 0.0
        %5317 = vmatpush1.msra.mxu0 0.0
        %5318 = vmatprep.subr.mxu0 0.0
        %5319 = vmatpush1.msra.mxu0 0.0
        %5320 = vmatprep.subr.mxu0 0.0
        %5321 = vmatpush1.msra.mxu0 0.0
        %5322 = vmatprep.subr.mxu0 0.0
        %5323 = vmatpush1.msra.mxu0 0.0
        %5324 = vmatprep.subr.mxu0 0.0
        %5325 = vmatpush1.msra.mxu0 0.0
        %5326 = vmatprep.subr.mxu0 0.0
        %5327 = vmatpush1.msra.mxu0 0.0
        %5328 = vmatprep.subr.mxu0 0.0
        %5329 = vmatpush1.msra.mxu0 0.0
        %5330 = vmatprep.subr.mxu0 0.0
        %5331 = vmatpush1.msra.mxu0 0.0
        %5332 = vmatprep.subr.mxu0 0.0
        %5333 = vmatpush1.msra.mxu0 0.0
        %5334 = vmatprep.subr.mxu0 0.0
        %5335 = vmatpush1.msra.mxu0 0.0
        %5336 = vmatprep.subr.mxu0 0.0
        %5337 = vmatpush1.msra.mxu0 0.0
        %5338 = vmatprep.subr.mxu0 0.0
        %5339 = vmatpush1.msra.mxu0 0.0
        %5340 = vmatprep.subr.mxu0 0.0
        %5341 = vmatpush1.msra.mxu0 0.0
        %5342 = vmatprep.mubr.f32.mxu0 0.0
        %v5343 = vand.u32 %v4229, 4294901760
        %v5344 = vsub.f32 %v4229, %v5343
        %v5345 = vand.u32 %v5344, 4294901760
        %v5346 = vsub.f32 %v5344, %v5345
        %v5347 = vand.u32 %v5346, 4294901760
        %5348 = vmatmul.mubr.f32.gmra.mrb[0].mxu0 %v5347
        %v5349 = vpop.f32.mrb[0].mxu0
        %v5350 = vadd.f32 %v5246, %v5349
        %v5351 = vpop.f32.mrb[0].mxu0
        %5352 = vmatprep.mubr.f32.mxu0 0.0
        %v5353 = vand.u32 %v4232, 4294901760
        %v5354 = vsub.f32 %v4232, %v5353
        %v5355 = vand.u32 %v5354, 4294901760
        %v5356 = vsub.f32 %v5354, %v5355
        %v5357 = vand.u32 %v5356, 4294901760
        %5358 = vmatmul.mubr.f32.gmra.mrb[0].mxu0 %v5357
        %v5359 = vpop.f32.mrb[0].mxu0
        %v5360 = vadd.f32 %v5253, %v5359
        %v5361 = vpop.f32.mrb[0].mxu0
        %5362 = vmatprep.mubr.f32.mxu0 0.0
        %v5363 = vand.u32 %v4235, 4294901760
        %v5364 = vsub.f32 %v4235, %v5363
        %v5365 = vand.u32 %v5364, 4294901760
        %v5366 = vsub.f32 %v5364, %v5365
        %v5367 = vand.u32 %v5366, 4294901760
        %5368 = vmatmul.mubr.f32.gmra.mrb[0].mxu0 %v5367
        %v5369 = vpop.f32.mrb[0].mxu0
        %v5370 = vadd.f32 %v5260, %v5369
        %v5371 = vpop.f32.mrb[0].mxu0
        %5372 = vmatprep.mubr.f32.mxu0 0.0
        %v5373 = vand.u32 %v4238, 4294901760
        %v5374 = vsub.f32 %v4238, %v5373
        %v5375 = vand.u32 %v5374, 4294901760
        %v5376 = vsub.f32 %v5374, %v5375
        %v5377 = vand.u32 %v5376, 4294901760
        %5378 = vmatmul.mubr.f32.gmra.mrb[0].mxu0 %v5377
        %v5379 = vpop.f32.mrb[0].mxu0
        %v5380 = vadd.f32 %v5267, %v5379
        %v5381 = vpop.f32.mrb[0].mxu0
        %5382 = vdwg.mxu0
        %5383 = vmatprep.subr.mxu0 0.0
        %v5384 = vand.u32 %v4220, 4294901760
        %v5385 = vsub.f32 %v4220, %v5384
        %v5386 = vand.u32 %v5385, 4294901760
        %v5387 = vsub.f32 %v5385, %v5386
        %v5388 = vand.u32 %v5387, 4294901760
        %5389 = vmatpush1.msra.mxu0 %v5388
        %5390 = vmatprep.subr.mxu0 0.0
        %v5391 = vand.u32 %v4221, 4294901760
        %v5392 = vsub.f32 %v4221, %v5391
        %v5393 = vand.u32 %v5392, 4294901760
        %v5394 = vsub.f32 %v5392, %v5393
        %v5395 = vand.u32 %v5394, 4294901760
        %5396 = vmatpush1.msra.mxu0 %v5395
        %5397 = vmatprep.subr.mxu0 0.0
        %v5398 = vand.u32 %v4222, 4294901760
        %v5399 = vsub.f32 %v4222, %v5398
        %v5400 = vand.u32 %v5399, 4294901760
        %v5401 = vsub.f32 %v5399, %v5400
        %v5402 = vand.u32 %v5401, 4294901760
        %5403 = vmatpush1.msra.mxu0 %v5402
        %5404 = vmatprep.subr.mxu0 0.0
        %v5405 = vand.u32 %v4223, 4294901760
        %v5406 = vsub.f32 %v4223, %v5405
        %v5407 = vand.u32 %v5406, 4294901760
        %v5408 = vsub.f32 %v5406, %v5407
        %v5409 = vand.u32 %v5408, 4294901760
        %5410 = vmatpush1.msra.mxu0 %v5409
        %5411 = vmatprep.subr.mxu0 0.0
        %v5412 = vand.u32 %v4224, 4294901760
        %v5413 = vsub.f32 %v4224, %v5412
        %v5414 = vand.u32 %v5413, 4294901760
        %v5415 = vsub.f32 %v5413, %v5414
        %v5416 = vand.u32 %v5415, 4294901760
        %5417 = vmatpush1.msra.mxu0 %v5416
        %5418 = vmatprep.subr.mxu0 0.0
        %v5419 = vand.u32 %v4225, 4294901760
        %v5420 = vsub.f32 %v4225, %v5419
        %v5421 = vand.u32 %v5420, 4294901760
        %v5422 = vsub.f32 %v5420, %v5421
        %v5423 = vand.u32 %v5422, 4294901760
        %5424 = vmatpush1.msra.mxu0 %v5423
        %5425 = vmatprep.subr.mxu0 0.0
        %v5426 = vand.u32 %v4226, 4294901760
        %v5427 = vsub.f32 %v4226, %v5426
        %v5428 = vand.u32 %v5427, 4294901760
        %v5429 = vsub.f32 %v5427, %v5428
        %v5430 = vand.u32 %v5429, 4294901760
        %5431 = vmatpush1.msra.mxu0 %v5430
        %5432 = vmatprep.subr.mxu0 0.0
        %v5433 = vand.u32 %v4227, 4294901760
        %v5434 = vsub.f32 %v4227, %v5433
        %v5435 = vand.u32 %v5434, 4294901760
        %v5436 = vsub.f32 %v5434, %v5435
        %v5437 = vand.u32 %v5436, 4294901760
        %5438 = vmatpush1.msra.mxu0 %v5437
        %5439 = vmatprep.subr.mxu0 0.0
        %5440 = vmatpush1.msra.mxu0 0.0
        %5441 = vmatprep.subr.mxu0 0.0
        %5442 = vmatpush1.msra.mxu0 0.0
        %5443 = vmatprep.subr.mxu0 0.0
        %5444 = vmatpush1.msra.mxu0 0.0
        %5445 = vmatprep.subr.mxu0 0.0
        %5446 = vmatpush1.msra.mxu0 0.0
        %5447 = vmatprep.subr.mxu0 0.0
        %5448 = vmatpush1.msra.mxu0 0.0
        %5449 = vmatprep.subr.mxu0 0.0
        %5450 = vmatpush1.msra.mxu0 0.0
        %5451 = vmatprep.subr.mxu0 0.0
        %5452 = vmatpush1.msra.mxu0 0.0
        %5453 = vmatprep.subr.mxu0 0.0
        %5454 = vmatpush1.msra.mxu0 0.0
        %5455 = vmatprep.subr.mxu0 0.0
        %5456 = vmatpush1.msra.mxu0 0.0
        %5457 = vmatprep.subr.mxu0 0.0
        %5458 = vmatpush1.msra.mxu0 0.0
        %5459 = vmatprep.subr.mxu0 0.0
        %5460 = vmatpush1.msra.mxu0 0.0
        %5461 = vmatprep.subr.mxu0 0.0
        %5462 = vmatpush1.msra.mxu0 0.0
        %5463 = vmatprep.subr.mxu0 0.0
        %5464 = vmatpush1.msra.mxu0 0.0
        %5465 = vmatprep.subr.mxu0 0.0
        %5466 = vmatpush1.msra.mxu0 0.0
        %5467 = vmatprep.subr.mxu0 0.0
        %5468 = vmatpush1.msra.mxu0 0.0
        %5469 = vmatprep.subr.mxu0 0.0
        %5470 = vmatpush1.msra.mxu0 0.0
        %5471 = vmatprep.subr.mxu0 0.0
        %5472 = vmatpush1.msra.mxu0 0.0
        %5473 = vmatprep.subr.mxu0 0.0
        %5474 = vmatpush1.msra.mxu0 0.0
        %5475 = vmatprep.subr.mxu0 0.0
        %5476 = vmatpush1.msra.mxu0 0.0
        %5477 = vmatprep.subr.mxu0 0.0
        %5478 = vmatpush1.msra.mxu0 0.0
        %5479 = vmatprep.subr.mxu0 0.0
        %5480 = vmatpush1.msra.mxu0 0.0
        %5481 = vmatprep.subr.mxu0 0.0
        %5482 = vmatpush1.msra.mxu0 0.0
        %5483 = vmatprep.subr.mxu0 0.0
        %5484 = vmatpush1.msra.mxu0 0.0
        %5485 = vmatprep.subr.mxu0 0.0
        %5486 = vmatpush1.msra.mxu0 0.0
        %5487 = vmatprep.mubr.f32.mxu0 0.0
        %v5488 = vand.u32 %v4229, 4294901760
        %5489 = vmatmul.mubr.f32.gmra.mrb[0].mxu0 %v5488
        %v5490 = vpop.f32.mrb[0].mxu0
        %v5491 = vadd.f32 %v5350, %v5490
        %v5492 = vpop.f32.mrb[0].mxu0
        %5493 = vmatprep.mubr.f32.mxu0 0.0
        %v5494 = vand.u32 %v4232, 4294901760
        %5495 = vmatmul.mubr.f32.gmra.mrb[0].mxu0 %v5494
        %v5496 = vpop.f32.mrb[0].mxu0
        %v5497 = vadd.f32 %v5360, %v5496
        %v5498 = vpop.f32.mrb[0].mxu0
        %5499 = vmatprep.mubr.f32.mxu0 0.0
        %v5500 = vand.u32 %v4235, 4294901760
        %5501 = vmatmul.mubr.f32.gmra.mrb[0].mxu0 %v5500
        %v5502 = vpop.f32.mrb[0].mxu0
        %v5503 = vadd.f32 %v5370, %v5502
        %v5504 = vpop.f32.mrb[0].mxu0
        %5505 = vmatprep.mubr.f32.mxu0 0.0
        %v5506 = vand.u32 %v4238, 4294901760
        %5507 = vmatmul.mubr.f32.gmra.mrb[0].mxu0 %v5506
        %v5508 = vpop.f32.mrb[0].mxu0
        %v5509 = vadd.f32 %v5380, %v5508
        %v5510 = vpop.f32.mrb[0].mxu0
        %5511 = vdwg.mxu0
        %5512 = vmatprep.subr.mxu0 0.0
        %v5513 = vand.u32 %v4220, 4294901760
        %v5514 = vsub.f32 %v4220, %v5513
        %5515 = vmatpush1.msra.mxu0 %v5514
        %5516 = vmatprep.subr.mxu0 0.0
        %v5517 = vand.u32 %v4221, 4294901760
        %v5518 = vsub.f32 %v4221, %v5517
        %5519 = vmatpush1.msra.mxu0 %v5518
        %5520 = vmatprep.subr.mxu0 0.0
        %v5521 = vand.u32 %v4222, 4294901760
        %v5522 = vsub.f32 %v4222, %v5521
        %5523 = vmatpush1.msra.mxu0 %v5522
        %5524 = vmatprep.subr.mxu0 0.0
        %v5525 = vand.u32 %v4223, 4294901760
        %v5526 = vsub.f32 %v4223, %v5525
        %5527 = vmatpush1.msra.mxu0 %v5526
        %5528 = vmatprep.subr.mxu0 0.0
        %v5529 = vand.u32 %v4224, 4294901760
        %v5530 = vsub.f32 %v4224, %v5529
        %5531 = vmatpush1.msra.mxu0 %v5530
        %5532 = vmatprep.subr.mxu0 0.0
        %v5533 = vand.u32 %v4225, 4294901760
        %v5534 = vsub.f32 %v4225, %v5533
        %5535 = vmatpush1.msra.mxu0 %v5534
        %5536 = vmatprep.subr.mxu0 0.0
        %v5537 = vand.u32 %v4226, 4294901760
        %v5538 = vsub.f32 %v4226, %v5537
        %5539 = vmatpush1.msra.mxu0 %v5538
        %5540 = vmatprep.subr.mxu0 0.0
        %v5541 = vand.u32 %v4227, 4294901760
        %v5542 = vsub.f32 %v4227, %v5541
        %5543 = vmatpush1.msra.mxu0 %v5542
        %5544 = vmatprep.subr.mxu0 0.0
        %5545 = vmatpush1.msra.mxu0 0.0
        %5546 = vmatprep.subr.mxu0 0.0
        %5547 = vmatpush1.msra.mxu0 0.0
        %5548 = vmatprep.subr.mxu0 0.0
        %5549 = vmatpush1.msra.mxu0 0.0
        %5550 = vmatprep.subr.mxu0 0.0
        %5551 = vmatpush1.msra.mxu0 0.0
        %5552 = vmatprep.subr.mxu0 0.0
        %5553 = vmatpush1.msra.mxu0 0.0
        %5554 = vmatprep.subr.mxu0 0.0
        %5555 = vmatpush1.msra.mxu0 0.0
        %5556 = vmatprep.subr.mxu0 0.0
        %5557 = vmatpush1.msra.mxu0 0.0
        %5558 = vmatprep.subr.mxu0 0.0
        %5559 = vmatpush1.msra.mxu0 0.0
        %5560 = vmatprep.subr.mxu0 0.0
        %5561 = vmatpush1.msra.mxu0 0.0
        %5562 = vmatprep.subr.mxu0 0.0
        %5563 = vmatpush1.msra.mxu0 0.0
        %5564 = vmatprep.subr.mxu0 0.0
        %5565 = vmatpush1.msra.mxu0 0.0
        %5566 = vmatprep.subr.mxu0 0.0
        %5567 = vmatpush1.msra.mxu0 0.0
        %5568 = vmatprep.subr.mxu0 0.0
        %5569 = vmatpush1.msra.mxu0 0.0
        %5570 = vmatprep.subr.mxu0 0.0
        %5571 = vmatpush1.msra.mxu0 0.0
        %5572 = vmatprep.subr.mxu0 0.0
        %5573 = vmatpush1.msra.mxu0 0.0
        %5574 = vmatprep.subr.mxu0 0.0
        %5575 = vmatpush1.msra.mxu0 0.0
        %5576 = vmatprep.subr.mxu0 0.0
        %5577 = vmatpush1.msra.mxu0 0.0
        %5578 = vmatprep.subr.mxu0 0.0
        %5579 = vmatpush1.msra.mxu0 0.0
        %5580 = vmatprep.subr.mxu0 0.0
        %5581 = vmatpush1.msra.mxu0 0.0
        %5582 = vmatprep.subr.mxu0 0.0
        %5583 = vmatpush1.msra.mxu0 0.0
        %5584 = vmatprep.subr.mxu0 0.0
        %5585 = vmatpush1.msra.mxu0 0.0
        %5586 = vmatprep.subr.mxu0 0.0
        %5587 = vmatpush1.msra.mxu0 0.0
        %5588 = vmatprep.subr.mxu0 0.0
        %5589 = vmatpush1.msra.mxu0 0.0
        %5590 = vmatprep.subr.mxu0 0.0
        %5591 = vmatpush1.msra.mxu0 0.0
        %5592 = vmatprep.mubr.f32.mxu0 0.0
        %v5593 = vand.u32 %v4229, 4294901760
        %v5594 = vsub.f32 %v4229, %v5593
        %5595 = vmatmul.mubr.f32.gmra.mrb[0].mxu0 %v5594
        %v5596 = vpop.f32.mrb[0].mxu0
        %v5597 = vadd.f32 %v5491, %v5596
        %v5598 = vpop.f32.mrb[0].mxu0
        %5599 = vmatprep.mubr.f32.mxu0 0.0
        %v5600 = vand.u32 %v4232, 4294901760
        %v5601 = vsub.f32 %v4232, %v5600
        %5602 = vmatmul.mubr.f32.gmra.mrb[0].mxu0 %v5601
        %v5603 = vpop.f32.mrb[0].mxu0
        %v5604 = vadd.f32 %v5497, %v5603
        %v5605 = vpop.f32.mrb[0].mxu0
        %5606 = vmatprep.mubr.f32.mxu0 0.0
        %v5607 = vand.u32 %v4235, 4294901760
        %v5608 = vsub.f32 %v4235, %v5607
        %5609 = vmatmul.mubr.f32.gmra.mrb[0].mxu0 %v5608
        %v5610 = vpop.f32.mrb[0].mxu0
        %v5611 = vadd.f32 %v5503, %v5610
        %v5612 = vpop.f32.mrb[0].mxu0
        %5613 = vmatprep.mubr.f32.mxu0 0.0
        %v5614 = vand.u32 %v4238, 4294901760
        %v5615 = vsub.f32 %v4238, %v5614
        %5616 = vmatmul.mubr.f32.gmra.mrb[0].mxu0 %v5615
        %v5617 = vpop.f32.mrb[0].mxu0
        %v5618 = vadd.f32 %v5509, %v5617
        %v5619 = vpop.f32.mrb[0].mxu0
        %5620 = vdwg.mxu0
        %5621 = vmatprep.subr.mxu0 0.0
        %v5622 = vand.u32 %v4220, 4294901760
        %5623 = vmatpush1.msra.mxu0 %v5622
        %5624 = vmatprep.subr.mxu0 0.0
        %v5625 = vand.u32 %v4221, 4294901760
        %5626 = vmatpush1.msra.mxu0 %v5625
        %5627 = vmatprep.subr.mxu0 0.0
        %v5628 = vand.u32 %v4222, 4294901760
        %5629 = vmatpush1.msra.mxu0 %v5628
        %5630 = vmatprep.subr.mxu0 0.0
        %v5631 = vand.u32 %v4223, 4294901760
        %5632 = vmatpush1.msra.mxu0 %v5631
        %5633 = vmatprep.subr.mxu0 0.0
        %v5634 = vand.u32 %v4224, 4294901760
        %5635 = vmatpush1.msra.mxu0 %v5634
        %5636 = vmatprep.subr.mxu0 0.0
        %v5637 = vand.u32 %v4225, 4294901760
        %5638 = vmatpush1.msra.mxu0 %v5637
        %5639 = vmatprep.subr.mxu0 0.0
        %v5640 = vand.u32 %v4226, 4294901760
        %5641 = vmatpush1.msra.mxu0 %v5640
        %5642 = vmatprep.subr.mxu0 0.0
        %v5643 = vand.u32 %v4227, 4294901760
        %5644 = vmatpush1.msra.mxu0 %v5643
        %5645 = vmatprep.subr.mxu0 0.0
        %5646 = vmatpush1.msra.mxu0 0.0
        %5647 = vmatprep.subr.mxu0 0.0
        %5648 = vmatpush1.msra.mxu0 0.0
        %5649 = vmatprep.subr.mxu0 0.0
        %5650 = vmatpush1.msra.mxu0 0.0
        %5651 = vmatprep.subr.mxu0 0.0
        %5652 = vmatpush1.msra.mxu0 0.0
        %5653 = vmatprep.subr.mxu0 0.0
        %5654 = vmatpush1.msra.mxu0 0.0
        %5655 = vmatprep.subr.mxu0 0.0
        %5656 = vmatpush1.msra.mxu0 0.0
        %5657 = vmatprep.subr.mxu0 0.0
        %5658 = vmatpush1.msra.mxu0 0.0
        %5659 = vmatprep.subr.mxu0 0.0
        %5660 = vmatpush1.msra.mxu0 0.0
        %5661 = vmatprep.subr.mxu0 0.0
        %5662 = vmatpush1.msra.mxu0 0.0
        %5663 = vmatprep.subr.mxu0 0.0
        %5664 = vmatpush1.msra.mxu0 0.0
        %5665 = vmatprep.subr.mxu0 0.0
        %5666 = vmatpush1.msra.mxu0 0.0
        %5667 = vmatprep.subr.mxu0 0.0
        %5668 = vmatpush1.msra.mxu0 0.0
        %5669 = vmatprep.subr.mxu0 0.0
        %5670 = vmatpush1.msra.mxu0 0.0
        %5671 = vmatprep.subr.mxu0 0.0
        %5672 = vmatpush1.msra.mxu0 0.0
        %5673 = vmatprep.subr.mxu0 0.0
        %5674 = vmatpush1.msra.mxu0 0.0
        %5675 = vmatprep.subr.mxu0 0.0
        %5676 = vmatpush1.msra.mxu0 0.0
        %5677 = vmatprep.subr.mxu0 0.0
        %5678 = vmatpush1.msra.mxu0 0.0
        %5679 = vmatprep.subr.mxu0 0.0
        %5680 = vmatpush1.msra.mxu0 0.0
        %5681 = vmatprep.subr.mxu0 0.0
        %5682 = vmatpush1.msra.mxu0 0.0
        %5683 = vmatprep.subr.mxu0 0.0
        %5684 = vmatpush1.msra.mxu0 0.0
        %5685 = vmatprep.subr.mxu0 0.0
        %5686 = vmatpush1.msra.mxu0 0.0
        %5687 = vmatprep.subr.mxu0 0.0
        %5688 = vmatpush1.msra.mxu0 0.0
        %5689 = vmatprep.subr.mxu0 0.0
        %5690 = vmatpush1.msra.mxu0 0.0
        %5691 = vmatprep.subr.mxu0 0.0
        %5692 = vmatpush1.msra.mxu0 0.0
        %5693 = vmatprep.mubr.f32.mxu0 0.0
        %v5694 = vand.u32 %v4229, 4294901760
        %v5695 = vsub.f32 %v4229, %v5694
        %v5696 = vand.u32 %v5695, 4294901760
        %5697 = vmatmul.mubr.f32.gmra.mrb[0].mxu0 %v5696
        %v5698 = vpop.f32.mrb[0].mxu0
        %v5699 = vadd.f32 %v5597, %v5698
        %v5700 = vpop.f32.mrb[0].mxu0
        %5701 = vmatprep.mubr.f32.mxu0 0.0
        %v5702 = vand.u32 %v4232, 4294901760
        %v5703 = vsub.f32 %v4232, %v5702
        %v5704 = vand.u32 %v5703, 4294901760
        %5705 = vmatmul.mubr.f32.gmra.mrb[0].mxu0 %v5704
        %v5706 = vpop.f32.mrb[0].mxu0
        %v5707 = vadd.f32 %v5604, %v5706
        %v5708 = vpop.f32.mrb[0].mxu0
        %5709 = vmatprep.mubr.f32.mxu0 0.0
        %v5710 = vand.u32 %v4235, 4294901760
        %v5711 = vsub.f32 %v4235, %v5710
        %v5712 = vand.u32 %v5711, 4294901760
        %5713 = vmatmul.mubr.f32.gmra.mrb[0].mxu0 %v5712
        %v5714 = vpop.f32.mrb[0].mxu0
        %v5715 = vadd.f32 %v5611, %v5714
        %v5716 = vpop.f32.mrb[0].mxu0
        %5717 = vmatprep.mubr.f32.mxu0 0.0
        %v5718 = vand.u32 %v4238, 4294901760
        %v5719 = vsub.f32 %v4238, %v5718
        %v5720 = vand.u32 %v5719, 4294901760
        %5721 = vmatmul.mubr.f32.gmra.mrb[0].mxu0 %v5720
        %v5722 = vpop.f32.mrb[0].mxu0
        %v5723 = vadd.f32 %v5618, %v5722
        %v5724 = vpop.f32.mrb[0].mxu0
        %5725 = vdwg.mxu0
        %5726 = vmatprep.subr.mxu0 0.0
        %v5727 = vand.u32 %v4220, 4294901760
        %v5728 = vsub.f32 %v4220, %v5727
        %v5729 = vand.u32 %v5728, 4294901760
        %5730 = vmatpush1.msra.mxu0 %v5729
        %5731 = vmatprep.subr.mxu0 0.0
        %v5732 = vand.u32 %v4221, 4294901760
        %v5733 = vsub.f32 %v4221, %v5732
        %v5734 = vand.u32 %v5733, 4294901760
        %5735 = vmatpush1.msra.mxu0 %v5734
        %5736 = vmatprep.subr.mxu0 0.0
        %v5737 = vand.u32 %v4222, 4294901760
        %v5738 = vsub.f32 %v4222, %v5737
        %v5739 = vand.u32 %v5738, 4294901760
        %5740 = vmatpush1.msra.mxu0 %v5739
        %5741 = vmatprep.subr.mxu0 0.0
        %v5742 = vand.u32 %v4223, 4294901760
        %v5743 = vsub.f32 %v4223, %v5742
        %v5744 = vand.u32 %v5743, 4294901760
        %5745 = vmatpush1.msra.mxu0 %v5744
        %5746 = vmatprep.subr.mxu0 0.0
        %v5747 = vand.u32 %v4224, 4294901760
        %v5748 = vsub.f32 %v4224, %v5747
        %v5749 = vand.u32 %v5748, 4294901760
        %5750 = vmatpush1.msra.mxu0 %v5749
        %5751 = vmatprep.subr.mxu0 0.0
        %v5752 = vand.u32 %v4225, 4294901760
        %v5753 = vsub.f32 %v4225, %v5752
        %v5754 = vand.u32 %v5753, 4294901760
        %5755 = vmatpush1.msra.mxu0 %v5754
        %5756 = vmatprep.subr.mxu0 0.0
        %v5757 = vand.u32 %v4226, 4294901760
        %v5758 = vsub.f32 %v4226, %v5757
        %v5759 = vand.u32 %v5758, 4294901760
        %5760 = vmatpush1.msra.mxu0 %v5759
        %5761 = vmatprep.subr.mxu0 0.0
        %v5762 = vand.u32 %v4227, 4294901760
        %v5763 = vsub.f32 %v4227, %v5762
        %v5764 = vand.u32 %v5763, 4294901760
        %5765 = vmatpush1.msra.mxu0 %v5764
        %5766 = vmatprep.subr.mxu0 0.0
        %5767 = vmatpush1.msra.mxu0 0.0
        %5768 = vmatprep.subr.mxu0 0.0
        %5769 = vmatpush1.msra.mxu0 0.0
        %5770 = vmatprep.subr.mxu0 0.0
        %5771 = vmatpush1.msra.mxu0 0.0
        %5772 = vmatprep.subr.mxu0 0.0
        %5773 = vmatpush1.msra.mxu0 0.0
        %5774 = vmatprep.subr.mxu0 0.0
        %5775 = vmatpush1.msra.mxu0 0.0
        %5776 = vmatprep.subr.mxu0 0.0
        %5777 = vmatpush1.msra.mxu0 0.0
        %5778 = vmatprep.subr.mxu0 0.0
        %5779 = vmatpush1.msra.mxu0 0.0
        %5780 = vmatprep.subr.mxu0 0.0
        %5781 = vmatpush1.msra.mxu0 0.0
        %5782 = vmatprep.subr.mxu0 0.0
        %5783 = vmatpush1.msra.mxu0 0.0
        %5784 = vmatprep.subr.mxu0 0.0
        %5785 = vmatpush1.msra.mxu0 0.0
        %5786 = vmatprep.subr.mxu0 0.0
        %5787 = vmatpush1.msra.mxu0 0.0
        %5788 = vmatprep.subr.mxu0 0.0
        %5789 = vmatpush1.msra.mxu0 0.0
        %5790 = vmatprep.subr.mxu0 0.0
        %5791 = vmatpush1.msra.mxu0 0.0
        %5792 = vmatprep.subr.mxu0 0.0
        %5793 = vmatpush1.msra.mxu0 0.0
        %5794 = vmatprep.subr.mxu0 0.0
        %5795 = vmatpush1.msra.mxu0 0.0
        %5796 = vmatprep.subr.mxu0 0.0
        %5797 = vmatpush1.msra.mxu0 0.0
        %5798 = vmatprep.subr.mxu0 0.0
        %5799 = vmatpush1.msra.mxu0 0.0
        %5800 = vmatprep.subr.mxu0 0.0
        %5801 = vmatpush1.msra.mxu0 0.0
        %5802 = vmatprep.subr.mxu0 0.0
        %5803 = vmatpush1.msra.mxu0 0.0
        %5804 = vmatprep.subr.mxu0 0.0
        %5805 = vmatpush1.msra.mxu0 0.0
        %5806 = vmatprep.subr.mxu0 0.0
        %5807 = vmatpush1.msra.mxu0 0.0
        %5808 = vmatprep.subr.mxu0 0.0
        %5809 = vmatpush1.msra.mxu0 0.0
        %5810 = vmatprep.subr.mxu0 0.0
        %5811 = vmatpush1.msra.mxu0 0.0
        %5812 = vmatprep.subr.mxu0 0.0
        %5813 = vmatpush1.msra.mxu0 0.0
        %5814 = vmatprep.mubr.f32.mxu0 0.0
        %v5815 = vand.u32 %v4229, 4294901760
        %5816 = vmatmul.mubr.f32.gmra.mrb[0].mxu0 %v5815
        %v5817 = vpop.f32.mrb[0].mxu0
        %v5818 = vadd.f32 %v5699, %v5817
        %v5819 = vpop.f32.mrb[0].mxu0
        %5820 = vmatprep.mubr.f32.mxu0 0.0
        %v5821 = vand.u32 %v4232, 4294901760
        %5822 = vmatmul.mubr.f32.gmra.mrb[0].mxu0 %v5821
        %v5823 = vpop.f32.mrb[0].mxu0
        %v5824 = vadd.f32 %v5707, %v5823
        %v5825 = vpop.f32.mrb[0].mxu0
        %5826 = vmatprep.mubr.f32.mxu0 0.0
        %v5827 = vand.u32 %v4235, 4294901760
        %5828 = vmatmul.mubr.f32.gmra.mrb[0].mxu0 %v5827
        %v5829 = vpop.f32.mrb[0].mxu0
        %v5830 = vadd.f32 %v5715, %v5829
        %v5831 = vpop.f32.mrb[0].mxu0
        %5832 = vmatprep.mubr.f32.mxu0 0.0
        %v5833 = vand.u32 %v4238, 4294901760
        %5834 = vmatmul.mubr.f32.gmra.mrb[0].mxu0 %v5833
        %v5835 = vpop.f32.mrb[0].mxu0
        %v5836 = vadd.f32 %v5723, %v5835
        %v5837 = vpop.f32.mrb[0].mxu0
        %5838 = vdwg.mxu0
        %5839 = vmatprep.subr.mxu0 0.0
        %v5840 = vand.u32 %v4220, 4294901760
        %5841 = vmatpush1.msra.mxu0 %v5840
        %5842 = vmatprep.subr.mxu0 0.0
        %v5843 = vand.u32 %v4221, 4294901760
        %5844 = vmatpush1.msra.mxu0 %v5843
        %5845 = vmatprep.subr.mxu0 0.0
        %v5846 = vand.u32 %v4222, 4294901760
        %5847 = vmatpush1.msra.mxu0 %v5846
        %5848 = vmatprep.subr.mxu0 0.0
        %v5849 = vand.u32 %v4223, 4294901760
        %5850 = vmatpush1.msra.mxu0 %v5849
        %5851 = vmatprep.subr.mxu0 0.0
        %v5852 = vand.u32 %v4224, 4294901760
        %5853 = vmatpush1.msra.mxu0 %v5852
        %5854 = vmatprep.subr.mxu0 0.0
        %v5855 = vand.u32 %v4225, 4294901760
        %5856 = vmatpush1.msra.mxu0 %v5855
        %5857 = vmatprep.subr.mxu0 0.0
        %v5858 = vand.u32 %v4226, 4294901760
        %5859 = vmatpush1.msra.mxu0 %v5858
        %5860 = vmatprep.subr.mxu0 0.0
        %v5861 = vand.u32 %v4227, 4294901760
        %5862 = vmatpush1.msra.mxu0 %v5861
        %5863 = vmatprep.subr.mxu0 0.0
        %5864 = vmatpush1.msra.mxu0 0.0
        %5865 = vmatprep.subr.mxu0 0.0
        %5866 = vmatpush1.msra.mxu0 0.0
        %5867 = vmatprep.subr.mxu0 0.0
        %5868 = vmatpush1.msra.mxu0 0.0
        %5869 = vmatprep.subr.mxu0 0.0
        %5870 = vmatpush1.msra.mxu0 0.0
        %5871 = vmatprep.subr.mxu0 0.0
        %5872 = vmatpush1.msra.mxu0 0.0
        %5873 = vmatprep.subr.mxu0 0.0
        %5874 = vmatpush1.msra.mxu0 0.0
        %5875 = vmatprep.subr.mxu0 0.0
        %5876 = vmatpush1.msra.mxu0 0.0
        %5877 = vmatprep.subr.mxu0 0.0
        %5878 = vmatpush1.msra.mxu0 0.0
        %5879 = vmatprep.subr.mxu0 0.0
        %5880 = vmatpush1.msra.mxu0 0.0
        %5881 = vmatprep.subr.mxu0 0.0
        %5882 = vmatpush1.msra.mxu0 0.0
        %5883 = vmatprep.subr.mxu0 0.0
        %5884 = vmatpush1.msra.mxu0 0.0
        %5885 = vmatprep.subr.mxu0 0.0
        %5886 = vmatpush1.msra.mxu0 0.0
        %5887 = vmatprep.subr.mxu0 0.0
        %5888 = vmatpush1.msra.mxu0 0.0
        %5889 = vmatprep.subr.mxu0 0.0
        %5890 = vmatpush1.msra.mxu0 0.0
        %5891 = vmatprep.subr.mxu0 0.0
        %5892 = vmatpush1.msra.mxu0 0.0
        %5893 = vmatprep.subr.mxu0 0.0
        %5894 = vmatpush1.msra.mxu0 0.0
        %5895 = vmatprep.subr.mxu0 0.0
        %5896 = vmatpush1.msra.mxu0 0.0
        %5897 = vmatprep.subr.mxu0 0.0
        %5898 = vmatpush1.msra.mxu0 0.0
        %5899 = vmatprep.subr.mxu0 0.0
        %5900 = vmatpush1.msra.mxu0 0.0
        %5901 = vmatprep.subr.mxu0 0.0
        %5902 = vmatpush1.msra.mxu0 0.0
        %5903 = vmatprep.subr.mxu0 0.0
        %5904 = vmatpush1.msra.mxu0 0.0
        %5905 = vmatprep.subr.mxu0 0.0
        %5906 = vmatpush1.msra.mxu0 0.0
        %5907 = vmatprep.subr.mxu0 0.0
        %5908 = vmatpush1.msra.mxu0 0.0
        %5909 = vmatprep.subr.mxu0 0.0
        %5910 = vmatpush1.msra.mxu0 0.0
        %5911 = vmatprep.mubr.f32.mxu0 0.0
        %v5912 = vand.u32 %v4229, 4294901760
        %5913 = vmatmul.mubr.f32.gmra.mrb[0].mxu0 %v5912
        %v5914 = vpop.f32.mrb[0].mxu0
        %v5915 = vadd.f32 %v5818, %v5914
        %v5916 = vpop.f32.mrb[0].mxu0
        %5917 = vmatprep.mubr.f32.mxu0 0.0
        %v5918 = vand.u32 %v4232, 4294901760
        %5919 = vmatmul.mubr.f32.gmra.mrb[0].mxu0 %v5918
        %v5920 = vpop.f32.mrb[0].mxu0
        %v5921 = vadd.f32 %v5824, %v5920
        %v5922 = vpop.f32.mrb[0].mxu0
        %5923 = vmatprep.mubr.f32.mxu0 0.0
        %v5924 = vand.u32 %v4235, 4294901760
        %5925 = vmatmul.mubr.f32.gmra.mrb[0].mxu0 %v5924
        %v5926 = vpop.f32.mrb[0].mxu0
        %v5927 = vadd.f32 %v5830, %v5926
        %v5928 = vpop.f32.mrb[0].mxu0
        %5929 = vmatprep.mubr.f32.mxu0 0.0
        %v5930 = vand.u32 %v4238, 4294901760
        %5931 = vmatmul.mubr.f32.gmra.mrb[0].mxu0 %v5930
        %v5932 = vpop.f32.mrb[0].mxu0
        %v5933 = vadd.f32 %v5836, %v5932
        %v5934 = vpop.f32.mrb[0].mxu0
        %5935 = vdwg.mxu0
        %v5936 = vsub.f32 0.0, %v5915
        %v5937 = vsub.f32 0.0, %v5921
        %v5938 = vsub.f32 0.0, %v5927
        %v5939 = vsub.f32 0.0, %v5933
        %v5940 = vmul.f32 %v5936, 1.442695
        %v5941 = vpow.pop %v5940
        %v5942 = vmul.f32 %v5937, 1.442695
        %v5943 = vpow.pop %v5942
        %v5944 = vmul.f32 %v5938, 1.442695
        %v5945 = vpow.pop %v5944
        %v5946 = vmul.f32 %v5939, 1.442695
        %v5947 = vpow.pop %v5946
        %v5948 = vadd.f32 %v5941, 1.0
        %v5949 = vadd.f32 %v5943, 1.0
        %v5950 = vadd.f32 %v5945, 1.0
        %v5951 = vadd.f32 %v5947, 1.0
        %v5952 = vrcp.pop %v5948
        %v5953 = vmul.f32 1.0, %v5952
        %v5954 = vrcp.pop %v5949
        %v5955 = vmul.f32 1.0, %v5954
        %v5956 = vrcp.pop %v5950
        %v5957 = vmul.f32 1.0, %v5956
        %v5958 = vrcp.pop %v5951
        %v5959 = vmul.f32 1.0, %v5958
        %v5960 = vmul.f32 %v3771, %v5953
        %v5961 = vmul.f32 %v3777, %v5955
        %v5962 = vmul.f32 %v3783, %v5957
        %v5963 = vmul.f32 %v3789, %v5959
        %vm5964 = vcmp.gt.f32.partialorder %v5960, 0.0
        %vm5965 = vcmp.gt.f32.partialorder %v5961, 0.0
        %vm5966 = vcmp.gt.f32.partialorder %v5962, 0.0
        %vm5967 = vcmp.gt.f32.partialorder %v5963, 0.0
        %v5968 = vld [vmem:[%s12] sm:$0x1]
        %v5970 = vlaneseq
        %v5971 = vshrl.u32 %v5970, 7
        %v5972 = vsub.s32 0, %v5971
        %v5973 = vrot.slane %v5968, %v5972
        %v5975 = vmul.f32 %v5973, %v5960
        %v5976 = vmul.f32 %v5973, %v5961
        %v5977 = vmul.f32 %v5973, %v5962
        %v5978 = vmul.f32 %v5973, %v5963
        %v5979 = vsel %vm5964, %v5960, %v5975
        %v5980 = vsel %vm5965, %v5961, %v5976
        %v5981 = vsel %vm5966, %v5962, %v5977
        %v5982 = vsel %vm5967, %v5963, %v5978
        %v5983 = vld [vmem:[%s13] sm:$0x1]
        %v5984 = vld [vmem:[%s14] sm:$0x1]
        %v5985 = vsel %vm1636, %v5979, 0.0
        %5986 = vadd.xlane.f32.xlu0 %v5985
        %v5987 = vpop.xlane.xlu0 %5986
        %v5988 = vsel %vm1636, %v5980, 0.0
        %5989 = vadd.xlane.f32.xlu0 %v5988
        %v5990 = vpop.xlane.xlu0 %5989
        %v5991 = vsel %vm1636, %v5981, 0.0
        %5992 = vadd.xlane.f32.xlu0 %v5991
        %v5993 = vpop.xlane.xlu0 %5992
        %v5994 = vsel %vm1636, %v5982, 0.0
        %5995 = vadd.xlane.f32.xlu0 %v5994
        %v5996 = vpop.xlane.xlu0 %5995
        %v5997 = vmul.f32 %v5979, %v5979
        %v5998 = vmul.f32 %v5980, %v5980
        %v5999 = vmul.f32 %v5981, %v5981
        %v6000 = vmul.f32 %v5982, %v5982
        %v6001 = vsel %vm1636, %v5997, 0.0
        %6002 = vadd.xlane.f32.xlu0 %v6001
        %v6003 = vpop.xlane.xlu0 %6002
        %v6004 = vsel %vm1636, %v5998, 0.0
        %6005 = vadd.xlane.f32.xlu0 %v6004
        %v6006 = vpop.xlane.xlu0 %6005
        %v6007 = vsel %vm1636, %v5999, 0.0
        %6008 = vadd.xlane.f32.xlu0 %v6007
        %v6009 = vpop.xlane.xlu0 %6008
        %v6010 = vsel %vm1636, %v6000, 0.0
        %6011 = vadd.xlane.f32.xlu0 %v6010
        %v6012 = vpop.xlane.xlu0 %6011
        %v6013 = vrot.slane %v5987, 7
        %v6014 = vrot.slane %v5990, 7
        %v6015 = vrot.slane %v5993, 7
        %v6016 = vrot.slane %v5996, 7
        %v6017 = vsel %vm1669, %v6015, %v6016
        %v6018 = vsel %vm1669, %v6014, %v6015
        %v6019 = vsel %vm1669, %v6013, %v6014
        %v6020 = vsel %vm1669, %v6016, %v6013
        %v6021 = vsel %vm1674, %v6020, 0.0
        %v6022 = vsel %vm1675, %v6019, 0.0
        %v6023 = vsel %vm1676, %v6018, 0.0
        %v6024 = vsel %vm1677, %v6017, 0.0
        %v6025 = vadd.f32 %v5987, %v6021
        %v6026 = vadd.f32 %v5990, %v6022
        %v6027 = vadd.f32 %v5993, %v6023
        %v6028 = vadd.f32 %v5996, %v6024
        %v6029 = vrot.slane %v6025, 6
        %v6030 = vrot.slane %v6026, 6
        %v6031 = vrot.slane %v6027, 6
        %v6032 = vrot.slane %v6028, 6
        %v6033 = vsel %vm1690, %v6031, %v6032
        %v6034 = vsel %vm1690, %v6030, %v6031
        %v6035 = vsel %vm1690, %v6029, %v6030
        %v6036 = vsel %vm1690, %v6032, %v6029
        %v6037 = vsel %vm1695, %v6036, 0.0
        %v6038 = vsel %vm1696, %v6035, 0.0
        %v6039 = vsel %vm1697, %v6034, 0.0
        %v6040 = vsel %vm1698, %v6033, 0.0
        %v6041 = vadd.f32 %v6025, %v6037
        %v6042 = vadd.f32 %v6026, %v6038
        %v6043 = vadd.f32 %v6027, %v6039
        %v6044 = vadd.f32 %v6028, %v6040
        %v6045 = vrot.slane %v6041, 4
        %v6046 = vrot.slane %v6042, 4
        %v6047 = vrot.slane %v6043, 4
        %v6048 = vrot.slane %v6044, 4
        %v6049 = vsel %vm1711, %v6047, %v6048
        %v6050 = vsel %vm1711, %v6046, %v6047
        %v6051 = vsel %vm1711, %v6045, %v6046
        %v6052 = vsel %vm1711, %v6048, %v6045
        %v6053 = vsel %vm1716, %v6052, 0.0
        %v6054 = vsel %vm1717, %v6051, 0.0
        %v6055 = vsel %vm1718, %v6050, 0.0
        %v6056 = vsel %vm1719, %v6049, 0.0
        %v6057 = vadd.f32 %v6041, %v6053
        %v6058 = vadd.f32 %v6042, %v6054
        %v6059 = vadd.f32 %v6043, %v6055
        %v6060 = vadd.f32 %v6044, %v6056
        %v6061 = vsel %vm1728, %v6060, 0.0
        %v6062 = vsel %vm1729, %v6057, 0.0
        %v6063 = vsel %vm1730, %v6058, 0.0
        %v6064 = vsel %vm1731, %v6059, 0.0
        %v6065 = vadd.f32 %v6057, %v6061
        %v6066 = vadd.f32 %v6058, %v6062
        %v6067 = vadd.f32 %v6059, %v6063
        %v6068 = vadd.f32 %v6060, %v6064
        %v6069 = vsel %vm1740, %v6067, 0.0
        %v6070 = vsel %vm1741, %v6068, 0.0
        %v6071 = vsel %vm1742, %v6065, 0.0
        %v6072 = vsel %vm1743, %v6066, 0.0
        %v6073 = vadd.f32 %v6065, %v6069
        %v6074 = vadd.f32 %v6066, %v6070
        %v6075 = vadd.f32 %v6067, %v6071
        %v6076 = vadd.f32 %v6068, %v6072
        %v6077 = vrot.slane %v6003, 7
        %v6078 = vrot.slane %v6006, 7
        %v6079 = vrot.slane %v6009, 7
        %v6080 = vrot.slane %v6012, 7
        %v6081 = vsel %vm1669, %v6079, %v6080
        %v6082 = vsel %vm1669, %v6078, %v6079
        %v6083 = vsel %vm1669, %v6077, %v6078
        %v6084 = vsel %vm1669, %v6080, %v6077
        %v6085 = vsel %vm1674, %v6084, 0.0
        %v6086 = vsel %vm1675, %v6083, 0.0
        %v6087 = vsel %vm1676, %v6082, 0.0
        %v6088 = vsel %vm1677, %v6081, 0.0
        %v6089 = vadd.f32 %v6003, %v6085
        %v6090 = vadd.f32 %v6006, %v6086
        %v6091 = vadd.f32 %v6009, %v6087
        %v6092 = vadd.f32 %v6012, %v6088
        %v6093 = vrot.slane %v6089, 6
        %v6094 = vrot.slane %v6090, 6
        %v6095 = vrot.slane %v6091, 6
        %v6096 = vrot.slane %v6092, 6
        %v6097 = vsel %vm1690, %v6095, %v6096
        %v6098 = vsel %vm1690, %v6094, %v6095
        %v6099 = vsel %vm1690, %v6093, %v6094
        %v6100 = vsel %vm1690, %v6096, %v6093
        %v6101 = vsel %vm1695, %v6100, 0.0
        %v6102 = vsel %vm1696, %v6099, 0.0
        %v6103 = vsel %vm1697, %v6098, 0.0
        %v6104 = vsel %vm1698, %v6097, 0.0
        %v6105 = vadd.f32 %v6089, %v6101
        %v6106 = vadd.f32 %v6090, %v6102
        %v6107 = vadd.f32 %v6091, %v6103
        %v6108 = vadd.f32 %v6092, %v6104
        %v6109 = vrot.slane %v6105, 4
        %v6110 = vrot.slane %v6106, 4
        %v6111 = vrot.slane %v6107, 4
        %v6112 = vrot.slane %v6108, 4
        %v6113 = vsel %vm1711, %v6111, %v6112
        %v6114 = vsel %vm1711, %v6110, %v6111
        %v6115 = vsel %vm1711, %v6109, %v6110
        %v6116 = vsel %vm1711, %v6112, %v6109
        %v6117 = vsel %vm1716, %v6116, 0.0
        %v6118 = vsel %vm1717, %v6115, 0.0
        %v6119 = vsel %vm1718, %v6114, 0.0
        %v6120 = vsel %vm1719, %v6113, 0.0
        %v6121 = vadd.f32 %v6105, %v6117
        %v6122 = vadd.f32 %v6106, %v6118
        %v6123 = vadd.f32 %v6107, %v6119
        %v6124 = vadd.f32 %v6108, %v6120
        %v6125 = vsel %vm1728, %v6124, 0.0
        %v6126 = vsel %vm1729, %v6121, 0.0
        %v6127 = vsel %vm1730, %v6122, 0.0
        %v6128 = vsel %vm1731, %v6123, 0.0
        %v6129 = vadd.f32 %v6121, %v6125
        %v6130 = vadd.f32 %v6122, %v6126
        %v6131 = vadd.f32 %v6123, %v6127
        %v6132 = vadd.f32 %v6124, %v6128
        %v6133 = vsel %vm1740, %v6131, 0.0
        %v6134 = vsel %vm1741, %v6132, 0.0
        %v6135 = vsel %vm1742, %v6129, 0.0
        %v6136 = vsel %vm1743, %v6130, 0.0
        %v6137 = vadd.f32 %v6129, %v6133
        %v6138 = vadd.f32 %v6130, %v6134
        %v6139 = vadd.f32 %v6131, %v6135
        %v6140 = vadd.f32 %v6132, %v6136
        %v6141 = vmul.f32 %v6073, %v538
        %v6142 = vmul.f32 %v6074, %v540
        %v6143 = vmul.f32 %v6075, %v542
        %v6144 = vmul.f32 %v6076, %v544
        %v6145 = vmul.f32 %v6137, %v538
        %v6146 = vmul.f32 %v6138, %v540
        %v6147 = vmul.f32 %v6139, %v542
        %v6148 = vmul.f32 %v6140, %v544
        %v6149 = vmul.f32 %v6141, %v6141
        %v6150 = vmul.f32 %v6142, %v6142
        %v6151 = vmul.f32 %v6143, %v6143
        %v6152 = vmul.f32 %v6144, %v6144
        %v6153 = vsub.f32 %v6145, %v6149
        %v6154 = vsub.f32 %v6146, %v6150
        %v6155 = vsub.f32 %v6147, %v6151
        %v6156 = vsub.f32 %v6148, %v6152
        %v6157 = vmax.f32 %v6153, 0.0
        %v6158 = vmax.f32 %v6154, 0.0
        %v6159 = vmax.f32 %v6155, 0.0
        %v6160 = vmax.f32 %v6156, 0.0
        %v6161 = vadd.f32 %v6157, 1e-05
        %v6162 = vadd.f32 %v6158, 1e-05
        %v6163 = vadd.f32 %v6159, 1e-05
        %v6164 = vadd.f32 %v6160, 1e-05
        %v6165 = vrsqrt.pop %v6161
        %v6166 = vmul.f32 %v6161, %v6165
        %vm6167 = vcmp.eq.f32.partialorder %v6161, inf
        %v6168 = vsel %vm6167, %v6161, %v6166
        %vm6169 = vcmp.eq.f32.partialorder %v6161, 0.0
        %v6170 = vand.u32 %v6161, 2147483648
        %v6171 = vsel %vm6169, %v6170, %v6168
        %v6172 = vrsqrt.pop %v6162
        %v6173 = vmul.f32 %v6162, %v6172
        %vm6174 = vcmp.eq.f32.partialorder %v6162, inf
        %v6175 = vsel %vm6174, %v6162, %v6173
        %vm6176 = vcmp.eq.f32.partialorder %v6162, 0.0
        %v6177 = vand.u32 %v6162, 2147483648
        %v6178 = vsel %vm6176, %v6177, %v6175
        %v6179 = vrsqrt.pop %v6163
        %v6180 = vmul.f32 %v6163, %v6179
        %vm6181 = vcmp.eq.f32.partialorder %v6163, inf
        %v6182 = vsel %vm6181, %v6163, %v6180
        %vm6183 = vcmp.eq.f32.partialorder %v6163, 0.0
        %v6184 = vand.u32 %v6163, 2147483648
        %v6185 = vsel %vm6183, %v6184, %v6182
        %v6186 = vrsqrt.pop %v6164
        %v6187 = vmul.f32 %v6164, %v6186
        %vm6188 = vcmp.eq.f32.partialorder %v6164, inf
        %v6189 = vsel %vm6188, %v6164, %v6187
        %vm6190 = vcmp.eq.f32.partialorder %v6164, 0.0
        %v6191 = vand.u32 %v6164, 2147483648
        %v6192 = vsel %vm6190, %v6191, %v6189
        %6194 = vset.pattern.permute.xlu0 0
        %6195 = vperm.xlu0 %6194, %v6141
        %v6196 = vpop.permute.xlu0 %6195
        %6199 = vset.pattern.permute.xlu0 0
        %6200 = vperm.xlu0 %6199, %v6142
        %v6201 = vpop.permute.xlu0 %6200
        %6204 = vset.pattern.permute.xlu0 0
        %6205 = vperm.xlu0 %6204, %v6143
        %v6206 = vpop.permute.xlu0 %6205
        %6209 = vset.pattern.permute.xlu0 0
        %6210 = vperm.xlu0 %6209, %v6144
        %v6211 = vpop.permute.xlu0 %6210
        %v6213 = vsub.f32 %v5979, %v6196
        %v6214 = vsub.f32 %v5980, %v6201
        %v6215 = vsub.f32 %v5981, %v6206
        %v6216 = vsub.f32 %v5982, %v6211
        %6218 = vset.pattern.permute.xlu0 0
        %6219 = vperm.xlu0 %6218, %v6171
        %v6220 = vpop.permute.xlu0 %6219
        %6223 = vset.pattern.permute.xlu0 0
        %6224 = vperm.xlu0 %6223, %v6178
        %v6225 = vpop.permute.xlu0 %6224
        %6228 = vset.pattern.permute.xlu0 0
        %6229 = vperm.xlu0 %6228, %v6185
        %v6230 = vpop.permute.xlu0 %6229
        %6233 = vset.pattern.permute.xlu0 0
        %6234 = vperm.xlu0 %6233, %v6192
        %v6235 = vpop.permute.xlu0 %6234
        %v6237 = vrcp.pop %v6220
        %v6238 = vmul.f32 %v6213, %v6237
        %v6239 = vrcp.pop %v6225
        %v6240 = vmul.f32 %v6214, %v6239
        %v6241 = vrcp.pop %v6230
        %v6242 = vmul.f32 %v6215, %v6241
        %v6243 = vrcp.pop %v6235
        %v6244 = vmul.f32 %v6216, %v6243
        %v6246 = vlaneseq
        %v6247 = vshrl.u32 %v6246, 7
        %v6248 = vsub.s32 0, %v6247
        %v6249 = vrot.slane %v5983, %v6248
        %v6251 = vmul.f32 %v6238, %v6249
        %v6252 = vmul.f32 %v6240, %v6249
        %v6253 = vmul.f32 %v6242, %v6249
        %v6254 = vmul.f32 %v6244, %v6249
        %v6256 = vlaneseq
        %v6257 = vshrl.u32 %v6256, 7
        %v6258 = vsub.s32 0, %v6257
        %v6259 = vrot.slane %v5984, %v6258
        %v6261 = vadd.f32 %v6251, %v6259
        %v6262 = vadd.f32 %v6252, %v6259
        %v6263 = vadd.f32 %v6253, %v6259
        %v6264 = vadd.f32 %v6254, %v6259
        %v6265 = vld [vmem:[%s15] sm:$0xff]
        %v6266 = vld [vmem:[%s15 + $0x8] sm:$0xff]
        %v6267 = vld [vmem:[%s15 + $0x10] sm:$0xff]
        %v6268 = vld [vmem:[%s15 + $0x18] sm:$0xff]
        %v6269 = vld [vmem:[%s15 + $0x20] sm:$0xff]
        %v6270 = vld [vmem:[%s15 + $0x28] sm:$0xff]
        %v6271 = vld [vmem:[%s15 + $0x30] sm:$0xff]
        %v6272 = vld [vmem:[%s15 + $0x38] sm:$0xff]
        %v6273 = vld [vmem:[%s15 + $0x40] sm:$0xff]
        %v6274 = vld [vmem:[%s15 + $0x48] sm:$0xff]
        %v6275 = vld [vmem:[%s15 + $0x50] sm:$0xff]
        %v6276 = vld [vmem:[%s15 + $0x58] sm:$0xff]
        %v6277 = vld [vmem:[%s15 + $0x60] sm:$0xff]
        %v6278 = vld [vmem:[%s15 + $0x68] sm:$0xff]
        %v6279 = vld [vmem:[%s15 + $0x70] sm:$0xff]
        %v6280 = vld [vmem:[%s15 + $0x78] sm:$0xff]
        %v6282 = vsel %vm1636, %v6261, 0
        %v6285 = vsel %vm1636, %v6262, 0
        %v6288 = vsel %vm1636, %v6263, 0
        %v6291 = vsel %vm1636, %v6264, 0
        %v6293 = vand.u32 %v6266, 4294901760
        %6294 = vmatprep.subr.mxu0 %v6293
        %v6295 = vand.u32 %v6265, 4294901760
        %6296 = vmatpush1.msra.mxu0 %v6295
        %v6297 = vand.u32 %v6268, 4294901760
        %6298 = vmatprep.subr.mxu0 %v6297
        %v6299 = vand.u32 %v6267, 4294901760
        %6300 = vmatpush1.msra.mxu0 %v6299
        %v6301 = vand.u32 %v6270, 4294901760
        %6302 = vmatprep.subr.mxu0 %v6301
        %v6303 = vand.u32 %v6269, 4294901760
        %6304 = vmatpush1.msra.mxu0 %v6303
        %v6305 = vand.u32 %v6272, 4294901760
        %6306 = vmatprep.subr.mxu0 %v6305
        %v6307 = vand.u32 %v6271, 4294901760
        %6308 = vmatpush1.msra.mxu0 %v6307
        %v6309 = vand.u32 %v6274, 4294901760
        %6310 = vmatprep.subr.mxu0 %v6309
        %v6311 = vand.u32 %v6273, 4294901760
        %6312 = vmatpush1.msra.mxu0 %v6311
        %v6313 = vand.u32 %v6276, 4294901760
        %6314 = vmatprep.subr.mxu0 %v6313
        %v6315 = vand.u32 %v6275, 4294901760
        %6316 = vmatpush1.msra.mxu0 %v6315
        %v6317 = vand.u32 %v6278, 4294901760
        %6318 = vmatprep.subr.mxu0 %v6317
        %v6319 = vand.u32 %v6277, 4294901760
        %6320 = vmatpush1.msra.mxu0 %v6319
        %v6321 = vand.u32 %v6280, 4294901760
        %6322 = vmatprep.subr.mxu0 %v6321
        %v6323 = vand.u32 %v6279, 4294901760
        %6324 = vmatpush1.msra.mxu0 %v6323
        %6325 = vmatprep.subr.mxu0 0.0
        %6326 = vmatpush1.msra.mxu0 0.0
        %6327 = vmatprep.subr.mxu0 0.0
        %6328 = vmatpush1.msra.mxu0 0.0
        %6329 = vmatprep.subr.mxu0 0.0
        %6330 = vmatpush1.msra.mxu0 0.0
        %6331 = vmatprep.subr.mxu0 0.0
        %6332 = vmatpush1.msra.mxu0 0.0
        %6333 = vmatprep.subr.mxu0 0.0
        %6334 = vmatpush1.msra.mxu0 0.0
        %6335 = vmatprep.subr.mxu0 0.0
        %6336 = vmatpush1.msra.mxu0 0.0
        %6337 = vmatprep.subr.mxu0 0.0
        %6338 = vmatpush1.msra.mxu0 0.0
        %6339 = vmatprep.subr.mxu0 0.0
        %6340 = vmatpush1.msra.mxu0 0.0
        %6341 = vmatprep.subr.mxu0 0.0
        %6342 = vmatpush1.msra.mxu0 0.0
        %6343 = vmatprep.subr.mxu0 0.0
        %6344 = vmatpush1.msra.mxu0 0.0
        %6345 = vmatprep.subr.mxu0 0.0
        %6346 = vmatpush1.msra.mxu0 0.0
        %6347 = vmatprep.subr.mxu0 0.0
        %6348 = vmatpush1.msra.mxu0 0.0
        %6349 = vmatprep.subr.mxu0 0.0
        %6350 = vmatpush1.msra.mxu0 0.0
        %6351 = vmatprep.subr.mxu0 0.0
        %6352 = vmatpush1.msra.mxu0 0.0
        %6353 = vmatprep.subr.mxu0 0.0
        %6354 = vmatpush1.msra.mxu0 0.0
        %6355 = vmatprep.subr.mxu0 0.0
        %6356 = vmatpush1.msra.mxu0 0.0
        %6357 = vmatprep.subr.mxu0 0.0
        %6358 = vmatpush1.msra.mxu0 0.0
        %6359 = vmatprep.subr.mxu0 0.0
        %6360 = vmatpush1.msra.mxu0 0.0
        %6361 = vmatprep.subr.mxu0 0.0
        %6362 = vmatpush1.msra.mxu0 0.0
        %6363 = vmatprep.subr.mxu0 0.0
        %6364 = vmatpush1.msra.mxu0 0.0
        %6365 = vmatprep.subr.mxu0 0.0
        %6366 = vmatpush1.msra.mxu0 0.0
        %6367 = vmatprep.subr.mxu0 0.0
        %6368 = vmatpush1.msra.mxu0 0.0
        %6369 = vmatprep.subr.mxu0 0.0
        %6370 = vmatpush1.msra.mxu0 0.0
        %6371 = vmatprep.subr.mxu0 0.0
        %6372 = vmatpush1.msra.mxu0 0.0
        %6373 = vmatprep.mubr.f32.mxu0 0.0
        %v6374 = vand.u32 %v6282, 4294901760
        %v6375 = vsub.f32 %v6282, %v6374
        %v6376 = vand.u32 %v6375, 4294901760
        %v6377 = vsub.f32 %v6375, %v6376
        %v6378 = vand.u32 %v6377, 4294901760
        %6379 = vmatmul.mubr.f32.gmra.mrb[0].mxu0 %v6378
        %v6380 = vpop.f32.mrb[0].mxu0
        %v6381 = vadd.f32 %v545, %v6380
        %v6382 = vpop.f32.mrb[0].mxu0
        %v6383 = vadd.f32 %v546, %v6382
        %6384 = vmatprep.mubr.f32.mxu0 0.0
        %v6385 = vand.u32 %v6285, 4294901760
        %v6386 = vsub.f32 %v6285, %v6385
        %v6387 = vand.u32 %v6386, 4294901760
        %v6388 = vsub.f32 %v6386, %v6387
        %v6389 = vand.u32 %v6388, 4294901760
        %6390 = vmatmul.mubr.f32.gmra.mrb[0].mxu0 %v6389
        %v6391 = vpop.f32.mrb[0].mxu0
        %v6392 = vadd.f32 %v547, %v6391
        %v6393 = vpop.f32.mrb[0].mxu0
        %v6394 = vadd.f32 %v548, %v6393
        %6395 = vmatprep.mubr.f32.mxu0 0.0
        %v6396 = vand.u32 %v6288, 4294901760
        %v6397 = vsub.f32 %v6288, %v6396
        %v6398 = vand.u32 %v6397, 4294901760
        %v6399 = vsub.f32 %v6397, %v6398
        %v6400 = vand.u32 %v6399, 4294901760
        %6401 = vmatmul.mubr.f32.gmra.mrb[0].mxu0 %v6400
        %v6402 = vpop.f32.mrb[0].mxu0
        %v6403 = vadd.f32 %v549, %v6402
        %v6404 = vpop.f32.mrb[0].mxu0
        %v6405 = vadd.f32 %v550, %v6404
        %6406 = vmatprep.mubr.f32.mxu0 0.0
        %v6407 = vand.u32 %v6291, 4294901760
        %v6408 = vsub.f32 %v6291, %v6407
        %v6409 = vand.u32 %v6408, 4294901760
        %v6410 = vsub.f32 %v6408, %v6409
        %v6411 = vand.u32 %v6410, 4294901760
        %6412 = vmatmul.mubr.f32.gmra.mrb[0].mxu0 %v6411
        %v6413 = vpop.f32.mrb[0].mxu0
        %v6414 = vadd.f32 %v551, %v6413
        %v6415 = vpop.f32.mrb[0].mxu0
        %v6416 = vadd.f32 %v552, %v6415
        %6417 = vdwg.mxu0
        %v6418 = vand.u32 %v6266, 4294901760
        %v6419 = vsub.f32 %v6266, %v6418
        %v6420 = vand.u32 %v6419, 4294901760
        %v6421 = vsub.f32 %v6419, %v6420
        %v6422 = vand.u32 %v6421, 4294901760
        %6423 = vmatprep.subr.mxu0 %v6422
        %v6424 = vand.u32 %v6265, 4294901760
        %v6425 = vsub.f32 %v6265, %v6424
        %v6426 = vand.u32 %v6425, 4294901760
        %v6427 = vsub.f32 %v6425, %v6426
        %v6428 = vand.u32 %v6427, 4294901760
        %6429 = vmatpush1.msra.mxu0 %v6428
        %v6430 = vand.u32 %v6268, 4294901760
        %v6431 = vsub.f32 %v6268, %v6430
        %v6432 = vand.u32 %v6431, 4294901760
        %v6433 = vsub.f32 %v6431, %v6432
        %v6434 = vand.u32 %v6433, 4294901760
        %6435 = vmatprep.subr.mxu0 %v6434
        %v6436 = vand.u32 %v6267, 4294901760
        %v6437 = vsub.f32 %v6267, %v6436
        %v6438 = vand.u32 %v6437, 4294901760
        %v6439 = vsub.f32 %v6437, %v6438
        %v6440 = vand.u32 %v6439, 4294901760
        %6441 = vmatpush1.msra.mxu0 %v6440
        %v6442 = vand.u32 %v6270, 4294901760
        %v6443 = vsub.f32 %v6270, %v6442
        %v6444 = vand.u32 %v6443, 4294901760
        %v6445 = vsub.f32 %v6443, %v6444
        %v6446 = vand.u32 %v6445, 4294901760
        %6447 = vmatprep.subr.mxu0 %v6446
        %v6448 = vand.u32 %v6269, 4294901760
        %v6449 = vsub.f32 %v6269, %v6448
        %v6450 = vand.u32 %v6449, 4294901760
        %v6451 = vsub.f32 %v6449, %v6450
        %v6452 = vand.u32 %v6451, 4294901760
        %6453 = vmatpush1.msra.mxu0 %v6452
        %v6454 = vand.u32 %v6272, 4294901760
        %v6455 = vsub.f32 %v6272, %v6454
        %v6456 = vand.u32 %v6455, 4294901760
        %v6457 = vsub.f32 %v6455, %v6456
        %v6458 = vand.u32 %v6457, 4294901760
        %6459 = vmatprep.subr.mxu0 %v6458
        %v6460 = vand.u32 %v6271, 4294901760
        %v6461 = vsub.f32 %v6271, %v6460
        %v6462 = vand.u32 %v6461, 4294901760
        %v6463 = vsub.f32 %v6461, %v6462
        %v6464 = vand.u32 %v6463, 4294901760
        %6465 = vmatpush1.msra.mxu0 %v6464
        %v6466 = vand.u32 %v6274, 4294901760
        %v6467 = vsub.f32 %v6274, %v6466
        %v6468 = vand.u32 %v6467, 4294901760
        %v6469 = vsub.f32 %v6467, %v6468
        %v6470 = vand.u32 %v6469, 4294901760
        %6471 = vmatprep.subr.mxu0 %v6470
        %v6472 = vand.u32 %v6273, 4294901760
        %v6473 = vsub.f32 %v6273, %v6472
        %v6474 = vand.u32 %v6473, 4294901760
        %v6475 = vsub.f32 %v6473, %v6474
        %v6476 = vand.u32 %v6475, 4294901760
        %6477 = vmatpush1.msra.mxu0 %v6476
        %v6478 = vand.u32 %v6276, 4294901760
        %v6479 = vsub.f32 %v6276, %v6478
        %v6480 = vand.u32 %v6479, 4294901760
        %v6481 = vsub.f32 %v6479, %v6480
        %v6482 = vand.u32 %v6481, 4294901760
        %6483 = vmatprep.subr.mxu0 %v6482
        %v6484 = vand.u32 %v6275, 4294901760
        %v6485 = vsub.f32 %v6275, %v6484
        %v6486 = vand.u32 %v6485, 4294901760
        %v6487 = vsub.f32 %v6485, %v6486
        %v6488 = vand.u32 %v6487, 4294901760
        %6489 = vmatpush1.msra.mxu0 %v6488
        %v6490 = vand.u32 %v6278, 4294901760
        %v6491 = vsub.f32 %v6278, %v6490
        %v6492 = vand.u32 %v6491, 4294901760
        %v6493 = vsub.f32 %v6491, %v6492
        %v6494 = vand.u32 %v6493, 4294901760
        %6495 = vmatprep.subr.mxu0 %v6494
        %v6496 = vand.u32 %v6277, 4294901760
        %v6497 = vsub.f32 %v6277, %v6496
        %v6498 = vand.u32 %v6497, 4294901760
        %v6499 = vsub.f32 %v6497, %v6498
        %v6500 = vand.u32 %v6499, 4294901760
        %6501 = vmatpush1.msra.mxu0 %v6500
        %v6502 = vand.u32 %v6280, 4294901760
        %v6503 = vsub.f32 %v6280, %v6502
        %v6504 = vand.u32 %v6503, 4294901760
        %v6505 = vsub.f32 %v6503, %v6504
        %v6506 = vand.u32 %v6505, 4294901760
        %6507 = vmatprep.subr.mxu0 %v6506
        %v6508 = vand.u32 %v6279, 4294901760
        %v6509 = vsub.f32 %v6279, %v6508
        %v6510 = vand.u32 %v6509, 4294901760
        %v6511 = vsub.f32 %v6509, %v6510
        %v6512 = vand.u32 %v6511, 4294901760
        %6513 = vmatpush1.msra.mxu0 %v6512
        %6514 = vmatprep.subr.mxu0 0.0
        %6515 = vmatpush1.msra.mxu0 0.0
        %6516 = vmatprep.subr.mxu0 0.0
        %6517 = vmatpush1.msra.mxu0 0.0
        %6518 = vmatprep.subr.mxu0 0.0
        %6519 = vmatpush1.msra.mxu0 0.0
        %6520 = vmatprep.subr.mxu0 0.0
        %6521 = vmatpush1.msra.mxu0 0.0
        %6522 = vmatprep.subr.mxu0 0.0
        %6523 = vmatpush1.msra.mxu0 0.0
        %6524 = vmatprep.subr.mxu0 0.0
        %6525 = vmatpush1.msra.mxu0 0.0
        %6526 = vmatprep.subr.mxu0 0.0
        %6527 = vmatpush1.msra.mxu0 0.0
        %6528 = vmatprep.subr.mxu0 0.0
        %6529 = vmatpush1.msra.mxu0 0.0
        %6530 = vmatprep.subr.mxu0 0.0
        %6531 = vmatpush1.msra.mxu0 0.0
        %6532 = vmatprep.subr.mxu0 0.0
        %6533 = vmatpush1.msra.mxu0 0.0
        %6534 = vmatprep.subr.mxu0 0.0
        %6535 = vmatpush1.msra.mxu0 0.0
        %6536 = vmatprep.subr.mxu0 0.0
        %6537 = vmatpush1.msra.mxu0 0.0
        %6538 = vmatprep.subr.mxu0 0.0
        %6539 = vmatpush1.msra.mxu0 0.0
        %6540 = vmatprep.subr.mxu0 0.0
        %6541 = vmatpush1.msra.mxu0 0.0
        %6542 = vmatprep.subr.mxu0 0.0
        %6543 = vmatpush1.msra.mxu0 0.0
        %6544 = vmatprep.subr.mxu0 0.0
        %6545 = vmatpush1.msra.mxu0 0.0
        %6546 = vmatprep.subr.mxu0 0.0
        %6547 = vmatpush1.msra.mxu0 0.0
        %6548 = vmatprep.subr.mxu0 0.0
        %6549 = vmatpush1.msra.mxu0 0.0
        %6550 = vmatprep.subr.mxu0 0.0
        %6551 = vmatpush1.msra.mxu0 0.0
        %6552 = vmatprep.subr.mxu0 0.0
        %6553 = vmatpush1.msra.mxu0 0.0
        %6554 = vmatprep.subr.mxu0 0.0
        %6555 = vmatpush1.msra.mxu0 0.0
        %6556 = vmatprep.subr.mxu0 0.0
        %6557 = vmatpush1.msra.mxu0 0.0
        %6558 = vmatprep.subr.mxu0 0.0
        %6559 = vmatpush1.msra.mxu0 0.0
        %6560 = vmatprep.subr.mxu0 0.0
        %6561 = vmatpush1.msra.mxu0 0.0
        %6562 = vmatprep.mubr.f32.mxu0 0.0
        %v6563 = vand.u32 %v6282, 4294901760
        %6564 = vmatmul.mubr.f32.gmra.mrb[0].mxu0 %v6563
        %v6565 = vpop.f32.mrb[0].mxu0
        %v6566 = vadd.f32 %v6381, %v6565
        %v6567 = vpop.f32.mrb[0].mxu0
        %v6568 = vadd.f32 %v6383, %v6567
        %6569 = vmatprep.mubr.f32.mxu0 0.0
        %v6570 = vand.u32 %v6285, 4294901760
        %6571 = vmatmul.mubr.f32.gmra.mrb[0].mxu0 %v6570
        %v6572 = vpop.f32.mrb[0].mxu0
        %v6573 = vadd.f32 %v6392, %v6572
        %v6574 = vpop.f32.mrb[0].mxu0
        %v6575 = vadd.f32 %v6394, %v6574
        %6576 = vmatprep.mubr.f32.mxu0 0.0
        %v6577 = vand.u32 %v6288, 4294901760
        %6578 = vmatmul.mubr.f32.gmra.mrb[0].mxu0 %v6577
        %v6579 = vpop.f32.mrb[0].mxu0
        %v6580 = vadd.f32 %v6403, %v6579
        %v6581 = vpop.f32.mrb[0].mxu0
        %v6582 = vadd.f32 %v6405, %v6581
        %6583 = vmatprep.mubr.f32.mxu0 0.0
        %v6584 = vand.u32 %v6291, 4294901760
        %6585 = vmatmul.mubr.f32.gmra.mrb[0].mxu0 %v6584
        %v6586 = vpop.f32.mrb[0].mxu0
        %v6587 = vadd.f32 %v6414, %v6586
        %v6588 = vpop.f32.mrb[0].mxu0
        %v6589 = vadd.f32 %v6416, %v6588
        %6590 = vdwg.mxu0
        %v6591 = vand.u32 %v6266, 4294901760
        %v6592 = vsub.f32 %v6266, %v6591
        %6593 = vmatprep.subr.mxu0 %v6592
        %v6594 = vand.u32 %v6265, 4294901760
        %v6595 = vsub.f32 %v6265, %v6594
        %6596 = vmatpush1.msra.mxu0 %v6595
        %v6597 = vand.u32 %v6268, 4294901760
        %v6598 = vsub.f32 %v6268, %v6597
        %6599 = vmatprep.subr.mxu0 %v6598
        %v6600 = vand.u32 %v6267, 4294901760
        %v6601 = vsub.f32 %v6267, %v6600
        %6602 = vmatpush1.msra.mxu0 %v6601
        %v6603 = vand.u32 %v6270, 4294901760
        %v6604 = vsub.f32 %v6270, %v6603
        %6605 = vmatprep.subr.mxu0 %v6604
        %v6606 = vand.u32 %v6269, 4294901760
        %v6607 = vsub.f32 %v6269, %v6606
        %6608 = vmatpush1.msra.mxu0 %v6607
        %v6609 = vand.u32 %v6272, 4294901760
        %v6610 = vsub.f32 %v6272, %v6609
        %6611 = vmatprep.subr.mxu0 %v6610
        %v6612 = vand.u32 %v6271, 4294901760
        %v6613 = vsub.f32 %v6271, %v6612
        %6614 = vmatpush1.msra.mxu0 %v6613
        %v6615 = vand.u32 %v6274, 4294901760
        %v6616 = vsub.f32 %v6274, %v6615
        %6617 = vmatprep.subr.mxu0 %v6616
        %v6618 = vand.u32 %v6273, 4294901760
        %v6619 = vsub.f32 %v6273, %v6618
        %6620 = vmatpush1.msra.mxu0 %v6619
        %v6621 = vand.u32 %v6276, 4294901760
        %v6622 = vsub.f32 %v6276, %v6621
        %6623 = vmatprep.subr.mxu0 %v6622
        %v6624 = vand.u32 %v6275, 4294901760
        %v6625 = vsub.f32 %v6275, %v6624
        %6626 = vmatpush1.msra.mxu0 %v6625
        %v6627 = vand.u32 %v6278, 4294901760
        %v6628 = vsub.f32 %v6278, %v6627
        %6629 = vmatprep.subr.mxu0 %v6628
        %v6630 = vand.u32 %v6277, 4294901760
        %v6631 = vsub.f32 %v6277, %v6630
        %6632 = vmatpush1.msra.mxu0 %v6631
        %v6633 = vand.u32 %v6280, 4294901760
        %v6634 = vsub.f32 %v6280, %v6633
        %6635 = vmatprep.subr.mxu0 %v6634
        %v6636 = vand.u32 %v6279, 4294901760
        %v6637 = vsub.f32 %v6279, %v6636
        %6638 = vmatpush1.msra.mxu0 %v6637
        %6639 = vmatprep.subr.mxu0 0.0
        %6640 = vmatpush1.msra.mxu0 0.0
        %6641 = vmatprep.subr.mxu0 0.0
        %6642 = vmatpush1.msra.mxu0 0.0
        %6643 = vmatprep.subr.mxu0 0.0
        %6644 = vmatpush1.msra.mxu0 0.0
        %6645 = vmatprep.subr.mxu0 0.0
        %6646 = vmatpush1.msra.mxu0 0.0
        %6647 = vmatprep.subr.mxu0 0.0
        %6648 = vmatpush1.msra.mxu0 0.0
        %6649 = vmatprep.subr.mxu0 0.0
        %6650 = vmatpush1.msra.mxu0 0.0
        %6651 = vmatprep.subr.mxu0 0.0
        %6652 = vmatpush1.msra.mxu0 0.0
        %6653 = vmatprep.subr.mxu0 0.0
        %6654 = vmatpush1.msra.mxu0 0.0
        %6655 = vmatprep.subr.mxu0 0.0
        %6656 = vmatpush1.msra.mxu0 0.0
        %6657 = vmatprep.subr.mxu0 0.0
        %6658 = vmatpush1.msra.mxu0 0.0
        %6659 = vmatprep.subr.mxu0 0.0
        %6660 = vmatpush1.msra.mxu0 0.0
        %6661 = vmatprep.subr.mxu0 0.0
        %6662 = vmatpush1.msra.mxu0 0.0
        %6663 = vmatprep.subr.mxu0 0.0
        %6664 = vmatpush1.msra.mxu0 0.0
        %6665 = vmatprep.subr.mxu0 0.0
        %6666 = vmatpush1.msra.mxu0 0.0
        %6667 = vmatprep.subr.mxu0 0.0
        %6668 = vmatpush1.msra.mxu0 0.0
        %6669 = vmatprep.subr.mxu0 0.0
        %6670 = vmatpush1.msra.mxu0 0.0
        %6671 = vmatprep.subr.mxu0 0.0
        %6672 = vmatpush1.msra.mxu0 0.0
        %6673 = vmatprep.subr.mxu0 0.0
        %6674 = vmatpush1.msra.mxu0 0.0
        %6675 = vmatprep.subr.mxu0 0.0
        %6676 = vmatpush1.msra.mxu0 0.0
        %6677 = vmatprep.subr.mxu0 0.0
        %6678 = vmatpush1.msra.mxu0 0.0
        %6679 = vmatprep.subr.mxu0 0.0
        %6680 = vmatpush1.msra.mxu0 0.0
        %6681 = vmatprep.subr.mxu0 0.0
        %6682 = vmatpush1.msra.mxu0 0.0
        %6683 = vmatprep.subr.mxu0 0.0
        %6684 = vmatpush1.msra.mxu0 0.0
        %6685 = vmatprep.subr.mxu0 0.0
        %6686 = vmatpush1.msra.mxu0 0.0
        %6687 = vmatprep.mubr.f32.mxu0 0.0
        %v6688 = vand.u32 %v6282, 4294901760
        %v6689 = vsub.f32 %v6282, %v6688
        %6690 = vmatmul.mubr.f32.gmra.mrb[0].mxu0 %v6689
        %v6691 = vpop.f32.mrb[0].mxu0
        %v6692 = vadd.f32 %v6566, %v6691
        %v6693 = vpop.f32.mrb[0].mxu0
        %v6694 = vadd.f32 %v6568, %v6693
        %6695 = vmatprep.mubr.f32.mxu0 0.0
        %v6696 = vand.u32 %v6285, 4294901760
        %v6697 = vsub.f32 %v6285, %v6696
        %6698 = vmatmul.mubr.f32.gmra.mrb[0].mxu0 %v6697
        %v6699 = vpop.f32.mrb[0].mxu0
        %v6700 = vadd.f32 %v6573, %v6699
        %v6701 = vpop.f32.mrb[0].mxu0
        %v6702 = vadd.f32 %v6575, %v6701
        %6703 = vmatprep.mubr.f32.mxu0 0.0
        %v6704 = vand.u32 %v6288, 4294901760
        %v6705 = vsub.f32 %v6288, %v6704
        %6706 = vmatmul.mubr.f32.gmra.mrb[0].mxu0 %v6705
        %v6707 = vpop.f32.mrb[0].mxu0
        %v6708 = vadd.f32 %v6580, %v6707
        %v6709 = vpop.f32.mrb[0].mxu0
        %v6710 = vadd.f32 %v6582, %v6709
        %6711 = vmatprep.mubr.f32.mxu0 0.0
        %v6712 = vand.u32 %v6291, 4294901760
        %v6713 = vsub.f32 %v6291, %v6712
        %6714 = vmatmul.mubr.f32.gmra.mrb[0].mxu0 %v6713
        %v6715 = vpop.f32.mrb[0].mxu0
        %v6716 = vadd.f32 %v6587, %v6715
        %v6717 = vpop.f32.mrb[0].mxu0
        %v6718 = vadd.f32 %v6589, %v6717
        %6719 = vdwg.mxu0
        %v6720 = vand.u32 %v6266, 4294901760
        %6721 = vmatprep.subr.mxu0 %v6720
        %v6722 = vand.u32 %v6265, 4294901760
        %6723 = vmatpush1.msra.mxu0 %v6722
        %v6724 = vand.u32 %v6268, 4294901760
        %6725 = vmatprep.subr.mxu0 %v6724
        %v6726 = vand.u32 %v6267, 4294901760
        %6727 = vmatpush1.msra.mxu0 %v6726
        %v6728 = vand.u32 %v6270, 4294901760
        %6729 = vmatprep.subr.mxu0 %v6728
        %v6730 = vand.u32 %v6269, 4294901760
        %6731 = vmatpush1.msra.mxu0 %v6730
        %v6732 = vand.u32 %v6272, 4294901760
        %6733 = vmatprep.subr.mxu0 %v6732
        %v6734 = vand.u32 %v6271, 4294901760
        %6735 = vmatpush1.msra.mxu0 %v6734
        %v6736 = vand.u32 %v6274, 4294901760
        %6737 = vmatprep.subr.mxu0 %v6736
        %v6738 = vand.u32 %v6273, 4294901760
        %6739 = vmatpush1.msra.mxu0 %v6738
        %v6740 = vand.u32 %v6276, 4294901760
        %6741 = vmatprep.subr.mxu0 %v6740
        %v6742 = vand.u32 %v6275, 4294901760
        %6743 = vmatpush1.msra.mxu0 %v6742
        %v6744 = vand.u32 %v6278, 4294901760
        %6745 = vmatprep.subr.mxu0 %v6744
        %v6746 = vand.u32 %v6277, 4294901760
        %6747 = vmatpush1.msra.mxu0 %v6746
        %v6748 = vand.u32 %v6280, 4294901760
        %6749 = vmatprep.subr.mxu0 %v6748
        %v6750 = vand.u32 %v6279, 4294901760
        %6751 = vmatpush1.msra.mxu0 %v6750
        %6752 = vmatprep.subr.mxu0 0.0
        %6753 = vmatpush1.msra.mxu0 0.0
        %6754 = vmatprep.subr.mxu0 0.0
        %6755 = vmatpush1.msra.mxu0 0.0
        %6756 = vmatprep.subr.mxu0 0.0
        %6757 = vmatpush1.msra.mxu0 0.0
        %6758 = vmatprep.subr.mxu0 0.0
        %6759 = vmatpush1.msra.mxu0 0.0
        %6760 = vmatprep.subr.mxu0 0.0
        %6761 = vmatpush1.msra.mxu0 0.0
        %6762 = vmatprep.subr.mxu0 0.0
        %6763 = vmatpush1.msra.mxu0 0.0
        %6764 = vmatprep.subr.mxu0 0.0
        %6765 = vmatpush1.msra.mxu0 0.0
        %6766 = vmatprep.subr.mxu0 0.0
        %6767 = vmatpush1.msra.mxu0 0.0
        %6768 = vmatprep.subr.mxu0 0.0
        %6769 = vmatpush1.msra.mxu0 0.0
        %6770 = vmatprep.subr.mxu0 0.0
        %6771 = vmatpush1.msra.mxu0 0.0
        %6772 = vmatprep.subr.mxu0 0.0
        %6773 = vmatpush1.msra.mxu0 0.0
        %6774 = vmatprep.subr.mxu0 0.0
        %6775 = vmatpush1.msra.mxu0 0.0
        %6776 = vmatprep.subr.mxu0 0.0
        %6777 = vmatpush1.msra.mxu0 0.0
        %6778 = vmatprep.subr.mxu0 0.0
        %6779 = vmatpush1.msra.mxu0 0.0
        %6780 = vmatprep.subr.mxu0 0.0
        %6781 = vmatpush1.msra.mxu0 0.0
        %6782 = vmatprep.subr.mxu0 0.0
        %6783 = vmatpush1.msra.mxu0 0.0
        %6784 = vmatprep.subr.mxu0 0.0
        %6785 = vmatpush1.msra.mxu0 0.0
        %6786 = vmatprep.subr.mxu0 0.0
        %6787 = vmatpush1.msra.mxu0 0.0
        %6788 = vmatprep.subr.mxu0 0.0
        %6789 = vmatpush1.msra.mxu0 0.0
        %6790 = vmatprep.subr.mxu0 0.0
        %6791 = vmatpush1.msra.mxu0 0.0
        %6792 = vmatprep.subr.mxu0 0.0
        %6793 = vmatpush1.msra.mxu0 0.0
        %6794 = vmatprep.subr.mxu0 0.0
        %6795 = vmatpush1.msra.mxu0 0.0
        %6796 = vmatprep.subr.mxu0 0.0
        %6797 = vmatpush1.msra.mxu0 0.0
        %6798 = vmatprep.subr.mxu0 0.0
        %6799 = vmatpush1.msra.mxu0 0.0
        %6800 = vmatprep.mubr.f32.mxu0 0.0
        %v6801 = vand.u32 %v6282, 4294901760
        %v6802 = vsub.f32 %v6282, %v6801
        %v6803 = vand.u32 %v6802, 4294901760
        %6804 = vmatmul.mubr.f32.gmra.mrb[0].mxu0 %v6803
        %v6805 = vpop.f32.mrb[0].mxu0
        %v6806 = vadd.f32 %v6692, %v6805
        %v6807 = vpop.f32.mrb[0].mxu0
        %v6808 = vadd.f32 %v6694, %v6807
        %6809 = vmatprep.mubr.f32.mxu0 0.0
        %v6810 = vand.u32 %v6285, 4294901760
        %v6811 = vsub.f32 %v6285, %v6810
        %v6812 = vand.u32 %v6811, 4294901760
        %6813 = vmatmul.mubr.f32.gmra.mrb[0].mxu0 %v6812
        %v6814 = vpop.f32.mrb[0].mxu0
        %v6815 = vadd.f32 %v6700, %v6814
        %v6816 = vpop.f32.mrb[0].mxu0
        %v6817 = vadd.f32 %v6702, %v6816
        %6818 = vmatprep.mubr.f32.mxu0 0.0
        %v6819 = vand.u32 %v6288, 4294901760
        %v6820 = vsub.f32 %v6288, %v6819
        %v6821 = vand.u32 %v6820, 4294901760
        %6822 = vmatmul.mubr.f32.gmra.mrb[0].mxu0 %v6821
        %v6823 = vpop.f32.mrb[0].mxu0
        %v6824 = vadd.f32 %v6708, %v6823
        %v6825 = vpop.f32.mrb[0].mxu0
        %v6826 = vadd.f32 %v6710, %v6825
        %6827 = vmatprep.mubr.f32.mxu0 0.0
        %v6828 = vand.u32 %v6291, 4294901760
        %v6829 = vsub.f32 %v6291, %v6828
        %v6830 = vand.u32 %v6829, 4294901760
        %6831 = vmatmul.mubr.f32.gmra.mrb[0].mxu0 %v6830
        %v6832 = vpop.f32.mrb[0].mxu0
        %v6833 = vadd.f32 %v6716, %v6832
        %v6834 = vpop.f32.mrb[0].mxu0
        %v6835 = vadd.f32 %v6718, %v6834
        %6836 = vdwg.mxu0
        %v6837 = vand.u32 %v6266, 4294901760
        %v6838 = vsub.f32 %v6266, %v6837
        %v6839 = vand.u32 %v6838, 4294901760
        %6840 = vmatprep.subr.mxu0 %v6839
        %v6841 = vand.u32 %v6265, 4294901760
        %v6842 = vsub.f32 %v6265, %v6841
        %v6843 = vand.u32 %v6842, 4294901760
        %6844 = vmatpush1.msra.mxu0 %v6843
        %v6845 = vand.u32 %v6268, 4294901760
        %v6846 = vsub.f32 %v6268, %v6845
        %v6847 = vand.u32 %v6846, 4294901760
        %6848 = vmatprep.subr.mxu0 %v6847
        %v6849 = vand.u32 %v6267, 4294901760
        %v6850 = vsub.f32 %v6267, %v6849
        %v6851 = vand.u32 %v6850, 4294901760
        %6852 = vmatpush1.msra.mxu0 %v6851
        %v6853 = vand.u32 %v6270, 4294901760
        %v6854 = vsub.f32 %v6270, %v6853
        %v6855 = vand.u32 %v6854, 4294901760
        %6856 = vmatprep.subr.mxu0 %v6855
        %v6857 = vand.u32 %v6269, 4294901760
        %v6858 = vsub.f32 %v6269, %v6857
        %v6859 = vand.u32 %v6858, 4294901760
        %6860 = vmatpush1.msra.mxu0 %v6859
        %v6861 = vand.u32 %v6272, 4294901760
        %v6862 = vsub.f32 %v6272, %v6861
        %v6863 = vand.u32 %v6862, 4294901760
        %6864 = vmatprep.subr.mxu0 %v6863
        %v6865 = vand.u32 %v6271, 4294901760
        %v6866 = vsub.f32 %v6271, %v6865
        %v6867 = vand.u32 %v6866, 4294901760
        %6868 = vmatpush1.msra.mxu0 %v6867
        %v6869 = vand.u32 %v6274, 4294901760
        %v6870 = vsub.f32 %v6274, %v6869
        %v6871 = vand.u32 %v6870, 4294901760
        %6872 = vmatprep.subr.mxu0 %v6871
        %v6873 = vand.u32 %v6273, 4294901760
        %v6874 = vsub.f32 %v6273, %v6873
        %v6875 = vand.u32 %v6874, 4294901760
        %6876 = vmatpush1.msra.mxu0 %v6875
        %v6877 = vand.u32 %v6276, 4294901760
        %v6878 = vsub.f32 %v6276, %v6877
        %v6879 = vand.u32 %v6878, 4294901760
        %6880 = vmatprep.subr.mxu0 %v6879
        %v6881 = vand.u32 %v6275, 4294901760
        %v6882 = vsub.f32 %v6275, %v6881
        %v6883 = vand.u32 %v6882, 4294901760
        %6884 = vmatpush1.msra.mxu0 %v6883
        %v6885 = vand.u32 %v6278, 4294901760
        %v6886 = vsub.f32 %v6278, %v6885
        %v6887 = vand.u32 %v6886, 4294901760
        %6888 = vmatprep.subr.mxu0 %v6887
        %v6889 = vand.u32 %v6277, 4294901760
        %v6890 = vsub.f32 %v6277, %v6889
        %v6891 = vand.u32 %v6890, 4294901760
        %6892 = vmatpush1.msra.mxu0 %v6891
        %v6893 = vand.u32 %v6280, 4294901760
        %v6894 = vsub.f32 %v6280, %v6893
        %v6895 = vand.u32 %v6894, 4294901760
        %6896 = vmatprep.subr.mxu0 %v6895
        %v6897 = vand.u32 %v6279, 4294901760
        %v6898 = vsub.f32 %v6279, %v6897
        %v6899 = vand.u32 %v6898, 4294901760
        %6900 = vmatpush1.msra.mxu0 %v6899
        %6901 = vmatprep.subr.mxu0 0.0
        %6902 = vmatpush1.msra.mxu0 0.0
        %6903 = vmatprep.subr.mxu0 0.0
        %6904 = vmatpush1.msra.mxu0 0.0
        %6905 = vmatprep.subr.mxu0 0.0
        %6906 = vmatpush1.msra.mxu0 0.0
        %6907 = vmatprep.subr.mxu0 0.0
        %6908 = vmatpush1.msra.mxu0 0.0
        %6909 = vmatprep.subr.mxu0 0.0
        %6910 = vmatpush1.msra.mxu0 0.0
        %6911 = vmatprep.subr.mxu0 0.0
        %6912 = vmatpush1.msra.mxu0 0.0
        %6913 = vmatprep.subr.mxu0 0.0
        %6914 = vmatpush1.msra.mxu0 0.0
        %6915 = vmatprep.subr.mxu0 0.0
        %6916 = vmatpush1.msra.mxu0 0.0
        %6917 = vmatprep.subr.mxu0 0.0
        %6918 = vmatpush1.msra.mxu0 0.0
        %6919 = vmatprep.subr.mxu0 0.0
        %6920 = vmatpush1.msra.mxu0 0.0
        %6921 = vmatprep.subr.mxu0 0.0
        %6922 = vmatpush1.msra.mxu0 0.0
        %6923 = vmatprep.subr.mxu0 0.0
        %6924 = vmatpush1.msra.mxu0 0.0
        %6925 = vmatprep.subr.mxu0 0.0
        %6926 = vmatpush1.msra.mxu0 0.0
        %6927 = vmatprep.subr.mxu0 0.0
        %6928 = vmatpush1.msra.mxu0 0.0
        %6929 = vmatprep.subr.mxu0 0.0
        %6930 = vmatpush1.msra.mxu0 0.0
        %6931 = vmatprep.subr.mxu0 0.0
        %6932 = vmatpush1.msra.mxu0 0.0
        %6933 = vmatprep.subr.mxu0 0.0
        %6934 = vmatpush1.msra.mxu0 0.0
        %6935 = vmatprep.subr.mxu0 0.0
        %6936 = vmatpush1.msra.mxu0 0.0
        %6937 = vmatprep.subr.mxu0 0.0
        %6938 = vmatpush1.msra.mxu0 0.0
        %6939 = vmatprep.subr.mxu0 0.0
        %6940 = vmatpush1.msra.mxu0 0.0
        %6941 = vmatprep.subr.mxu0 0.0
        %6942 = vmatpush1.msra.mxu0 0.0
        %6943 = vmatprep.subr.mxu0 0.0
        %6944 = vmatpush1.msra.mxu0 0.0
        %6945 = vmatprep.subr.mxu0 0.0
        %6946 = vmatpush1.msra.mxu0 0.0
        %6947 = vmatprep.subr.mxu0 0.0
        %6948 = vmatpush1.msra.mxu0 0.0
        %6949 = vmatprep.mubr.f32.mxu0 0.0
        %v6950 = vand.u32 %v6282, 4294901760
        %6951 = vmatmul.mubr.f32.gmra.mrb[0].mxu0 %v6950
        %v6952 = vpop.f32.mrb[0].mxu0
        %v6953 = vadd.f32 %v6806, %v6952
        %v6954 = vpop.f32.mrb[0].mxu0
        %v6955 = vadd.f32 %v6808, %v6954
        %6956 = vmatprep.mubr.f32.mxu0 0.0
        %v6957 = vand.u32 %v6285, 4294901760
        %6958 = vmatmul.mubr.f32.gmra.mrb[0].mxu0 %v6957
        %v6959 = vpop.f32.mrb[0].mxu0
        %v6960 = vadd.f32 %v6815, %v6959
        %v6961 = vpop.f32.mrb[0].mxu0
        %v6962 = vadd.f32 %v6817, %v6961
        %6963 = vmatprep.mubr.f32.mxu0 0.0
        %v6964 = vand.u32 %v6288, 4294901760
        %6965 = vmatmul.mubr.f32.gmra.mrb[0].mxu0 %v6964
        %v6966 = vpop.f32.mrb[0].mxu0
        %v6967 = vadd.f32 %v6824, %v6966
        %v6968 = vpop.f32.mrb[0].mxu0
        %v6969 = vadd.f32 %v6826, %v6968
        %6970 = vmatprep.mubr.f32.mxu0 0.0
        %v6971 = vand.u32 %v6291, 4294901760
        %6972 = vmatmul.mubr.f32.gmra.mrb[0].mxu0 %v6971
        %v6973 = vpop.f32.mrb[0].mxu0
        %v6974 = vadd.f32 %v6833, %v6973
        %v6975 = vpop.f32.mrb[0].mxu0
        %v6976 = vadd.f32 %v6835, %v6975
        %6977 = vdwg.mxu0
        %v6978 = vand.u32 %v6266, 4294901760
        %6979 = vmatprep.subr.mxu0 %v6978
        %v6980 = vand.u32 %v6265, 4294901760
        %6981 = vmatpush1.msra.mxu0 %v6980
        %v6982 = vand.u32 %v6268, 4294901760
        %6983 = vmatprep.subr.mxu0 %v6982
        %v6984 = vand.u32 %v6267, 4294901760
        %6985 = vmatpush1.msra.mxu0 %v6984
        %v6986 = vand.u32 %v6270, 4294901760
        %6987 = vmatprep.subr.mxu0 %v6986
        %v6988 = vand.u32 %v6269, 4294901760
        %6989 = vmatpush1.msra.mxu0 %v6988
        %v6990 = vand.u32 %v6272, 4294901760
        %6991 = vmatprep.subr.mxu0 %v6990
        %v6992 = vand.u32 %v6271, 4294901760
        %6993 = vmatpush1.msra.mxu0 %v6992
        %v6994 = vand.u32 %v6274, 4294901760
        %6995 = vmatprep.subr.mxu0 %v6994
        %v6996 = vand.u32 %v6273, 4294901760
        %6997 = vmatpush1.msra.mxu0 %v6996
        %v6998 = vand.u32 %v6276, 4294901760
        %6999 = vmatprep.subr.mxu0 %v6998
        %v7000 = vand.u32 %v6275, 4294901760
        %7001 = vmatpush1.msra.mxu0 %v7000
        %v7002 = vand.u32 %v6278, 4294901760
        %7003 = vmatprep.subr.mxu0 %v7002
        %v7004 = vand.u32 %v6277, 4294901760
        %7005 = vmatpush1.msra.mxu0 %v7004
        %v7006 = vand.u32 %v6280, 4294901760
        %7007 = vmatprep.subr.mxu0 %v7006
        %v7008 = vand.u32 %v6279, 4294901760
        %7009 = vmatpush1.msra.mxu0 %v7008
        %7010 = vmatprep.subr.mxu0 0.0
        %7011 = vmatpush1.msra.mxu0 0.0
        %7012 = vmatprep.subr.mxu0 0.0
        %7013 = vmatpush1.msra.mxu0 0.0
        %7014 = vmatprep.subr.mxu0 0.0
        %7015 = vmatpush1.msra.mxu0 0.0
        %7016 = vmatprep.subr.mxu0 0.0
        %7017 = vmatpush1.msra.mxu0 0.0
        %7018 = vmatprep.subr.mxu0 0.0
        %7019 = vmatpush1.msra.mxu0 0.0
        %7020 = vmatprep.subr.mxu0 0.0
        %7021 = vmatpush1.msra.mxu0 0.0
        %7022 = vmatprep.subr.mxu0 0.0
        %7023 = vmatpush1.msra.mxu0 0.0
        %7024 = vmatprep.subr.mxu0 0.0
        %7025 = vmatpush1.msra.mxu0 0.0
        %7026 = vmatprep.subr.mxu0 0.0
        %7027 = vmatpush1.msra.mxu0 0.0
        %7028 = vmatprep.subr.mxu0 0.0
        %7029 = vmatpush1.msra.mxu0 0.0
        %7030 = vmatprep.subr.mxu0 0.0
        %7031 = vmatpush1.msra.mxu0 0.0
        %7032 = vmatprep.subr.mxu0 0.0
        %7033 = vmatpush1.msra.mxu0 0.0
        %7034 = vmatprep.subr.mxu0 0.0
        %7035 = vmatpush1.msra.mxu0 0.0
        %7036 = vmatprep.subr.mxu0 0.0
        %7037 = vmatpush1.msra.mxu0 0.0
        %7038 = vmatprep.subr.mxu0 0.0
        %7039 = vmatpush1.msra.mxu0 0.0
        %7040 = vmatprep.subr.mxu0 0.0
        %7041 = vmatpush1.msra.mxu0 0.0
        %7042 = vmatprep.subr.mxu0 0.0
        %7043 = vmatpush1.msra.mxu0 0.0
        %7044 = vmatprep.subr.mxu0 0.0
        %7045 = vmatpush1.msra.mxu0 0.0
        %7046 = vmatprep.subr.mxu0 0.0
        %7047 = vmatpush1.msra.mxu0 0.0
        %7048 = vmatprep.subr.mxu0 0.0
        %7049 = vmatpush1.msra.mxu0 0.0
        %7050 = vmatprep.subr.mxu0 0.0
        %7051 = vmatpush1.msra.mxu0 0.0
        %7052 = vmatprep.subr.mxu0 0.0
        %7053 = vmatpush1.msra.mxu0 0.0
        %7054 = vmatprep.subr.mxu0 0.0
        %7055 = vmatpush1.msra.mxu0 0.0
        %7056 = vmatprep.subr.mxu0 0.0
        %7057 = vmatpush1.msra.mxu0 0.0
        %7058 = vmatprep.mubr.f32.mxu0 0.0
        %v7059 = vand.u32 %v6282, 4294901760
        %7060 = vmatmul.mubr.f32.gmra.mrb[0].mxu0 %v7059
        %v7061 = vpop.f32.mrb[0].mxu0
        %v7062 = vadd.f32 %v6953, %v7061
        %v7063 = vpop.f32.mrb[0].mxu0
        %v7064 = vadd.f32 %v6955, %v7063
        %7065 = vmatprep.mubr.f32.mxu0 0.0
        %v7066 = vand.u32 %v6285, 4294901760
        %7067 = vmatmul.mubr.f32.gmra.mrb[0].mxu0 %v7066
        %v7068 = vpop.f32.mrb[0].mxu0
        %v7069 = vadd.f32 %v6960, %v7068
        %v7070 = vpop.f32.mrb[0].mxu0
        %v7071 = vadd.f32 %v6962, %v7070
        %7072 = vmatprep.mubr.f32.mxu0 0.0
        %v7073 = vand.u32 %v6288, 4294901760
        %7074 = vmatmul.mubr.f32.gmra.mrb[0].mxu0 %v7073
        %v7075 = vpop.f32.mrb[0].mxu0
        %v7076 = vadd.f32 %v6967, %v7075
        %v7077 = vpop.f32.mrb[0].mxu0
        %v7078 = vadd.f32 %v6969, %v7077
        %7079 = vmatprep.mubr.f32.mxu0 0.0
        %v7080 = vand.u32 %v6291, 4294901760
        %7081 = vmatmul.mubr.f32.gmra.mrb[0].mxu0 %v7080
        %v7082 = vpop.f32.mrb[0].mxu0
        %v7083 = vadd.f32 %v6974, %v7082
        %v7084 = vpop.f32.mrb[0].mxu0
        %v7085 = vadd.f32 %v6976, %v7084
        %7086 = vdwg.mxu0
        %7087 = vst [vmem:[%s514] sm:$0xff] %v7062
        %7088 = vst [vmem:[%s514 + $0x8] sm:$0xff] %v7064
        %7089 = vst [vmem:[%s514 + $0x10] sm:$0xff] %v7069
        %7090 = vst [vmem:[%s514 + $0x18] sm:$0xff] %v7071
        %7091 = vst [vmem:[%s514 + $0x20] sm:$0xff] %v7076
        %7092 = vst [vmem:[%s514 + $0x28] sm:$0xff] %v7078
        %7093 = vst [vmem:[%s514 + $0x30] sm:$0xff] %v7083
        %7094 = vst [vmem:[%s514 + $0x38] sm:$0xff] %v7085
        %s7095 = sand.u32 %s379, 1
        %s7096 = scalar_lea.sflag [#allocation3], %s7095
        %s7097 = sand.u32 %s379, 1
        %s7098 = smul.addr %s7097, 64
        %s7099 = scalar_lea.vmem [#allocation2], %s7098
        // Predicated region
        $region85: #{tpu_custom_call.1} parent=83 // pred_check
          %p7100 = pneg %p389
        $region86: #{tpu_custom_call.1} parent=83 // pred_check_branch
          %7102 = sbr.rel (%p7100) target = $region88
        $region87: #{tpu_custom_call.1} parent=83 // pred_region
          %s7104 = ssub.s32 1024, 1024
          %7105 = vsyncadd %s7096, %s7104
          %s7106 = smul.addr %s30, 8
          %s7107 = smul.addr %s7106, 128
          %s7108 = scalar_lea.hbm %s16, %s7107
          %s7109 = sshll.u32 %s7099, 4
          %s7110 = int_to_ptr.vmem [resolvable:$true] %s7109
          %7115 = dma.vmem_to_hbm [thread:$0]  %s7110, 1024, %s7108, %s7096, 256, 256, 16
        $region88: #{tpu_custom_call.1} parent=83 // pred_fallthru
          _
      $region84: #{tpu_custom_call.1} parent=5 // pred_fallthru
        _
      %p7116 = scmp.le.s32.totalorder 2, %s25
      // Predicated region
      $region89: #{tpu_custom_call.1} parent=5 // pred_check
        %p7117 = pneg %p7116
      $region90: #{tpu_custom_call.1} parent=5 // pred_check_branch
        %7119 = sbr.rel (%p7117) target = $region92
      $region91: #{tpu_custom_call.1} parent=5 // pred_region
        %s7120 = ssub.s32 %s25, 2
        // Predicated region
        $region93: #{tpu_custom_call.1} parent=91 // pred_check
          %p7121 = pneg %p395
        $region94: #{tpu_custom_call.1} parent=91 // pred_check_branch
          %7123 = sbr.rel (%p7121) target = $region96
        $region95: #{tpu_custom_call.1} parent=91 // pred_region
          %s7124 = sand.u32 %s380, 1
          %s7125 = scalar_lea.sflag [#allocation3], %s7124
          %s7126 = sand.u32 %s380, 1
          %s7127 = smul.addr %s7126, 64
          %s7128 = scalar_lea.vmem [#allocation2], %s7127
          %7129 = dma.done %s7125, 1024
        $region96: #{tpu_custom_call.1} parent=91 // pred_fallthru
          _
      $region92: #{tpu_custom_call.1} parent=5 // pred_fallthru
        _
    $region6: #{tpu_custom_call.1} parent=1 // loop_footer
      %s29 = sadd.s32 1, %s25
    $region7: #{tpu_custom_call.1} parent=1 // loop_footer_branch
      %24 = sbr.rel target = $region3
    $region8: #{tpu_custom_call.1} parent=1 // loop_exit
      _
    %7130 = vsyncpa [#allocation3], 1
    %s7131 = scalar_lea.sflag [#allocation3], 1
    %7132 = vsyncpa %s7131, 1

</llo_original>
